<compile_context>
chip_gen: v7x
topology: tpu7x:2x2x1
jax: 0.10.0
libtpu: 0.0.40
codegen_flags: <defaults>
</compile_context>

<pallas_src>
import functools

import jax
import jax.numpy as jnp
from jax.experimental import pallas as pl
from jax.experimental.pallas import tpu as pltpu

BN_EPS = 1e-5
_LP = 8       # left halo width in the padded scratches (8-sublane aligned)
_LANE = 128   # TPU lane width; channel dim is zero-padded to a multiple of it


def _round_up(a, b):
    return (a + b - 1) // b * b


# -----------------------------------------------------------------------------
# Fused kernel: conv3x3+bn1+act -> conv3x3+bn2+residual+act, one batch element
# per grid step.
# -----------------------------------------------------------------------------
def basic_block_kernel(x_ref, w1_ref, b1_ref, w2_ref, b2_ref, o_ref,
                       xpad_ref, mpad_ref, *, H, W):
    Cp = x_ref.shape[-1]          # channels, already padded to a lane multiple
    Wp = xpad_ref.shape[1]        # padded scratch width
    LP = _LP

    def zero_halo(ref):
        # Zero ONLY the halo strips; the (H, W) interior is fully overwritten
        # right after, so we never pay a full activation-sized clear.  Re-done
        # every step so the kernel stays correct if the "parallel" batch axis
        # is sharded across TensorCores (scratch is per-core).
        ref[0:1, :, :] = jnp.zeros((1, Wp, Cp), jnp.float32)            # top row
        ref[H + 1:H + 2, :, :] = jnp.zeros((1, Wp, Cp), jnp.float32)    # bottom row
        ref[1:H + 1, 0:LP, :] = jnp.zeros((H, LP, Cp), jnp.float32)     # left cols
        ref[1:H + 1, LP + W:Wp, :] = jnp.zeros((H, Wp - LP - W, Cp),
                                               jnp.float32)            # right cols

    zero_halo(xpad_ref)
    zero_halo(mpad_ref)

    x = x_ref[0]                                           # (H, W, Cp) bf16
    xpad_ref[1:H + 1, LP:LP + W, :] = x.astype(jnp.float32)  # aligned interior store

    def conv3x3(pad_ref, w_ref):
        """3x3 'SAME' conv over the zero-bordered halo buffer.

        9 accumulating MXU matmuls (M=H*W, K=Cp, N=Cp), bf16 operands with
        f32 accumulation.  No im2col slab is ever materialised.
        """
        acc = None
        for dh in range(3):
            for dw in range(3):
                c0 = LP - 1 + dw
                lhs = pad_ref[dh:dh + H, c0:c0 + W, :]
                lhs = lhs.reshape(H * W, Cp).astype(jnp.bfloat16)
                p = jnp.dot(lhs, w_ref[dh * 3 + dw],
                            preferred_element_type=jnp.float32)
                acc = p if acc is None else acc + p
        return acc                                         # (H*W, Cp) f32

    # conv1 (BN1 scale pre-folded into w1) + bias + Hardtanh(0, 20)
    y = jnp.clip(conv3x3(xpad_ref, w1_ref) + b1_ref[...], 0.0, 20.0)

    # intermediate activation never leaves VMEM
    mpad_ref[1:H + 1, LP:LP + W, :] = y.reshape(H, W, Cp)

    # conv2 (BN2 scale pre-folded into w2) + bias + residual + Hardtanh(0, 20)
    z = conv3x3(mpad_ref, w2_ref) + b2_ref[...]            # (H*W, Cp) f32
    z = z.reshape(H, W, Cp) + x.astype(jnp.float32)        # residual in NHWC layout
    o_ref[0] = jnp.clip(z, 0.0, 20.0).astype(o_ref.dtype)


# -----------------------------------------------------------------------------
# Wrapper: fold BN, pad channels to a lane multiple, cast MXU operands to bf16.
# -----------------------------------------------------------------------------
def fold_bn(gamma, beta, running_mean, running_var):
    scale = gamma / jnp.sqrt(running_var + BN_EPS)
    bias = beta - running_mean * scale
    return scale, bias


def basic_block_forward(x_nchw, params):
    orig_dtype = x_nchw.dtype
    x = jnp.transpose(x_nchw, (0, 2, 3, 1))                # NCHW -> NHWC
    N, H, W, C = x.shape
    Cp = _round_up(C, _LANE)                               # lane-dense channels

    s1, b1 = fold_bn(*params["bn1"])
    s2, b2 = fold_bn(*params["bn2"])

    def prep_w(w_hwio, scale):
        wf = (w_hwio * scale).astype(jnp.float32)          # fold BN scale into taps
        wp = jnp.zeros((3, 3, Cp, Cp), jnp.float32).at[:, :, :C, :C].set(wf)
        return wp.reshape(9, Cp, Cp).astype(jnp.bfloat16)  # (tap, Cin_p, Cout_p)

    w1 = prep_w(params["w1"], s1)
    w2 = prep_w(params["w2"], s2)
    b1p = jnp.zeros((1, Cp), jnp.float32).at[0, :C].set(b1)
    b2p = jnp.zeros((1, Cp), jnp.float32).at[0, :C].set(b2)

    # bf16 activations into the kernel (halves HBM read + input VMEM blocks)
    xp = jnp.zeros((N, H, W, Cp), jnp.bfloat16).at[..., :C].set(
        x.astype(jnp.bfloat16))

    # Scratch width: aligned left halo + W + (>=1 right halo col, rounded up to
    # a full sublane group so its zeroing store stays aligned).
    Wp = _round_up(_LP + W + 1, 8)

    cost = pl.CostEstimate(
        flops=2 * 2 * N * H * W * 9 * Cp * Cp,             # two 3x3 convs (MAC=2)
        transcendentals=0,
        bytes_accessed=(N * H * W * Cp * (2 + 4)           # x in (bf16) + out (f32)
                        + 2 * 9 * Cp * Cp * 2 + 2 * Cp * 4))

    out = pl.pallas_call(
        functools.partial(basic_block_kernel, H=H, W=W),
        out_shape=jax.ShapeDtypeStruct((N, H, W, Cp), jnp.float32),
        grid=(N,),
        in_specs=[
            pl.BlockSpec((1, H, W, Cp), lambda n: (n, 0, 0, 0)),   # x (bf16, padded)
            pl.BlockSpec((9, Cp, Cp), lambda n: (0, 0, 0)),        # w1 (BN-folded, bf16)
            pl.BlockSpec((1, Cp), lambda n: (0, 0)),               # b1 (f32)
            pl.BlockSpec((9, Cp, Cp), lambda n: (0, 0, 0)),        # w2 (BN-folded, bf16)
            pl.BlockSpec((1, Cp), lambda n: (0, 0)),               # b2 (f32)
        ],
        out_specs=pl.BlockSpec((1, H, W, Cp), lambda n: (n, 0, 0, 0)),
        scratch_shapes=[
            pltpu.VMEM((H + 2, Wp, Cp), jnp.float32),              # padded x
            pltpu.VMEM((H + 2, Wp, Cp), jnp.float32),              # padded mid act
        ],
        compiler_params=pltpu.CompilerParams(
            dimension_semantics=("parallel",),
            vmem_limit_bytes=32 * 1024 * 1024),
        cost_estimate=cost,
    )(xp, w1, b1p, w2, b2p)

    out = out[..., :C].astype(orig_dtype)                  # drop channel padding
    return jnp.transpose(out, (0, 3, 1, 2))                # NHWC -> NCHW


# -----------------------------------------------------------------------------
# Reference with the SAME precision policy (bf16 conv operands, f32 accumulation
# and epilogue) so the numerical check is tight.
# -----------------------------------------------------------------------------
def _ref_conv(x_nhwc, w_hwio):
    return jax.lax.conv_general_dilated(
        x_nhwc, w_hwio, window_strides=(1, 1), padding="SAME",
        dimension_numbers=("NHWC", "HWIO", "NHWC"),
        preferred_element_type=jnp.float32)


def basic_block_ref(x_nchw, params):
    x = jnp.transpose(x_nchw, (0, 2, 3, 1))
    s1, b1 = fold_bn(*params["bn1"])
    s2, b2 = fold_bn(*params["bn2"])
    xb = x.astype(jnp.bfloat16)
    w1 = (params["w1"] * s1).astype(jnp.bfloat16)
    w2 = (params["w2"] * s2).astype(jnp.bfloat16)
    mid = jnp.clip(_ref_conv(xb, w1) + b1, 0.0, 20.0)
    out = _ref_conv(mid.astype(jnp.bfloat16), w2) + b2
    out = jnp.clip(out + xb.astype(jnp.float32), 0.0, 20.0)
    return jnp.transpose(out, (0, 3, 1, 2)).astype(x_nchw.dtype)


# -----------------------------------------------------------------------------
if __name__ == "__main__":
    N, C, H, W = 2, 4, 16, 16  # in_channels == channels, stride=1, no downsample

    key = jax.random.PRNGKey(0)
    ks = jax.random.split(key, 11)

    x = jax.random.normal(ks[0], (N, C, H, W), jnp.float32)

    params = {
        "w1": 0.2 * jax.random.normal(ks[1], (3, 3, C, C), jnp.float32),
        "w2": 0.2 * jax.random.normal(ks[2], (3, 3, C, C), jnp.float32),
        "bn1": (
            1.0 + 0.1 * jax.random.normal(ks[3], (C,), jnp.float32),   # gamma
            0.1 * jax.random.normal(ks[4], (C,), jnp.float32),         # beta
            0.05 * jax.random.normal(ks[5], (C,), jnp.float32),        # running_mean
            jax.random.uniform(ks[6], (C,), jnp.float32, 0.5, 1.5),    # running_var
        ),
        "bn2": (
            1.0 + 0.1 * jax.random.normal(ks[7], (C,), jnp.float32),
            0.1 * jax.random.normal(ks[8], (C,), jnp.float32),
            0.05 * jax.random.normal(ks[9], (C,), jnp.float32),
            jax.random.uniform(ks[10], (C,), jnp.float32, 0.5, 1.5),
        ),
    }

    fwd = jax.jit(basic_block_forward)
    out = jax.block_until_ready(fwd(x, params))
    ref = jax.block_until_ready(basic_block_ref(x, params))

    assert out.shape == (N, C, H, W)
    assert out.dtype == x.dtype
    max_err = float(jnp.max(jnp.abs(out - ref)))
    assert jnp.allclose(out, ref, rtol=2e-3, atol=2e-3), f"max abs err {max_err}"

    print("KERNEL_OK")
</pallas_src>

<mosaic_0001>
module attributes {stable_mosaic.version = 11 : i64} {
  func.func @basic_block_kernel(%arg0: i32, %arg1: memref<1x16x16x128xbf16, #tpu.memory_space<vmem>>, %arg2: memref<9x128x128xbf16, #tpu.memory_space<vmem>>, %arg3: memref<1x128xf32, #tpu.memory_space<vmem>>, %arg4: memref<9x128x128xbf16, #tpu.memory_space<vmem>>, %arg5: memref<1x128xf32, #tpu.memory_space<vmem>>, %arg6: memref<1x16x16x128xf32, #tpu.memory_space<vmem>>, %arg7: memref<18x32x128xf32, #tpu.memory_space<vmem>>, %arg8: memref<18x32x128xf32, #tpu.memory_space<vmem>>) attributes {dimension_semantics = [#tpu.dimension_semantics<parallel>], iteration_bounds = array<i64: 2>, scalar_prefetch = 0 : i64, scratch_operands = 2 : i64, tpu.core_type = #tpu.core_type<tc>, window_params = [{transform_indices = @transform_0, window_bounds = array<i64: 1, 16, 16, 128>}, {pipeline_mode = #tpu.pipeline_mode<synchronous>, transform_indices = @transform_1, window_bounds = array<i64: 9, 128, 128>}, {pipeline_mode = #tpu.pipeline_mode<synchronous>, transform_indices = @transform_2, window_bounds = array<i64: 1, 128>}, {pipeline_mode = #tpu.pipeline_mode<synchronous>, transform_indices = @transform_3, window_bounds = array<i64: 9, 128, 128>}, {pipeline_mode = #tpu.pipeline_mode<synchronous>, transform_indices = @transform_4, window_bounds = array<i64: 1, 128>}, {transform_indices = @transform_5, window_bounds = array<i64: 1, 16, 16, 128>}]} {
    %cst = arith.constant 0.000000e+00 : f32
    %0 = vector.broadcast %cst : f32 to vector<1x32x128xf32>
    %c0 = arith.constant 0 : index
    %c0_0 = arith.constant 0 : index
    %c0_1 = arith.constant 0 : index
    %1 = vector.load %arg7[%c0, %c0_0, %c0_1] : memref<18x32x128xf32, #tpu.memory_space<vmem>>, vector<1x32x128xf32>
    tpu.vector_store %arg7[%c0, %c0_0, %c0_1], %0 {strides = array<i32>} : memref<18x32x128xf32, #tpu.memory_space<vmem>>, vector<1x32x128xf32>,
    %cst_2 = arith.constant 0.000000e+00 : f32
    %2 = vector.broadcast %cst_2 : f32 to vector<1x32x128xf32>
    %c17 = arith.constant 17 : index
    %c0_3 = arith.constant 0 : index
    %c0_4 = arith.constant 0 : index
    %3 = vector.load %arg7[%c17, %c0_3, %c0_4] : memref<18x32x128xf32, #tpu.memory_space<vmem>>, vector<1x32x128xf32>
    tpu.vector_store %arg7[%c17, %c0_3, %c0_4], %2 {strides = array<i32>} : memref<18x32x128xf32, #tpu.memory_space<vmem>>, vector<1x32x128xf32>,
    %cst_5 = arith.constant 0.000000e+00 : f32
    %4 = vector.broadcast %cst_5 : f32 to vector<16x8x128xf32>
    %c1 = arith.constant 1 : index
    %c0_6 = arith.constant 0 : index
    %c0_7 = arith.constant 0 : index
    %5 = vector.load %arg7[%c1, %c0_6, %c0_7] : memref<18x32x128xf32, #tpu.memory_space<vmem>>, vector<16x8x128xf32>
    tpu.vector_store %arg7[%c1, %c0_6, %c0_7], %4 {strides = array<i32>} : memref<18x32x128xf32, #tpu.memory_space<vmem>>, vector<16x8x128xf32>,
    %cst_8 = arith.constant 0.000000e+00 : f32
    %6 = vector.broadcast %cst_8 : f32 to vector<16x8x128xf32>
    %c1_9 = arith.constant 1 : index
    %c24 = arith.constant 24 : index
    %c0_10 = arith.constant 0 : index
    %7 = vector.load %arg7[%c1_9, %c24, %c0_10] : memref<18x32x128xf32, #tpu.memory_space<vmem>>, vector<16x8x128xf32>
    tpu.vector_store %arg7[%c1_9, %c24, %c0_10], %6 {strides = array<i32>} : memref<18x32x128xf32, #tpu.memory_space<vmem>>, vector<16x8x128xf32>,
    %cst_11 = arith.constant 0.000000e+00 : f32
    %8 = vector.broadcast %cst_11 : f32 to vector<1x32x128xf32>
    %c0_12 = arith.constant 0 : index
    %c0_13 = arith.constant 0 : index
    %c0_14 = arith.constant 0 : index
    %9 = vector.load %arg8[%c0_12, %c0_13, %c0_14] : memref<18x32x128xf32, #tpu.memory_space<vmem>>, vector<1x32x128xf32>
    tpu.vector_store %arg8[%c0_12, %c0_13, %c0_14], %8 {strides = array<i32>} : memref<18x32x128xf32, #tpu.memory_space<vmem>>, vector<1x32x128xf32>,
    %cst_15 = arith.constant 0.000000e+00 : f32
    %10 = vector.broadcast %cst_15 : f32 to vector<1x32x128xf32>
    %c17_16 = arith.constant 17 : index
    %c0_17 = arith.constant 0 : index
    %c0_18 = arith.constant 0 : index
    %11 = vector.load %arg8[%c17_16, %c0_17, %c0_18] : memref<18x32x128xf32, #tpu.memory_space<vmem>>, vector<1x32x128xf32>
    tpu.vector_store %arg8[%c17_16, %c0_17, %c0_18], %10 {strides = array<i32>} : memref<18x32x128xf32, #tpu.memory_space<vmem>>, vector<1x32x128xf32>,
    %cst_19 = arith.constant 0.000000e+00 : f32
    %12 = vector.broadcast %cst_19 : f32 to vector<16x8x128xf32>
    %c1_20 = arith.constant 1 : index
    %c0_21 = arith.constant 0 : index
    %c0_22 = arith.constant 0 : index
    %13 = vector.load %arg8[%c1_20, %c0_21, %c0_22] : memref<18x32x128xf32, #tpu.memory_space<vmem>>, vector<16x8x128xf32>
    tpu.vector_store %arg8[%c1_20, %c0_21, %c0_22], %12 {strides = array<i32>} : memref<18x32x128xf32, #tpu.memory_space<vmem>>, vector<16x8x128xf32>,
    %cst_23 = arith.constant 0.000000e+00 : f32
    %14 = vector.broadcast %cst_23 : f32 to vector<16x8x128xf32>
    %c1_24 = arith.constant 1 : index
    %c24_25 = arith.constant 24 : index
    %c0_26 = arith.constant 0 : index
    %15 = vector.load %arg8[%c1_24, %c24_25, %c0_26] : memref<18x32x128xf32, #tpu.memory_space<vmem>>, vector<16x8x128xf32>
    tpu.vector_store %arg8[%c1_24, %c24_25, %c0_26], %14 {strides = array<i32>} : memref<18x32x128xf32, #tpu.memory_space<vmem>>, vector<16x8x128xf32>,
    %c0_27 = arith.constant 0 : index
    %c0_28 = arith.constant 0 : index
    %c0_29 = arith.constant 0 : index
    %c0_30 = arith.constant 0 : index
    %16 = vector.load %arg1[%c0_27, %c0_28, %c0_29, %c0_30] : memref<1x16x16x128xbf16, #tpu.memory_space<vmem>>, vector<1x16x16x128xbf16>
    %17 = vector.shape_cast %16 : vector<1x16x16x128xbf16> to vector<16x16x128xbf16>
    %18 = arith.extf %17 : vector<16x16x128xbf16> to vector<16x16x128xf32>
    %c1_31 = arith.constant 1 : index
    %c8 = arith.constant 8 : index
    %c0_32 = arith.constant 0 : index
    %19 = vector.load %arg7[%c1_31, %c8, %c0_32] : memref<18x32x128xf32, #tpu.memory_space<vmem>>, vector<16x16x128xf32>
    tpu.vector_store %arg7[%c1_31, %c8, %c0_32], %18 {strides = array<i32>} : memref<18x32x128xf32, #tpu.memory_space<vmem>>, vector<16x16x128xf32>,
    %c0_33 = arith.constant 0 : index
    %c7 = arith.constant 7 : index
    %c0_34 = arith.constant 0 : index
    %20 = vector.load %arg7[%c0_33, %c7, %c0_34] : memref<18x32x128xf32, #tpu.memory_space<vmem>>, vector<16x16x128xf32>
    %21 = vector.shape_cast %20 : vector<16x16x128xf32> to vector<256x128xf32>
    %22 = arith.truncf %21 : vector<256x128xf32> to vector<256x128xbf16>
    %c0_35 = arith.constant 0 : index
    %c0_36 = arith.constant 0 : index
    %c0_37 = arith.constant 0 : index
    %23 = vector.load %arg2[%c0_35, %c0_36, %c0_37] : memref<9x128x128xbf16, #tpu.memory_space<vmem>>, vector<1x128x128xbf16>
    %24 = vector.shape_cast %23 : vector<1x128x128xbf16> to vector<128x128xbf16>
    %cst_38 = arith.constant dense<0.000000e+00> : vector<256x128xf32>
    %25 = tpu.matmul %22, %24, %cst_38 {dimension_numbers = #tpu.dot_dimension_numbers<[1], [0], [0], [1], [0, 0, 1, 1], [], []>} : vector<256x128xbf16>, vector<128x128xbf16>, vector<256x128xf32> -> vector<256x128xf32>
    %c0_39 = arith.constant 0 : index
    %c8_40 = arith.constant 8 : index
    %c0_41 = arith.constant 0 : index
    %26 = vector.load %arg7[%c0_39, %c8_40, %c0_41] : memref<18x32x128xf32, #tpu.memory_space<vmem>>, vector<16x16x128xf32>
    %27 = vector.shape_cast %26 : vector<16x16x128xf32> to vector<256x128xf32>
    %28 = arith.truncf %27 : vector<256x128xf32> to vector<256x128xbf16>
    %c1_42 = arith.constant 1 : index
    %c0_43 = arith.constant 0 : index
    %c0_44 = arith.constant 0 : index
    %29 = vector.load %arg2[%c1_42, %c0_43, %c0_44] : memref<9x128x128xbf16, #tpu.memory_space<vmem>>, vector<1x128x128xbf16>
    %30 = vector.shape_cast %29 : vector<1x128x128xbf16> to vector<128x128xbf16>
    %cst_45 = arith.constant dense<0.000000e+00> : vector<256x128xf32>
    %31 = tpu.matmul %28, %30, %cst_45 {dimension_numbers = #tpu.dot_dimension_numbers<[1], [0], [0], [1], [0, 0, 1, 1], [], []>} : vector<256x128xbf16>, vector<128x128xbf16>, vector<256x128xf32> -> vector<256x128xf32>
    %32 = arith.addf %25, %31 : vector<256x128xf32>
    %c0_46 = arith.constant 0 : index
    %c9 = arith.constant 9 : index
    %c0_47 = arith.constant 0 : index
    %33 = vector.load %arg7[%c0_46, %c9, %c0_47] : memref<18x32x128xf32, #tpu.memory_space<vmem>>, vector<16x16x128xf32>
    %34 = vector.shape_cast %33 : vector<16x16x128xf32> to vector<256x128xf32>
    %35 = arith.truncf %34 : vector<256x128xf32> to vector<256x128xbf16>
    %c2 = arith.constant 2 : index
    %c0_48 = arith.constant 0 : index
    %c0_49 = arith.constant 0 : index
    %36 = vector.load %arg2[%c2, %c0_48, %c0_49] : memref<9x128x128xbf16, #tpu.memory_space<vmem>>, vector<1x128x128xbf16>
    %37 = vector.shape_cast %36 : vector<1x128x128xbf16> to vector<128x128xbf16>
    %cst_50 = arith.constant dense<0.000000e+00> : vector<256x128xf32>
    %38 = tpu.matmul %35, %37, %cst_50 {dimension_numbers = #tpu.dot_dimension_numbers<[1], [0], [0], [1], [0, 0, 1, 1], [], []>} : vector<256x128xbf16>, vector<128x128xbf16>, vector<256x128xf32> -> vector<256x128xf32>
    %39 = arith.addf %32, %38 : vector<256x128xf32>
    %c1_51 = arith.constant 1 : index
    %c7_52 = arith.constant 7 : index
    %c0_53 = arith.constant 0 : index
    %40 = vector.load %arg7[%c1_51, %c7_52, %c0_53] : memref<18x32x128xf32, #tpu.memory_space<vmem>>, vector<16x16x128xf32>
    %41 = vector.shape_cast %40 : vector<16x16x128xf32> to vector<256x128xf32>
    %42 = arith.truncf %41 : vector<256x128xf32> to vector<256x128xbf16>
    %c3 = arith.constant 3 : index
    %c0_54 = arith.constant 0 : index
    %c0_55 = arith.constant 0 : index
    %43 = vector.load %arg2[%c3, %c0_54, %c0_55] : memref<9x128x128xbf16, #tpu.memory_space<vmem>>, vector<1x128x128xbf16>
    %44 = vector.shape_cast %43 : vector<1x128x128xbf16> to vector<128x128xbf16>
    %cst_56 = arith.constant dense<0.000000e+00> : vector<256x128xf32>
    %45 = tpu.matmul %42, %44, %cst_56 {dimension_numbers = #tpu.dot_dimension_numbers<[1], [0], [0], [1], [0, 0, 1, 1], [], []>} : vector<256x128xbf16>, vector<128x128xbf16>, vector<256x128xf32> -> vector<256x128xf32>
    %46 = arith.addf %39, %45 : vector<256x128xf32>
    %c1_57 = arith.constant 1 : index
    %c8_58 = arith.constant 8 : index
    %c0_59 = arith.constant 0 : index
    %47 = vector.load %arg7[%c1_57, %c8_58, %c0_59] : memref<18x32x128xf32, #tpu.memory_space<vmem>>, vector<16x16x128xf32>
    %48 = vector.shape_cast %47 : vector<16x16x128xf32> to vector<256x128xf32>
    %49 = arith.truncf %48 : vector<256x128xf32> to vector<256x128xbf16>
    %c4 = arith.constant 4 : index
    %c0_60 = arith.constant 0 : index
    %c0_61 = arith.constant 0 : index
    %50 = vector.load %arg2[%c4, %c0_60, %c0_61] : memref<9x128x128xbf16, #tpu.memory_space<vmem>>, vector<1x128x128xbf16>
    %51 = vector.shape_cast %50 : vector<1x128x128xbf16> to vector<128x128xbf16>
    %cst_62 = arith.constant dense<0.000000e+00> : vector<256x128xf32>
    %52 = tpu.matmul %49, %51, %cst_62 {dimension_numbers = #tpu.dot_dimension_numbers<[1], [0], [0], [1], [0, 0, 1, 1], [], []>} : vector<256x128xbf16>, vector<128x128xbf16>, vector<256x128xf32> -> vector<256x128xf32>
    %53 = arith.addf %46, %52 : vector<256x128xf32>
    %c1_63 = arith.constant 1 : index
    %c9_64 = arith.constant 9 : index
    %c0_65 = arith.constant 0 : index
    %54 = vector.load %arg7[%c1_63, %c9_64, %c0_65] : memref<18x32x128xf32, #tpu.memory_space<vmem>>, vector<16x16x128xf32>
    %55 = vector.shape_cast %54 : vector<16x16x128xf32> to vector<256x128xf32>
    %56 = arith.truncf %55 : vector<256x128xf32> to vector<256x128xbf16>
    %c5 = arith.constant 5 : index
    %c0_66 = arith.constant 0 : index
    %c0_67 = arith.constant 0 : index
    %57 = vector.load %arg2[%c5, %c0_66, %c0_67] : memref<9x128x128xbf16, #tpu.memory_space<vmem>>, vector<1x128x128xbf16>
    %58 = vector.shape_cast %57 : vector<1x128x128xbf16> to vector<128x128xbf16>
    %cst_68 = arith.constant dense<0.000000e+00> : vector<256x128xf32>
    %59 = tpu.matmul %56, %58, %cst_68 {dimension_numbers = #tpu.dot_dimension_numbers<[1], [0], [0], [1], [0, 0, 1, 1], [], []>} : vector<256x128xbf16>, vector<128x128xbf16>, vector<256x128xf32> -> vector<256x128xf32>
    %60 = arith.addf %53, %59 : vector<256x128xf32>
    %c2_69 = arith.constant 2 : index
    %c7_70 = arith.constant 7 : index
    %c0_71 = arith.constant 0 : index
    %61 = vector.load %arg7[%c2_69, %c7_70, %c0_71] : memref<18x32x128xf32, #tpu.memory_space<vmem>>, vector<16x16x128xf32>
    %62 = vector.shape_cast %61 : vector<16x16x128xf32> to vector<256x128xf32>
    %63 = arith.truncf %62 : vector<256x128xf32> to vector<256x128xbf16>
    %c6 = arith.constant 6 : index
    %c0_72 = arith.constant 0 : index
    %c0_73 = arith.constant 0 : index
    %64 = vector.load %arg2[%c6, %c0_72, %c0_73] : memref<9x128x128xbf16, #tpu.memory_space<vmem>>, vector<1x128x128xbf16>
    %65 = vector.shape_cast %64 : vector<1x128x128xbf16> to vector<128x128xbf16>
    %cst_74 = arith.constant dense<0.000000e+00> : vector<256x128xf32>
    %66 = tpu.matmul %63, %65, %cst_74 {dimension_numbers = #tpu.dot_dimension_numbers<[1], [0], [0], [1], [0, 0, 1, 1], [], []>} : vector<256x128xbf16>, vector<128x128xbf16>, vector<256x128xf32> -> vector<256x128xf32>
    %67 = arith.addf %60, %66 : vector<256x128xf32>
    %c2_75 = arith.constant 2 : index
    %c8_76 = arith.constant 8 : index
    %c0_77 = arith.constant 0 : index
    %68 = vector.load %arg7[%c2_75, %c8_76, %c0_77] : memref<18x32x128xf32, #tpu.memory_space<vmem>>, vector<16x16x128xf32>
    %69 = vector.shape_cast %68 : vector<16x16x128xf32> to vector<256x128xf32>
    %70 = arith.truncf %69 : vector<256x128xf32> to vector<256x128xbf16>
    %c7_78 = arith.constant 7 : index
    %c0_79 = arith.constant 0 : index
    %c0_80 = arith.constant 0 : index
    %71 = vector.load %arg2[%c7_78, %c0_79, %c0_80] : memref<9x128x128xbf16, #tpu.memory_space<vmem>>, vector<1x128x128xbf16>
    %72 = vector.shape_cast %71 : vector<1x128x128xbf16> to vector<128x128xbf16>
    %cst_81 = arith.constant dense<0.000000e+00> : vector<256x128xf32>
    %73 = tpu.matmul %70, %72, %cst_81 {dimension_numbers = #tpu.dot_dimension_numbers<[1], [0], [0], [1], [0, 0, 1, 1], [], []>} : vector<256x128xbf16>, vector<128x128xbf16>, vector<256x128xf32> -> vector<256x128xf32>
    %74 = arith.addf %67, %73 : vector<256x128xf32>
    %c2_82 = arith.constant 2 : index
    %c9_83 = arith.constant 9 : index
    %c0_84 = arith.constant 0 : index
    %75 = vector.load %arg7[%c2_82, %c9_83, %c0_84] : memref<18x32x128xf32, #tpu.memory_space<vmem>>, vector<16x16x128xf32>
    %76 = vector.shape_cast %75 : vector<16x16x128xf32> to vector<256x128xf32>
    %77 = arith.truncf %76 : vector<256x128xf32> to vector<256x128xbf16>
    %c8_85 = arith.constant 8 : index
    %c0_86 = arith.constant 0 : index
    %c0_87 = arith.constant 0 : index
    %78 = vector.load %arg2[%c8_85, %c0_86, %c0_87] : memref<9x128x128xbf16, #tpu.memory_space<vmem>>, vector<1x128x128xbf16>
    %79 = vector.shape_cast %78 : vector<1x128x128xbf16> to vector<128x128xbf16>
    %cst_88 = arith.constant dense<0.000000e+00> : vector<256x128xf32>
    %80 = tpu.matmul %77, %79, %cst_88 {dimension_numbers = #tpu.dot_dimension_numbers<[1], [0], [0], [1], [0, 0, 1, 1], [], []>} : vector<256x128xbf16>, vector<128x128xbf16>, vector<256x128xf32> -> vector<256x128xf32>
    %81 = arith.addf %74, %80 : vector<256x128xf32>
    %c0_89 = arith.constant 0 : index
    %c0_90 = arith.constant 0 : index
    %82 = vector.load %arg3[%c0_89, %c0_90] : memref<1x128xf32, #tpu.memory_space<vmem>>, vector<1x128xf32>
    %83 = vector.broadcast %82 : vector<1x128xf32> to vector<256x128xf32>
    %84 = arith.addf %81, %83 : vector<256x128xf32>
    %cst_91 = arith.constant 0.000000e+00 : f32
    %cst_92 = arith.constant 2.000000e+01 : f32
    %85 = vector.broadcast %cst_91 : f32 to vector<256x128xf32>
    %86 = arith.maximumf %85, %84 : vector<256x128xf32>
    %87 = vector.broadcast %cst_92 : f32 to vector<256x128xf32>
    %88 = arith.minimumf %87, %86 : vector<256x128xf32>
    %89 = vector.shape_cast %88 : vector<256x128xf32> to vector<16x16x128xf32>
    %c1_93 = arith.constant 1 : index
    %c8_94 = arith.constant 8 : index
    %c0_95 = arith.constant 0 : index
    %90 = vector.load %arg8[%c1_93, %c8_94, %c0_95] : memref<18x32x128xf32, #tpu.memory_space<vmem>>, vector<16x16x128xf32>
    tpu.vector_store %arg8[%c1_93, %c8_94, %c0_95], %89 {strides = array<i32>} : memref<18x32x128xf32, #tpu.memory_space<vmem>>, vector<16x16x128xf32>,
    %c0_96 = arith.constant 0 : index
    %c7_97 = arith.constant 7 : index
    %c0_98 = arith.constant 0 : index
    %91 = vector.load %arg8[%c0_96, %c7_97, %c0_98] : memref<18x32x128xf32, #tpu.memory_space<vmem>>, vector<16x16x128xf32>
    %92 = vector.shape_cast %91 : vector<16x16x128xf32> to vector<256x128xf32>
    %93 = arith.truncf %92 : vector<256x128xf32> to vector<256x128xbf16>
    %c0_99 = arith.constant 0 : index
    %c0_100 = arith.constant 0 : index
    %c0_101 = arith.constant 0 : index
    %94 = vector.load %arg4[%c0_99, %c0_100, %c0_101] : memref<9x128x128xbf16, #tpu.memory_space<vmem>>, vector<1x128x128xbf16>
    %95 = vector.shape_cast %94 : vector<1x128x128xbf16> to vector<128x128xbf16>
    %cst_102 = arith.constant dense<0.000000e+00> : vector<256x128xf32>
    %96 = tpu.matmul %93, %95, %cst_102 {dimension_numbers = #tpu.dot_dimension_numbers<[1], [0], [0], [1], [0, 0, 1, 1], [], []>} : vector<256x128xbf16>, vector<128x128xbf16>, vector<256x128xf32> -> vector<256x128xf32>
    %c0_103 = arith.constant 0 : index
    %c8_104 = arith.constant 8 : index
    %c0_105 = arith.constant 0 : index
    %97 = vector.load %arg8[%c0_103, %c8_104, %c0_105] : memref<18x32x128xf32, #tpu.memory_space<vmem>>, vector<16x16x128xf32>
    %98 = vector.shape_cast %97 : vector<16x16x128xf32> to vector<256x128xf32>
    %99 = arith.truncf %98 : vector<256x128xf32> to vector<256x128xbf16>
    %c1_106 = arith.constant 1 : index
    %c0_107 = arith.constant 0 : index
    %c0_108 = arith.constant 0 : index
    %100 = vector.load %arg4[%c1_106, %c0_107, %c0_108] : memref<9x128x128xbf16, #tpu.memory_space<vmem>>, vector<1x128x128xbf16>
    %101 = vector.shape_cast %100 : vector<1x128x128xbf16> to vector<128x128xbf16>
    %cst_109 = arith.constant dense<0.000000e+00> : vector<256x128xf32>
    %102 = tpu.matmul %99, %101, %cst_109 {dimension_numbers = #tpu.dot_dimension_numbers<[1], [0], [0], [1], [0, 0, 1, 1], [], []>} : vector<256x128xbf16>, vector<128x128xbf16>, vector<256x128xf32> -> vector<256x128xf32>
    %103 = arith.addf %96, %102 : vector<256x128xf32>
    %c0_110 = arith.constant 0 : index
    %c9_111 = arith.constant 9 : index
    %c0_112 = arith.constant 0 : index
    %104 = vector.load %arg8[%c0_110, %c9_111, %c0_112] : memref<18x32x128xf32, #tpu.memory_space<vmem>>, vector<16x16x128xf32>
    %105 = vector.shape_cast %104 : vector<16x16x128xf32> to vector<256x128xf32>
    %106 = arith.truncf %105 : vector<256x128xf32> to vector<256x128xbf16>
    %c2_113 = arith.constant 2 : index
    %c0_114 = arith.constant 0 : index
    %c0_115 = arith.constant 0 : index
    %107 = vector.load %arg4[%c2_113, %c0_114, %c0_115] : memref<9x128x128xbf16, #tpu.memory_space<vmem>>, vector<1x128x128xbf16>
    %108 = vector.shape_cast %107 : vector<1x128x128xbf16> to vector<128x128xbf16>
    %cst_116 = arith.constant dense<0.000000e+00> : vector<256x128xf32>
    %109 = tpu.matmul %106, %108, %cst_116 {dimension_numbers = #tpu.dot_dimension_numbers<[1], [0], [0], [1], [0, 0, 1, 1], [], []>} : vector<256x128xbf16>, vector<128x128xbf16>, vector<256x128xf32> -> vector<256x128xf32>
    %110 = arith.addf %103, %109 : vector<256x128xf32>
    %c1_117 = arith.constant 1 : index
    %c7_118 = arith.constant 7 : index
    %c0_119 = arith.constant 0 : index
    %111 = vector.load %arg8[%c1_117, %c7_118, %c0_119] : memref<18x32x128xf32, #tpu.memory_space<vmem>>, vector<16x16x128xf32>
    %112 = vector.shape_cast %111 : vector<16x16x128xf32> to vector<256x128xf32>
    %113 = arith.truncf %112 : vector<256x128xf32> to vector<256x128xbf16>
    %c3_120 = arith.constant 3 : index
    %c0_121 = arith.constant 0 : index
    %c0_122 = arith.constant 0 : index
    %114 = vector.load %arg4[%c3_120, %c0_121, %c0_122] : memref<9x128x128xbf16, #tpu.memory_space<vmem>>, vector<1x128x128xbf16>
    %115 = vector.shape_cast %114 : vector<1x128x128xbf16> to vector<128x128xbf16>
    %cst_123 = arith.constant dense<0.000000e+00> : vector<256x128xf32>
    %116 = tpu.matmul %113, %115, %cst_123 {dimension_numbers = #tpu.dot_dimension_numbers<[1], [0], [0], [1], [0, 0, 1, 1], [], []>} : vector<256x128xbf16>, vector<128x128xbf16>, vector<256x128xf32> -> vector<256x128xf32>
    %117 = arith.addf %110, %116 : vector<256x128xf32>
    %c1_124 = arith.constant 1 : index
    %c8_125 = arith.constant 8 : index
    %c0_126 = arith.constant 0 : index
    %118 = vector.load %arg8[%c1_124, %c8_125, %c0_126] : memref<18x32x128xf32, #tpu.memory_space<vmem>>, vector<16x16x128xf32>
    %119 = vector.shape_cast %118 : vector<16x16x128xf32> to vector<256x128xf32>
    %120 = arith.truncf %119 : vector<256x128xf32> to vector<256x128xbf16>
    %c4_127 = arith.constant 4 : index
    %c0_128 = arith.constant 0 : index
    %c0_129 = arith.constant 0 : index
    %121 = vector.load %arg4[%c4_127, %c0_128, %c0_129] : memref<9x128x128xbf16, #tpu.memory_space<vmem>>, vector<1x128x128xbf16>
    %122 = vector.shape_cast %121 : vector<1x128x128xbf16> to vector<128x128xbf16>
    %cst_130 = arith.constant dense<0.000000e+00> : vector<256x128xf32>
    %123 = tpu.matmul %120, %122, %cst_130 {dimension_numbers = #tpu.dot_dimension_numbers<[1], [0], [0], [1], [0, 0, 1, 1], [], []>} : vector<256x128xbf16>, vector<128x128xbf16>, vector<256x128xf32> -> vector<256x128xf32>
    %124 = arith.addf %117, %123 : vector<256x128xf32>
    %c1_131 = arith.constant 1 : index
    %c9_132 = arith.constant 9 : index
    %c0_133 = arith.constant 0 : index
    %125 = vector.load %arg8[%c1_131, %c9_132, %c0_133] : memref<18x32x128xf32, #tpu.memory_space<vmem>>, vector<16x16x128xf32>
    %126 = vector.shape_cast %125 : vector<16x16x128xf32> to vector<256x128xf32>
    %127 = arith.truncf %126 : vector<256x128xf32> to vector<256x128xbf16>
    %c5_134 = arith.constant 5 : index
    %c0_135 = arith.constant 0 : index
    %c0_136 = arith.constant 0 : index
    %128 = vector.load %arg4[%c5_134, %c0_135, %c0_136] : memref<9x128x128xbf16, #tpu.memory_space<vmem>>, vector<1x128x128xbf16>
    %129 = vector.shape_cast %128 : vector<1x128x128xbf16> to vector<128x128xbf16>
    %cst_137 = arith.constant dense<0.000000e+00> : vector<256x128xf32>
    %130 = tpu.matmul %127, %129, %cst_137 {dimension_numbers = #tpu.dot_dimension_numbers<[1], [0], [0], [1], [0, 0, 1, 1], [], []>} : vector<256x128xbf16>, vector<128x128xbf16>, vector<256x128xf32> -> vector<256x128xf32>
    %131 = arith.addf %124, %130 : vector<256x128xf32>
    %c2_138 = arith.constant 2 : index
    %c7_139 = arith.constant 7 : index
    %c0_140 = arith.constant 0 : index
    %132 = vector.load %arg8[%c2_138, %c7_139, %c0_140] : memref<18x32x128xf32, #tpu.memory_space<vmem>>, vector<16x16x128xf32>
    %133 = vector.shape_cast %132 : vector<16x16x128xf32> to vector<256x128xf32>
    %134 = arith.truncf %133 : vector<256x128xf32> to vector<256x128xbf16>
    %c6_141 = arith.constant 6 : index
    %c0_142 = arith.constant 0 : index
    %c0_143 = arith.constant 0 : index
    %135 = vector.load %arg4[%c6_141, %c0_142, %c0_143] : memref<9x128x128xbf16, #tpu.memory_space<vmem>>, vector<1x128x128xbf16>
    %136 = vector.shape_cast %135 : vector<1x128x128xbf16> to vector<128x128xbf16>
    %cst_144 = arith.constant dense<0.000000e+00> : vector<256x128xf32>
    %137 = tpu.matmul %134, %136, %cst_144 {dimension_numbers = #tpu.dot_dimension_numbers<[1], [0], [0], [1], [0, 0, 1, 1], [], []>} : vector<256x128xbf16>, vector<128x128xbf16>, vector<256x128xf32> -> vector<256x128xf32>
    %138 = arith.addf %131, %137 : vector<256x128xf32>
    %c2_145 = arith.constant 2 : index
    %c8_146 = arith.constant 8 : index
    %c0_147 = arith.constant 0 : index
    %139 = vector.load %arg8[%c2_145, %c8_146, %c0_147] : memref<18x32x128xf32, #tpu.memory_space<vmem>>, vector<16x16x128xf32>
    %140 = vector.shape_cast %139 : vector<16x16x128xf32> to vector<256x128xf32>
    %141 = arith.truncf %140 : vector<256x128xf32> to vector<256x128xbf16>
    %c7_148 = arith.constant 7 : index
    %c0_149 = arith.constant 0 : index
    %c0_150 = arith.constant 0 : index
    %142 = vector.load %arg4[%c7_148, %c0_149, %c0_150] : memref<9x128x128xbf16, #tpu.memory_space<vmem>>, vector<1x128x128xbf16>
    %143 = vector.shape_cast %142 : vector<1x128x128xbf16> to vector<128x128xbf16>
    %cst_151 = arith.constant dense<0.000000e+00> : vector<256x128xf32>
    %144 = tpu.matmul %141, %143, %cst_151 {dimension_numbers = #tpu.dot_dimension_numbers<[1], [0], [0], [1], [0, 0, 1, 1], [], []>} : vector<256x128xbf16>, vector<128x128xbf16>, vector<256x128xf32> -> vector<256x128xf32>
    %145 = arith.addf %138, %144 : vector<256x128xf32>
    %c2_152 = arith.constant 2 : index
    %c9_153 = arith.constant 9 : index
    %c0_154 = arith.constant 0 : index
    %146 = vector.load %arg8[%c2_152, %c9_153, %c0_154] : memref<18x32x128xf32, #tpu.memory_space<vmem>>, vector<16x16x128xf32>
    %147 = vector.shape_cast %146 : vector<16x16x128xf32> to vector<256x128xf32>
    %148 = arith.truncf %147 : vector<256x128xf32> to vector<256x128xbf16>
    %c8_155 = arith.constant 8 : index
    %c0_156 = arith.constant 0 : index
    %c0_157 = arith.constant 0 : index
    %149 = vector.load %arg4[%c8_155, %c0_156, %c0_157] : memref<9x128x128xbf16, #tpu.memory_space<vmem>>, vector<1x128x128xbf16>
    %150 = vector.shape_cast %149 : vector<1x128x128xbf16> to vector<128x128xbf16>
    %cst_158 = arith.constant dense<0.000000e+00> : vector<256x128xf32>
    %151 = tpu.matmul %148, %150, %cst_158 {dimension_numbers = #tpu.dot_dimension_numbers<[1], [0], [0], [1], [0, 0, 1, 1], [], []>} : vector<256x128xbf16>, vector<128x128xbf16>, vector<256x128xf32> -> vector<256x128xf32>
    %152 = arith.addf %145, %151 : vector<256x128xf32>
    %c0_159 = arith.constant 0 : index
    %c0_160 = arith.constant 0 : index
    %153 = vector.load %arg5[%c0_159, %c0_160] : memref<1x128xf32, #tpu.memory_space<vmem>>, vector<1x128xf32>
    %154 = vector.broadcast %153 : vector<1x128xf32> to vector<256x128xf32>
    %155 = arith.addf %152, %154 : vector<256x128xf32>
    %156 = vector.shape_cast %155 : vector<256x128xf32> to vector<16x16x128xf32>
    %157 = arith.extf %17 : vector<16x16x128xbf16> to vector<16x16x128xf32>
    %158 = arith.addf %156, %157 : vector<16x16x128xf32>
    %cst_161 = arith.constant 0.000000e+00 : f32
    %cst_162 = arith.constant 2.000000e+01 : f32
    %159 = vector.broadcast %cst_161 : f32 to vector<16x16x128xf32>
    %160 = arith.maximumf %159, %158 : vector<16x16x128xf32>
    %161 = vector.broadcast %cst_162 : f32 to vector<16x16x128xf32>
    %162 = arith.minimumf %161, %160 : vector<16x16x128xf32>
    %c0_163 = arith.constant 0 : index
    %c0_164 = arith.constant 0 : index
    %c0_165 = arith.constant 0 : index
    %c0_166 = arith.constant 0 : index
    %163 = vector.load %arg6[%c0_163, %c0_164, %c0_165, %c0_166] : memref<1x16x16x128xf32, #tpu.memory_space<vmem>>, vector<1x16x16x128xf32>
    %164 = vector.shape_cast %163 : vector<1x16x16x128xf32> to vector<16x16x128xf32>
    %165 = vector.shape_cast %162 : vector<16x16x128xf32> to vector<1x16x16x128xf32>
    tpu.vector_store %arg6[%c0_163, %c0_164, %c0_165, %c0_166], %165 {strides = array<i32>} : memref<1x16x16x128xf32, #tpu.memory_space<vmem>>, vector<1x16x16x128xf32>,
    return
  }
  func.func @transform_0(%arg0: i32) -> (i32, i32, i32, i32) {
    %c0_i32 = arith.constant 0 : i32
    %c0_i32_0 = arith.constant 0 : i32
    %c0_i32_1 = arith.constant 0 : i32
    %c0_i32_2 = arith.constant 0 : i32
    return %arg0, %c0_i32, %c0_i32_0, %c0_i32_1 : i32, i32, i32, i32
  }
  func.func @transform_1(%arg0: i32) -> (i32, i32, i32) {
    %c0_i32 = arith.constant 0 : i32
    %c0_i32_0 = arith.constant 0 : i32
    %c0_i32_1 = arith.constant 0 : i32
    %c0_i32_2 = arith.constant 0 : i32
    return %c0_i32, %c0_i32_0, %c0_i32_1 : i32, i32, i32
  }
  func.func @transform_2(%arg0: i32) -> (i32, i32) {
    %c0_i32 = arith.constant 0 : i32
    %c0_i32_0 = arith.constant 0 : i32
    %c0_i32_1 = arith.constant 0 : i32
    return %c0_i32, %c0_i32_0 : i32, i32
  }
  func.func @transform_3(%arg0: i32) -> (i32, i32, i32) {
    %c0_i32 = arith.constant 0 : i32
    %c0_i32_0 = arith.constant 0 : i32
    %c0_i32_1 = arith.constant 0 : i32
    %c0_i32_2 = arith.constant 0 : i32
    return %c0_i32, %c0_i32_0, %c0_i32_1 : i32, i32, i32
  }
  func.func @transform_4(%arg0: i32) -> (i32, i32) {
    %c0_i32 = arith.constant 0 : i32
    %c0_i32_0 = arith.constant 0 : i32
    %c0_i32_1 = arith.constant 0 : i32
    return %c0_i32, %c0_i32_0 : i32, i32
  }
  func.func @transform_5(%arg0: i32) -> (i32, i32, i32, i32) {
    %c0_i32 = arith.constant 0 : i32
    %c0_i32_0 = arith.constant 0 : i32
    %c0_i32_1 = arith.constant 0 : i32
    %c0_i32_2 = arith.constant 0 : i32
    return %arg0, %c0_i32, %c0_i32_0, %c0_i32_1 : i32, i32, i32, i32
  }
}

</mosaic_0001>

<llo_original>
// kernel: basic_block_forward.1
$region0: #{basic_block_forward.1}
  #allocation0 [shape = 'u32[]', space=smem, size = 0x4, offset = 0x4, fixed_abs, tag = 'smem constant byte address 0x4 - core index']
  #allocation1 [shape = 'u32[144,128]{1,0:T(1,128)}', space=vmem, size = 0x12000, scoped, tag = 'internal scratch']
  #allocation2 [shape = 'f32[18,32,128]{2,1,0:T(8,128)}', space=vmem, size = 0x48000, scoped, tag = 'scratch operand']
  #allocation3 [shape = 'f32[18,32,128]{2,1,0:T(8,128)}', space=vmem, size = 0x48000, scoped, tag = 'scratch operand']
  %s0 = inlined_call_operand.vmem [shape: bf16[2,16,16,128], index: 0, kind: input, shape index: {}]
  %s1 = inlined_call_operand.vmem [shape: bf16[9,128,128], index: 1, kind: input, shape index: {}]
  %s2 = inlined_call_operand.vmem [shape: f32[1,128], index: 2, kind: input, shape index: {}]
  %s3 = inlined_call_operand.vmem [shape: bf16[9,128,128], index: 3, kind: input, shape index: {}]
  %s4 = inlined_call_operand.vmem [shape: f32[1,128], index: 4, kind: input, shape index: {}]
  %s5 = inlined_call_operand.vmem [shape: f32[2,16,16,128], index: 5, kind: output, shape index: {}]
  %s6 = sld [smem:[#allocation0]]
  $region53: #{basic_block_forward.1} parent=0
    _
  %s8 = ssub.s32 1, %s6
  %s9 = scalar_select 0, %s8, %s6
  loop: start=0, step=1, limit=4
  $region2: #{basic_block_forward.1} parent=0 // loop_pre_header
    _
  $region3: #{basic_block_forward.1} parent=0 // loop_header
    %s11 = sphi 0, %s15
    %p12 = scmp.ge.s32.totalorder %s11, 4
    %s21 = sphi 0, %s23
    %s24 = sphi 0, %s21
    %s25 = sphi 0, %s24
    %s41 = sphi 0, %s25
    %s45 = sphi 0, %s45
    %s47 = sphi 0, %s45
    %s48 = sphi 0, %s47
    %s62 = sphi 0, %s48
    %s66 = sphi 0, %s66
    %s68 = sphi 0, %s66
    %s69 = sphi 0, %s68
    %s83 = sphi 0, %s69
    %s87 = sphi 0, %s87
    %s89 = sphi 0, %s87
    %s90 = sphi 0, %s89
    %s104 = sphi 0, %s90
    %s108 = sphi 0, %s108
    %s110 = sphi 0, %s108
    %s111 = sphi 0, %s110
    %s125 = sphi 0, %s111
    %s131 = sphi 0, %s133
    %s134 = sphi 0, %s131
    %s135 = sphi 0, %s134
    %s151 = sphi 0, %s135
  $region4: #{basic_block_forward.1} parent=0 // loop_header_branch
    %14 = sbr.rel (%p12) target = $region8
  $region5: #{basic_block_forward.1} parent=0 // loop_body
    %s16 = ssub.s32 %s11, 1
    %s17 = ssub.s32 %s11, 2
    %s18 = sadd.s32 %s11, 1
    %s19 = ssub.s32 %s11, %s18
    %p20 = scmp.eq.s32.totalorder %s19, 0
    %s22 = sadd.s32 %s21, 1
    %s23 = scalar_select %p20, %s21, %s22
    %p26 = pneg %p20
    %p27 = scmp.eq.s32.totalorder %s11, 1
    %p28 = por %p26, %p27
    %p29 = scmp.ne.s32.totalorder %s21, %s24
    %p30 = scmp.eq.s32.totalorder %s11, 0
    %p31 = por %p29, %p30
    %p32 = scmp.ne.s32.totalorder %s21, %s24
    %p33 = scmp.eq.s32.totalorder %s16, 1
    %p34 = por %p32, %p33
    %p35 = scmp.ne.s32.totalorder %s24, %s25
    %p36 = scmp.eq.s32.totalorder %s16, 0
    %p37 = por %p35, %p36
    %p38 = scmp.ne.s32.totalorder %s24, %s25
    %p39 = scmp.eq.s32.totalorder %s17, 1
    %p40 = por %p38, %p39
    %p42 = scmp.ne.s32.totalorder %s25, %s41
    %p43 = scmp.eq.s32.totalorder %s17, 0
    %p44 = por %p42, %p43
    %s46 = sadd.s32 %s45, 1
    %p49 = scmp.eq.s32.totalorder %s11, 1
    %p50 = scmp.ne.s32.totalorder %s45, %s47
    %p51 = scmp.eq.s32.totalorder %s11, 0
    %p52 = por %p50, %p51
    %p53 = scmp.ne.s32.totalorder %s45, %s47
    %p54 = scmp.eq.s32.totalorder %s16, 1
    %p55 = por %p53, %p54
    %p56 = scmp.ne.s32.totalorder %s47, %s48
    %p57 = scmp.eq.s32.totalorder %s16, 0
    %p58 = por %p56, %p57
    %p59 = scmp.ne.s32.totalorder %s47, %s48
    %p60 = scmp.eq.s32.totalorder %s17, 1
    %p61 = por %p59, %p60
    %p63 = scmp.ne.s32.totalorder %s48, %s62
    %p64 = scmp.eq.s32.totalorder %s17, 0
    %p65 = por %p63, %p64
    %s67 = sadd.s32 %s66, 1
    %p70 = scmp.eq.s32.totalorder %s11, 1
    %p71 = scmp.ne.s32.totalorder %s66, %s68
    %p72 = scmp.eq.s32.totalorder %s11, 0
    %p73 = por %p71, %p72
    %p74 = scmp.ne.s32.totalorder %s66, %s68
    %p75 = scmp.eq.s32.totalorder %s16, 1
    %p76 = por %p74, %p75
    %p77 = scmp.ne.s32.totalorder %s68, %s69
    %p78 = scmp.eq.s32.totalorder %s16, 0
    %p79 = por %p77, %p78
    %p80 = scmp.ne.s32.totalorder %s68, %s69
    %p81 = scmp.eq.s32.totalorder %s17, 1
    %p82 = por %p80, %p81
    %p84 = scmp.ne.s32.totalorder %s69, %s83
    %p85 = scmp.eq.s32.totalorder %s17, 0
    %p86 = por %p84, %p85
    %s88 = sadd.s32 %s87, 1
    %p91 = scmp.eq.s32.totalorder %s11, 1
    %p92 = scmp.ne.s32.totalorder %s87, %s89
    %p93 = scmp.eq.s32.totalorder %s11, 0
    %p94 = por %p92, %p93
    %p95 = scmp.ne.s32.totalorder %s87, %s89
    %p96 = scmp.eq.s32.totalorder %s16, 1
    %p97 = por %p95, %p96
    %p98 = scmp.ne.s32.totalorder %s89, %s90
    %p99 = scmp.eq.s32.totalorder %s16, 0
    %p100 = por %p98, %p99
    %p101 = scmp.ne.s32.totalorder %s89, %s90
    %p102 = scmp.eq.s32.totalorder %s17, 1
    %p103 = por %p101, %p102
    %p105 = scmp.ne.s32.totalorder %s90, %s104
    %p106 = scmp.eq.s32.totalorder %s17, 0
    %p107 = por %p105, %p106
    %s109 = sadd.s32 %s108, 1
    %p112 = scmp.eq.s32.totalorder %s11, 1
    %p113 = scmp.ne.s32.totalorder %s108, %s110
    %p114 = scmp.eq.s32.totalorder %s11, 0
    %p115 = por %p113, %p114
    %p116 = scmp.ne.s32.totalorder %s108, %s110
    %p117 = scmp.eq.s32.totalorder %s16, 1
    %p118 = por %p116, %p117
    %p119 = scmp.ne.s32.totalorder %s110, %s111
    %p120 = scmp.eq.s32.totalorder %s16, 0
    %p121 = por %p119, %p120
    %p122 = scmp.ne.s32.totalorder %s110, %s111
    %p123 = scmp.eq.s32.totalorder %s17, 1
    %p124 = por %p122, %p123
    %p126 = scmp.ne.s32.totalorder %s111, %s125
    %p127 = scmp.eq.s32.totalorder %s17, 0
    %p128 = por %p126, %p127
    %s129 = ssub.s32 %s11, %s18
    %p130 = scmp.eq.s32.totalorder %s129, 0
    %s132 = sadd.s32 %s131, 1
    %s133 = scalar_select %p130, %s131, %s132
    %p136 = pneg %p130
    %p137 = scmp.eq.s32.totalorder %s11, 1
    %p138 = por %p136, %p137
    %p139 = scmp.ne.s32.totalorder %s131, %s134
    %p140 = scmp.eq.s32.totalorder %s11, 0
    %p141 = por %p139, %p140
    %p142 = scmp.ne.s32.totalorder %s131, %s134
    %p143 = scmp.eq.s32.totalorder %s16, 1
    %p144 = por %p142, %p143
    %p145 = scmp.ne.s32.totalorder %s134, %s135
    %p146 = scmp.eq.s32.totalorder %s16, 0
    %p147 = por %p145, %p146
    %p148 = scmp.ne.s32.totalorder %s134, %s135
    %p149 = scmp.eq.s32.totalorder %s17, 1
    %p150 = por %p148, %p149
    %p152 = scmp.ne.s32.totalorder %s135, %s151
    %p153 = scmp.eq.s32.totalorder %s17, 0
    %p154 = por %p152, %p153
    %p155 = scmp.le.s32.totalorder 1, %s11
    %p156 = scmp.lt.s32.totalorder %s11, 3
    %p157 = pnand %p155, %p156
    %p158 = pneg %p157
    // Predicated region
    $region9: #{basic_block_forward.1} parent=5 // pred_check
      _
    $region10: #{basic_block_forward.1} parent=5 // pred_check_branch
      %160 = sbr.rel (%p157) target = $region12
    $region11: #{basic_block_forward.1} parent=5 // pred_region
      %s161 = ssub.s32 %s11, 1
      // Predicated region
      $region13: #{basic_block_forward.1} parent=11 // pred_check
        %p162 = pneg %p58
      $region14: #{basic_block_forward.1} parent=11 // pred_check_branch
        %164 = sbr.rel (%p162) target = $region16
      $region15: #{basic_block_forward.1} parent=11 // pred_region
        _
      $region16: #{basic_block_forward.1} parent=11 // pred_fallthru
        _
      // Predicated region
      $region17: #{basic_block_forward.1} parent=11 // pred_check
        %p165 = pneg %p79
      $region18: #{basic_block_forward.1} parent=11 // pred_check_branch
        %167 = sbr.rel (%p165) target = $region20
      $region19: #{basic_block_forward.1} parent=11 // pred_region
        _
      $region20: #{basic_block_forward.1} parent=11 // pred_fallthru
        _
      // Predicated region
      $region21: #{basic_block_forward.1} parent=11 // pred_check
        %p168 = pneg %p100
      $region22: #{basic_block_forward.1} parent=11 // pred_check_branch
        %170 = sbr.rel (%p168) target = $region24
      $region23: #{basic_block_forward.1} parent=11 // pred_region
        _
      $region24: #{basic_block_forward.1} parent=11 // pred_fallthru
        _
      // Predicated region
      $region25: #{basic_block_forward.1} parent=11 // pred_check
        %p171 = pneg %p121
      $region26: #{basic_block_forward.1} parent=11 // pred_check_branch
        %173 = sbr.rel (%p171) target = $region28
      $region27: #{basic_block_forward.1} parent=11 // pred_region
        _
      $region28: #{basic_block_forward.1} parent=11 // pred_fallthru
        _
    $region12: #{basic_block_forward.1} parent=5 // pred_fallthru
      _
    %p174 = scmp.lt.s32.totalorder %s11, 2
    // Predicated region
    $region29: #{basic_block_forward.1} parent=5 // pred_check
      %p175 = pneg %p174
    $region30: #{basic_block_forward.1} parent=5 // pred_check_branch
      %177 = sbr.rel (%p175) target = $region32
    $region31: #{basic_block_forward.1} parent=5 // pred_region
      // Predicated region
      $region33: #{basic_block_forward.1} parent=31 // pred_check
        %p178 = pneg %p31
      $region34: #{basic_block_forward.1} parent=31 // pred_check_branch
        %180 = sbr.rel (%p178) target = $region36
      $region35: #{basic_block_forward.1} parent=31 // pred_region
        %p181 = scmp.lt.s32.totalorder %s11, 1
        %s182 = scalar_select %p181, %s11, 1
        %s183 = smul.addr %s182, 32
        %s184 = smul.addr %s183, 4
        %s185 = scalar_lea.vmem %s0, %s184
      $region36: #{basic_block_forward.1} parent=31 // pred_fallthru
        _
    $region32: #{basic_block_forward.1} parent=5 // pred_fallthru
      _
    %p186 = scmp.le.s32.totalorder 1, %s11
    %p187 = scmp.lt.s32.totalorder %s11, 3
    %p188 = pnand %p186, %p187
    %p189 = pneg %p188
    // Predicated region
    $region37: #{basic_block_forward.1} parent=5 // pred_check
      _
    $region38: #{basic_block_forward.1} parent=5 // pred_check_branch
      %191 = sbr.rel (%p188) target = $region40
    $region39: #{basic_block_forward.1} parent=5 // pred_region
      %s192 = ssub.s32 %s11, 1
      %p193 = scmp.lt.s32.totalorder %s16, 1
      %s194 = scalar_select %p193, %s16, 1
      %s195 = smul.addr %s194, 32
      %s196 = smul.addr %s195, 4
      %s197 = scalar_lea.vmem %s0, %s196
      %p198 = pneg %p37
      %p199 = pneg %p34
      %p200 = pneg %p58
      %p201 = pneg %p55
      %p202 = pneg %p79
      %p203 = pneg %p76
      %p204 = pneg %p100
      %p205 = pneg %p97
      %p206 = pneg %p121
      %p207 = pneg %p118
      %p208 = pneg %p147
      %p209 = pneg %p144
      %p210 = scmp.lt.s32.totalorder %s16, 1
      %s211 = scalar_select %p210, %s16, 1
      %s212 = smul.addr %s211, 32
      %s213 = smul.addr %s212, 8
      %s214 = scalar_lea.vmem %s5, %s213
      %p215 = scmp.lt.s32.totalorder %s16, 1
      %s216 = scalar_select %p215, %s16, 1
      %s217 = smul.addr %s216, 32
      %s218 = smul.addr %s217, 4
      %s219 = scalar_lea.vmem %s0, %s218
      %p220 = scmp.lt.s32.totalorder %s16, 1
      %s221 = scalar_select %p220, %s16, 1
      %s222 = smul.addr %s221, 32
      %s223 = smul.addr %s222, 8
      %s224 = scalar_lea.vmem %s5, %s223
      %226 = vst [vmem:[#allocation2] sm:$0xff] 0.0
      %227 = vst [vmem:[#allocation2 + $0x8] sm:$0xff] 0.0
      %228 = vst [vmem:[#allocation2 + $0x10] sm:$0xff] 0.0
      %229 = vst [vmem:[#allocation2 + $0x18] sm:$0xff] 0.0
      %s230 = scalar_lea.vmem [#allocation2], 544
      %231 = vst [vmem:[%s230] sm:$0xff] 0.0
      %232 = vst [vmem:[%s230 + $0x8] sm:$0xff] 0.0
      %233 = vst [vmem:[%s230 + $0x10] sm:$0xff] 0.0
      %234 = vst [vmem:[%s230 + $0x18] sm:$0xff] 0.0
      %s235 = scalar_lea.vmem [#allocation2], 32
      %236 = vst [vmem:[%s235] sm:$0xff] 0.0
      %237 = vst [vmem:[%s235 + $0x20] sm:$0xff] 0.0
      %238 = vst [vmem:[%s235 + $0x40] sm:$0xff] 0.0
      %239 = vst [vmem:[%s235 + $0x60] sm:$0xff] 0.0
      %240 = vst [vmem:[%s235 + $0x80] sm:$0xff] 0.0
      %241 = vst [vmem:[%s235 + $0xa0] sm:$0xff] 0.0
      %242 = vst [vmem:[%s235 + $0xc0] sm:$0xff] 0.0
      %243 = vst [vmem:[%s235 + $0xe0] sm:$0xff] 0.0
      %244 = vst [vmem:[%s235 + $0x100] sm:$0xff] 0.0
      %245 = vst [vmem:[%s235 + $0x120] sm:$0xff] 0.0
      %246 = vst [vmem:[%s235 + $0x140] sm:$0xff] 0.0
      %247 = vst [vmem:[%s235 + $0x160] sm:$0xff] 0.0
      %248 = vst [vmem:[%s235 + $0x180] sm:$0xff] 0.0
      %249 = vst [vmem:[%s235 + $0x1a0] sm:$0xff] 0.0
      %250 = vst [vmem:[%s235 + $0x1c0] sm:$0xff] 0.0
      %251 = vst [vmem:[%s235 + $0x1e0] sm:$0xff] 0.0
      %252 = vst [vmem:[%s235 + $0x18] sm:$0xff] 0.0
      %253 = vst [vmem:[%s235 + $0x38] sm:$0xff] 0.0
      %254 = vst [vmem:[%s235 + $0x58] sm:$0xff] 0.0
      %255 = vst [vmem:[%s235 + $0x78] sm:$0xff] 0.0
      %256 = vst [vmem:[%s235 + $0x98] sm:$0xff] 0.0
      %257 = vst [vmem:[%s235 + $0xb8] sm:$0xff] 0.0
      %258 = vst [vmem:[%s235 + $0xd8] sm:$0xff] 0.0
      %259 = vst [vmem:[%s235 + $0xf8] sm:$0xff] 0.0
      %260 = vst [vmem:[%s235 + $0x118] sm:$0xff] 0.0
      %261 = vst [vmem:[%s235 + $0x138] sm:$0xff] 0.0
      %262 = vst [vmem:[%s235 + $0x158] sm:$0xff] 0.0
      %263 = vst [vmem:[%s235 + $0x178] sm:$0xff] 0.0
      %264 = vst [vmem:[%s235 + $0x198] sm:$0xff] 0.0
      %265 = vst [vmem:[%s235 + $0x1b8] sm:$0xff] 0.0
      %266 = vst [vmem:[%s235 + $0x1d8] sm:$0xff] 0.0
      %267 = vst [vmem:[%s235 + $0x1f8] sm:$0xff] 0.0
      %268 = vst [vmem:[#allocation3] sm:$0xff] 0.0
      %269 = vst [vmem:[#allocation3 + $0x8] sm:$0xff] 0.0
      %270 = vst [vmem:[#allocation3 + $0x10] sm:$0xff] 0.0
      %271 = vst [vmem:[#allocation3 + $0x18] sm:$0xff] 0.0
      %s272 = scalar_lea.vmem [#allocation3], 544
      %273 = vst [vmem:[%s272] sm:$0xff] 0.0
      %274 = vst [vmem:[%s272 + $0x8] sm:$0xff] 0.0
      %275 = vst [vmem:[%s272 + $0x10] sm:$0xff] 0.0
      %276 = vst [vmem:[%s272 + $0x18] sm:$0xff] 0.0
      %s277 = scalar_lea.vmem [#allocation3], 32
      %278 = vst [vmem:[%s277] sm:$0xff] 0.0
      %279 = vst [vmem:[%s277 + $0x20] sm:$0xff] 0.0
      %280 = vst [vmem:[%s277 + $0x40] sm:$0xff] 0.0
      %281 = vst [vmem:[%s277 + $0x60] sm:$0xff] 0.0
      %282 = vst [vmem:[%s277 + $0x80] sm:$0xff] 0.0
      %283 = vst [vmem:[%s277 + $0xa0] sm:$0xff] 0.0
      %284 = vst [vmem:[%s277 + $0xc0] sm:$0xff] 0.0
      %285 = vst [vmem:[%s277 + $0xe0] sm:$0xff] 0.0
      %286 = vst [vmem:[%s277 + $0x100] sm:$0xff] 0.0
      %287 = vst [vmem:[%s277 + $0x120] sm:$0xff] 0.0
      %288 = vst [vmem:[%s277 + $0x140] sm:$0xff] 0.0
      %289 = vst [vmem:[%s277 + $0x160] sm:$0xff] 0.0
      %290 = vst [vmem:[%s277 + $0x180] sm:$0xff] 0.0
      %291 = vst [vmem:[%s277 + $0x1a0] sm:$0xff] 0.0
      %292 = vst [vmem:[%s277 + $0x1c0] sm:$0xff] 0.0
      %293 = vst [vmem:[%s277 + $0x1e0] sm:$0xff] 0.0
      %294 = vst [vmem:[%s277 + $0x18] sm:$0xff] 0.0
      %295 = vst [vmem:[%s277 + $0x38] sm:$0xff] 0.0
      %296 = vst [vmem:[%s277 + $0x58] sm:$0xff] 0.0
      %297 = vst [vmem:[%s277 + $0x78] sm:$0xff] 0.0
      %298 = vst [vmem:[%s277 + $0x98] sm:$0xff] 0.0
      %299 = vst [vmem:[%s277 + $0xb8] sm:$0xff] 0.0
      %300 = vst [vmem:[%s277 + $0xd8] sm:$0xff] 0.0
      %301 = vst [vmem:[%s277 + $0xf8] sm:$0xff] 0.0
      %302 = vst [vmem:[%s277 + $0x118] sm:$0xff] 0.0
      %303 = vst [vmem:[%s277 + $0x138] sm:$0xff] 0.0
      %304 = vst [vmem:[%s277 + $0x158] sm:$0xff] 0.0
      %305 = vst [vmem:[%s277 + $0x178] sm:$0xff] 0.0
      %306 = vst [vmem:[%s277 + $0x198] sm:$0xff] 0.0
      %307 = vst [vmem:[%s277 + $0x1b8] sm:$0xff] 0.0
      %308 = vst [vmem:[%s277 + $0x1d8] sm:$0xff] 0.0
      %309 = vst [vmem:[%s277 + $0x1f8] sm:$0xff] 0.0
      %v310 = vld [vmem:[%s219] sm:$0xf]
      %v311 = vld [vmem:[%s219 + $0x4] sm:$0xf]
      %v312 = vld [vmem:[%s219 + $0x8] sm:$0xf]
      %v313 = vld [vmem:[%s219 + $0xc] sm:$0xf]
      %v314 = vld [vmem:[%s219 + $0x10] sm:$0xf]
      %v315 = vld [vmem:[%s219 + $0x14] sm:$0xf]
      %v316 = vld [vmem:[%s219 + $0x18] sm:$0xf]
      %v317 = vld [vmem:[%s219 + $0x1c] sm:$0xf]
      %v318 = vld [vmem:[%s219 + $0x20] sm:$0xf]
      %v319 = vld [vmem:[%s219 + $0x24] sm:$0xf]
      %v320 = vld [vmem:[%s219 + $0x28] sm:$0xf]
      %v321 = vld [vmem:[%s219 + $0x2c] sm:$0xf]
      %v322 = vld [vmem:[%s219 + $0x30] sm:$0xf]
      %v323 = vld [vmem:[%s219 + $0x34] sm:$0xf]
      %v324 = vld [vmem:[%s219 + $0x38] sm:$0xf]
      %v325 = vld [vmem:[%s219 + $0x3c] sm:$0xf]
      %v326 = vld [vmem:[%s219 + $0x40] sm:$0xf]
      %v327 = vld [vmem:[%s219 + $0x44] sm:$0xf]
      %v328 = vld [vmem:[%s219 + $0x48] sm:$0xf]
      %v329 = vld [vmem:[%s219 + $0x4c] sm:$0xf]
      %v330 = vld [vmem:[%s219 + $0x50] sm:$0xf]
      %v331 = vld [vmem:[%s219 + $0x54] sm:$0xf]
      %v332 = vld [vmem:[%s219 + $0x58] sm:$0xf]
      %v333 = vld [vmem:[%s219 + $0x5c] sm:$0xf]
      %v334 = vld [vmem:[%s219 + $0x60] sm:$0xf]
      %v335 = vld [vmem:[%s219 + $0x64] sm:$0xf]
      %v336 = vld [vmem:[%s219 + $0x68] sm:$0xf]
      %v337 = vld [vmem:[%s219 + $0x6c] sm:$0xf]
      %v338 = vld [vmem:[%s219 + $0x70] sm:$0xf]
      %v339 = vld [vmem:[%s219 + $0x74] sm:$0xf]
      %v340 = vld [vmem:[%s219 + $0x78] sm:$0xf]
      %v341 = vld [vmem:[%s219 + $0x7c] sm:$0xf]
      %v342 = vunpack.c.l.bf16 %v310
      %v343 = vunpack.c.l.bf16 %v311
      %v344 = vunpack.c.l.bf16 %v312
      %v345 = vunpack.c.l.bf16 %v313
      %v346 = vunpack.c.l.bf16 %v314
      %v347 = vunpack.c.l.bf16 %v315
      %v348 = vunpack.c.l.bf16 %v316
      %v349 = vunpack.c.l.bf16 %v317
      %v350 = vunpack.c.l.bf16 %v318
      %v351 = vunpack.c.l.bf16 %v319
      %v352 = vunpack.c.l.bf16 %v320
      %v353 = vunpack.c.l.bf16 %v321
      %v354 = vunpack.c.l.bf16 %v322
      %v355 = vunpack.c.l.bf16 %v323
      %v356 = vunpack.c.l.bf16 %v324
      %v357 = vunpack.c.l.bf16 %v325
      %v358 = vunpack.c.l.bf16 %v326
      %v359 = vunpack.c.l.bf16 %v327
      %v360 = vunpack.c.l.bf16 %v328
      %v361 = vunpack.c.l.bf16 %v329
      %v362 = vunpack.c.l.bf16 %v330
      %v363 = vunpack.c.l.bf16 %v331
      %v364 = vunpack.c.l.bf16 %v332
      %v365 = vunpack.c.l.bf16 %v333
      %v366 = vunpack.c.l.bf16 %v334
      %v367 = vunpack.c.l.bf16 %v335
      %v368 = vunpack.c.l.bf16 %v336
      %v369 = vunpack.c.l.bf16 %v337
      %v370 = vunpack.c.l.bf16 %v338
      %v371 = vunpack.c.l.bf16 %v339
      %v372 = vunpack.c.l.bf16 %v340
      %v373 = vunpack.c.l.bf16 %v341
      %374 = vst [vmem:[%s235 + $0x8] sm:$0xff] %v342
      %375 = vst [vmem:[%s235 + $0x10] sm:$0xff] %v343
      %376 = vst [vmem:[%s235 + $0x28] sm:$0xff] %v344
      %377 = vst [vmem:[%s235 + $0x30] sm:$0xff] %v345
      %378 = vst [vmem:[%s235 + $0x48] sm:$0xff] %v346
      %379 = vst [vmem:[%s235 + $0x50] sm:$0xff] %v347
      %380 = vst [vmem:[%s235 + $0x68] sm:$0xff] %v348
      %381 = vst [vmem:[%s235 + $0x70] sm:$0xff] %v349
      %382 = vst [vmem:[%s235 + $0x88] sm:$0xff] %v350
      %383 = vst [vmem:[%s235 + $0x90] sm:$0xff] %v351
      %384 = vst [vmem:[%s235 + $0xa8] sm:$0xff] %v352
      %385 = vst [vmem:[%s235 + $0xb0] sm:$0xff] %v353
      %386 = vst [vmem:[%s235 + $0xc8] sm:$0xff] %v354
      %387 = vst [vmem:[%s235 + $0xd0] sm:$0xff] %v355
      %388 = vst [vmem:[%s235 + $0xe8] sm:$0xff] %v356
      %389 = vst [vmem:[%s235 + $0xf0] sm:$0xff] %v357
      %390 = vst [vmem:[%s235 + $0x108] sm:$0xff] %v358
      %391 = vst [vmem:[%s235 + $0x110] sm:$0xff] %v359
      %392 = vst [vmem:[%s235 + $0x128] sm:$0xff] %v360
      %393 = vst [vmem:[%s235 + $0x130] sm:$0xff] %v361
      %394 = vst [vmem:[%s235 + $0x148] sm:$0xff] %v362
      %395 = vst [vmem:[%s235 + $0x150] sm:$0xff] %v363
      %396 = vst [vmem:[%s235 + $0x168] sm:$0xff] %v364
      %397 = vst [vmem:[%s235 + $0x170] sm:$0xff] %v365
      %398 = vst [vmem:[%s235 + $0x188] sm:$0xff] %v366
      %399 = vst [vmem:[%s235 + $0x190] sm:$0xff] %v367
      %400 = vst [vmem:[%s235 + $0x1a8] sm:$0xff] %v368
      %401 = vst [vmem:[%s235 + $0x1b0] sm:$0xff] %v369
      %402 = vst [vmem:[%s235 + $0x1c8] sm:$0xff] %v370
      %403 = vst [vmem:[%s235 + $0x1d0] sm:$0xff] %v371
      %404 = vst [vmem:[%s235 + $0x1e8] sm:$0xff] %v372
      %405 = vst [vmem:[%s235 + $0x1f0] sm:$0xff] %v373
      %v406 = vld [vmem:[#allocation2 + $0x7] sm:$0xff]
      %v407 = vld [vmem:[#allocation2 + $0xf] sm:$0xff]
      %v408 = vld [vmem:[#allocation2 + $0x27] sm:$0xff]
      %v409 = vld [vmem:[#allocation2 + $0x2f] sm:$0xff]
      %v410 = vld [vmem:[#allocation2 + $0x47] sm:$0xff]
      %v411 = vld [vmem:[#allocation2 + $0x4f] sm:$0xff]
      %v412 = vld [vmem:[#allocation2 + $0x67] sm:$0xff]
      %v413 = vld [vmem:[#allocation2 + $0x6f] sm:$0xff]
      %v414 = vld [vmem:[#allocation2 + $0x87] sm:$0xff]
      %v415 = vld [vmem:[#allocation2 + $0x8f] sm:$0xff]
      %v416 = vld [vmem:[#allocation2 + $0xa7] sm:$0xff]
      %v417 = vld [vmem:[#allocation2 + $0xaf] sm:$0xff]
      %v418 = vld [vmem:[#allocation2 + $0xc7] sm:$0xff]
      %v419 = vld [vmem:[#allocation2 + $0xcf] sm:$0xff]
      %v420 = vld [vmem:[#allocation2 + $0xe7] sm:$0xff]
      %v421 = vld [vmem:[#allocation2 + $0xef] sm:$0xff]
      %v422 = vld [vmem:[#allocation2 + $0x107] sm:$0xff]
      %v423 = vld [vmem:[#allocation2 + $0x10f] sm:$0xff]
      %v424 = vld [vmem:[#allocation2 + $0x127] sm:$0xff]
      %v425 = vld [vmem:[#allocation2 + $0x12f] sm:$0xff]
      %v426 = vld [vmem:[#allocation2 + $0x147] sm:$0xff]
      %v427 = vld [vmem:[#allocation2 + $0x14f] sm:$0xff]
      %v428 = vld [vmem:[#allocation2 + $0x167] sm:$0xff]
      %v429 = vld [vmem:[#allocation2 + $0x16f] sm:$0xff]
      %v430 = vld [vmem:[#allocation2 + $0x187] sm:$0xff]
      %v431 = vld [vmem:[#allocation2 + $0x18f] sm:$0xff]
      %v432 = vld [vmem:[#allocation2 + $0x1a7] sm:$0xff]
      %v433 = vld [vmem:[#allocation2 + $0x1af] sm:$0xff]
      %v434 = vld [vmem:[#allocation2 + $0x1c7] sm:$0xff]
      %v435 = vld [vmem:[#allocation2 + $0x1cf] sm:$0xff]
      %v436 = vld [vmem:[#allocation2 + $0x1e7] sm:$0xff]
      %v437 = vld [vmem:[#allocation2 + $0x1ef] sm:$0xff]
      %v438 = vpack.c.bf16 %v407, %v406
      %v439 = vpack.c.bf16 %v409, %v408
      %v440 = vpack.c.bf16 %v411, %v410
      %v441 = vpack.c.bf16 %v413, %v412
      %v442 = vpack.c.bf16 %v415, %v414
      %v443 = vpack.c.bf16 %v417, %v416
      %v444 = vpack.c.bf16 %v419, %v418
      %v445 = vpack.c.bf16 %v421, %v420
      %v446 = vpack.c.bf16 %v423, %v422
      %v447 = vpack.c.bf16 %v425, %v424
      %v448 = vpack.c.bf16 %v427, %v426
      %v449 = vpack.c.bf16 %v429, %v428
      %v450 = vpack.c.bf16 %v431, %v430
      %v451 = vpack.c.bf16 %v433, %v432
      %v452 = vpack.c.bf16 %v435, %v434
      %v453 = vpack.c.bf16 %v437, %v436
      %v454 = vld [vmem:[%s1] sm:$0xf]
      %v455 = vld [vmem:[%s1 + $0x4] sm:$0xf]
      %v456 = vld [vmem:[%s1 + $0x8] sm:$0xf]
      %v457 = vld [vmem:[%s1 + $0xc] sm:$0xf]
      %v458 = vld [vmem:[%s1 + $0x10] sm:$0xf]
      %v459 = vld [vmem:[%s1 + $0x14] sm:$0xf]
      %v460 = vld [vmem:[%s1 + $0x18] sm:$0xf]
      %v461 = vld [vmem:[%s1 + $0x1c] sm:$0xf]
      %v462 = vld [vmem:[%s1 + $0x20] sm:$0xf]
      %v463 = vld [vmem:[%s1 + $0x24] sm:$0xf]
      %v464 = vld [vmem:[%s1 + $0x28] sm:$0xf]
      %v465 = vld [vmem:[%s1 + $0x2c] sm:$0xf]
      %v466 = vld [vmem:[%s1 + $0x30] sm:$0xf]
      %v467 = vld [vmem:[%s1 + $0x34] sm:$0xf]
      %v468 = vld [vmem:[%s1 + $0x38] sm:$0xf]
      %v469 = vld [vmem:[%s1 + $0x3c] sm:$0xf]
      %v470 = vld [vmem:[#allocation2 + $0x8] sm:$0xff]
      %v471 = vld [vmem:[#allocation2 + $0x10] sm:$0xff]
      %v472 = vld [vmem:[#allocation2 + $0x28] sm:$0xff]
      %v473 = vld [vmem:[#allocation2 + $0x30] sm:$0xff]
      %v474 = vld [vmem:[#allocation2 + $0x48] sm:$0xff]
      %v475 = vld [vmem:[#allocation2 + $0x50] sm:$0xff]
      %v476 = vld [vmem:[#allocation2 + $0x68] sm:$0xff]
      %v477 = vld [vmem:[#allocation2 + $0x70] sm:$0xff]
      %v478 = vld [vmem:[#allocation2 + $0x88] sm:$0xff]
      %v479 = vld [vmem:[#allocation2 + $0x90] sm:$0xff]
      %v480 = vld [vmem:[#allocation2 + $0xa8] sm:$0xff]
      %v481 = vld [vmem:[#allocation2 + $0xb0] sm:$0xff]
      %v482 = vld [vmem:[#allocation2 + $0xc8] sm:$0xff]
      %v483 = vld [vmem:[#allocation2 + $0xd0] sm:$0xff]
      %v484 = vld [vmem:[#allocation2 + $0xe8] sm:$0xff]
      %v485 = vld [vmem:[#allocation2 + $0xf0] sm:$0xff]
      %v486 = vld [vmem:[#allocation2 + $0x108] sm:$0xff]
      %v487 = vld [vmem:[#allocation2 + $0x110] sm:$0xff]
      %v488 = vld [vmem:[#allocation2 + $0x128] sm:$0xff]
      %v489 = vld [vmem:[#allocation2 + $0x130] sm:$0xff]
      %v490 = vld [vmem:[#allocation2 + $0x148] sm:$0xff]
      %v491 = vld [vmem:[#allocation2 + $0x150] sm:$0xff]
      %v492 = vld [vmem:[#allocation2 + $0x168] sm:$0xff]
      %v493 = vld [vmem:[#allocation2 + $0x170] sm:$0xff]
      %v494 = vld [vmem:[#allocation2 + $0x188] sm:$0xff]
      %v495 = vld [vmem:[#allocation2 + $0x190] sm:$0xff]
      %v496 = vld [vmem:[#allocation2 + $0x1a8] sm:$0xff]
      %v497 = vld [vmem:[#allocation2 + $0x1b0] sm:$0xff]
      %v498 = vld [vmem:[#allocation2 + $0x1c8] sm:$0xff]
      %v499 = vld [vmem:[#allocation2 + $0x1d0] sm:$0xff]
      %v500 = vld [vmem:[#allocation2 + $0x1e8] sm:$0xff]
      %v501 = vld [vmem:[#allocation2 + $0x1f0] sm:$0xff]
      %v502 = vpack.c.bf16 %v471, %v470
      %v503 = vpack.c.bf16 %v473, %v472
      %v504 = vpack.c.bf16 %v475, %v474
      %v505 = vpack.c.bf16 %v477, %v476
      %v506 = vpack.c.bf16 %v479, %v478
      %v507 = vpack.c.bf16 %v481, %v480
      %v508 = vpack.c.bf16 %v483, %v482
      %v509 = vpack.c.bf16 %v485, %v484
      %v510 = vpack.c.bf16 %v487, %v486
      %v511 = vpack.c.bf16 %v489, %v488
      %v512 = vpack.c.bf16 %v491, %v490
      %v513 = vpack.c.bf16 %v493, %v492
      %v514 = vpack.c.bf16 %v495, %v494
      %v515 = vpack.c.bf16 %v497, %v496
      %v516 = vpack.c.bf16 %v499, %v498
      %v517 = vpack.c.bf16 %v501, %v500
      %s518 = scalar_lea.vmem %s1, 64
      %v519 = vld [vmem:[%s518] sm:$0xf]
      %v520 = vld [vmem:[%s518 + $0x4] sm:$0xf]
      %v521 = vld [vmem:[%s518 + $0x8] sm:$0xf]
      %v522 = vld [vmem:[%s518 + $0xc] sm:$0xf]
      %v523 = vld [vmem:[%s518 + $0x10] sm:$0xf]
      %v524 = vld [vmem:[%s518 + $0x14] sm:$0xf]
      %v525 = vld [vmem:[%s518 + $0x18] sm:$0xf]
      %v526 = vld [vmem:[%s518 + $0x1c] sm:$0xf]
      %v527 = vld [vmem:[%s518 + $0x20] sm:$0xf]
      %v528 = vld [vmem:[%s518 + $0x24] sm:$0xf]
      %v529 = vld [vmem:[%s518 + $0x28] sm:$0xf]
      %v530 = vld [vmem:[%s518 + $0x2c] sm:$0xf]
      %v531 = vld [vmem:[%s518 + $0x30] sm:$0xf]
      %v532 = vld [vmem:[%s518 + $0x34] sm:$0xf]
      %v533 = vld [vmem:[%s518 + $0x38] sm:$0xf]
      %v534 = vld [vmem:[%s518 + $0x3c] sm:$0xf]
      %v551 = vunpack.c.l.b16 %v519
      %v552 = vunpack.c.l.b16 %v520
      %v553 = vunpack.c.l.b16 %v521
      %v554 = vunpack.c.l.b16 %v522
      %v555 = vunpack.c.l.b16 %v523
      %v556 = vunpack.c.l.b16 %v524
      %v557 = vunpack.c.l.b16 %v525
      %v558 = vunpack.c.l.b16 %v526
      %v559 = vunpack.c.l.b16 %v527
      %v560 = vunpack.c.l.b16 %v528
      %v561 = vunpack.c.l.b16 %v529
      %v562 = vunpack.c.l.b16 %v530
      %v563 = vunpack.c.l.b16 %v531
      %v564 = vunpack.c.l.b16 %v532
      %v565 = vunpack.c.l.b16 %v533
      %v566 = vunpack.c.l.b16 %v534
      %v567 = vpack.c.b16 %v552, %v551
      %v568 = vpack.c.b16 %v554, %v553
      %v569 = vpack.c.b16 %v556, %v555
      %v570 = vpack.c.b16 %v558, %v557
      %v571 = vpack.c.b16 %v560, %v559
      %v572 = vpack.c.b16 %v562, %v561
      %v573 = vpack.c.b16 %v564, %v563
      %v574 = vpack.c.b16 %v566, %v565
      %583 = vmatprep.subr.bf16.mxu0 0
      %584 = vmatpush1.bf16.msra.mxu0 %v567
      %585 = vmatprep.subr.bf16.mxu0 0
      %586 = vmatpush1.bf16.msra.mxu0 %v568
      %587 = vmatprep.subr.bf16.mxu0 0
      %588 = vmatpush1.bf16.msra.mxu0 %v569
      %589 = vmatprep.subr.bf16.mxu0 0
      %590 = vmatpush1.bf16.msra.mxu0 %v570
      %591 = vmatprep.subr.bf16.mxu0 0
      %592 = vmatpush1.bf16.msra.mxu0 %v571
      %593 = vmatprep.subr.bf16.mxu0 0
      %594 = vmatpush1.bf16.msra.mxu0 %v572
      %595 = vmatprep.subr.bf16.mxu0 0
      %596 = vmatpush1.bf16.msra.mxu0 %v573
      %597 = vmatprep.subr.bf16.mxu0 0
      %598 = vmatpush1.bf16.msra.mxu0 %v574
      %599 = vmatprep.subr.bf16.mxu0 0
      %600 = vmatpush1.bf16.msra.mxu0 0
      %601 = vmatprep.subr.bf16.mxu0 0
      %602 = vmatpush1.bf16.msra.mxu0 0
      %603 = vmatprep.subr.bf16.mxu0 0
      %604 = vmatpush1.bf16.msra.mxu0 0
      %605 = vmatprep.subr.bf16.mxu0 0
      %606 = vmatpush1.bf16.msra.mxu0 0
      %607 = vmatprep.subr.bf16.mxu0 0
      %608 = vmatpush1.bf16.msra.mxu0 0
      %609 = vmatprep.subr.bf16.mxu0 0
      %610 = vmatpush1.bf16.msra.mxu0 0
      %611 = vmatprep.subr.bf16.mxu0 0
      %612 = vmatpush1.bf16.msra.mxu0 0
      %613 = vmatprep.subr.bf16.mxu0 0
      %614 = vmatpush1.bf16.msra.mxu0 0
      %615 = vmatprep.mubr.bf16.mxu0 0
      %616 = vmatmul.mubr.bf16.gmra.mrb[0].mxu0 %v502
      %v617 = vpop.f32.mrb[0].mxu0
      %v618 = vadd.f32 0.0, %v617
      %v619 = vpop.f32.mrb[0].mxu0
      %v620 = vpop.f32.mrb[0].mxu0
      %v621 = vadd.f32 0.0, %v620
      %v622 = vpop.f32.mrb[0].mxu0
      %623 = vmatprep.mubr.bf16.mxu0 0
      %624 = vmatmul.mubr.bf16.gmra.mrb[0].mxu0 %v503
      %v625 = vpop.f32.mrb[0].mxu0
      %v626 = vadd.f32 0.0, %v625
      %v627 = vpop.f32.mrb[0].mxu0
      %v628 = vpop.f32.mrb[0].mxu0
      %v629 = vadd.f32 0.0, %v628
      %v630 = vpop.f32.mrb[0].mxu0
      %631 = vmatprep.mubr.bf16.mxu0 0
      %632 = vmatmul.mubr.bf16.gmra.mrb[0].mxu0 %v504
      %v633 = vpop.f32.mrb[0].mxu0
      %v634 = vadd.f32 0.0, %v633
      %v635 = vpop.f32.mrb[0].mxu0
      %v636 = vpop.f32.mrb[0].mxu0
      %v637 = vadd.f32 0.0, %v636
      %v638 = vpop.f32.mrb[0].mxu0
      %639 = vmatprep.mubr.bf16.mxu0 0
      %640 = vmatmul.mubr.bf16.gmra.mrb[0].mxu0 %v505
      %v641 = vpop.f32.mrb[0].mxu0
      %v642 = vadd.f32 0.0, %v641
      %v643 = vpop.f32.mrb[0].mxu0
      %v644 = vpop.f32.mrb[0].mxu0
      %v645 = vadd.f32 0.0, %v644
      %v646 = vpop.f32.mrb[0].mxu0
      %647 = vmatprep.mubr.bf16.mxu0 0
      %648 = vmatmul.mubr.bf16.gmra.mrb[0].mxu0 %v506
      %v649 = vpop.f32.mrb[0].mxu0
      %v650 = vadd.f32 0.0, %v649
      %v651 = vpop.f32.mrb[0].mxu0
      %v652 = vpop.f32.mrb[0].mxu0
      %v653 = vadd.f32 0.0, %v652
      %v654 = vpop.f32.mrb[0].mxu0
      %655 = vmatprep.mubr.bf16.mxu0 0
      %656 = vmatmul.mubr.bf16.gmra.mrb[0].mxu0 %v507
      %v657 = vpop.f32.mrb[0].mxu0
      %v658 = vadd.f32 0.0, %v657
      %v659 = vpop.f32.mrb[0].mxu0
      %v660 = vpop.f32.mrb[0].mxu0
      %v661 = vadd.f32 0.0, %v660
      %v662 = vpop.f32.mrb[0].mxu0
      %663 = vmatprep.mubr.bf16.mxu0 0
      %664 = vmatmul.mubr.bf16.gmra.mrb[0].mxu0 %v508
      %v665 = vpop.f32.mrb[0].mxu0
      %v666 = vadd.f32 0.0, %v665
      %v667 = vpop.f32.mrb[0].mxu0
      %v668 = vpop.f32.mrb[0].mxu0
      %v669 = vadd.f32 0.0, %v668
      %v670 = vpop.f32.mrb[0].mxu0
      %671 = vmatprep.mubr.bf16.mxu0 0
      %672 = vmatmul.mubr.bf16.gmra.mrb[0].mxu0 %v509
      %v673 = vpop.f32.mrb[0].mxu0
      %v674 = vadd.f32 0.0, %v673
      %v675 = vpop.f32.mrb[0].mxu0
      %v676 = vpop.f32.mrb[0].mxu0
      %v677 = vadd.f32 0.0, %v676
      %v678 = vpop.f32.mrb[0].mxu0
      %679 = vmatprep.mubr.bf16.mxu0 0
      %680 = vmatmul.mubr.bf16.gmra.mrb[0].mxu0 %v510
      %v681 = vpop.f32.mrb[0].mxu0
      %v682 = vadd.f32 0.0, %v681
      %v683 = vpop.f32.mrb[0].mxu0
      %v684 = vpop.f32.mrb[0].mxu0
      %v685 = vadd.f32 0.0, %v684
      %v686 = vpop.f32.mrb[0].mxu0
      %687 = vmatprep.mubr.bf16.mxu0 0
      %688 = vmatmul.mubr.bf16.gmra.mrb[0].mxu0 %v511
      %v689 = vpop.f32.mrb[0].mxu0
      %v690 = vadd.f32 0.0, %v689
      %v691 = vpop.f32.mrb[0].mxu0
      %v692 = vpop.f32.mrb[0].mxu0
      %v693 = vadd.f32 0.0, %v692
      %v694 = vpop.f32.mrb[0].mxu0
      %695 = vmatprep.mubr.bf16.mxu0 0
      %696 = vmatmul.mubr.bf16.gmra.mrb[0].mxu0 %v512
      %v697 = vpop.f32.mrb[0].mxu0
      %v698 = vadd.f32 0.0, %v697
      %v699 = vpop.f32.mrb[0].mxu0
      %v700 = vpop.f32.mrb[0].mxu0
      %v701 = vadd.f32 0.0, %v700
      %v702 = vpop.f32.mrb[0].mxu0
      %703 = vmatprep.mubr.bf16.mxu0 0
      %704 = vmatmul.mubr.bf16.gmra.mrb[0].mxu0 %v513
      %v705 = vpop.f32.mrb[0].mxu0
      %v706 = vadd.f32 0.0, %v705
      %v707 = vpop.f32.mrb[0].mxu0
      %v708 = vpop.f32.mrb[0].mxu0
      %v709 = vadd.f32 0.0, %v708
      %v710 = vpop.f32.mrb[0].mxu0
      %711 = vmatprep.mubr.bf16.mxu0 0
      %712 = vmatmul.mubr.bf16.gmra.mrb[0].mxu0 %v514
      %v713 = vpop.f32.mrb[0].mxu0
      %v714 = vadd.f32 0.0, %v713
      %v715 = vpop.f32.mrb[0].mxu0
      %v716 = vpop.f32.mrb[0].mxu0
      %v717 = vadd.f32 0.0, %v716
      %v718 = vpop.f32.mrb[0].mxu0
      %719 = vmatprep.mubr.bf16.mxu0 0
      %720 = vmatmul.mubr.bf16.gmra.mrb[0].mxu0 %v515
      %v721 = vpop.f32.mrb[0].mxu0
      %v722 = vadd.f32 0.0, %v721
      %v723 = vpop.f32.mrb[0].mxu0
      %v724 = vpop.f32.mrb[0].mxu0
      %v725 = vadd.f32 0.0, %v724
      %v726 = vpop.f32.mrb[0].mxu0
      %727 = vmatprep.mubr.bf16.mxu0 0
      %728 = vmatmul.mubr.bf16.gmra.mrb[0].mxu0 %v516
      %v729 = vpop.f32.mrb[0].mxu0
      %v730 = vadd.f32 0.0, %v729
      %v731 = vpop.f32.mrb[0].mxu0
      %v732 = vpop.f32.mrb[0].mxu0
      %v733 = vadd.f32 0.0, %v732
      %v734 = vpop.f32.mrb[0].mxu0
      %735 = vmatprep.mubr.bf16.mxu0 0
      %736 = vmatmul.mubr.bf16.gmra.mrb[0].mxu0 %v517
      %v737 = vpop.f32.mrb[0].mxu0
      %v738 = vadd.f32 0.0, %v737
      %v739 = vpop.f32.mrb[0].mxu0
      %v740 = vpop.f32.mrb[0].mxu0
      %v741 = vadd.f32 0.0, %v740
      %v742 = vpop.f32.mrb[0].mxu0
      %743 = vdwg.mxu0
      %v760 = vunpack.c.l.b16 %v454
      %v761 = vunpack.c.l.b16 %v455
      %v762 = vunpack.c.l.b16 %v456
      %v763 = vunpack.c.l.b16 %v457
      %v764 = vunpack.c.l.b16 %v458
      %v765 = vunpack.c.l.b16 %v459
      %v766 = vunpack.c.l.b16 %v460
      %v767 = vunpack.c.l.b16 %v461
      %v768 = vunpack.c.l.b16 %v462
      %v769 = vunpack.c.l.b16 %v463
      %v770 = vunpack.c.l.b16 %v464
      %v771 = vunpack.c.l.b16 %v465
      %v772 = vunpack.c.l.b16 %v466
      %v773 = vunpack.c.l.b16 %v467
      %v774 = vunpack.c.l.b16 %v468
      %v775 = vunpack.c.l.b16 %v469
      %v776 = vpack.c.b16 %v761, %v760
      %v777 = vpack.c.b16 %v763, %v762
      %v778 = vpack.c.b16 %v765, %v764
      %v779 = vpack.c.b16 %v767, %v766
      %v780 = vpack.c.b16 %v769, %v768
      %v781 = vpack.c.b16 %v771, %v770
      %v782 = vpack.c.b16 %v773, %v772
      %v783 = vpack.c.b16 %v775, %v774
      %792 = vmatprep.subr.bf16.mxu0 0
      %793 = vmatpush1.bf16.msra.mxu0 %v776
      %794 = vmatprep.subr.bf16.mxu0 0
      %795 = vmatpush1.bf16.msra.mxu0 %v777
      %796 = vmatprep.subr.bf16.mxu0 0
      %797 = vmatpush1.bf16.msra.mxu0 %v778
      %798 = vmatprep.subr.bf16.mxu0 0
      %799 = vmatpush1.bf16.msra.mxu0 %v779
      %800 = vmatprep.subr.bf16.mxu0 0
      %801 = vmatpush1.bf16.msra.mxu0 %v780
      %802 = vmatprep.subr.bf16.mxu0 0
      %803 = vmatpush1.bf16.msra.mxu0 %v781
      %804 = vmatprep.subr.bf16.mxu0 0
      %805 = vmatpush1.bf16.msra.mxu0 %v782
      %806 = vmatprep.subr.bf16.mxu0 0
      %807 = vmatpush1.bf16.msra.mxu0 %v783
      %808 = vmatprep.subr.bf16.mxu0 0
      %809 = vmatpush1.bf16.msra.mxu0 0
      %810 = vmatprep.subr.bf16.mxu0 0
      %811 = vmatpush1.bf16.msra.mxu0 0
      %812 = vmatprep.subr.bf16.mxu0 0
      %813 = vmatpush1.bf16.msra.mxu0 0
      %814 = vmatprep.subr.bf16.mxu0 0
      %815 = vmatpush1.bf16.msra.mxu0 0
      %816 = vmatprep.subr.bf16.mxu0 0
      %817 = vmatpush1.bf16.msra.mxu0 0
      %818 = vmatprep.subr.bf16.mxu0 0
      %819 = vmatpush1.bf16.msra.mxu0 0
      %820 = vmatprep.subr.bf16.mxu0 0
      %821 = vmatpush1.bf16.msra.mxu0 0
      %822 = vmatprep.subr.bf16.mxu0 0
      %823 = vmatpush1.bf16.msra.mxu0 0
      %824 = vmatprep.mubr.bf16.mxu0 0
      %825 = vmatmul.mubr.bf16.gmra.mrb[0].mxu0 %v438
      %v826 = vpop.f32.mrb[0].mxu0
      %v827 = vadd.f32 %v618, %v826
      %v828 = vpop.f32.mrb[0].mxu0
      %v829 = vpop.f32.mrb[0].mxu0
      %v830 = vadd.f32 %v621, %v829
      %v831 = vpop.f32.mrb[0].mxu0
      %832 = vmatprep.mubr.bf16.mxu0 0
      %833 = vmatmul.mubr.bf16.gmra.mrb[0].mxu0 %v439
      %v834 = vpop.f32.mrb[0].mxu0
      %v835 = vadd.f32 %v626, %v834
      %v836 = vpop.f32.mrb[0].mxu0
      %v837 = vpop.f32.mrb[0].mxu0
      %v838 = vadd.f32 %v629, %v837
      %v839 = vpop.f32.mrb[0].mxu0
      %840 = vmatprep.mubr.bf16.mxu0 0
      %841 = vmatmul.mubr.bf16.gmra.mrb[0].mxu0 %v440
      %v842 = vpop.f32.mrb[0].mxu0
      %v843 = vadd.f32 %v634, %v842
      %v844 = vpop.f32.mrb[0].mxu0
      %v845 = vpop.f32.mrb[0].mxu0
      %v846 = vadd.f32 %v637, %v845
      %v847 = vpop.f32.mrb[0].mxu0
      %848 = vmatprep.mubr.bf16.mxu0 0
      %849 = vmatmul.mubr.bf16.gmra.mrb[0].mxu0 %v441
      %v850 = vpop.f32.mrb[0].mxu0
      %v851 = vadd.f32 %v642, %v850
      %v852 = vpop.f32.mrb[0].mxu0
      %v853 = vpop.f32.mrb[0].mxu0
      %v854 = vadd.f32 %v645, %v853
      %v855 = vpop.f32.mrb[0].mxu0
      %856 = vmatprep.mubr.bf16.mxu0 0
      %857 = vmatmul.mubr.bf16.gmra.mrb[0].mxu0 %v442
      %v858 = vpop.f32.mrb[0].mxu0
      %v859 = vadd.f32 %v650, %v858
      %v860 = vpop.f32.mrb[0].mxu0
      %v861 = vpop.f32.mrb[0].mxu0
      %v862 = vadd.f32 %v653, %v861
      %v863 = vpop.f32.mrb[0].mxu0
      %864 = vmatprep.mubr.bf16.mxu0 0
      %865 = vmatmul.mubr.bf16.gmra.mrb[0].mxu0 %v443
      %v866 = vpop.f32.mrb[0].mxu0
      %v867 = vadd.f32 %v658, %v866
      %v868 = vpop.f32.mrb[0].mxu0
      %v869 = vpop.f32.mrb[0].mxu0
      %v870 = vadd.f32 %v661, %v869
      %v871 = vpop.f32.mrb[0].mxu0
      %872 = vmatprep.mubr.bf16.mxu0 0
      %873 = vmatmul.mubr.bf16.gmra.mrb[0].mxu0 %v444
      %v874 = vpop.f32.mrb[0].mxu0
      %v875 = vadd.f32 %v666, %v874
      %v876 = vpop.f32.mrb[0].mxu0
      %v877 = vpop.f32.mrb[0].mxu0
      %v878 = vadd.f32 %v669, %v877
      %v879 = vpop.f32.mrb[0].mxu0
      %880 = vmatprep.mubr.bf16.mxu0 0
      %881 = vmatmul.mubr.bf16.gmra.mrb[0].mxu0 %v445
      %v882 = vpop.f32.mrb[0].mxu0
      %v883 = vadd.f32 %v674, %v882
      %v884 = vpop.f32.mrb[0].mxu0
      %v885 = vpop.f32.mrb[0].mxu0
      %v886 = vadd.f32 %v677, %v885
      %v887 = vpop.f32.mrb[0].mxu0
      %888 = vmatprep.mubr.bf16.mxu0 0
      %889 = vmatmul.mubr.bf16.gmra.mrb[0].mxu0 %v446
      %v890 = vpop.f32.mrb[0].mxu0
      %v891 = vadd.f32 %v682, %v890
      %v892 = vpop.f32.mrb[0].mxu0
      %v893 = vpop.f32.mrb[0].mxu0
      %v894 = vadd.f32 %v685, %v893
      %v895 = vpop.f32.mrb[0].mxu0
      %896 = vmatprep.mubr.bf16.mxu0 0
      %897 = vmatmul.mubr.bf16.gmra.mrb[0].mxu0 %v447
      %v898 = vpop.f32.mrb[0].mxu0
      %v899 = vadd.f32 %v690, %v898
      %v900 = vpop.f32.mrb[0].mxu0
      %v901 = vpop.f32.mrb[0].mxu0
      %v902 = vadd.f32 %v693, %v901
      %v903 = vpop.f32.mrb[0].mxu0
      %904 = vmatprep.mubr.bf16.mxu0 0
      %905 = vmatmul.mubr.bf16.gmra.mrb[0].mxu0 %v448
      %v906 = vpop.f32.mrb[0].mxu0
      %v907 = vadd.f32 %v698, %v906
      %v908 = vpop.f32.mrb[0].mxu0
      %v909 = vpop.f32.mrb[0].mxu0
      %v910 = vadd.f32 %v701, %v909
      %v911 = vpop.f32.mrb[0].mxu0
      %912 = vmatprep.mubr.bf16.mxu0 0
      %913 = vmatmul.mubr.bf16.gmra.mrb[0].mxu0 %v449
      %v914 = vpop.f32.mrb[0].mxu0
      %v915 = vadd.f32 %v706, %v914
      %v916 = vpop.f32.mrb[0].mxu0
      %v917 = vpop.f32.mrb[0].mxu0
      %v918 = vadd.f32 %v709, %v917
      %v919 = vpop.f32.mrb[0].mxu0
      %920 = vmatprep.mubr.bf16.mxu0 0
      %921 = vmatmul.mubr.bf16.gmra.mrb[0].mxu0 %v450
      %v922 = vpop.f32.mrb[0].mxu0
      %v923 = vadd.f32 %v714, %v922
      %v924 = vpop.f32.mrb[0].mxu0
      %v925 = vpop.f32.mrb[0].mxu0
      %v926 = vadd.f32 %v717, %v925
      %v927 = vpop.f32.mrb[0].mxu0
      %928 = vmatprep.mubr.bf16.mxu0 0
      %929 = vmatmul.mubr.bf16.gmra.mrb[0].mxu0 %v451
      %v930 = vpop.f32.mrb[0].mxu0
      %v931 = vadd.f32 %v722, %v930
      %v932 = vpop.f32.mrb[0].mxu0
      %v933 = vpop.f32.mrb[0].mxu0
      %v934 = vadd.f32 %v725, %v933
      %v935 = vpop.f32.mrb[0].mxu0
      %936 = vmatprep.mubr.bf16.mxu0 0
      %937 = vmatmul.mubr.bf16.gmra.mrb[0].mxu0 %v452
      %v938 = vpop.f32.mrb[0].mxu0
      %v939 = vadd.f32 %v730, %v938
      %v940 = vpop.f32.mrb[0].mxu0
      %v941 = vpop.f32.mrb[0].mxu0
      %v942 = vadd.f32 %v733, %v941
      %v943 = vpop.f32.mrb[0].mxu0
      %944 = vmatprep.mubr.bf16.mxu0 0
      %945 = vmatmul.mubr.bf16.gmra.mrb[0].mxu0 %v453
      %v946 = vpop.f32.mrb[0].mxu0
      %v947 = vadd.f32 %v738, %v946
      %v948 = vpop.f32.mrb[0].mxu0
      %v949 = vpop.f32.mrb[0].mxu0
      %v950 = vadd.f32 %v741, %v949
      %v951 = vpop.f32.mrb[0].mxu0
      %952 = vdwg.mxu0
      %v953 = vld [vmem:[#allocation2 + $0x9] sm:$0xff]
      %v954 = vld [vmem:[#allocation2 + $0x11] sm:$0xff]
      %v955 = vld [vmem:[#allocation2 + $0x29] sm:$0xff]
      %v956 = vld [vmem:[#allocation2 + $0x31] sm:$0xff]
      %v957 = vld [vmem:[#allocation2 + $0x49] sm:$0xff]
      %v958 = vld [vmem:[#allocation2 + $0x51] sm:$0xff]
      %v959 = vld [vmem:[#allocation2 + $0x69] sm:$0xff]
      %v960 = vld [vmem:[#allocation2 + $0x71] sm:$0xff]
      %v961 = vld [vmem:[#allocation2 + $0x89] sm:$0xff]
      %v962 = vld [vmem:[#allocation2 + $0x91] sm:$0xff]
      %v963 = vld [vmem:[#allocation2 + $0xa9] sm:$0xff]
      %v964 = vld [vmem:[#allocation2 + $0xb1] sm:$0xff]
      %v965 = vld [vmem:[#allocation2 + $0xc9] sm:$0xff]
      %v966 = vld [vmem:[#allocation2 + $0xd1] sm:$0xff]
      %v967 = vld [vmem:[#allocation2 + $0xe9] sm:$0xff]
      %v968 = vld [vmem:[#allocation2 + $0xf1] sm:$0xff]
      %v969 = vld [vmem:[#allocation2 + $0x109] sm:$0xff]
      %v970 = vld [vmem:[#allocation2 + $0x111] sm:$0xff]
      %v971 = vld [vmem:[#allocation2 + $0x129] sm:$0xff]
      %v972 = vld [vmem:[#allocation2 + $0x131] sm:$0xff]
      %v973 = vld [vmem:[#allocation2 + $0x149] sm:$0xff]
      %v974 = vld [vmem:[#allocation2 + $0x151] sm:$0xff]
      %v975 = vld [vmem:[#allocation2 + $0x169] sm:$0xff]
      %v976 = vld [vmem:[#allocation2 + $0x171] sm:$0xff]
      %v977 = vld [vmem:[#allocation2 + $0x189] sm:$0xff]
      %v978 = vld [vmem:[#allocation2 + $0x191] sm:$0xff]
      %v979 = vld [vmem:[#allocation2 + $0x1a9] sm:$0xff]
      %v980 = vld [vmem:[#allocation2 + $0x1b1] sm:$0xff]
      %v981 = vld [vmem:[#allocation2 + $0x1c9] sm:$0xff]
      %v982 = vld [vmem:[#allocation2 + $0x1d1] sm:$0xff]
      %v983 = vld [vmem:[#allocation2 + $0x1e9] sm:$0xff]
      %v984 = vld [vmem:[#allocation2 + $0x1f1] sm:$0xff]
      %v985 = vpack.c.bf16 %v954, %v953
      %v986 = vpack.c.bf16 %v956, %v955
      %v987 = vpack.c.bf16 %v958, %v957
      %v988 = vpack.c.bf16 %v960, %v959
      %v989 = vpack.c.bf16 %v962, %v961
      %v990 = vpack.c.bf16 %v964, %v963
      %v991 = vpack.c.bf16 %v966, %v965
      %v992 = vpack.c.bf16 %v968, %v967
      %v993 = vpack.c.bf16 %v970, %v969
      %v994 = vpack.c.bf16 %v972, %v971
      %v995 = vpack.c.bf16 %v974, %v973
      %v996 = vpack.c.bf16 %v976, %v975
      %v997 = vpack.c.bf16 %v978, %v977
      %v998 = vpack.c.bf16 %v980, %v979
      %v999 = vpack.c.bf16 %v982, %v981
      %v1000 = vpack.c.bf16 %v984, %v983
      %s1001 = scalar_lea.vmem %s1, 128
      %v1002 = vld [vmem:[%s1001] sm:$0xf]
      %v1003 = vld [vmem:[%s1001 + $0x4] sm:$0xf]
      %v1004 = vld [vmem:[%s1001 + $0x8] sm:$0xf]
      %v1005 = vld [vmem:[%s1001 + $0xc] sm:$0xf]
      %v1006 = vld [vmem:[%s1001 + $0x10] sm:$0xf]
      %v1007 = vld [vmem:[%s1001 + $0x14] sm:$0xf]
      %v1008 = vld [vmem:[%s1001 + $0x18] sm:$0xf]
      %v1009 = vld [vmem:[%s1001 + $0x1c] sm:$0xf]
      %v1010 = vld [vmem:[%s1001 + $0x20] sm:$0xf]
      %v1011 = vld [vmem:[%s1001 + $0x24] sm:$0xf]
      %v1012 = vld [vmem:[%s1001 + $0x28] sm:$0xf]
      %v1013 = vld [vmem:[%s1001 + $0x2c] sm:$0xf]
      %v1014 = vld [vmem:[%s1001 + $0x30] sm:$0xf]
      %v1015 = vld [vmem:[%s1001 + $0x34] sm:$0xf]
      %v1016 = vld [vmem:[%s1001 + $0x38] sm:$0xf]
      %v1017 = vld [vmem:[%s1001 + $0x3c] sm:$0xf]
      %v1034 = vunpack.c.l.b16 %v1002
      %v1035 = vunpack.c.l.b16 %v1003
      %v1036 = vunpack.c.l.b16 %v1004
      %v1037 = vunpack.c.l.b16 %v1005
      %v1038 = vunpack.c.l.b16 %v1006
      %v1039 = vunpack.c.l.b16 %v1007
      %v1040 = vunpack.c.l.b16 %v1008
      %v1041 = vunpack.c.l.b16 %v1009
      %v1042 = vunpack.c.l.b16 %v1010
      %v1043 = vunpack.c.l.b16 %v1011
      %v1044 = vunpack.c.l.b16 %v1012
      %v1045 = vunpack.c.l.b16 %v1013
      %v1046 = vunpack.c.l.b16 %v1014
      %v1047 = vunpack.c.l.b16 %v1015
      %v1048 = vunpack.c.l.b16 %v1016
      %v1049 = vunpack.c.l.b16 %v1017
      %v1050 = vpack.c.b16 %v1035, %v1034
      %v1051 = vpack.c.b16 %v1037, %v1036
      %v1052 = vpack.c.b16 %v1039, %v1038
      %v1053 = vpack.c.b16 %v1041, %v1040
      %v1054 = vpack.c.b16 %v1043, %v1042
      %v1055 = vpack.c.b16 %v1045, %v1044
      %v1056 = vpack.c.b16 %v1047, %v1046
      %v1057 = vpack.c.b16 %v1049, %v1048
      %1066 = vmatprep.subr.bf16.mxu0 0
      %1067 = vmatpush1.bf16.msra.mxu0 %v1050
      %1068 = vmatprep.subr.bf16.mxu0 0
      %1069 = vmatpush1.bf16.msra.mxu0 %v1051
      %1070 = vmatprep.subr.bf16.mxu0 0
      %1071 = vmatpush1.bf16.msra.mxu0 %v1052
      %1072 = vmatprep.subr.bf16.mxu0 0
      %1073 = vmatpush1.bf16.msra.mxu0 %v1053
      %1074 = vmatprep.subr.bf16.mxu0 0
      %1075 = vmatpush1.bf16.msra.mxu0 %v1054
      %1076 = vmatprep.subr.bf16.mxu0 0
      %1077 = vmatpush1.bf16.msra.mxu0 %v1055
      %1078 = vmatprep.subr.bf16.mxu0 0
      %1079 = vmatpush1.bf16.msra.mxu0 %v1056
      %1080 = vmatprep.subr.bf16.mxu0 0
      %1081 = vmatpush1.bf16.msra.mxu0 %v1057
      %1082 = vmatprep.subr.bf16.mxu0 0
      %1083 = vmatpush1.bf16.msra.mxu0 0
      %1084 = vmatprep.subr.bf16.mxu0 0
      %1085 = vmatpush1.bf16.msra.mxu0 0
      %1086 = vmatprep.subr.bf16.mxu0 0
      %1087 = vmatpush1.bf16.msra.mxu0 0
      %1088 = vmatprep.subr.bf16.mxu0 0
      %1089 = vmatpush1.bf16.msra.mxu0 0
      %1090 = vmatprep.subr.bf16.mxu0 0
      %1091 = vmatpush1.bf16.msra.mxu0 0
      %1092 = vmatprep.subr.bf16.mxu0 0
      %1093 = vmatpush1.bf16.msra.mxu0 0
      %1094 = vmatprep.subr.bf16.mxu0 0
      %1095 = vmatpush1.bf16.msra.mxu0 0
      %1096 = vmatprep.subr.bf16.mxu0 0
      %1097 = vmatpush1.bf16.msra.mxu0 0
      %1098 = vmatprep.mubr.bf16.mxu0 0
      %1099 = vmatmul.mubr.bf16.gmra.mrb[0].mxu0 %v985
      %v1100 = vpop.f32.mrb[0].mxu0
      %v1101 = vadd.f32 0.0, %v1100
      %v1102 = vpop.f32.mrb[0].mxu0
      %v1103 = vpop.f32.mrb[0].mxu0
      %v1104 = vadd.f32 0.0, %v1103
      %v1105 = vpop.f32.mrb[0].mxu0
      %1106 = vmatprep.mubr.bf16.mxu0 0
      %1107 = vmatmul.mubr.bf16.gmra.mrb[0].mxu0 %v986
      %v1108 = vpop.f32.mrb[0].mxu0
      %v1109 = vadd.f32 0.0, %v1108
      %v1110 = vpop.f32.mrb[0].mxu0
      %v1111 = vpop.f32.mrb[0].mxu0
      %v1112 = vadd.f32 0.0, %v1111
      %v1113 = vpop.f32.mrb[0].mxu0
      %1114 = vmatprep.mubr.bf16.mxu0 0
      %1115 = vmatmul.mubr.bf16.gmra.mrb[0].mxu0 %v987
      %v1116 = vpop.f32.mrb[0].mxu0
      %v1117 = vadd.f32 0.0, %v1116
      %v1118 = vpop.f32.mrb[0].mxu0
      %v1119 = vpop.f32.mrb[0].mxu0
      %v1120 = vadd.f32 0.0, %v1119
      %v1121 = vpop.f32.mrb[0].mxu0
      %1122 = vmatprep.mubr.bf16.mxu0 0
      %1123 = vmatmul.mubr.bf16.gmra.mrb[0].mxu0 %v988
      %v1124 = vpop.f32.mrb[0].mxu0
      %v1125 = vadd.f32 0.0, %v1124
      %v1126 = vpop.f32.mrb[0].mxu0
      %v1127 = vpop.f32.mrb[0].mxu0
      %v1128 = vadd.f32 0.0, %v1127
      %v1129 = vpop.f32.mrb[0].mxu0
      %1130 = vmatprep.mubr.bf16.mxu0 0
      %1131 = vmatmul.mubr.bf16.gmra.mrb[0].mxu0 %v989
      %v1132 = vpop.f32.mrb[0].mxu0
      %v1133 = vadd.f32 0.0, %v1132
      %v1134 = vpop.f32.mrb[0].mxu0
      %v1135 = vpop.f32.mrb[0].mxu0
      %v1136 = vadd.f32 0.0, %v1135
      %v1137 = vpop.f32.mrb[0].mxu0
      %1138 = vmatprep.mubr.bf16.mxu0 0
      %1139 = vmatmul.mubr.bf16.gmra.mrb[0].mxu0 %v990
      %v1140 = vpop.f32.mrb[0].mxu0
      %v1141 = vadd.f32 0.0, %v1140
      %v1142 = vpop.f32.mrb[0].mxu0
      %v1143 = vpop.f32.mrb[0].mxu0
      %v1144 = vadd.f32 0.0, %v1143
      %v1145 = vpop.f32.mrb[0].mxu0
      %1146 = vmatprep.mubr.bf16.mxu0 0
      %1147 = vmatmul.mubr.bf16.gmra.mrb[0].mxu0 %v991
      %v1148 = vpop.f32.mrb[0].mxu0
      %v1149 = vadd.f32 0.0, %v1148
      %v1150 = vpop.f32.mrb[0].mxu0
      %v1151 = vpop.f32.mrb[0].mxu0
      %v1152 = vadd.f32 0.0, %v1151
      %v1153 = vpop.f32.mrb[0].mxu0
      %1154 = vmatprep.mubr.bf16.mxu0 0
      %1155 = vmatmul.mubr.bf16.gmra.mrb[0].mxu0 %v992
      %v1156 = vpop.f32.mrb[0].mxu0
      %v1157 = vadd.f32 0.0, %v1156
      %v1158 = vpop.f32.mrb[0].mxu0
      %v1159 = vpop.f32.mrb[0].mxu0
      %v1160 = vadd.f32 0.0, %v1159
      %v1161 = vpop.f32.mrb[0].mxu0
      %1162 = vmatprep.mubr.bf16.mxu0 0
      %1163 = vmatmul.mubr.bf16.gmra.mrb[0].mxu0 %v993
      %v1164 = vpop.f32.mrb[0].mxu0
      %v1165 = vadd.f32 0.0, %v1164
      %v1166 = vpop.f32.mrb[0].mxu0
      %v1167 = vpop.f32.mrb[0].mxu0
      %v1168 = vadd.f32 0.0, %v1167
      %v1169 = vpop.f32.mrb[0].mxu0
      %1170 = vmatprep.mubr.bf16.mxu0 0
      %1171 = vmatmul.mubr.bf16.gmra.mrb[0].mxu0 %v994
      %v1172 = vpop.f32.mrb[0].mxu0
      %v1173 = vadd.f32 0.0, %v1172
      %v1174 = vpop.f32.mrb[0].mxu0
      %v1175 = vpop.f32.mrb[0].mxu0
      %v1176 = vadd.f32 0.0, %v1175
      %v1177 = vpop.f32.mrb[0].mxu0
      %1178 = vmatprep.mubr.bf16.mxu0 0
      %1179 = vmatmul.mubr.bf16.gmra.mrb[0].mxu0 %v995
      %v1180 = vpop.f32.mrb[0].mxu0
      %v1181 = vadd.f32 0.0, %v1180
      %v1182 = vpop.f32.mrb[0].mxu0
      %v1183 = vpop.f32.mrb[0].mxu0
      %v1184 = vadd.f32 0.0, %v1183
      %v1185 = vpop.f32.mrb[0].mxu0
      %1186 = vmatprep.mubr.bf16.mxu0 0
      %1187 = vmatmul.mubr.bf16.gmra.mrb[0].mxu0 %v996
      %v1188 = vpop.f32.mrb[0].mxu0
      %v1189 = vadd.f32 0.0, %v1188
      %v1190 = vpop.f32.mrb[0].mxu0
      %v1191 = vpop.f32.mrb[0].mxu0
      %v1192 = vadd.f32 0.0, %v1191
      %v1193 = vpop.f32.mrb[0].mxu0
      %1194 = vmatprep.mubr.bf16.mxu0 0
      %1195 = vmatmul.mubr.bf16.gmra.mrb[0].mxu0 %v997
      %v1196 = vpop.f32.mrb[0].mxu0
      %v1197 = vadd.f32 0.0, %v1196
      %v1198 = vpop.f32.mrb[0].mxu0
      %v1199 = vpop.f32.mrb[0].mxu0
      %v1200 = vadd.f32 0.0, %v1199
      %v1201 = vpop.f32.mrb[0].mxu0
      %1202 = vmatprep.mubr.bf16.mxu0 0
      %1203 = vmatmul.mubr.bf16.gmra.mrb[0].mxu0 %v998
      %v1204 = vpop.f32.mrb[0].mxu0
      %v1205 = vadd.f32 0.0, %v1204
      %v1206 = vpop.f32.mrb[0].mxu0
      %v1207 = vpop.f32.mrb[0].mxu0
      %v1208 = vadd.f32 0.0, %v1207
      %v1209 = vpop.f32.mrb[0].mxu0
      %1210 = vmatprep.mubr.bf16.mxu0 0
      %1211 = vmatmul.mubr.bf16.gmra.mrb[0].mxu0 %v999
      %v1212 = vpop.f32.mrb[0].mxu0
      %v1213 = vadd.f32 0.0, %v1212
      %v1214 = vpop.f32.mrb[0].mxu0
      %v1215 = vpop.f32.mrb[0].mxu0
      %v1216 = vadd.f32 0.0, %v1215
      %v1217 = vpop.f32.mrb[0].mxu0
      %1218 = vmatprep.mubr.bf16.mxu0 0
      %1219 = vmatmul.mubr.bf16.gmra.mrb[0].mxu0 %v1000
      %v1220 = vpop.f32.mrb[0].mxu0
      %v1221 = vadd.f32 0.0, %v1220
      %v1222 = vpop.f32.mrb[0].mxu0
      %v1223 = vpop.f32.mrb[0].mxu0
      %v1224 = vadd.f32 0.0, %v1223
      %v1225 = vpop.f32.mrb[0].mxu0
      %1226 = vdwg.mxu0
      %v1227 = vadd.f32 %v827, %v1101
      %v1228 = vadd.f32 %v830, %v1104
      %v1229 = vadd.f32 %v835, %v1109
      %v1230 = vadd.f32 %v838, %v1112
      %v1231 = vadd.f32 %v843, %v1117
      %v1232 = vadd.f32 %v846, %v1120
      %v1233 = vadd.f32 %v851, %v1125
      %v1234 = vadd.f32 %v854, %v1128
      %v1235 = vadd.f32 %v859, %v1133
      %v1236 = vadd.f32 %v862, %v1136
      %v1237 = vadd.f32 %v867, %v1141
      %v1238 = vadd.f32 %v870, %v1144
      %v1239 = vadd.f32 %v875, %v1149
      %v1240 = vadd.f32 %v878, %v1152
      %v1241 = vadd.f32 %v883, %v1157
      %v1242 = vadd.f32 %v886, %v1160
      %v1243 = vadd.f32 %v891, %v1165
      %v1244 = vadd.f32 %v894, %v1168
      %v1245 = vadd.f32 %v899, %v1173
      %v1246 = vadd.f32 %v902, %v1176
      %v1247 = vadd.f32 %v907, %v1181
      %v1248 = vadd.f32 %v910, %v1184
      %v1249 = vadd.f32 %v915, %v1189
      %v1250 = vadd.f32 %v918, %v1192
      %v1251 = vadd.f32 %v923, %v1197
      %v1252 = vadd.f32 %v926, %v1200
      %v1253 = vadd.f32 %v931, %v1205
      %v1254 = vadd.f32 %v934, %v1208
      %v1255 = vadd.f32 %v939, %v1213
      %v1256 = vadd.f32 %v942, %v1216
      %v1257 = vadd.f32 %v947, %v1221
      %v1258 = vadd.f32 %v950, %v1224
      %v1259 = vld [vmem:[%s235 + $0x7] sm:$0xff]
      %v1260 = vld [vmem:[%s235 + $0xf] sm:$0xff]
      %v1261 = vld [vmem:[%s235 + $0x27] sm:$0xff]
      %v1262 = vld [vmem:[%s235 + $0x2f] sm:$0xff]
      %v1263 = vld [vmem:[%s235 + $0x47] sm:$0xff]
      %v1264 = vld [vmem:[%s235 + $0x4f] sm:$0xff]
      %v1265 = vld [vmem:[%s235 + $0x67] sm:$0xff]
      %v1266 = vld [vmem:[%s235 + $0x6f] sm:$0xff]
      %v1267 = vld [vmem:[%s235 + $0x87] sm:$0xff]
      %v1268 = vld [vmem:[%s235 + $0x8f] sm:$0xff]
      %v1269 = vld [vmem:[%s235 + $0xa7] sm:$0xff]
      %v1270 = vld [vmem:[%s235 + $0xaf] sm:$0xff]
      %v1271 = vld [vmem:[%s235 + $0xc7] sm:$0xff]
      %v1272 = vld [vmem:[%s235 + $0xcf] sm:$0xff]
      %v1273 = vld [vmem:[%s235 + $0xe7] sm:$0xff]
      %v1274 = vld [vmem:[%s235 + $0xef] sm:$0xff]
      %v1275 = vld [vmem:[%s235 + $0x107] sm:$0xff]
      %v1276 = vld [vmem:[%s235 + $0x10f] sm:$0xff]
      %v1277 = vld [vmem:[%s235 + $0x127] sm:$0xff]
      %v1278 = vld [vmem:[%s235 + $0x12f] sm:$0xff]
      %v1279 = vld [vmem:[%s235 + $0x147] sm:$0xff]
      %v1280 = vld [vmem:[%s235 + $0x14f] sm:$0xff]
      %v1281 = vld [vmem:[%s235 + $0x167] sm:$0xff]
      %v1282 = vld [vmem:[%s235 + $0x16f] sm:$0xff]
      %v1283 = vld [vmem:[%s235 + $0x187] sm:$0xff]
      %v1284 = vld [vmem:[%s235 + $0x18f] sm:$0xff]
      %v1285 = vld [vmem:[%s235 + $0x1a7] sm:$0xff]
      %v1286 = vld [vmem:[%s235 + $0x1af] sm:$0xff]
      %v1287 = vld [vmem:[%s235 + $0x1c7] sm:$0xff]
      %v1288 = vld [vmem:[%s235 + $0x1cf] sm:$0xff]
      %v1289 = vld [vmem:[%s235 + $0x1e7] sm:$0xff]
      %v1290 = vld [vmem:[%s235 + $0x1ef] sm:$0xff]
      %v1291 = vpack.c.bf16 %v1260, %v1259
      %v1292 = vpack.c.bf16 %v1262, %v1261
      %v1293 = vpack.c.bf16 %v1264, %v1263
      %v1294 = vpack.c.bf16 %v1266, %v1265
      %v1295 = vpack.c.bf16 %v1268, %v1267
      %v1296 = vpack.c.bf16 %v1270, %v1269
      %v1297 = vpack.c.bf16 %v1272, %v1271
      %v1298 = vpack.c.bf16 %v1274, %v1273
      %v1299 = vpack.c.bf16 %v1276, %v1275
      %v1300 = vpack.c.bf16 %v1278, %v1277
      %v1301 = vpack.c.bf16 %v1280, %v1279
      %v1302 = vpack.c.bf16 %v1282, %v1281
      %v1303 = vpack.c.bf16 %v1284, %v1283
      %v1304 = vpack.c.bf16 %v1286, %v1285
      %v1305 = vpack.c.bf16 %v1288, %v1287
      %v1306 = vpack.c.bf16 %v1290, %v1289
      %s1307 = scalar_lea.vmem %s1, 192
      %v1308 = vld [vmem:[%s1307] sm:$0xf]
      %v1309 = vld [vmem:[%s1307 + $0x4] sm:$0xf]
      %v1310 = vld [vmem:[%s1307 + $0x8] sm:$0xf]
      %v1311 = vld [vmem:[%s1307 + $0xc] sm:$0xf]
      %v1312 = vld [vmem:[%s1307 + $0x10] sm:$0xf]
      %v1313 = vld [vmem:[%s1307 + $0x14] sm:$0xf]
      %v1314 = vld [vmem:[%s1307 + $0x18] sm:$0xf]
      %v1315 = vld [vmem:[%s1307 + $0x1c] sm:$0xf]
      %v1316 = vld [vmem:[%s1307 + $0x20] sm:$0xf]
      %v1317 = vld [vmem:[%s1307 + $0x24] sm:$0xf]
      %v1318 = vld [vmem:[%s1307 + $0x28] sm:$0xf]
      %v1319 = vld [vmem:[%s1307 + $0x2c] sm:$0xf]
      %v1320 = vld [vmem:[%s1307 + $0x30] sm:$0xf]
      %v1321 = vld [vmem:[%s1307 + $0x34] sm:$0xf]
      %v1322 = vld [vmem:[%s1307 + $0x38] sm:$0xf]
      %v1323 = vld [vmem:[%s1307 + $0x3c] sm:$0xf]
      %v1340 = vunpack.c.l.b16 %v1308
      %v1341 = vunpack.c.l.b16 %v1309
      %v1342 = vunpack.c.l.b16 %v1310
      %v1343 = vunpack.c.l.b16 %v1311
      %v1344 = vunpack.c.l.b16 %v1312
      %v1345 = vunpack.c.l.b16 %v1313
      %v1346 = vunpack.c.l.b16 %v1314
      %v1347 = vunpack.c.l.b16 %v1315
      %v1348 = vunpack.c.l.b16 %v1316
      %v1349 = vunpack.c.l.b16 %v1317
      %v1350 = vunpack.c.l.b16 %v1318
      %v1351 = vunpack.c.l.b16 %v1319
      %v1352 = vunpack.c.l.b16 %v1320
      %v1353 = vunpack.c.l.b16 %v1321
      %v1354 = vunpack.c.l.b16 %v1322
      %v1355 = vunpack.c.l.b16 %v1323
      %v1356 = vpack.c.b16 %v1341, %v1340
      %v1357 = vpack.c.b16 %v1343, %v1342
      %v1358 = vpack.c.b16 %v1345, %v1344
      %v1359 = vpack.c.b16 %v1347, %v1346
      %v1360 = vpack.c.b16 %v1349, %v1348
      %v1361 = vpack.c.b16 %v1351, %v1350
      %v1362 = vpack.c.b16 %v1353, %v1352
      %v1363 = vpack.c.b16 %v1355, %v1354
      %1372 = vmatprep.subr.bf16.mxu0 0
      %1373 = vmatpush1.bf16.msra.mxu0 %v1356
      %1374 = vmatprep.subr.bf16.mxu0 0
      %1375 = vmatpush1.bf16.msra.mxu0 %v1357
      %1376 = vmatprep.subr.bf16.mxu0 0
      %1377 = vmatpush1.bf16.msra.mxu0 %v1358
      %1378 = vmatprep.subr.bf16.mxu0 0
      %1379 = vmatpush1.bf16.msra.mxu0 %v1359
      %1380 = vmatprep.subr.bf16.mxu0 0
      %1381 = vmatpush1.bf16.msra.mxu0 %v1360
      %1382 = vmatprep.subr.bf16.mxu0 0
      %1383 = vmatpush1.bf16.msra.mxu0 %v1361
      %1384 = vmatprep.subr.bf16.mxu0 0
      %1385 = vmatpush1.bf16.msra.mxu0 %v1362
      %1386 = vmatprep.subr.bf16.mxu0 0
      %1387 = vmatpush1.bf16.msra.mxu0 %v1363
      %1388 = vmatprep.subr.bf16.mxu0 0
      %1389 = vmatpush1.bf16.msra.mxu0 0
      %1390 = vmatprep.subr.bf16.mxu0 0
      %1391 = vmatpush1.bf16.msra.mxu0 0
      %1392 = vmatprep.subr.bf16.mxu0 0
      %1393 = vmatpush1.bf16.msra.mxu0 0
      %1394 = vmatprep.subr.bf16.mxu0 0
      %1395 = vmatpush1.bf16.msra.mxu0 0
      %1396 = vmatprep.subr.bf16.mxu0 0
      %1397 = vmatpush1.bf16.msra.mxu0 0
      %1398 = vmatprep.subr.bf16.mxu0 0
      %1399 = vmatpush1.bf16.msra.mxu0 0
      %1400 = vmatprep.subr.bf16.mxu0 0
      %1401 = vmatpush1.bf16.msra.mxu0 0
      %1402 = vmatprep.subr.bf16.mxu0 0
      %1403 = vmatpush1.bf16.msra.mxu0 0
      %1404 = vmatprep.mubr.bf16.mxu0 0
      %1405 = vmatmul.mubr.bf16.gmra.mrb[0].mxu0 %v1291
      %v1406 = vpop.f32.mrb[0].mxu0
      %v1407 = vadd.f32 0.0, %v1406
      %v1408 = vpop.f32.mrb[0].mxu0
      %v1409 = vpop.f32.mrb[0].mxu0
      %v1410 = vadd.f32 0.0, %v1409
      %v1411 = vpop.f32.mrb[0].mxu0
      %1412 = vmatprep.mubr.bf16.mxu0 0
      %1413 = vmatmul.mubr.bf16.gmra.mrb[0].mxu0 %v1292
      %v1414 = vpop.f32.mrb[0].mxu0
      %v1415 = vadd.f32 0.0, %v1414
      %v1416 = vpop.f32.mrb[0].mxu0
      %v1417 = vpop.f32.mrb[0].mxu0
      %v1418 = vadd.f32 0.0, %v1417
      %v1419 = vpop.f32.mrb[0].mxu0
      %1420 = vmatprep.mubr.bf16.mxu0 0
      %1421 = vmatmul.mubr.bf16.gmra.mrb[0].mxu0 %v1293
      %v1422 = vpop.f32.mrb[0].mxu0
      %v1423 = vadd.f32 0.0, %v1422
      %v1424 = vpop.f32.mrb[0].mxu0
      %v1425 = vpop.f32.mrb[0].mxu0
      %v1426 = vadd.f32 0.0, %v1425
      %v1427 = vpop.f32.mrb[0].mxu0
      %1428 = vmatprep.mubr.bf16.mxu0 0
      %1429 = vmatmul.mubr.bf16.gmra.mrb[0].mxu0 %v1294
      %v1430 = vpop.f32.mrb[0].mxu0
      %v1431 = vadd.f32 0.0, %v1430
      %v1432 = vpop.f32.mrb[0].mxu0
      %v1433 = vpop.f32.mrb[0].mxu0
      %v1434 = vadd.f32 0.0, %v1433
      %v1435 = vpop.f32.mrb[0].mxu0
      %1436 = vmatprep.mubr.bf16.mxu0 0
      %1437 = vmatmul.mubr.bf16.gmra.mrb[0].mxu0 %v1295
      %v1438 = vpop.f32.mrb[0].mxu0
      %v1439 = vadd.f32 0.0, %v1438
      %v1440 = vpop.f32.mrb[0].mxu0
      %v1441 = vpop.f32.mrb[0].mxu0
      %v1442 = vadd.f32 0.0, %v1441
      %v1443 = vpop.f32.mrb[0].mxu0
      %1444 = vmatprep.mubr.bf16.mxu0 0
      %1445 = vmatmul.mubr.bf16.gmra.mrb[0].mxu0 %v1296
      %v1446 = vpop.f32.mrb[0].mxu0
      %v1447 = vadd.f32 0.0, %v1446
      %v1448 = vpop.f32.mrb[0].mxu0
      %v1449 = vpop.f32.mrb[0].mxu0
      %v1450 = vadd.f32 0.0, %v1449
      %v1451 = vpop.f32.mrb[0].mxu0
      %1452 = vmatprep.mubr.bf16.mxu0 0
      %1453 = vmatmul.mubr.bf16.gmra.mrb[0].mxu0 %v1297
      %v1454 = vpop.f32.mrb[0].mxu0
      %v1455 = vadd.f32 0.0, %v1454
      %v1456 = vpop.f32.mrb[0].mxu0
      %v1457 = vpop.f32.mrb[0].mxu0
      %v1458 = vadd.f32 0.0, %v1457
      %v1459 = vpop.f32.mrb[0].mxu0
      %1460 = vmatprep.mubr.bf16.mxu0 0
      %1461 = vmatmul.mubr.bf16.gmra.mrb[0].mxu0 %v1298
      %v1462 = vpop.f32.mrb[0].mxu0
      %v1463 = vadd.f32 0.0, %v1462
      %v1464 = vpop.f32.mrb[0].mxu0
      %v1465 = vpop.f32.mrb[0].mxu0
      %v1466 = vadd.f32 0.0, %v1465
      %v1467 = vpop.f32.mrb[0].mxu0
      %1468 = vmatprep.mubr.bf16.mxu0 0
      %1469 = vmatmul.mubr.bf16.gmra.mrb[0].mxu0 %v1299
      %v1470 = vpop.f32.mrb[0].mxu0
      %v1471 = vadd.f32 0.0, %v1470
      %v1472 = vpop.f32.mrb[0].mxu0
      %v1473 = vpop.f32.mrb[0].mxu0
      %v1474 = vadd.f32 0.0, %v1473
      %v1475 = vpop.f32.mrb[0].mxu0
      %1476 = vmatprep.mubr.bf16.mxu0 0
      %1477 = vmatmul.mubr.bf16.gmra.mrb[0].mxu0 %v1300
      %v1478 = vpop.f32.mrb[0].mxu0
      %v1479 = vadd.f32 0.0, %v1478
      %v1480 = vpop.f32.mrb[0].mxu0
      %v1481 = vpop.f32.mrb[0].mxu0
      %v1482 = vadd.f32 0.0, %v1481
      %v1483 = vpop.f32.mrb[0].mxu0
      %1484 = vmatprep.mubr.bf16.mxu0 0
      %1485 = vmatmul.mubr.bf16.gmra.mrb[0].mxu0 %v1301
      %v1486 = vpop.f32.mrb[0].mxu0
      %v1487 = vadd.f32 0.0, %v1486
      %v1488 = vpop.f32.mrb[0].mxu0
      %v1489 = vpop.f32.mrb[0].mxu0
      %v1490 = vadd.f32 0.0, %v1489
      %v1491 = vpop.f32.mrb[0].mxu0
      %1492 = vmatprep.mubr.bf16.mxu0 0
      %1493 = vmatmul.mubr.bf16.gmra.mrb[0].mxu0 %v1302
      %v1494 = vpop.f32.mrb[0].mxu0
      %v1495 = vadd.f32 0.0, %v1494
      %v1496 = vpop.f32.mrb[0].mxu0
      %v1497 = vpop.f32.mrb[0].mxu0
      %v1498 = vadd.f32 0.0, %v1497
      %v1499 = vpop.f32.mrb[0].mxu0
      %1500 = vmatprep.mubr.bf16.mxu0 0
      %1501 = vmatmul.mubr.bf16.gmra.mrb[0].mxu0 %v1303
      %v1502 = vpop.f32.mrb[0].mxu0
      %v1503 = vadd.f32 0.0, %v1502
      %v1504 = vpop.f32.mrb[0].mxu0
      %v1505 = vpop.f32.mrb[0].mxu0
      %v1506 = vadd.f32 0.0, %v1505
      %v1507 = vpop.f32.mrb[0].mxu0
      %1508 = vmatprep.mubr.bf16.mxu0 0
      %1509 = vmatmul.mubr.bf16.gmra.mrb[0].mxu0 %v1304
      %v1510 = vpop.f32.mrb[0].mxu0
      %v1511 = vadd.f32 0.0, %v1510
      %v1512 = vpop.f32.mrb[0].mxu0
      %v1513 = vpop.f32.mrb[0].mxu0
      %v1514 = vadd.f32 0.0, %v1513
      %v1515 = vpop.f32.mrb[0].mxu0
      %1516 = vmatprep.mubr.bf16.mxu0 0
      %1517 = vmatmul.mubr.bf16.gmra.mrb[0].mxu0 %v1305
      %v1518 = vpop.f32.mrb[0].mxu0
      %v1519 = vadd.f32 0.0, %v1518
      %v1520 = vpop.f32.mrb[0].mxu0
      %v1521 = vpop.f32.mrb[0].mxu0
      %v1522 = vadd.f32 0.0, %v1521
      %v1523 = vpop.f32.mrb[0].mxu0
      %1524 = vmatprep.mubr.bf16.mxu0 0
      %1525 = vmatmul.mubr.bf16.gmra.mrb[0].mxu0 %v1306
      %v1526 = vpop.f32.mrb[0].mxu0
      %v1527 = vadd.f32 0.0, %v1526
      %v1528 = vpop.f32.mrb[0].mxu0
      %v1529 = vpop.f32.mrb[0].mxu0
      %v1530 = vadd.f32 0.0, %v1529
      %v1531 = vpop.f32.mrb[0].mxu0
      %1532 = vdwg.mxu0
      %v1533 = vadd.f32 %v1227, %v1407
      %v1534 = vadd.f32 %v1228, %v1410
      %v1535 = vadd.f32 %v1229, %v1415
      %v1536 = vadd.f32 %v1230, %v1418
      %v1537 = vadd.f32 %v1231, %v1423
      %v1538 = vadd.f32 %v1232, %v1426
      %v1539 = vadd.f32 %v1233, %v1431
      %v1540 = vadd.f32 %v1234, %v1434
      %v1541 = vadd.f32 %v1235, %v1439
      %v1542 = vadd.f32 %v1236, %v1442
      %v1543 = vadd.f32 %v1237, %v1447
      %v1544 = vadd.f32 %v1238, %v1450
      %v1545 = vadd.f32 %v1239, %v1455
      %v1546 = vadd.f32 %v1240, %v1458
      %v1547 = vadd.f32 %v1241, %v1463
      %v1548 = vadd.f32 %v1242, %v1466
      %v1549 = vadd.f32 %v1243, %v1471
      %v1550 = vadd.f32 %v1244, %v1474
      %v1551 = vadd.f32 %v1245, %v1479
      %v1552 = vadd.f32 %v1246, %v1482
      %v1553 = vadd.f32 %v1247, %v1487
      %v1554 = vadd.f32 %v1248, %v1490
      %v1555 = vadd.f32 %v1249, %v1495
      %v1556 = vadd.f32 %v1250, %v1498
      %v1557 = vadd.f32 %v1251, %v1503
      %v1558 = vadd.f32 %v1252, %v1506
      %v1559 = vadd.f32 %v1253, %v1511
      %v1560 = vadd.f32 %v1254, %v1514
      %v1561 = vadd.f32 %v1255, %v1519
      %v1562 = vadd.f32 %v1256, %v1522
      %v1563 = vadd.f32 %v1257, %v1527
      %v1564 = vadd.f32 %v1258, %v1530
      %v1565 = vld [vmem:[%s235 + $0x8] sm:$0xff]
      %v1566 = vld [vmem:[%s235 + $0x10] sm:$0xff]
      %v1567 = vld [vmem:[%s235 + $0x28] sm:$0xff]
      %v1568 = vld [vmem:[%s235 + $0x30] sm:$0xff]
      %v1569 = vld [vmem:[%s235 + $0x48] sm:$0xff]
      %v1570 = vld [vmem:[%s235 + $0x50] sm:$0xff]
      %v1571 = vld [vmem:[%s235 + $0x68] sm:$0xff]
      %v1572 = vld [vmem:[%s235 + $0x70] sm:$0xff]
      %v1573 = vld [vmem:[%s235 + $0x88] sm:$0xff]
      %v1574 = vld [vmem:[%s235 + $0x90] sm:$0xff]
      %v1575 = vld [vmem:[%s235 + $0xa8] sm:$0xff]
      %v1576 = vld [vmem:[%s235 + $0xb0] sm:$0xff]
      %v1577 = vld [vmem:[%s235 + $0xc8] sm:$0xff]
      %v1578 = vld [vmem:[%s235 + $0xd0] sm:$0xff]
      %v1579 = vld [vmem:[%s235 + $0xe8] sm:$0xff]
      %v1580 = vld [vmem:[%s235 + $0xf0] sm:$0xff]
      %v1581 = vld [vmem:[%s235 + $0x108] sm:$0xff]
      %v1582 = vld [vmem:[%s235 + $0x110] sm:$0xff]
      %v1583 = vld [vmem:[%s235 + $0x128] sm:$0xff]
      %v1584 = vld [vmem:[%s235 + $0x130] sm:$0xff]
      %v1585 = vld [vmem:[%s235 + $0x148] sm:$0xff]
      %v1586 = vld [vmem:[%s235 + $0x150] sm:$0xff]
      %v1587 = vld [vmem:[%s235 + $0x168] sm:$0xff]
      %v1588 = vld [vmem:[%s235 + $0x170] sm:$0xff]
      %v1589 = vld [vmem:[%s235 + $0x188] sm:$0xff]
      %v1590 = vld [vmem:[%s235 + $0x190] sm:$0xff]
      %v1591 = vld [vmem:[%s235 + $0x1a8] sm:$0xff]
      %v1592 = vld [vmem:[%s235 + $0x1b0] sm:$0xff]
      %v1593 = vld [vmem:[%s235 + $0x1c8] sm:$0xff]
      %v1594 = vld [vmem:[%s235 + $0x1d0] sm:$0xff]
      %v1595 = vld [vmem:[%s235 + $0x1e8] sm:$0xff]
      %v1596 = vld [vmem:[%s235 + $0x1f0] sm:$0xff]
      %v1597 = vpack.c.bf16 %v1566, %v1565
      %v1598 = vpack.c.bf16 %v1568, %v1567
      %v1599 = vpack.c.bf16 %v1570, %v1569
      %v1600 = vpack.c.bf16 %v1572, %v1571
      %v1601 = vpack.c.bf16 %v1574, %v1573
      %v1602 = vpack.c.bf16 %v1576, %v1575
      %v1603 = vpack.c.bf16 %v1578, %v1577
      %v1604 = vpack.c.bf16 %v1580, %v1579
      %v1605 = vpack.c.bf16 %v1582, %v1581
      %v1606 = vpack.c.bf16 %v1584, %v1583
      %v1607 = vpack.c.bf16 %v1586, %v1585
      %v1608 = vpack.c.bf16 %v1588, %v1587
      %v1609 = vpack.c.bf16 %v1590, %v1589
      %v1610 = vpack.c.bf16 %v1592, %v1591
      %v1611 = vpack.c.bf16 %v1594, %v1593
      %v1612 = vpack.c.bf16 %v1596, %v1595
      %s1613 = scalar_lea.vmem %s1, 256
      %v1614 = vld [vmem:[%s1613] sm:$0xf]
      %v1615 = vld [vmem:[%s1613 + $0x4] sm:$0xf]
      %v1616 = vld [vmem:[%s1613 + $0x8] sm:$0xf]
      %v1617 = vld [vmem:[%s1613 + $0xc] sm:$0xf]
      %v1618 = vld [vmem:[%s1613 + $0x10] sm:$0xf]
      %v1619 = vld [vmem:[%s1613 + $0x14] sm:$0xf]
      %v1620 = vld [vmem:[%s1613 + $0x18] sm:$0xf]
      %v1621 = vld [vmem:[%s1613 + $0x1c] sm:$0xf]
      %v1622 = vld [vmem:[%s1613 + $0x20] sm:$0xf]
      %v1623 = vld [vmem:[%s1613 + $0x24] sm:$0xf]
      %v1624 = vld [vmem:[%s1613 + $0x28] sm:$0xf]
      %v1625 = vld [vmem:[%s1613 + $0x2c] sm:$0xf]
      %v1626 = vld [vmem:[%s1613 + $0x30] sm:$0xf]
      %v1627 = vld [vmem:[%s1613 + $0x34] sm:$0xf]
      %v1628 = vld [vmem:[%s1613 + $0x38] sm:$0xf]
      %v1629 = vld [vmem:[%s1613 + $0x3c] sm:$0xf]
      %v1646 = vunpack.c.l.b16 %v1614
      %v1647 = vunpack.c.l.b16 %v1615
      %v1648 = vunpack.c.l.b16 %v1616
      %v1649 = vunpack.c.l.b16 %v1617
      %v1650 = vunpack.c.l.b16 %v1618
      %v1651 = vunpack.c.l.b16 %v1619
      %v1652 = vunpack.c.l.b16 %v1620
      %v1653 = vunpack.c.l.b16 %v1621
      %v1654 = vunpack.c.l.b16 %v1622
      %v1655 = vunpack.c.l.b16 %v1623
      %v1656 = vunpack.c.l.b16 %v1624
      %v1657 = vunpack.c.l.b16 %v1625
      %v1658 = vunpack.c.l.b16 %v1626
      %v1659 = vunpack.c.l.b16 %v1627
      %v1660 = vunpack.c.l.b16 %v1628
      %v1661 = vunpack.c.l.b16 %v1629
      %v1662 = vpack.c.b16 %v1647, %v1646
      %v1663 = vpack.c.b16 %v1649, %v1648
      %v1664 = vpack.c.b16 %v1651, %v1650
      %v1665 = vpack.c.b16 %v1653, %v1652
      %v1666 = vpack.c.b16 %v1655, %v1654
      %v1667 = vpack.c.b16 %v1657, %v1656
      %v1668 = vpack.c.b16 %v1659, %v1658
      %v1669 = vpack.c.b16 %v1661, %v1660
      %1678 = vmatprep.subr.bf16.mxu0 0
      %1679 = vmatpush1.bf16.msra.mxu0 %v1662
      %1680 = vmatprep.subr.bf16.mxu0 0
      %1681 = vmatpush1.bf16.msra.mxu0 %v1663
      %1682 = vmatprep.subr.bf16.mxu0 0
      %1683 = vmatpush1.bf16.msra.mxu0 %v1664
      %1684 = vmatprep.subr.bf16.mxu0 0
      %1685 = vmatpush1.bf16.msra.mxu0 %v1665
      %1686 = vmatprep.subr.bf16.mxu0 0
      %1687 = vmatpush1.bf16.msra.mxu0 %v1666
      %1688 = vmatprep.subr.bf16.mxu0 0
      %1689 = vmatpush1.bf16.msra.mxu0 %v1667
      %1690 = vmatprep.subr.bf16.mxu0 0
      %1691 = vmatpush1.bf16.msra.mxu0 %v1668
      %1692 = vmatprep.subr.bf16.mxu0 0
      %1693 = vmatpush1.bf16.msra.mxu0 %v1669
      %1694 = vmatprep.subr.bf16.mxu0 0
      %1695 = vmatpush1.bf16.msra.mxu0 0
      %1696 = vmatprep.subr.bf16.mxu0 0
      %1697 = vmatpush1.bf16.msra.mxu0 0
      %1698 = vmatprep.subr.bf16.mxu0 0
      %1699 = vmatpush1.bf16.msra.mxu0 0
      %1700 = vmatprep.subr.bf16.mxu0 0
      %1701 = vmatpush1.bf16.msra.mxu0 0
      %1702 = vmatprep.subr.bf16.mxu0 0
      %1703 = vmatpush1.bf16.msra.mxu0 0
      %1704 = vmatprep.subr.bf16.mxu0 0
      %1705 = vmatpush1.bf16.msra.mxu0 0
      %1706 = vmatprep.subr.bf16.mxu0 0
      %1707 = vmatpush1.bf16.msra.mxu0 0
      %1708 = vmatprep.subr.bf16.mxu0 0
      %1709 = vmatpush1.bf16.msra.mxu0 0
      %1710 = vmatprep.mubr.bf16.mxu0 0
      %1711 = vmatmul.mubr.bf16.gmra.mrb[0].mxu0 %v1597
      %v1712 = vpop.f32.mrb[0].mxu0
      %v1713 = vadd.f32 0.0, %v1712
      %v1714 = vpop.f32.mrb[0].mxu0
      %v1715 = vpop.f32.mrb[0].mxu0
      %v1716 = vadd.f32 0.0, %v1715
      %v1717 = vpop.f32.mrb[0].mxu0
      %1718 = vmatprep.mubr.bf16.mxu0 0
      %1719 = vmatmul.mubr.bf16.gmra.mrb[0].mxu0 %v1598
      %v1720 = vpop.f32.mrb[0].mxu0
      %v1721 = vadd.f32 0.0, %v1720
      %v1722 = vpop.f32.mrb[0].mxu0
      %v1723 = vpop.f32.mrb[0].mxu0
      %v1724 = vadd.f32 0.0, %v1723
      %v1725 = vpop.f32.mrb[0].mxu0
      %1726 = vmatprep.mubr.bf16.mxu0 0
      %1727 = vmatmul.mubr.bf16.gmra.mrb[0].mxu0 %v1599
      %v1728 = vpop.f32.mrb[0].mxu0
      %v1729 = vadd.f32 0.0, %v1728
      %v1730 = vpop.f32.mrb[0].mxu0
      %v1731 = vpop.f32.mrb[0].mxu0
      %v1732 = vadd.f32 0.0, %v1731
      %v1733 = vpop.f32.mrb[0].mxu0
      %1734 = vmatprep.mubr.bf16.mxu0 0
      %1735 = vmatmul.mubr.bf16.gmra.mrb[0].mxu0 %v1600
      %v1736 = vpop.f32.mrb[0].mxu0
      %v1737 = vadd.f32 0.0, %v1736
      %v1738 = vpop.f32.mrb[0].mxu0
      %v1739 = vpop.f32.mrb[0].mxu0
      %v1740 = vadd.f32 0.0, %v1739
      %v1741 = vpop.f32.mrb[0].mxu0
      %1742 = vmatprep.mubr.bf16.mxu0 0
      %1743 = vmatmul.mubr.bf16.gmra.mrb[0].mxu0 %v1601
      %v1744 = vpop.f32.mrb[0].mxu0
      %v1745 = vadd.f32 0.0, %v1744
      %v1746 = vpop.f32.mrb[0].mxu0
      %v1747 = vpop.f32.mrb[0].mxu0
      %v1748 = vadd.f32 0.0, %v1747
      %v1749 = vpop.f32.mrb[0].mxu0
      %1750 = vmatprep.mubr.bf16.mxu0 0
      %1751 = vmatmul.mubr.bf16.gmra.mrb[0].mxu0 %v1602
      %v1752 = vpop.f32.mrb[0].mxu0
      %v1753 = vadd.f32 0.0, %v1752
      %v1754 = vpop.f32.mrb[0].mxu0
      %v1755 = vpop.f32.mrb[0].mxu0
      %v1756 = vadd.f32 0.0, %v1755
      %v1757 = vpop.f32.mrb[0].mxu0
      %1758 = vmatprep.mubr.bf16.mxu0 0
      %1759 = vmatmul.mubr.bf16.gmra.mrb[0].mxu0 %v1603
      %v1760 = vpop.f32.mrb[0].mxu0
      %v1761 = vadd.f32 0.0, %v1760
      %v1762 = vpop.f32.mrb[0].mxu0
      %v1763 = vpop.f32.mrb[0].mxu0
      %v1764 = vadd.f32 0.0, %v1763
      %v1765 = vpop.f32.mrb[0].mxu0
      %1766 = vmatprep.mubr.bf16.mxu0 0
      %1767 = vmatmul.mubr.bf16.gmra.mrb[0].mxu0 %v1604
      %v1768 = vpop.f32.mrb[0].mxu0
      %v1769 = vadd.f32 0.0, %v1768
      %v1770 = vpop.f32.mrb[0].mxu0
      %v1771 = vpop.f32.mrb[0].mxu0
      %v1772 = vadd.f32 0.0, %v1771
      %v1773 = vpop.f32.mrb[0].mxu0
      %1774 = vmatprep.mubr.bf16.mxu0 0
      %1775 = vmatmul.mubr.bf16.gmra.mrb[0].mxu0 %v1605
      %v1776 = vpop.f32.mrb[0].mxu0
      %v1777 = vadd.f32 0.0, %v1776
      %v1778 = vpop.f32.mrb[0].mxu0
      %v1779 = vpop.f32.mrb[0].mxu0
      %v1780 = vadd.f32 0.0, %v1779
      %v1781 = vpop.f32.mrb[0].mxu0
      %1782 = vmatprep.mubr.bf16.mxu0 0
      %1783 = vmatmul.mubr.bf16.gmra.mrb[0].mxu0 %v1606
      %v1784 = vpop.f32.mrb[0].mxu0
      %v1785 = vadd.f32 0.0, %v1784
      %v1786 = vpop.f32.mrb[0].mxu0
      %v1787 = vpop.f32.mrb[0].mxu0
      %v1788 = vadd.f32 0.0, %v1787
      %v1789 = vpop.f32.mrb[0].mxu0
      %1790 = vmatprep.mubr.bf16.mxu0 0
      %1791 = vmatmul.mubr.bf16.gmra.mrb[0].mxu0 %v1607
      %v1792 = vpop.f32.mrb[0].mxu0
      %v1793 = vadd.f32 0.0, %v1792
      %v1794 = vpop.f32.mrb[0].mxu0
      %v1795 = vpop.f32.mrb[0].mxu0
      %v1796 = vadd.f32 0.0, %v1795
      %v1797 = vpop.f32.mrb[0].mxu0
      %1798 = vmatprep.mubr.bf16.mxu0 0
      %1799 = vmatmul.mubr.bf16.gmra.mrb[0].mxu0 %v1608
      %v1800 = vpop.f32.mrb[0].mxu0
      %v1801 = vadd.f32 0.0, %v1800
      %v1802 = vpop.f32.mrb[0].mxu0
      %v1803 = vpop.f32.mrb[0].mxu0
      %v1804 = vadd.f32 0.0, %v1803
      %v1805 = vpop.f32.mrb[0].mxu0
      %1806 = vmatprep.mubr.bf16.mxu0 0
      %1807 = vmatmul.mubr.bf16.gmra.mrb[0].mxu0 %v1609
      %v1808 = vpop.f32.mrb[0].mxu0
      %v1809 = vadd.f32 0.0, %v1808
      %v1810 = vpop.f32.mrb[0].mxu0
      %v1811 = vpop.f32.mrb[0].mxu0
      %v1812 = vadd.f32 0.0, %v1811
      %v1813 = vpop.f32.mrb[0].mxu0
      %1814 = vmatprep.mubr.bf16.mxu0 0
      %1815 = vmatmul.mubr.bf16.gmra.mrb[0].mxu0 %v1610
      %v1816 = vpop.f32.mrb[0].mxu0
      %v1817 = vadd.f32 0.0, %v1816
      %v1818 = vpop.f32.mrb[0].mxu0
      %v1819 = vpop.f32.mrb[0].mxu0
      %v1820 = vadd.f32 0.0, %v1819
      %v1821 = vpop.f32.mrb[0].mxu0
      %1822 = vmatprep.mubr.bf16.mxu0 0
      %1823 = vmatmul.mubr.bf16.gmra.mrb[0].mxu0 %v1611
      %v1824 = vpop.f32.mrb[0].mxu0
      %v1825 = vadd.f32 0.0, %v1824
      %v1826 = vpop.f32.mrb[0].mxu0
      %v1827 = vpop.f32.mrb[0].mxu0
      %v1828 = vadd.f32 0.0, %v1827
      %v1829 = vpop.f32.mrb[0].mxu0
      %1830 = vmatprep.mubr.bf16.mxu0 0
      %1831 = vmatmul.mubr.bf16.gmra.mrb[0].mxu0 %v1612
      %v1832 = vpop.f32.mrb[0].mxu0
      %v1833 = vadd.f32 0.0, %v1832
      %v1834 = vpop.f32.mrb[0].mxu0
      %v1835 = vpop.f32.mrb[0].mxu0
      %v1836 = vadd.f32 0.0, %v1835
      %v1837 = vpop.f32.mrb[0].mxu0
      %1838 = vdwg.mxu0
      %v1839 = vadd.f32 %v1533, %v1713
      %v1840 = vadd.f32 %v1534, %v1716
      %v1841 = vadd.f32 %v1535, %v1721
      %v1842 = vadd.f32 %v1536, %v1724
      %v1843 = vadd.f32 %v1537, %v1729
      %v1844 = vadd.f32 %v1538, %v1732
      %v1845 = vadd.f32 %v1539, %v1737
      %v1846 = vadd.f32 %v1540, %v1740
      %v1847 = vadd.f32 %v1541, %v1745
      %v1848 = vadd.f32 %v1542, %v1748
      %v1849 = vadd.f32 %v1543, %v1753
      %v1850 = vadd.f32 %v1544, %v1756
      %v1851 = vadd.f32 %v1545, %v1761
      %v1852 = vadd.f32 %v1546, %v1764
      %v1853 = vadd.f32 %v1547, %v1769
      %v1854 = vadd.f32 %v1548, %v1772
      %v1855 = vadd.f32 %v1549, %v1777
      %v1856 = vadd.f32 %v1550, %v1780
      %v1857 = vadd.f32 %v1551, %v1785
      %v1858 = vadd.f32 %v1552, %v1788
      %v1859 = vadd.f32 %v1553, %v1793
      %v1860 = vadd.f32 %v1554, %v1796
      %v1861 = vadd.f32 %v1555, %v1801
      %v1862 = vadd.f32 %v1556, %v1804
      %v1863 = vadd.f32 %v1557, %v1809
      %v1864 = vadd.f32 %v1558, %v1812
      %v1865 = vadd.f32 %v1559, %v1817
      %v1866 = vadd.f32 %v1560, %v1820
      %v1867 = vadd.f32 %v1561, %v1825
      %v1868 = vadd.f32 %v1562, %v1828
      %v1869 = vadd.f32 %v1563, %v1833
      %v1870 = vadd.f32 %v1564, %v1836
      %v1871 = vld [vmem:[%s235 + $0x9] sm:$0xff]
      %v1872 = vld [vmem:[%s235 + $0x11] sm:$0xff]
      %v1873 = vld [vmem:[%s235 + $0x29] sm:$0xff]
      %v1874 = vld [vmem:[%s235 + $0x31] sm:$0xff]
      %v1875 = vld [vmem:[%s235 + $0x49] sm:$0xff]
      %v1876 = vld [vmem:[%s235 + $0x51] sm:$0xff]
      %v1877 = vld [vmem:[%s235 + $0x69] sm:$0xff]
      %v1878 = vld [vmem:[%s235 + $0x71] sm:$0xff]
      %v1879 = vld [vmem:[%s235 + $0x89] sm:$0xff]
      %v1880 = vld [vmem:[%s235 + $0x91] sm:$0xff]
      %v1881 = vld [vmem:[%s235 + $0xa9] sm:$0xff]
      %v1882 = vld [vmem:[%s235 + $0xb1] sm:$0xff]
      %v1883 = vld [vmem:[%s235 + $0xc9] sm:$0xff]
      %v1884 = vld [vmem:[%s235 + $0xd1] sm:$0xff]
      %v1885 = vld [vmem:[%s235 + $0xe9] sm:$0xff]
      %v1886 = vld [vmem:[%s235 + $0xf1] sm:$0xff]
      %v1887 = vld [vmem:[%s235 + $0x109] sm:$0xff]
      %v1888 = vld [vmem:[%s235 + $0x111] sm:$0xff]
      %v1889 = vld [vmem:[%s235 + $0x129] sm:$0xff]
      %v1890 = vld [vmem:[%s235 + $0x131] sm:$0xff]
      %v1891 = vld [vmem:[%s235 + $0x149] sm:$0xff]
      %v1892 = vld [vmem:[%s235 + $0x151] sm:$0xff]
      %v1893 = vld [vmem:[%s235 + $0x169] sm:$0xff]
      %v1894 = vld [vmem:[%s235 + $0x171] sm:$0xff]
      %v1895 = vld [vmem:[%s235 + $0x189] sm:$0xff]
      %v1896 = vld [vmem:[%s235 + $0x191] sm:$0xff]
      %v1897 = vld [vmem:[%s235 + $0x1a9] sm:$0xff]
      %v1898 = vld [vmem:[%s235 + $0x1b1] sm:$0xff]
      %v1899 = vld [vmem:[%s235 + $0x1c9] sm:$0xff]
      %v1900 = vld [vmem:[%s235 + $0x1d1] sm:$0xff]
      %v1901 = vld [vmem:[%s235 + $0x1e9] sm:$0xff]
      %v1902 = vld [vmem:[%s235 + $0x1f1] sm:$0xff]
      %v1903 = vpack.c.bf16 %v1872, %v1871
      %v1904 = vpack.c.bf16 %v1874, %v1873
      %v1905 = vpack.c.bf16 %v1876, %v1875
      %v1906 = vpack.c.bf16 %v1878, %v1877
      %v1907 = vpack.c.bf16 %v1880, %v1879
      %v1908 = vpack.c.bf16 %v1882, %v1881
      %v1909 = vpack.c.bf16 %v1884, %v1883
      %v1910 = vpack.c.bf16 %v1886, %v1885
      %v1911 = vpack.c.bf16 %v1888, %v1887
      %v1912 = vpack.c.bf16 %v1890, %v1889
      %v1913 = vpack.c.bf16 %v1892, %v1891
      %v1914 = vpack.c.bf16 %v1894, %v1893
      %v1915 = vpack.c.bf16 %v1896, %v1895
      %v1916 = vpack.c.bf16 %v1898, %v1897
      %v1917 = vpack.c.bf16 %v1900, %v1899
      %v1918 = vpack.c.bf16 %v1902, %v1901
      %s1919 = scalar_lea.vmem %s1, 320
      %v1920 = vld [vmem:[%s1919] sm:$0xf]
      %v1921 = vld [vmem:[%s1919 + $0x4] sm:$0xf]
      %v1922 = vld [vmem:[%s1919 + $0x8] sm:$0xf]
      %v1923 = vld [vmem:[%s1919 + $0xc] sm:$0xf]
      %v1924 = vld [vmem:[%s1919 + $0x10] sm:$0xf]
      %v1925 = vld [vmem:[%s1919 + $0x14] sm:$0xf]
      %v1926 = vld [vmem:[%s1919 + $0x18] sm:$0xf]
      %v1927 = vld [vmem:[%s1919 + $0x1c] sm:$0xf]
      %v1928 = vld [vmem:[%s1919 + $0x20] sm:$0xf]
      %v1929 = vld [vmem:[%s1919 + $0x24] sm:$0xf]
      %v1930 = vld [vmem:[%s1919 + $0x28] sm:$0xf]
      %v1931 = vld [vmem:[%s1919 + $0x2c] sm:$0xf]
      %v1932 = vld [vmem:[%s1919 + $0x30] sm:$0xf]
      %v1933 = vld [vmem:[%s1919 + $0x34] sm:$0xf]
      %v1934 = vld [vmem:[%s1919 + $0x38] sm:$0xf]
      %v1935 = vld [vmem:[%s1919 + $0x3c] sm:$0xf]
      %v1952 = vunpack.c.l.b16 %v1920
      %v1953 = vunpack.c.l.b16 %v1921
      %v1954 = vunpack.c.l.b16 %v1922
      %v1955 = vunpack.c.l.b16 %v1923
      %v1956 = vunpack.c.l.b16 %v1924
      %v1957 = vunpack.c.l.b16 %v1925
      %v1958 = vunpack.c.l.b16 %v1926
      %v1959 = vunpack.c.l.b16 %v1927
      %v1960 = vunpack.c.l.b16 %v1928
      %v1961 = vunpack.c.l.b16 %v1929
      %v1962 = vunpack.c.l.b16 %v1930
      %v1963 = vunpack.c.l.b16 %v1931
      %v1964 = vunpack.c.l.b16 %v1932
      %v1965 = vunpack.c.l.b16 %v1933
      %v1966 = vunpack.c.l.b16 %v1934
      %v1967 = vunpack.c.l.b16 %v1935
      %v1968 = vpack.c.b16 %v1953, %v1952
      %v1969 = vpack.c.b16 %v1955, %v1954
      %v1970 = vpack.c.b16 %v1957, %v1956
      %v1971 = vpack.c.b16 %v1959, %v1958
      %v1972 = vpack.c.b16 %v1961, %v1960
      %v1973 = vpack.c.b16 %v1963, %v1962
      %v1974 = vpack.c.b16 %v1965, %v1964
      %v1975 = vpack.c.b16 %v1967, %v1966
      %1984 = vmatprep.subr.bf16.mxu0 0
      %1985 = vmatpush1.bf16.msra.mxu0 %v1968
      %1986 = vmatprep.subr.bf16.mxu0 0
      %1987 = vmatpush1.bf16.msra.mxu0 %v1969
      %1988 = vmatprep.subr.bf16.mxu0 0
      %1989 = vmatpush1.bf16.msra.mxu0 %v1970
      %1990 = vmatprep.subr.bf16.mxu0 0
      %1991 = vmatpush1.bf16.msra.mxu0 %v1971
      %1992 = vmatprep.subr.bf16.mxu0 0
      %1993 = vmatpush1.bf16.msra.mxu0 %v1972
      %1994 = vmatprep.subr.bf16.mxu0 0
      %1995 = vmatpush1.bf16.msra.mxu0 %v1973
      %1996 = vmatprep.subr.bf16.mxu0 0
      %1997 = vmatpush1.bf16.msra.mxu0 %v1974
      %1998 = vmatprep.subr.bf16.mxu0 0
      %1999 = vmatpush1.bf16.msra.mxu0 %v1975
      %2000 = vmatprep.subr.bf16.mxu0 0
      %2001 = vmatpush1.bf16.msra.mxu0 0
      %2002 = vmatprep.subr.bf16.mxu0 0
      %2003 = vmatpush1.bf16.msra.mxu0 0
      %2004 = vmatprep.subr.bf16.mxu0 0
      %2005 = vmatpush1.bf16.msra.mxu0 0
      %2006 = vmatprep.subr.bf16.mxu0 0
      %2007 = vmatpush1.bf16.msra.mxu0 0
      %2008 = vmatprep.subr.bf16.mxu0 0
      %2009 = vmatpush1.bf16.msra.mxu0 0
      %2010 = vmatprep.subr.bf16.mxu0 0
      %2011 = vmatpush1.bf16.msra.mxu0 0
      %2012 = vmatprep.subr.bf16.mxu0 0
      %2013 = vmatpush1.bf16.msra.mxu0 0
      %2014 = vmatprep.subr.bf16.mxu0 0
      %2015 = vmatpush1.bf16.msra.mxu0 0
      %2016 = vmatprep.mubr.bf16.mxu0 0
      %2017 = vmatmul.mubr.bf16.gmra.mrb[0].mxu0 %v1903
      %v2018 = vpop.f32.mrb[0].mxu0
      %v2019 = vadd.f32 0.0, %v2018
      %v2020 = vpop.f32.mrb[0].mxu0
      %v2021 = vpop.f32.mrb[0].mxu0
      %v2022 = vadd.f32 0.0, %v2021
      %v2023 = vpop.f32.mrb[0].mxu0
      %2024 = vmatprep.mubr.bf16.mxu0 0
      %2025 = vmatmul.mubr.bf16.gmra.mrb[0].mxu0 %v1904
      %v2026 = vpop.f32.mrb[0].mxu0
      %v2027 = vadd.f32 0.0, %v2026
      %v2028 = vpop.f32.mrb[0].mxu0
      %v2029 = vpop.f32.mrb[0].mxu0
      %v2030 = vadd.f32 0.0, %v2029
      %v2031 = vpop.f32.mrb[0].mxu0
      %2032 = vmatprep.mubr.bf16.mxu0 0
      %2033 = vmatmul.mubr.bf16.gmra.mrb[0].mxu0 %v1905
      %v2034 = vpop.f32.mrb[0].mxu0
      %v2035 = vadd.f32 0.0, %v2034
      %v2036 = vpop.f32.mrb[0].mxu0
      %v2037 = vpop.f32.mrb[0].mxu0
      %v2038 = vadd.f32 0.0, %v2037
      %v2039 = vpop.f32.mrb[0].mxu0
      %2040 = vmatprep.mubr.bf16.mxu0 0
      %2041 = vmatmul.mubr.bf16.gmra.mrb[0].mxu0 %v1906
      %v2042 = vpop.f32.mrb[0].mxu0
      %v2043 = vadd.f32 0.0, %v2042
      %v2044 = vpop.f32.mrb[0].mxu0
      %v2045 = vpop.f32.mrb[0].mxu0
      %v2046 = vadd.f32 0.0, %v2045
      %v2047 = vpop.f32.mrb[0].mxu0
      %2048 = vmatprep.mubr.bf16.mxu0 0
      %2049 = vmatmul.mubr.bf16.gmra.mrb[0].mxu0 %v1907
      %v2050 = vpop.f32.mrb[0].mxu0
      %v2051 = vadd.f32 0.0, %v2050
      %v2052 = vpop.f32.mrb[0].mxu0
      %v2053 = vpop.f32.mrb[0].mxu0
      %v2054 = vadd.f32 0.0, %v2053
      %v2055 = vpop.f32.mrb[0].mxu0
      %2056 = vmatprep.mubr.bf16.mxu0 0
      %2057 = vmatmul.mubr.bf16.gmra.mrb[0].mxu0 %v1908
      %v2058 = vpop.f32.mrb[0].mxu0
      %v2059 = vadd.f32 0.0, %v2058
      %v2060 = vpop.f32.mrb[0].mxu0
      %v2061 = vpop.f32.mrb[0].mxu0
      %v2062 = vadd.f32 0.0, %v2061
      %v2063 = vpop.f32.mrb[0].mxu0
      %2064 = vmatprep.mubr.bf16.mxu0 0
      %2065 = vmatmul.mubr.bf16.gmra.mrb[0].mxu0 %v1909
      %v2066 = vpop.f32.mrb[0].mxu0
      %v2067 = vadd.f32 0.0, %v2066
      %v2068 = vpop.f32.mrb[0].mxu0
      %v2069 = vpop.f32.mrb[0].mxu0
      %v2070 = vadd.f32 0.0, %v2069
      %v2071 = vpop.f32.mrb[0].mxu0
      %2072 = vmatprep.mubr.bf16.mxu0 0
      %2073 = vmatmul.mubr.bf16.gmra.mrb[0].mxu0 %v1910
      %v2074 = vpop.f32.mrb[0].mxu0
      %v2075 = vadd.f32 0.0, %v2074
      %v2076 = vpop.f32.mrb[0].mxu0
      %v2077 = vpop.f32.mrb[0].mxu0
      %v2078 = vadd.f32 0.0, %v2077
      %v2079 = vpop.f32.mrb[0].mxu0
      %2080 = vmatprep.mubr.bf16.mxu0 0
      %2081 = vmatmul.mubr.bf16.gmra.mrb[0].mxu0 %v1911
      %v2082 = vpop.f32.mrb[0].mxu0
      %v2083 = vadd.f32 0.0, %v2082
      %v2084 = vpop.f32.mrb[0].mxu0
      %v2085 = vpop.f32.mrb[0].mxu0
      %v2086 = vadd.f32 0.0, %v2085
      %v2087 = vpop.f32.mrb[0].mxu0
      %2088 = vmatprep.mubr.bf16.mxu0 0
      %2089 = vmatmul.mubr.bf16.gmra.mrb[0].mxu0 %v1912
      %v2090 = vpop.f32.mrb[0].mxu0
      %v2091 = vadd.f32 0.0, %v2090
      %v2092 = vpop.f32.mrb[0].mxu0
      %v2093 = vpop.f32.mrb[0].mxu0
      %v2094 = vadd.f32 0.0, %v2093
      %v2095 = vpop.f32.mrb[0].mxu0
      %2096 = vmatprep.mubr.bf16.mxu0 0
      %2097 = vmatmul.mubr.bf16.gmra.mrb[0].mxu0 %v1913
      %v2098 = vpop.f32.mrb[0].mxu0
      %v2099 = vadd.f32 0.0, %v2098
      %v2100 = vpop.f32.mrb[0].mxu0
      %v2101 = vpop.f32.mrb[0].mxu0
      %v2102 = vadd.f32 0.0, %v2101
      %v2103 = vpop.f32.mrb[0].mxu0
      %2104 = vmatprep.mubr.bf16.mxu0 0
      %2105 = vmatmul.mubr.bf16.gmra.mrb[0].mxu0 %v1914
      %v2106 = vpop.f32.mrb[0].mxu0
      %v2107 = vadd.f32 0.0, %v2106
      %v2108 = vpop.f32.mrb[0].mxu0
      %v2109 = vpop.f32.mrb[0].mxu0
      %v2110 = vadd.f32 0.0, %v2109
      %v2111 = vpop.f32.mrb[0].mxu0
      %2112 = vmatprep.mubr.bf16.mxu0 0
      %2113 = vmatmul.mubr.bf16.gmra.mrb[0].mxu0 %v1915
      %v2114 = vpop.f32.mrb[0].mxu0
      %v2115 = vadd.f32 0.0, %v2114
      %v2116 = vpop.f32.mrb[0].mxu0
      %v2117 = vpop.f32.mrb[0].mxu0
      %v2118 = vadd.f32 0.0, %v2117
      %v2119 = vpop.f32.mrb[0].mxu0
      %2120 = vmatprep.mubr.bf16.mxu0 0
      %2121 = vmatmul.mubr.bf16.gmra.mrb[0].mxu0 %v1916
      %v2122 = vpop.f32.mrb[0].mxu0
      %v2123 = vadd.f32 0.0, %v2122
      %v2124 = vpop.f32.mrb[0].mxu0
      %v2125 = vpop.f32.mrb[0].mxu0
      %v2126 = vadd.f32 0.0, %v2125
      %v2127 = vpop.f32.mrb[0].mxu0
      %2128 = vmatprep.mubr.bf16.mxu0 0
      %2129 = vmatmul.mubr.bf16.gmra.mrb[0].mxu0 %v1917
      %v2130 = vpop.f32.mrb[0].mxu0
      %v2131 = vadd.f32 0.0, %v2130
      %v2132 = vpop.f32.mrb[0].mxu0
      %v2133 = vpop.f32.mrb[0].mxu0
      %v2134 = vadd.f32 0.0, %v2133
      %v2135 = vpop.f32.mrb[0].mxu0
      %2136 = vmatprep.mubr.bf16.mxu0 0
      %2137 = vmatmul.mubr.bf16.gmra.mrb[0].mxu0 %v1918
      %v2138 = vpop.f32.mrb[0].mxu0
      %v2139 = vadd.f32 0.0, %v2138
      %v2140 = vpop.f32.mrb[0].mxu0
      %v2141 = vpop.f32.mrb[0].mxu0
      %v2142 = vadd.f32 0.0, %v2141
      %v2143 = vpop.f32.mrb[0].mxu0
      %2144 = vdwg.mxu0
      %v2145 = vadd.f32 %v1839, %v2019
      %v2146 = vadd.f32 %v1840, %v2022
      %v2147 = vadd.f32 %v1841, %v2027
      %v2148 = vadd.f32 %v1842, %v2030
      %v2149 = vadd.f32 %v1843, %v2035
      %v2150 = vadd.f32 %v1844, %v2038
      %v2151 = vadd.f32 %v1845, %v2043
      %v2152 = vadd.f32 %v1846, %v2046
      %v2153 = vadd.f32 %v1847, %v2051
      %v2154 = vadd.f32 %v1848, %v2054
      %v2155 = vadd.f32 %v1849, %v2059
      %v2156 = vadd.f32 %v1850, %v2062
      %v2157 = vadd.f32 %v1851, %v2067
      %v2158 = vadd.f32 %v1852, %v2070
      %v2159 = vadd.f32 %v1853, %v2075
      %v2160 = vadd.f32 %v1854, %v2078
      %v2161 = vadd.f32 %v1855, %v2083
      %v2162 = vadd.f32 %v1856, %v2086
      %v2163 = vadd.f32 %v1857, %v2091
      %v2164 = vadd.f32 %v1858, %v2094
      %v2165 = vadd.f32 %v1859, %v2099
      %v2166 = vadd.f32 %v1860, %v2102
      %v2167 = vadd.f32 %v1861, %v2107
      %v2168 = vadd.f32 %v1862, %v2110
      %v2169 = vadd.f32 %v1863, %v2115
      %v2170 = vadd.f32 %v1864, %v2118
      %v2171 = vadd.f32 %v1865, %v2123
      %v2172 = vadd.f32 %v1866, %v2126
      %v2173 = vadd.f32 %v1867, %v2131
      %v2174 = vadd.f32 %v1868, %v2134
      %v2175 = vadd.f32 %v1869, %v2139
      %v2176 = vadd.f32 %v1870, %v2142
      %s2177 = scalar_lea.vmem [#allocation2], 64
      %v2178 = vld [vmem:[%s2177 + $0x7] sm:$0xff]
      %v2179 = vld [vmem:[%s2177 + $0xf] sm:$0xff]
      %v2180 = vld [vmem:[%s2177 + $0x27] sm:$0xff]
      %v2181 = vld [vmem:[%s2177 + $0x2f] sm:$0xff]
      %v2182 = vld [vmem:[%s2177 + $0x47] sm:$0xff]
      %v2183 = vld [vmem:[%s2177 + $0x4f] sm:$0xff]
      %v2184 = vld [vmem:[%s2177 + $0x67] sm:$0xff]
      %v2185 = vld [vmem:[%s2177 + $0x6f] sm:$0xff]
      %v2186 = vld [vmem:[%s2177 + $0x87] sm:$0xff]
      %v2187 = vld [vmem:[%s2177 + $0x8f] sm:$0xff]
      %v2188 = vld [vmem:[%s2177 + $0xa7] sm:$0xff]
      %v2189 = vld [vmem:[%s2177 + $0xaf] sm:$0xff]
      %v2190 = vld [vmem:[%s2177 + $0xc7] sm:$0xff]
      %v2191 = vld [vmem:[%s2177 + $0xcf] sm:$0xff]
      %v2192 = vld [vmem:[%s2177 + $0xe7] sm:$0xff]
      %v2193 = vld [vmem:[%s2177 + $0xef] sm:$0xff]
      %v2194 = vld [vmem:[%s2177 + $0x107] sm:$0xff]
      %v2195 = vld [vmem:[%s2177 + $0x10f] sm:$0xff]
      %v2196 = vld [vmem:[%s2177 + $0x127] sm:$0xff]
      %v2197 = vld [vmem:[%s2177 + $0x12f] sm:$0xff]
      %v2198 = vld [vmem:[%s2177 + $0x147] sm:$0xff]
      %v2199 = vld [vmem:[%s2177 + $0x14f] sm:$0xff]
      %v2200 = vld [vmem:[%s2177 + $0x167] sm:$0xff]
      %v2201 = vld [vmem:[%s2177 + $0x16f] sm:$0xff]
      %v2202 = vld [vmem:[%s2177 + $0x187] sm:$0xff]
      %v2203 = vld [vmem:[%s2177 + $0x18f] sm:$0xff]
      %v2204 = vld [vmem:[%s2177 + $0x1a7] sm:$0xff]
      %v2205 = vld [vmem:[%s2177 + $0x1af] sm:$0xff]
      %v2206 = vld [vmem:[%s2177 + $0x1c7] sm:$0xff]
      %v2207 = vld [vmem:[%s2177 + $0x1cf] sm:$0xff]
      %v2208 = vld [vmem:[%s2177 + $0x1e7] sm:$0xff]
      %v2209 = vld [vmem:[%s2177 + $0x1ef] sm:$0xff]
      %v2210 = vpack.c.bf16 %v2179, %v2178
      %v2211 = vpack.c.bf16 %v2181, %v2180
      %v2212 = vpack.c.bf16 %v2183, %v2182
      %v2213 = vpack.c.bf16 %v2185, %v2184
      %v2214 = vpack.c.bf16 %v2187, %v2186
      %v2215 = vpack.c.bf16 %v2189, %v2188
      %v2216 = vpack.c.bf16 %v2191, %v2190
      %v2217 = vpack.c.bf16 %v2193, %v2192
      %v2218 = vpack.c.bf16 %v2195, %v2194
      %v2219 = vpack.c.bf16 %v2197, %v2196
      %v2220 = vpack.c.bf16 %v2199, %v2198
      %v2221 = vpack.c.bf16 %v2201, %v2200
      %v2222 = vpack.c.bf16 %v2203, %v2202
      %v2223 = vpack.c.bf16 %v2205, %v2204
      %v2224 = vpack.c.bf16 %v2207, %v2206
      %v2225 = vpack.c.bf16 %v2209, %v2208
      %s2226 = scalar_lea.vmem %s1, 384
      %v2227 = vld [vmem:[%s2226] sm:$0xf]
      %v2228 = vld [vmem:[%s2226 + $0x4] sm:$0xf]
      %v2229 = vld [vmem:[%s2226 + $0x8] sm:$0xf]
      %v2230 = vld [vmem:[%s2226 + $0xc] sm:$0xf]
      %v2231 = vld [vmem:[%s2226 + $0x10] sm:$0xf]
      %v2232 = vld [vmem:[%s2226 + $0x14] sm:$0xf]
      %v2233 = vld [vmem:[%s2226 + $0x18] sm:$0xf]
      %v2234 = vld [vmem:[%s2226 + $0x1c] sm:$0xf]
      %v2235 = vld [vmem:[%s2226 + $0x20] sm:$0xf]
      %v2236 = vld [vmem:[%s2226 + $0x24] sm:$0xf]
      %v2237 = vld [vmem:[%s2226 + $0x28] sm:$0xf]
      %v2238 = vld [vmem:[%s2226 + $0x2c] sm:$0xf]
      %v2239 = vld [vmem:[%s2226 + $0x30] sm:$0xf]
      %v2240 = vld [vmem:[%s2226 + $0x34] sm:$0xf]
      %v2241 = vld [vmem:[%s2226 + $0x38] sm:$0xf]
      %v2242 = vld [vmem:[%s2226 + $0x3c] sm:$0xf]
      %v2259 = vunpack.c.l.b16 %v2227
      %v2260 = vunpack.c.l.b16 %v2228
      %v2261 = vunpack.c.l.b16 %v2229
      %v2262 = vunpack.c.l.b16 %v2230
      %v2263 = vunpack.c.l.b16 %v2231
      %v2264 = vunpack.c.l.b16 %v2232
      %v2265 = vunpack.c.l.b16 %v2233
      %v2266 = vunpack.c.l.b16 %v2234
      %v2267 = vunpack.c.l.b16 %v2235
      %v2268 = vunpack.c.l.b16 %v2236
      %v2269 = vunpack.c.l.b16 %v2237
      %v2270 = vunpack.c.l.b16 %v2238
      %v2271 = vunpack.c.l.b16 %v2239
      %v2272 = vunpack.c.l.b16 %v2240
      %v2273 = vunpack.c.l.b16 %v2241
      %v2274 = vunpack.c.l.b16 %v2242
      %v2275 = vpack.c.b16 %v2260, %v2259
      %v2276 = vpack.c.b16 %v2262, %v2261
      %v2277 = vpack.c.b16 %v2264, %v2263
      %v2278 = vpack.c.b16 %v2266, %v2265
      %v2279 = vpack.c.b16 %v2268, %v2267
      %v2280 = vpack.c.b16 %v2270, %v2269
      %v2281 = vpack.c.b16 %v2272, %v2271
      %v2282 = vpack.c.b16 %v2274, %v2273
      %2291 = vmatprep.subr.bf16.mxu0 0
      %2292 = vmatpush1.bf16.msra.mxu0 %v2275
      %2293 = vmatprep.subr.bf16.mxu0 0
      %2294 = vmatpush1.bf16.msra.mxu0 %v2276
      %2295 = vmatprep.subr.bf16.mxu0 0
      %2296 = vmatpush1.bf16.msra.mxu0 %v2277
      %2297 = vmatprep.subr.bf16.mxu0 0
      %2298 = vmatpush1.bf16.msra.mxu0 %v2278
      %2299 = vmatprep.subr.bf16.mxu0 0
      %2300 = vmatpush1.bf16.msra.mxu0 %v2279
      %2301 = vmatprep.subr.bf16.mxu0 0
      %2302 = vmatpush1.bf16.msra.mxu0 %v2280
      %2303 = vmatprep.subr.bf16.mxu0 0
      %2304 = vmatpush1.bf16.msra.mxu0 %v2281
      %2305 = vmatprep.subr.bf16.mxu0 0
      %2306 = vmatpush1.bf16.msra.mxu0 %v2282
      %2307 = vmatprep.subr.bf16.mxu0 0
      %2308 = vmatpush1.bf16.msra.mxu0 0
      %2309 = vmatprep.subr.bf16.mxu0 0
      %2310 = vmatpush1.bf16.msra.mxu0 0
      %2311 = vmatprep.subr.bf16.mxu0 0
      %2312 = vmatpush1.bf16.msra.mxu0 0
      %2313 = vmatprep.subr.bf16.mxu0 0
      %2314 = vmatpush1.bf16.msra.mxu0 0
      %2315 = vmatprep.subr.bf16.mxu0 0
      %2316 = vmatpush1.bf16.msra.mxu0 0
      %2317 = vmatprep.subr.bf16.mxu0 0
      %2318 = vmatpush1.bf16.msra.mxu0 0
      %2319 = vmatprep.subr.bf16.mxu0 0
      %2320 = vmatpush1.bf16.msra.mxu0 0
      %2321 = vmatprep.subr.bf16.mxu0 0
      %2322 = vmatpush1.bf16.msra.mxu0 0
      %2323 = vmatprep.mubr.bf16.mxu0 0
      %2324 = vmatmul.mubr.bf16.gmra.mrb[0].mxu0 %v2210
      %v2325 = vpop.f32.mrb[0].mxu0
      %v2326 = vadd.f32 0.0, %v2325
      %v2327 = vpop.f32.mrb[0].mxu0
      %v2328 = vpop.f32.mrb[0].mxu0
      %v2329 = vadd.f32 0.0, %v2328
      %v2330 = vpop.f32.mrb[0].mxu0
      %2331 = vmatprep.mubr.bf16.mxu0 0
      %2332 = vmatmul.mubr.bf16.gmra.mrb[0].mxu0 %v2211
      %v2333 = vpop.f32.mrb[0].mxu0
      %v2334 = vadd.f32 0.0, %v2333
      %v2335 = vpop.f32.mrb[0].mxu0
      %v2336 = vpop.f32.mrb[0].mxu0
      %v2337 = vadd.f32 0.0, %v2336
      %v2338 = vpop.f32.mrb[0].mxu0
      %2339 = vmatprep.mubr.bf16.mxu0 0
      %2340 = vmatmul.mubr.bf16.gmra.mrb[0].mxu0 %v2212
      %v2341 = vpop.f32.mrb[0].mxu0
      %v2342 = vadd.f32 0.0, %v2341
      %v2343 = vpop.f32.mrb[0].mxu0
      %v2344 = vpop.f32.mrb[0].mxu0
      %v2345 = vadd.f32 0.0, %v2344
      %v2346 = vpop.f32.mrb[0].mxu0
      %2347 = vmatprep.mubr.bf16.mxu0 0
      %2348 = vmatmul.mubr.bf16.gmra.mrb[0].mxu0 %v2213
      %v2349 = vpop.f32.mrb[0].mxu0
      %v2350 = vadd.f32 0.0, %v2349
      %v2351 = vpop.f32.mrb[0].mxu0
      %v2352 = vpop.f32.mrb[0].mxu0
      %v2353 = vadd.f32 0.0, %v2352
      %v2354 = vpop.f32.mrb[0].mxu0
      %2355 = vmatprep.mubr.bf16.mxu0 0
      %2356 = vmatmul.mubr.bf16.gmra.mrb[0].mxu0 %v2214
      %v2357 = vpop.f32.mrb[0].mxu0
      %v2358 = vadd.f32 0.0, %v2357
      %v2359 = vpop.f32.mrb[0].mxu0
      %v2360 = vpop.f32.mrb[0].mxu0
      %v2361 = vadd.f32 0.0, %v2360
      %v2362 = vpop.f32.mrb[0].mxu0
      %2363 = vmatprep.mubr.bf16.mxu0 0
      %2364 = vmatmul.mubr.bf16.gmra.mrb[0].mxu0 %v2215
      %v2365 = vpop.f32.mrb[0].mxu0
      %v2366 = vadd.f32 0.0, %v2365
      %v2367 = vpop.f32.mrb[0].mxu0
      %v2368 = vpop.f32.mrb[0].mxu0
      %v2369 = vadd.f32 0.0, %v2368
      %v2370 = vpop.f32.mrb[0].mxu0
      %2371 = vmatprep.mubr.bf16.mxu0 0
      %2372 = vmatmul.mubr.bf16.gmra.mrb[0].mxu0 %v2216
      %v2373 = vpop.f32.mrb[0].mxu0
      %v2374 = vadd.f32 0.0, %v2373
      %v2375 = vpop.f32.mrb[0].mxu0
      %v2376 = vpop.f32.mrb[0].mxu0
      %v2377 = vadd.f32 0.0, %v2376
      %v2378 = vpop.f32.mrb[0].mxu0
      %2379 = vmatprep.mubr.bf16.mxu0 0
      %2380 = vmatmul.mubr.bf16.gmra.mrb[0].mxu0 %v2217
      %v2381 = vpop.f32.mrb[0].mxu0
      %v2382 = vadd.f32 0.0, %v2381
      %v2383 = vpop.f32.mrb[0].mxu0
      %v2384 = vpop.f32.mrb[0].mxu0
      %v2385 = vadd.f32 0.0, %v2384
      %v2386 = vpop.f32.mrb[0].mxu0
      %2387 = vmatprep.mubr.bf16.mxu0 0
      %2388 = vmatmul.mubr.bf16.gmra.mrb[0].mxu0 %v2218
      %v2389 = vpop.f32.mrb[0].mxu0
      %v2390 = vadd.f32 0.0, %v2389
      %v2391 = vpop.f32.mrb[0].mxu0
      %v2392 = vpop.f32.mrb[0].mxu0
      %v2393 = vadd.f32 0.0, %v2392
      %v2394 = vpop.f32.mrb[0].mxu0
      %2395 = vmatprep.mubr.bf16.mxu0 0
      %2396 = vmatmul.mubr.bf16.gmra.mrb[0].mxu0 %v2219
      %v2397 = vpop.f32.mrb[0].mxu0
      %v2398 = vadd.f32 0.0, %v2397
      %v2399 = vpop.f32.mrb[0].mxu0
      %v2400 = vpop.f32.mrb[0].mxu0
      %v2401 = vadd.f32 0.0, %v2400
      %v2402 = vpop.f32.mrb[0].mxu0
      %2403 = vmatprep.mubr.bf16.mxu0 0
      %2404 = vmatmul.mubr.bf16.gmra.mrb[0].mxu0 %v2220
      %v2405 = vpop.f32.mrb[0].mxu0
      %v2406 = vadd.f32 0.0, %v2405
      %v2407 = vpop.f32.mrb[0].mxu0
      %v2408 = vpop.f32.mrb[0].mxu0
      %v2409 = vadd.f32 0.0, %v2408
      %v2410 = vpop.f32.mrb[0].mxu0
      %2411 = vmatprep.mubr.bf16.mxu0 0
      %2412 = vmatmul.mubr.bf16.gmra.mrb[0].mxu0 %v2221
      %v2413 = vpop.f32.mrb[0].mxu0
      %v2414 = vadd.f32 0.0, %v2413
      %v2415 = vpop.f32.mrb[0].mxu0
      %v2416 = vpop.f32.mrb[0].mxu0
      %v2417 = vadd.f32 0.0, %v2416
      %v2418 = vpop.f32.mrb[0].mxu0
      %2419 = vmatprep.mubr.bf16.mxu0 0
      %2420 = vmatmul.mubr.bf16.gmra.mrb[0].mxu0 %v2222
      %v2421 = vpop.f32.mrb[0].mxu0
      %v2422 = vadd.f32 0.0, %v2421
      %v2423 = vpop.f32.mrb[0].mxu0
      %v2424 = vpop.f32.mrb[0].mxu0
      %v2425 = vadd.f32 0.0, %v2424
      %v2426 = vpop.f32.mrb[0].mxu0
      %2427 = vmatprep.mubr.bf16.mxu0 0
      %2428 = vmatmul.mubr.bf16.gmra.mrb[0].mxu0 %v2223
      %v2429 = vpop.f32.mrb[0].mxu0
      %v2430 = vadd.f32 0.0, %v2429
      %v2431 = vpop.f32.mrb[0].mxu0
      %v2432 = vpop.f32.mrb[0].mxu0
      %v2433 = vadd.f32 0.0, %v2432
      %v2434 = vpop.f32.mrb[0].mxu0
      %2435 = vmatprep.mubr.bf16.mxu0 0
      %2436 = vmatmul.mubr.bf16.gmra.mrb[0].mxu0 %v2224
      %v2437 = vpop.f32.mrb[0].mxu0
      %v2438 = vadd.f32 0.0, %v2437
      %v2439 = vpop.f32.mrb[0].mxu0
      %v2440 = vpop.f32.mrb[0].mxu0
      %v2441 = vadd.f32 0.0, %v2440
      %v2442 = vpop.f32.mrb[0].mxu0
      %2443 = vmatprep.mubr.bf16.mxu0 0
      %2444 = vmatmul.mubr.bf16.gmra.mrb[0].mxu0 %v2225
      %v2445 = vpop.f32.mrb[0].mxu0
      %v2446 = vadd.f32 0.0, %v2445
      %v2447 = vpop.f32.mrb[0].mxu0
      %v2448 = vpop.f32.mrb[0].mxu0
      %v2449 = vadd.f32 0.0, %v2448
      %v2450 = vpop.f32.mrb[0].mxu0
      %2451 = vdwg.mxu0
      %v2452 = vadd.f32 %v2145, %v2326
      %v2453 = vadd.f32 %v2146, %v2329
      %v2454 = vadd.f32 %v2147, %v2334
      %v2455 = vadd.f32 %v2148, %v2337
      %v2456 = vadd.f32 %v2149, %v2342
      %v2457 = vadd.f32 %v2150, %v2345
      %v2458 = vadd.f32 %v2151, %v2350
      %v2459 = vadd.f32 %v2152, %v2353
      %v2460 = vadd.f32 %v2153, %v2358
      %v2461 = vadd.f32 %v2154, %v2361
      %v2462 = vadd.f32 %v2155, %v2366
      %v2463 = vadd.f32 %v2156, %v2369
      %v2464 = vadd.f32 %v2157, %v2374
      %v2465 = vadd.f32 %v2158, %v2377
      %v2466 = vadd.f32 %v2159, %v2382
      %v2467 = vadd.f32 %v2160, %v2385
      %v2468 = vadd.f32 %v2161, %v2390
      %v2469 = vadd.f32 %v2162, %v2393
      %v2470 = vadd.f32 %v2163, %v2398
      %v2471 = vadd.f32 %v2164, %v2401
      %v2472 = vadd.f32 %v2165, %v2406
      %v2473 = vadd.f32 %v2166, %v2409
      %v2474 = vadd.f32 %v2167, %v2414
      %v2475 = vadd.f32 %v2168, %v2417
      %v2476 = vadd.f32 %v2169, %v2422
      %v2477 = vadd.f32 %v2170, %v2425
      %v2478 = vadd.f32 %v2171, %v2430
      %v2479 = vadd.f32 %v2172, %v2433
      %v2480 = vadd.f32 %v2173, %v2438
      %v2481 = vadd.f32 %v2174, %v2441
      %v2482 = vadd.f32 %v2175, %v2446
      %v2483 = vadd.f32 %v2176, %v2449
      %v2484 = vld [vmem:[%s2177 + $0x8] sm:$0xff]
      %v2485 = vld [vmem:[%s2177 + $0x10] sm:$0xff]
      %v2486 = vld [vmem:[%s2177 + $0x28] sm:$0xff]
      %v2487 = vld [vmem:[%s2177 + $0x30] sm:$0xff]
      %v2488 = vld [vmem:[%s2177 + $0x48] sm:$0xff]
      %v2489 = vld [vmem:[%s2177 + $0x50] sm:$0xff]
      %v2490 = vld [vmem:[%s2177 + $0x68] sm:$0xff]
      %v2491 = vld [vmem:[%s2177 + $0x70] sm:$0xff]
      %v2492 = vld [vmem:[%s2177 + $0x88] sm:$0xff]
      %v2493 = vld [vmem:[%s2177 + $0x90] sm:$0xff]
      %v2494 = vld [vmem:[%s2177 + $0xa8] sm:$0xff]
      %v2495 = vld [vmem:[%s2177 + $0xb0] sm:$0xff]
      %v2496 = vld [vmem:[%s2177 + $0xc8] sm:$0xff]
      %v2497 = vld [vmem:[%s2177 + $0xd0] sm:$0xff]
      %v2498 = vld [vmem:[%s2177 + $0xe8] sm:$0xff]
      %v2499 = vld [vmem:[%s2177 + $0xf0] sm:$0xff]
      %v2500 = vld [vmem:[%s2177 + $0x108] sm:$0xff]
      %v2501 = vld [vmem:[%s2177 + $0x110] sm:$0xff]
      %v2502 = vld [vmem:[%s2177 + $0x128] sm:$0xff]
      %v2503 = vld [vmem:[%s2177 + $0x130] sm:$0xff]
      %v2504 = vld [vmem:[%s2177 + $0x148] sm:$0xff]
      %v2505 = vld [vmem:[%s2177 + $0x150] sm:$0xff]
      %v2506 = vld [vmem:[%s2177 + $0x168] sm:$0xff]
      %v2507 = vld [vmem:[%s2177 + $0x170] sm:$0xff]
      %v2508 = vld [vmem:[%s2177 + $0x188] sm:$0xff]
      %v2509 = vld [vmem:[%s2177 + $0x190] sm:$0xff]
      %v2510 = vld [vmem:[%s2177 + $0x1a8] sm:$0xff]
      %v2511 = vld [vmem:[%s2177 + $0x1b0] sm:$0xff]
      %v2512 = vld [vmem:[%s2177 + $0x1c8] sm:$0xff]
      %v2513 = vld [vmem:[%s2177 + $0x1d0] sm:$0xff]
      %v2514 = vld [vmem:[%s2177 + $0x1e8] sm:$0xff]
      %v2515 = vld [vmem:[%s2177 + $0x1f0] sm:$0xff]
      %v2516 = vpack.c.bf16 %v2485, %v2484
      %v2517 = vpack.c.bf16 %v2487, %v2486
      %v2518 = vpack.c.bf16 %v2489, %v2488
      %v2519 = vpack.c.bf16 %v2491, %v2490
      %v2520 = vpack.c.bf16 %v2493, %v2492
      %v2521 = vpack.c.bf16 %v2495, %v2494
      %v2522 = vpack.c.bf16 %v2497, %v2496
      %v2523 = vpack.c.bf16 %v2499, %v2498
      %v2524 = vpack.c.bf16 %v2501, %v2500
      %v2525 = vpack.c.bf16 %v2503, %v2502
      %v2526 = vpack.c.bf16 %v2505, %v2504
      %v2527 = vpack.c.bf16 %v2507, %v2506
      %v2528 = vpack.c.bf16 %v2509, %v2508
      %v2529 = vpack.c.bf16 %v2511, %v2510
      %v2530 = vpack.c.bf16 %v2513, %v2512
      %v2531 = vpack.c.bf16 %v2515, %v2514
      %s2532 = scalar_lea.vmem %s1, 448
      %v2533 = vld [vmem:[%s2532] sm:$0xf]
      %v2534 = vld [vmem:[%s2532 + $0x4] sm:$0xf]
      %v2535 = vld [vmem:[%s2532 + $0x8] sm:$0xf]
      %v2536 = vld [vmem:[%s2532 + $0xc] sm:$0xf]
      %v2537 = vld [vmem:[%s2532 + $0x10] sm:$0xf]
      %v2538 = vld [vmem:[%s2532 + $0x14] sm:$0xf]
      %v2539 = vld [vmem:[%s2532 + $0x18] sm:$0xf]
      %v2540 = vld [vmem:[%s2532 + $0x1c] sm:$0xf]
      %v2541 = vld [vmem:[%s2532 + $0x20] sm:$0xf]
      %v2542 = vld [vmem:[%s2532 + $0x24] sm:$0xf]
      %v2543 = vld [vmem:[%s2532 + $0x28] sm:$0xf]
      %v2544 = vld [vmem:[%s2532 + $0x2c] sm:$0xf]
      %v2545 = vld [vmem:[%s2532 + $0x30] sm:$0xf]
      %v2546 = vld [vmem:[%s2532 + $0x34] sm:$0xf]
      %v2547 = vld [vmem:[%s2532 + $0x38] sm:$0xf]
      %v2548 = vld [vmem:[%s2532 + $0x3c] sm:$0xf]
      %v2565 = vunpack.c.l.b16 %v2533
      %v2566 = vunpack.c.l.b16 %v2534
      %v2567 = vunpack.c.l.b16 %v2535
      %v2568 = vunpack.c.l.b16 %v2536
      %v2569 = vunpack.c.l.b16 %v2537
      %v2570 = vunpack.c.l.b16 %v2538
      %v2571 = vunpack.c.l.b16 %v2539
      %v2572 = vunpack.c.l.b16 %v2540
      %v2573 = vunpack.c.l.b16 %v2541
      %v2574 = vunpack.c.l.b16 %v2542
      %v2575 = vunpack.c.l.b16 %v2543
      %v2576 = vunpack.c.l.b16 %v2544
      %v2577 = vunpack.c.l.b16 %v2545
      %v2578 = vunpack.c.l.b16 %v2546
      %v2579 = vunpack.c.l.b16 %v2547
      %v2580 = vunpack.c.l.b16 %v2548
      %v2581 = vpack.c.b16 %v2566, %v2565
      %v2582 = vpack.c.b16 %v2568, %v2567
      %v2583 = vpack.c.b16 %v2570, %v2569
      %v2584 = vpack.c.b16 %v2572, %v2571
      %v2585 = vpack.c.b16 %v2574, %v2573
      %v2586 = vpack.c.b16 %v2576, %v2575
      %v2587 = vpack.c.b16 %v2578, %v2577
      %v2588 = vpack.c.b16 %v2580, %v2579
      %2597 = vmatprep.subr.bf16.mxu0 0
      %2598 = vmatpush1.bf16.msra.mxu0 %v2581
      %2599 = vmatprep.subr.bf16.mxu0 0
      %2600 = vmatpush1.bf16.msra.mxu0 %v2582
      %2601 = vmatprep.subr.bf16.mxu0 0
      %2602 = vmatpush1.bf16.msra.mxu0 %v2583
      %2603 = vmatprep.subr.bf16.mxu0 0
      %2604 = vmatpush1.bf16.msra.mxu0 %v2584
      %2605 = vmatprep.subr.bf16.mxu0 0
      %2606 = vmatpush1.bf16.msra.mxu0 %v2585
      %2607 = vmatprep.subr.bf16.mxu0 0
      %2608 = vmatpush1.bf16.msra.mxu0 %v2586
      %2609 = vmatprep.subr.bf16.mxu0 0
      %2610 = vmatpush1.bf16.msra.mxu0 %v2587
      %2611 = vmatprep.subr.bf16.mxu0 0
      %2612 = vmatpush1.bf16.msra.mxu0 %v2588
      %2613 = vmatprep.subr.bf16.mxu0 0
      %2614 = vmatpush1.bf16.msra.mxu0 0
      %2615 = vmatprep.subr.bf16.mxu0 0
      %2616 = vmatpush1.bf16.msra.mxu0 0
      %2617 = vmatprep.subr.bf16.mxu0 0
      %2618 = vmatpush1.bf16.msra.mxu0 0
      %2619 = vmatprep.subr.bf16.mxu0 0
      %2620 = vmatpush1.bf16.msra.mxu0 0
      %2621 = vmatprep.subr.bf16.mxu0 0
      %2622 = vmatpush1.bf16.msra.mxu0 0
      %2623 = vmatprep.subr.bf16.mxu0 0
      %2624 = vmatpush1.bf16.msra.mxu0 0
      %2625 = vmatprep.subr.bf16.mxu0 0
      %2626 = vmatpush1.bf16.msra.mxu0 0
      %2627 = vmatprep.subr.bf16.mxu0 0
      %2628 = vmatpush1.bf16.msra.mxu0 0
      %2629 = vmatprep.mubr.bf16.mxu0 0
      %2630 = vmatmul.mubr.bf16.gmra.mrb[0].mxu0 %v2516
      %v2631 = vpop.f32.mrb[0].mxu0
      %v2632 = vadd.f32 0.0, %v2631
      %v2633 = vpop.f32.mrb[0].mxu0
      %v2634 = vpop.f32.mrb[0].mxu0
      %v2635 = vadd.f32 0.0, %v2634
      %v2636 = vpop.f32.mrb[0].mxu0
      %2637 = vmatprep.mubr.bf16.mxu0 0
      %2638 = vmatmul.mubr.bf16.gmra.mrb[0].mxu0 %v2517
      %v2639 = vpop.f32.mrb[0].mxu0
      %v2640 = vadd.f32 0.0, %v2639
      %v2641 = vpop.f32.mrb[0].mxu0
      %v2642 = vpop.f32.mrb[0].mxu0
      %v2643 = vadd.f32 0.0, %v2642
      %v2644 = vpop.f32.mrb[0].mxu0
      %2645 = vmatprep.mubr.bf16.mxu0 0
      %2646 = vmatmul.mubr.bf16.gmra.mrb[0].mxu0 %v2518
      %v2647 = vpop.f32.mrb[0].mxu0
      %v2648 = vadd.f32 0.0, %v2647
      %v2649 = vpop.f32.mrb[0].mxu0
      %v2650 = vpop.f32.mrb[0].mxu0
      %v2651 = vadd.f32 0.0, %v2650
      %v2652 = vpop.f32.mrb[0].mxu0
      %2653 = vmatprep.mubr.bf16.mxu0 0
      %2654 = vmatmul.mubr.bf16.gmra.mrb[0].mxu0 %v2519
      %v2655 = vpop.f32.mrb[0].mxu0
      %v2656 = vadd.f32 0.0, %v2655
      %v2657 = vpop.f32.mrb[0].mxu0
      %v2658 = vpop.f32.mrb[0].mxu0
      %v2659 = vadd.f32 0.0, %v2658
      %v2660 = vpop.f32.mrb[0].mxu0
      %2661 = vmatprep.mubr.bf16.mxu0 0
      %2662 = vmatmul.mubr.bf16.gmra.mrb[0].mxu0 %v2520
      %v2663 = vpop.f32.mrb[0].mxu0
      %v2664 = vadd.f32 0.0, %v2663
      %v2665 = vpop.f32.mrb[0].mxu0
      %v2666 = vpop.f32.mrb[0].mxu0
      %v2667 = vadd.f32 0.0, %v2666
      %v2668 = vpop.f32.mrb[0].mxu0
      %2669 = vmatprep.mubr.bf16.mxu0 0
      %2670 = vmatmul.mubr.bf16.gmra.mrb[0].mxu0 %v2521
      %v2671 = vpop.f32.mrb[0].mxu0
      %v2672 = vadd.f32 0.0, %v2671
      %v2673 = vpop.f32.mrb[0].mxu0
      %v2674 = vpop.f32.mrb[0].mxu0
      %v2675 = vadd.f32 0.0, %v2674
      %v2676 = vpop.f32.mrb[0].mxu0
      %2677 = vmatprep.mubr.bf16.mxu0 0
      %2678 = vmatmul.mubr.bf16.gmra.mrb[0].mxu0 %v2522
      %v2679 = vpop.f32.mrb[0].mxu0
      %v2680 = vadd.f32 0.0, %v2679
      %v2681 = vpop.f32.mrb[0].mxu0
      %v2682 = vpop.f32.mrb[0].mxu0
      %v2683 = vadd.f32 0.0, %v2682
      %v2684 = vpop.f32.mrb[0].mxu0
      %2685 = vmatprep.mubr.bf16.mxu0 0
      %2686 = vmatmul.mubr.bf16.gmra.mrb[0].mxu0 %v2523
      %v2687 = vpop.f32.mrb[0].mxu0
      %v2688 = vadd.f32 0.0, %v2687
      %v2689 = vpop.f32.mrb[0].mxu0
      %v2690 = vpop.f32.mrb[0].mxu0
      %v2691 = vadd.f32 0.0, %v2690
      %v2692 = vpop.f32.mrb[0].mxu0
      %2693 = vmatprep.mubr.bf16.mxu0 0
      %2694 = vmatmul.mubr.bf16.gmra.mrb[0].mxu0 %v2524
      %v2695 = vpop.f32.mrb[0].mxu0
      %v2696 = vadd.f32 0.0, %v2695
      %v2697 = vpop.f32.mrb[0].mxu0
      %v2698 = vpop.f32.mrb[0].mxu0
      %v2699 = vadd.f32 0.0, %v2698
      %v2700 = vpop.f32.mrb[0].mxu0
      %2701 = vmatprep.mubr.bf16.mxu0 0
      %2702 = vmatmul.mubr.bf16.gmra.mrb[0].mxu0 %v2525
      %v2703 = vpop.f32.mrb[0].mxu0
      %v2704 = vadd.f32 0.0, %v2703
      %v2705 = vpop.f32.mrb[0].mxu0
      %v2706 = vpop.f32.mrb[0].mxu0
      %v2707 = vadd.f32 0.0, %v2706
      %v2708 = vpop.f32.mrb[0].mxu0
      %2709 = vmatprep.mubr.bf16.mxu0 0
      %2710 = vmatmul.mubr.bf16.gmra.mrb[0].mxu0 %v2526
      %v2711 = vpop.f32.mrb[0].mxu0
      %v2712 = vadd.f32 0.0, %v2711
      %v2713 = vpop.f32.mrb[0].mxu0
      %v2714 = vpop.f32.mrb[0].mxu0
      %v2715 = vadd.f32 0.0, %v2714
      %v2716 = vpop.f32.mrb[0].mxu0
      %2717 = vmatprep.mubr.bf16.mxu0 0
      %2718 = vmatmul.mubr.bf16.gmra.mrb[0].mxu0 %v2527
      %v2719 = vpop.f32.mrb[0].mxu0
      %v2720 = vadd.f32 0.0, %v2719
      %v2721 = vpop.f32.mrb[0].mxu0
      %v2722 = vpop.f32.mrb[0].mxu0
      %v2723 = vadd.f32 0.0, %v2722
      %v2724 = vpop.f32.mrb[0].mxu0
      %2725 = vmatprep.mubr.bf16.mxu0 0
      %2726 = vmatmul.mubr.bf16.gmra.mrb[0].mxu0 %v2528
      %v2727 = vpop.f32.mrb[0].mxu0
      %v2728 = vadd.f32 0.0, %v2727
      %v2729 = vpop.f32.mrb[0].mxu0
      %v2730 = vpop.f32.mrb[0].mxu0
      %v2731 = vadd.f32 0.0, %v2730
      %v2732 = vpop.f32.mrb[0].mxu0
      %2733 = vmatprep.mubr.bf16.mxu0 0
      %2734 = vmatmul.mubr.bf16.gmra.mrb[0].mxu0 %v2529
      %v2735 = vpop.f32.mrb[0].mxu0
      %v2736 = vadd.f32 0.0, %v2735
      %v2737 = vpop.f32.mrb[0].mxu0
      %v2738 = vpop.f32.mrb[0].mxu0
      %v2739 = vadd.f32 0.0, %v2738
      %v2740 = vpop.f32.mrb[0].mxu0
      %2741 = vmatprep.mubr.bf16.mxu0 0
      %2742 = vmatmul.mubr.bf16.gmra.mrb[0].mxu0 %v2530
      %v2743 = vpop.f32.mrb[0].mxu0
      %v2744 = vadd.f32 0.0, %v2743
      %v2745 = vpop.f32.mrb[0].mxu0
      %v2746 = vpop.f32.mrb[0].mxu0
      %v2747 = vadd.f32 0.0, %v2746
      %v2748 = vpop.f32.mrb[0].mxu0
      %2749 = vmatprep.mubr.bf16.mxu0 0
      %2750 = vmatmul.mubr.bf16.gmra.mrb[0].mxu0 %v2531
      %v2751 = vpop.f32.mrb[0].mxu0
      %v2752 = vadd.f32 0.0, %v2751
      %v2753 = vpop.f32.mrb[0].mxu0
      %v2754 = vpop.f32.mrb[0].mxu0
      %v2755 = vadd.f32 0.0, %v2754
      %v2756 = vpop.f32.mrb[0].mxu0
      %2757 = vdwg.mxu0
      %v2758 = vadd.f32 %v2452, %v2632
      %v2759 = vadd.f32 %v2453, %v2635
      %v2760 = vadd.f32 %v2454, %v2640
      %v2761 = vadd.f32 %v2455, %v2643
      %v2762 = vadd.f32 %v2456, %v2648
      %v2763 = vadd.f32 %v2457, %v2651
      %v2764 = vadd.f32 %v2458, %v2656
      %v2765 = vadd.f32 %v2459, %v2659
      %v2766 = vadd.f32 %v2460, %v2664
      %v2767 = vadd.f32 %v2461, %v2667
      %v2768 = vadd.f32 %v2462, %v2672
      %v2769 = vadd.f32 %v2463, %v2675
      %v2770 = vadd.f32 %v2464, %v2680
      %v2771 = vadd.f32 %v2465, %v2683
      %v2772 = vadd.f32 %v2466, %v2688
      %v2773 = vadd.f32 %v2467, %v2691
      %v2774 = vadd.f32 %v2468, %v2696
      %v2775 = vadd.f32 %v2469, %v2699
      %v2776 = vadd.f32 %v2470, %v2704
      %v2777 = vadd.f32 %v2471, %v2707
      %v2778 = vadd.f32 %v2472, %v2712
      %v2779 = vadd.f32 %v2473, %v2715
      %v2780 = vadd.f32 %v2474, %v2720
      %v2781 = vadd.f32 %v2475, %v2723
      %v2782 = vadd.f32 %v2476, %v2728
      %v2783 = vadd.f32 %v2477, %v2731
      %v2784 = vadd.f32 %v2478, %v2736
      %v2785 = vadd.f32 %v2479, %v2739
      %v2786 = vadd.f32 %v2480, %v2744
      %v2787 = vadd.f32 %v2481, %v2747
      %v2788 = vadd.f32 %v2482, %v2752
      %v2789 = vadd.f32 %v2483, %v2755
      %v2790 = vld [vmem:[%s2177 + $0x9] sm:$0xff]
      %v2791 = vld [vmem:[%s2177 + $0x11] sm:$0xff]
      %v2792 = vld [vmem:[%s2177 + $0x29] sm:$0xff]
      %v2793 = vld [vmem:[%s2177 + $0x31] sm:$0xff]
      %v2794 = vld [vmem:[%s2177 + $0x49] sm:$0xff]
      %v2795 = vld [vmem:[%s2177 + $0x51] sm:$0xff]
      %v2796 = vld [vmem:[%s2177 + $0x69] sm:$0xff]
      %v2797 = vld [vmem:[%s2177 + $0x71] sm:$0xff]
      %v2798 = vld [vmem:[%s2177 + $0x89] sm:$0xff]
      %v2799 = vld [vmem:[%s2177 + $0x91] sm:$0xff]
      %v2800 = vld [vmem:[%s2177 + $0xa9] sm:$0xff]
      %v2801 = vld [vmem:[%s2177 + $0xb1] sm:$0xff]
      %v2802 = vld [vmem:[%s2177 + $0xc9] sm:$0xff]
      %v2803 = vld [vmem:[%s2177 + $0xd1] sm:$0xff]
      %v2804 = vld [vmem:[%s2177 + $0xe9] sm:$0xff]
      %v2805 = vld [vmem:[%s2177 + $0xf1] sm:$0xff]
      %v2806 = vld [vmem:[%s2177 + $0x109] sm:$0xff]
      %v2807 = vld [vmem:[%s2177 + $0x111] sm:$0xff]
      %v2808 = vld [vmem:[%s2177 + $0x129] sm:$0xff]
      %v2809 = vld [vmem:[%s2177 + $0x131] sm:$0xff]
      %v2810 = vld [vmem:[%s2177 + $0x149] sm:$0xff]
      %v2811 = vld [vmem:[%s2177 + $0x151] sm:$0xff]
      %v2812 = vld [vmem:[%s2177 + $0x169] sm:$0xff]
      %v2813 = vld [vmem:[%s2177 + $0x171] sm:$0xff]
      %v2814 = vld [vmem:[%s2177 + $0x189] sm:$0xff]
      %v2815 = vld [vmem:[%s2177 + $0x191] sm:$0xff]
      %v2816 = vld [vmem:[%s2177 + $0x1a9] sm:$0xff]
      %v2817 = vld [vmem:[%s2177 + $0x1b1] sm:$0xff]
      %v2818 = vld [vmem:[%s2177 + $0x1c9] sm:$0xff]
      %v2819 = vld [vmem:[%s2177 + $0x1d1] sm:$0xff]
      %v2820 = vld [vmem:[%s2177 + $0x1e9] sm:$0xff]
      %v2821 = vld [vmem:[%s2177 + $0x1f1] sm:$0xff]
      %v2822 = vpack.c.bf16 %v2791, %v2790
      %v2823 = vpack.c.bf16 %v2793, %v2792
      %v2824 = vpack.c.bf16 %v2795, %v2794
      %v2825 = vpack.c.bf16 %v2797, %v2796
      %v2826 = vpack.c.bf16 %v2799, %v2798
      %v2827 = vpack.c.bf16 %v2801, %v2800
      %v2828 = vpack.c.bf16 %v2803, %v2802
      %v2829 = vpack.c.bf16 %v2805, %v2804
      %v2830 = vpack.c.bf16 %v2807, %v2806
      %v2831 = vpack.c.bf16 %v2809, %v2808
      %v2832 = vpack.c.bf16 %v2811, %v2810
      %v2833 = vpack.c.bf16 %v2813, %v2812
      %v2834 = vpack.c.bf16 %v2815, %v2814
      %v2835 = vpack.c.bf16 %v2817, %v2816
      %v2836 = vpack.c.bf16 %v2819, %v2818
      %v2837 = vpack.c.bf16 %v2821, %v2820
      %s2838 = scalar_lea.vmem %s1, 512
      %v2839 = vld [vmem:[%s2838] sm:$0xf]
      %v2840 = vld [vmem:[%s2838 + $0x4] sm:$0xf]
      %v2841 = vld [vmem:[%s2838 + $0x8] sm:$0xf]
      %v2842 = vld [vmem:[%s2838 + $0xc] sm:$0xf]
      %v2843 = vld [vmem:[%s2838 + $0x10] sm:$0xf]
      %v2844 = vld [vmem:[%s2838 + $0x14] sm:$0xf]
      %v2845 = vld [vmem:[%s2838 + $0x18] sm:$0xf]
      %v2846 = vld [vmem:[%s2838 + $0x1c] sm:$0xf]
      %v2847 = vld [vmem:[%s2838 + $0x20] sm:$0xf]
      %v2848 = vld [vmem:[%s2838 + $0x24] sm:$0xf]
      %v2849 = vld [vmem:[%s2838 + $0x28] sm:$0xf]
      %v2850 = vld [vmem:[%s2838 + $0x2c] sm:$0xf]
      %v2851 = vld [vmem:[%s2838 + $0x30] sm:$0xf]
      %v2852 = vld [vmem:[%s2838 + $0x34] sm:$0xf]
      %v2853 = vld [vmem:[%s2838 + $0x38] sm:$0xf]
      %v2854 = vld [vmem:[%s2838 + $0x3c] sm:$0xf]
      %v2871 = vunpack.c.l.b16 %v2839
      %v2872 = vunpack.c.l.b16 %v2840
      %v2873 = vunpack.c.l.b16 %v2841
      %v2874 = vunpack.c.l.b16 %v2842
      %v2875 = vunpack.c.l.b16 %v2843
      %v2876 = vunpack.c.l.b16 %v2844
      %v2877 = vunpack.c.l.b16 %v2845
      %v2878 = vunpack.c.l.b16 %v2846
      %v2879 = vunpack.c.l.b16 %v2847
      %v2880 = vunpack.c.l.b16 %v2848
      %v2881 = vunpack.c.l.b16 %v2849
      %v2882 = vunpack.c.l.b16 %v2850
      %v2883 = vunpack.c.l.b16 %v2851
      %v2884 = vunpack.c.l.b16 %v2852
      %v2885 = vunpack.c.l.b16 %v2853
      %v2886 = vunpack.c.l.b16 %v2854
      %v2887 = vpack.c.b16 %v2872, %v2871
      %v2888 = vpack.c.b16 %v2874, %v2873
      %v2889 = vpack.c.b16 %v2876, %v2875
      %v2890 = vpack.c.b16 %v2878, %v2877
      %v2891 = vpack.c.b16 %v2880, %v2879
      %v2892 = vpack.c.b16 %v2882, %v2881
      %v2893 = vpack.c.b16 %v2884, %v2883
      %v2894 = vpack.c.b16 %v2886, %v2885
      %2903 = vmatprep.subr.bf16.mxu0 0
      %2904 = vmatpush1.bf16.msra.mxu0 %v2887
      %2905 = vmatprep.subr.bf16.mxu0 0
      %2906 = vmatpush1.bf16.msra.mxu0 %v2888
      %2907 = vmatprep.subr.bf16.mxu0 0
      %2908 = vmatpush1.bf16.msra.mxu0 %v2889
      %2909 = vmatprep.subr.bf16.mxu0 0
      %2910 = vmatpush1.bf16.msra.mxu0 %v2890
      %2911 = vmatprep.subr.bf16.mxu0 0
      %2912 = vmatpush1.bf16.msra.mxu0 %v2891
      %2913 = vmatprep.subr.bf16.mxu0 0
      %2914 = vmatpush1.bf16.msra.mxu0 %v2892
      %2915 = vmatprep.subr.bf16.mxu0 0
      %2916 = vmatpush1.bf16.msra.mxu0 %v2893
      %2917 = vmatprep.subr.bf16.mxu0 0
      %2918 = vmatpush1.bf16.msra.mxu0 %v2894
      %2919 = vmatprep.subr.bf16.mxu0 0
      %2920 = vmatpush1.bf16.msra.mxu0 0
      %2921 = vmatprep.subr.bf16.mxu0 0
      %2922 = vmatpush1.bf16.msra.mxu0 0
      %2923 = vmatprep.subr.bf16.mxu0 0
      %2924 = vmatpush1.bf16.msra.mxu0 0
      %2925 = vmatprep.subr.bf16.mxu0 0
      %2926 = vmatpush1.bf16.msra.mxu0 0
      %2927 = vmatprep.subr.bf16.mxu0 0
      %2928 = vmatpush1.bf16.msra.mxu0 0
      %2929 = vmatprep.subr.bf16.mxu0 0
      %2930 = vmatpush1.bf16.msra.mxu0 0
      %2931 = vmatprep.subr.bf16.mxu0 0
      %2932 = vmatpush1.bf16.msra.mxu0 0
      %2933 = vmatprep.subr.bf16.mxu0 0
      %2934 = vmatpush1.bf16.msra.mxu0 0
      %2935 = vmatprep.mubr.bf16.mxu0 0
      %2936 = vmatmul.mubr.bf16.gmra.mrb[0].mxu0 %v2822
      %v2937 = vpop.f32.mrb[0].mxu0
      %v2938 = vadd.f32 0.0, %v2937
      %v2939 = vpop.f32.mrb[0].mxu0
      %v2940 = vpop.f32.mrb[0].mxu0
      %v2941 = vadd.f32 0.0, %v2940
      %v2942 = vpop.f32.mrb[0].mxu0
      %2943 = vmatprep.mubr.bf16.mxu0 0
      %2944 = vmatmul.mubr.bf16.gmra.mrb[0].mxu0 %v2823
      %v2945 = vpop.f32.mrb[0].mxu0
      %v2946 = vadd.f32 0.0, %v2945
      %v2947 = vpop.f32.mrb[0].mxu0
      %v2948 = vpop.f32.mrb[0].mxu0
      %v2949 = vadd.f32 0.0, %v2948
      %v2950 = vpop.f32.mrb[0].mxu0
      %2951 = vmatprep.mubr.bf16.mxu0 0
      %2952 = vmatmul.mubr.bf16.gmra.mrb[0].mxu0 %v2824
      %v2953 = vpop.f32.mrb[0].mxu0
      %v2954 = vadd.f32 0.0, %v2953
      %v2955 = vpop.f32.mrb[0].mxu0
      %v2956 = vpop.f32.mrb[0].mxu0
      %v2957 = vadd.f32 0.0, %v2956
      %v2958 = vpop.f32.mrb[0].mxu0
      %2959 = vmatprep.mubr.bf16.mxu0 0
      %2960 = vmatmul.mubr.bf16.gmra.mrb[0].mxu0 %v2825
      %v2961 = vpop.f32.mrb[0].mxu0
      %v2962 = vadd.f32 0.0, %v2961
      %v2963 = vpop.f32.mrb[0].mxu0
      %v2964 = vpop.f32.mrb[0].mxu0
      %v2965 = vadd.f32 0.0, %v2964
      %v2966 = vpop.f32.mrb[0].mxu0
      %2967 = vmatprep.mubr.bf16.mxu0 0
      %2968 = vmatmul.mubr.bf16.gmra.mrb[0].mxu0 %v2826
      %v2969 = vpop.f32.mrb[0].mxu0
      %v2970 = vadd.f32 0.0, %v2969
      %v2971 = vpop.f32.mrb[0].mxu0
      %v2972 = vpop.f32.mrb[0].mxu0
      %v2973 = vadd.f32 0.0, %v2972
      %v2974 = vpop.f32.mrb[0].mxu0
      %2975 = vmatprep.mubr.bf16.mxu0 0
      %2976 = vmatmul.mubr.bf16.gmra.mrb[0].mxu0 %v2827
      %v2977 = vpop.f32.mrb[0].mxu0
      %v2978 = vadd.f32 0.0, %v2977
      %v2979 = vpop.f32.mrb[0].mxu0
      %v2980 = vpop.f32.mrb[0].mxu0
      %v2981 = vadd.f32 0.0, %v2980
      %v2982 = vpop.f32.mrb[0].mxu0
      %2983 = vmatprep.mubr.bf16.mxu0 0
      %2984 = vmatmul.mubr.bf16.gmra.mrb[0].mxu0 %v2828
      %v2985 = vpop.f32.mrb[0].mxu0
      %v2986 = vadd.f32 0.0, %v2985
      %v2987 = vpop.f32.mrb[0].mxu0
      %v2988 = vpop.f32.mrb[0].mxu0
      %v2989 = vadd.f32 0.0, %v2988
      %v2990 = vpop.f32.mrb[0].mxu0
      %2991 = vmatprep.mubr.bf16.mxu0 0
      %2992 = vmatmul.mubr.bf16.gmra.mrb[0].mxu0 %v2829
      %v2993 = vpop.f32.mrb[0].mxu0
      %v2994 = vadd.f32 0.0, %v2993
      %v2995 = vpop.f32.mrb[0].mxu0
      %v2996 = vpop.f32.mrb[0].mxu0
      %v2997 = vadd.f32 0.0, %v2996
      %v2998 = vpop.f32.mrb[0].mxu0
      %2999 = vmatprep.mubr.bf16.mxu0 0
      %3000 = vmatmul.mubr.bf16.gmra.mrb[0].mxu0 %v2830
      %v3001 = vpop.f32.mrb[0].mxu0
      %v3002 = vadd.f32 0.0, %v3001
      %v3003 = vpop.f32.mrb[0].mxu0
      %v3004 = vpop.f32.mrb[0].mxu0
      %v3005 = vadd.f32 0.0, %v3004
      %v3006 = vpop.f32.mrb[0].mxu0
      %3007 = vmatprep.mubr.bf16.mxu0 0
      %3008 = vmatmul.mubr.bf16.gmra.mrb[0].mxu0 %v2831
      %v3009 = vpop.f32.mrb[0].mxu0
      %v3010 = vadd.f32 0.0, %v3009
      %v3011 = vpop.f32.mrb[0].mxu0
      %v3012 = vpop.f32.mrb[0].mxu0
      %v3013 = vadd.f32 0.0, %v3012
      %v3014 = vpop.f32.mrb[0].mxu0
      %3015 = vmatprep.mubr.bf16.mxu0 0
      %3016 = vmatmul.mubr.bf16.gmra.mrb[0].mxu0 %v2832
      %v3017 = vpop.f32.mrb[0].mxu0
      %v3018 = vadd.f32 0.0, %v3017
      %v3019 = vpop.f32.mrb[0].mxu0
      %v3020 = vpop.f32.mrb[0].mxu0
      %v3021 = vadd.f32 0.0, %v3020
      %v3022 = vpop.f32.mrb[0].mxu0
      %3023 = vmatprep.mubr.bf16.mxu0 0
      %3024 = vmatmul.mubr.bf16.gmra.mrb[0].mxu0 %v2833
      %v3025 = vpop.f32.mrb[0].mxu0
      %v3026 = vadd.f32 0.0, %v3025
      %v3027 = vpop.f32.mrb[0].mxu0
      %v3028 = vpop.f32.mrb[0].mxu0
      %v3029 = vadd.f32 0.0, %v3028
      %v3030 = vpop.f32.mrb[0].mxu0
      %3031 = vmatprep.mubr.bf16.mxu0 0
      %3032 = vmatmul.mubr.bf16.gmra.mrb[0].mxu0 %v2834
      %v3033 = vpop.f32.mrb[0].mxu0
      %v3034 = vadd.f32 0.0, %v3033
      %v3035 = vpop.f32.mrb[0].mxu0
      %v3036 = vpop.f32.mrb[0].mxu0
      %v3037 = vadd.f32 0.0, %v3036
      %v3038 = vpop.f32.mrb[0].mxu0
      %3039 = vmatprep.mubr.bf16.mxu0 0
      %3040 = vmatmul.mubr.bf16.gmra.mrb[0].mxu0 %v2835
      %v3041 = vpop.f32.mrb[0].mxu0
      %v3042 = vadd.f32 0.0, %v3041
      %v3043 = vpop.f32.mrb[0].mxu0
      %v3044 = vpop.f32.mrb[0].mxu0
      %v3045 = vadd.f32 0.0, %v3044
      %v3046 = vpop.f32.mrb[0].mxu0
      %3047 = vmatprep.mubr.bf16.mxu0 0
      %3048 = vmatmul.mubr.bf16.gmra.mrb[0].mxu0 %v2836
      %v3049 = vpop.f32.mrb[0].mxu0
      %v3050 = vadd.f32 0.0, %v3049
      %v3051 = vpop.f32.mrb[0].mxu0
      %v3052 = vpop.f32.mrb[0].mxu0
      %v3053 = vadd.f32 0.0, %v3052
      %v3054 = vpop.f32.mrb[0].mxu0
      %3055 = vmatprep.mubr.bf16.mxu0 0
      %3056 = vmatmul.mubr.bf16.gmra.mrb[0].mxu0 %v2837
      %v3057 = vpop.f32.mrb[0].mxu0
      %v3058 = vadd.f32 0.0, %v3057
      %v3059 = vpop.f32.mrb[0].mxu0
      %v3060 = vpop.f32.mrb[0].mxu0
      %v3061 = vadd.f32 0.0, %v3060
      %v3062 = vpop.f32.mrb[0].mxu0
      %3063 = vdwg.mxu0
      %v3064 = vadd.f32 %v2758, %v2938
      %v3065 = vadd.f32 %v2759, %v2941
      %v3066 = vadd.f32 %v2760, %v2946
      %v3067 = vadd.f32 %v2761, %v2949
      %v3068 = vadd.f32 %v2762, %v2954
      %v3069 = vadd.f32 %v2763, %v2957
      %v3070 = vadd.f32 %v2764, %v2962
      %v3071 = vadd.f32 %v2765, %v2965
      %v3072 = vadd.f32 %v2766, %v2970
      %v3073 = vadd.f32 %v2767, %v2973
      %v3074 = vadd.f32 %v2768, %v2978
      %v3075 = vadd.f32 %v2769, %v2981
      %v3076 = vadd.f32 %v2770, %v2986
      %v3077 = vadd.f32 %v2771, %v2989
      %v3078 = vadd.f32 %v2772, %v2994
      %v3079 = vadd.f32 %v2773, %v2997
      %v3080 = vadd.f32 %v2774, %v3002
      %v3081 = vadd.f32 %v2775, %v3005
      %v3082 = vadd.f32 %v2776, %v3010
      %v3083 = vadd.f32 %v2777, %v3013
      %v3084 = vadd.f32 %v2778, %v3018
      %v3085 = vadd.f32 %v2779, %v3021
      %v3086 = vadd.f32 %v2780, %v3026
      %v3087 = vadd.f32 %v2781, %v3029
      %v3088 = vadd.f32 %v2782, %v3034
      %v3089 = vadd.f32 %v2783, %v3037
      %v3090 = vadd.f32 %v2784, %v3042
      %v3091 = vadd.f32 %v2785, %v3045
      %v3092 = vadd.f32 %v2786, %v3050
      %v3093 = vadd.f32 %v2787, %v3053
      %v3094 = vadd.f32 %v2788, %v3058
      %v3095 = vadd.f32 %v2789, %v3061
      %v3096 = vld [vmem:[%s2] sm:$0x1]
      %v3098 = vlaneseq
      %v3099 = vshrl.u32 %v3098, 7
      %v3100 = vsub.s32 0, %v3099
      %v3101 = vrot.slane %v3096, %v3100
      %v3103 = vadd.f32 %v3064, %v3101
      %v3104 = vadd.f32 %v3065, %v3101
      %v3105 = vadd.f32 %v3066, %v3101
      %v3106 = vadd.f32 %v3067, %v3101
      %v3107 = vadd.f32 %v3068, %v3101
      %v3108 = vadd.f32 %v3069, %v3101
      %v3109 = vadd.f32 %v3070, %v3101
      %v3110 = vadd.f32 %v3071, %v3101
      %v3111 = vadd.f32 %v3072, %v3101
      %v3112 = vadd.f32 %v3073, %v3101
      %v3113 = vadd.f32 %v3074, %v3101
      %v3114 = vadd.f32 %v3075, %v3101
      %v3115 = vadd.f32 %v3076, %v3101
      %v3116 = vadd.f32 %v3077, %v3101
      %v3117 = vadd.f32 %v3078, %v3101
      %v3118 = vadd.f32 %v3079, %v3101
      %v3119 = vadd.f32 %v3080, %v3101
      %v3120 = vadd.f32 %v3081, %v3101
      %v3121 = vadd.f32 %v3082, %v3101
      %v3122 = vadd.f32 %v3083, %v3101
      %v3123 = vadd.f32 %v3084, %v3101
      %v3124 = vadd.f32 %v3085, %v3101
      %v3125 = vadd.f32 %v3086, %v3101
      %v3126 = vadd.f32 %v3087, %v3101
      %v3127 = vadd.f32 %v3088, %v3101
      %v3128 = vadd.f32 %v3089, %v3101
      %v3129 = vadd.f32 %v3090, %v3101
      %v3130 = vadd.f32 %v3091, %v3101
      %v3131 = vadd.f32 %v3092, %v3101
      %v3132 = vadd.f32 %v3093, %v3101
      %v3133 = vadd.f32 %v3094, %v3101
      %v3134 = vadd.f32 %v3095, %v3101
      %v3135 = vmax.f32 %v3103, 0.0
      %v3136 = vmax.f32 %v3104, 0.0
      %v3137 = vmax.f32 %v3105, 0.0
      %v3138 = vmax.f32 %v3106, 0.0
      %v3139 = vmax.f32 %v3107, 0.0
      %v3140 = vmax.f32 %v3108, 0.0
      %v3141 = vmax.f32 %v3109, 0.0
      %v3142 = vmax.f32 %v3110, 0.0
      %v3143 = vmax.f32 %v3111, 0.0
      %v3144 = vmax.f32 %v3112, 0.0
      %v3145 = vmax.f32 %v3113, 0.0
      %v3146 = vmax.f32 %v3114, 0.0
      %v3147 = vmax.f32 %v3115, 0.0
      %v3148 = vmax.f32 %v3116, 0.0
      %v3149 = vmax.f32 %v3117, 0.0
      %v3150 = vmax.f32 %v3118, 0.0
      %v3151 = vmax.f32 %v3119, 0.0
      %v3152 = vmax.f32 %v3120, 0.0
      %v3153 = vmax.f32 %v3121, 0.0
      %v3154 = vmax.f32 %v3122, 0.0
      %v3155 = vmax.f32 %v3123, 0.0
      %v3156 = vmax.f32 %v3124, 0.0
      %v3157 = vmax.f32 %v3125, 0.0
      %v3158 = vmax.f32 %v3126, 0.0
      %v3159 = vmax.f32 %v3127, 0.0
      %v3160 = vmax.f32 %v3128, 0.0
      %v3161 = vmax.f32 %v3129, 0.0
      %v3162 = vmax.f32 %v3130, 0.0
      %v3163 = vmax.f32 %v3131, 0.0
      %v3164 = vmax.f32 %v3132, 0.0
      %v3165 = vmax.f32 %v3133, 0.0
      %v3166 = vmax.f32 %v3134, 0.0
      %v3167 = vmin.f32 %v3135, 20.0
      %v3168 = vmin.f32 %v3136, 20.0
      %v3169 = vmin.f32 %v3137, 20.0
      %v3170 = vmin.f32 %v3138, 20.0
      %v3171 = vmin.f32 %v3139, 20.0
      %v3172 = vmin.f32 %v3140, 20.0
      %v3173 = vmin.f32 %v3141, 20.0
      %v3174 = vmin.f32 %v3142, 20.0
      %v3175 = vmin.f32 %v3143, 20.0
      %v3176 = vmin.f32 %v3144, 20.0
      %v3177 = vmin.f32 %v3145, 20.0
      %v3178 = vmin.f32 %v3146, 20.0
      %v3179 = vmin.f32 %v3147, 20.0
      %v3180 = vmin.f32 %v3148, 20.0
      %v3181 = vmin.f32 %v3149, 20.0
      %v3182 = vmin.f32 %v3150, 20.0
      %v3183 = vmin.f32 %v3151, 20.0
      %v3184 = vmin.f32 %v3152, 20.0
      %v3185 = vmin.f32 %v3153, 20.0
      %v3186 = vmin.f32 %v3154, 20.0
      %v3187 = vmin.f32 %v3155, 20.0
      %v3188 = vmin.f32 %v3156, 20.0
      %v3189 = vmin.f32 %v3157, 20.0
      %v3190 = vmin.f32 %v3158, 20.0
      %v3191 = vmin.f32 %v3159, 20.0
      %v3192 = vmin.f32 %v3160, 20.0
      %v3193 = vmin.f32 %v3161, 20.0
      %v3194 = vmin.f32 %v3162, 20.0
      %v3195 = vmin.f32 %v3163, 20.0
      %v3196 = vmin.f32 %v3164, 20.0
      %v3197 = vmin.f32 %v3165, 20.0
      %v3198 = vmin.f32 %v3166, 20.0
      %3199 = vst [vmem:[%s277 + $0x8] sm:$0xff] %v3167
      %3200 = vst [vmem:[%s277 + $0x10] sm:$0xff] %v3168
      %3201 = vst [vmem:[%s277 + $0x28] sm:$0xff] %v3169
      %3202 = vst [vmem:[%s277 + $0x30] sm:$0xff] %v3170
      %3203 = vst [vmem:[%s277 + $0x48] sm:$0xff] %v3171
      %3204 = vst [vmem:[%s277 + $0x50] sm:$0xff] %v3172
      %3205 = vst [vmem:[%s277 + $0x68] sm:$0xff] %v3173
      %3206 = vst [vmem:[%s277 + $0x70] sm:$0xff] %v3174
      %3207 = vst [vmem:[%s277 + $0x88] sm:$0xff] %v3175
      %3208 = vst [vmem:[%s277 + $0x90] sm:$0xff] %v3176
      %3209 = vst [vmem:[%s277 + $0xa8] sm:$0xff] %v3177
      %3210 = vst [vmem:[%s277 + $0xb0] sm:$0xff] %v3178
      %3211 = vst [vmem:[%s277 + $0xc8] sm:$0xff] %v3179
      %3212 = vst [vmem:[%s277 + $0xd0] sm:$0xff] %v3180
      %3213 = vst [vmem:[%s277 + $0xe8] sm:$0xff] %v3181
      %3214 = vst [vmem:[%s277 + $0xf0] sm:$0xff] %v3182
      %3215 = vst [vmem:[%s277 + $0x108] sm:$0xff] %v3183
      %3216 = vst [vmem:[%s277 + $0x110] sm:$0xff] %v3184
      %3217 = vst [vmem:[%s277 + $0x128] sm:$0xff] %v3185
      %3218 = vst [vmem:[%s277 + $0x130] sm:$0xff] %v3186
      %3219 = vst [vmem:[%s277 + $0x148] sm:$0xff] %v3187
      %3220 = vst [vmem:[%s277 + $0x150] sm:$0xff] %v3188
      %3221 = vst [vmem:[%s277 + $0x168] sm:$0xff] %v3189
      %3222 = vst [vmem:[%s277 + $0x170] sm:$0xff] %v3190
      %3223 = vst [vmem:[%s277 + $0x188] sm:$0xff] %v3191
      %3224 = vst [vmem:[%s277 + $0x190] sm:$0xff] %v3192
      %3225 = vst [vmem:[%s277 + $0x1a8] sm:$0xff] %v3193
      %3226 = vst [vmem:[%s277 + $0x1b0] sm:$0xff] %v3194
      %3227 = vst [vmem:[%s277 + $0x1c8] sm:$0xff] %v3195
      %3228 = vst [vmem:[%s277 + $0x1d0] sm:$0xff] %v3196
      %3229 = vst [vmem:[%s277 + $0x1e8] sm:$0xff] %v3197
      %3230 = vst [vmem:[%s277 + $0x1f0] sm:$0xff] %v3198
      %v3231 = vld [vmem:[#allocation3 + $0x7] sm:$0xff]
      %v3232 = vld [vmem:[#allocation3 + $0xf] sm:$0xff]
      %v3233 = vld [vmem:[#allocation3 + $0x27] sm:$0xff]
      %v3234 = vld [vmem:[#allocation3 + $0x2f] sm:$0xff]
      %v3235 = vld [vmem:[#allocation3 + $0x47] sm:$0xff]
      %v3236 = vld [vmem:[#allocation3 + $0x4f] sm:$0xff]
      %v3237 = vld [vmem:[#allocation3 + $0x67] sm:$0xff]
      %v3238 = vld [vmem:[#allocation3 + $0x6f] sm:$0xff]
      %v3239 = vld [vmem:[#allocation3 + $0x87] sm:$0xff]
      %v3240 = vld [vmem:[#allocation3 + $0x8f] sm:$0xff]
      %v3241 = vld [vmem:[#allocation3 + $0xa7] sm:$0xff]
      %v3242 = vld [vmem:[#allocation3 + $0xaf] sm:$0xff]
      %v3243 = vld [vmem:[#allocation3 + $0xc7] sm:$0xff]
      %v3244 = vld [vmem:[#allocation3 + $0xcf] sm:$0xff]
      %v3245 = vld [vmem:[#allocation3 + $0xe7] sm:$0xff]
      %v3246 = vld [vmem:[#allocation3 + $0xef] sm:$0xff]
      %v3247 = vld [vmem:[#allocation3 + $0x107] sm:$0xff]
      %v3248 = vld [vmem:[#allocation3 + $0x10f] sm:$0xff]
      %v3249 = vld [vmem:[#allocation3 + $0x127] sm:$0xff]
      %v3250 = vld [vmem:[#allocation3 + $0x12f] sm:$0xff]
      %v3251 = vld [vmem:[#allocation3 + $0x147] sm:$0xff]
      %v3252 = vld [vmem:[#allocation3 + $0x14f] sm:$0xff]
      %v3253 = vld [vmem:[#allocation3 + $0x167] sm:$0xff]
      %v3254 = vld [vmem:[#allocation3 + $0x16f] sm:$0xff]
      %v3255 = vld [vmem:[#allocation3 + $0x187] sm:$0xff]
      %v3256 = vld [vmem:[#allocation3 + $0x18f] sm:$0xff]
      %v3257 = vld [vmem:[#allocation3 + $0x1a7] sm:$0xff]
      %v3258 = vld [vmem:[#allocation3 + $0x1af] sm:$0xff]
      %v3259 = vld [vmem:[#allocation3 + $0x1c7] sm:$0xff]
      %v3260 = vld [vmem:[#allocation3 + $0x1cf] sm:$0xff]
      %v3261 = vld [vmem:[#allocation3 + $0x1e7] sm:$0xff]
      %v3262 = vld [vmem:[#allocation3 + $0x1ef] sm:$0xff]
      %v3263 = vpack.c.bf16 %v3232, %v3231
      %v3264 = vpack.c.bf16 %v3234, %v3233
      %v3265 = vpack.c.bf16 %v3236, %v3235
      %v3266 = vpack.c.bf16 %v3238, %v3237
      %v3267 = vpack.c.bf16 %v3240, %v3239
      %v3268 = vpack.c.bf16 %v3242, %v3241
      %v3269 = vpack.c.bf16 %v3244, %v3243
      %v3270 = vpack.c.bf16 %v3246, %v3245
      %v3271 = vpack.c.bf16 %v3248, %v3247
      %v3272 = vpack.c.bf16 %v3250, %v3249
      %v3273 = vpack.c.bf16 %v3252, %v3251
      %v3274 = vpack.c.bf16 %v3254, %v3253
      %v3275 = vpack.c.bf16 %v3256, %v3255
      %v3276 = vpack.c.bf16 %v3258, %v3257
      %v3277 = vpack.c.bf16 %v3260, %v3259
      %v3278 = vpack.c.bf16 %v3262, %v3261
      %v3279 = vld [vmem:[%s3] sm:$0xf]
      %v3280 = vld [vmem:[%s3 + $0x4] sm:$0xf]
      %v3281 = vld [vmem:[%s3 + $0x8] sm:$0xf]
      %v3282 = vld [vmem:[%s3 + $0xc] sm:$0xf]
      %v3283 = vld [vmem:[%s3 + $0x10] sm:$0xf]
      %v3284 = vld [vmem:[%s3 + $0x14] sm:$0xf]
      %v3285 = vld [vmem:[%s3 + $0x18] sm:$0xf]
      %v3286 = vld [vmem:[%s3 + $0x1c] sm:$0xf]
      %v3287 = vld [vmem:[%s3 + $0x20] sm:$0xf]
      %v3288 = vld [vmem:[%s3 + $0x24] sm:$0xf]
      %v3289 = vld [vmem:[%s3 + $0x28] sm:$0xf]
      %v3290 = vld [vmem:[%s3 + $0x2c] sm:$0xf]
      %v3291 = vld [vmem:[%s3 + $0x30] sm:$0xf]
      %v3292 = vld [vmem:[%s3 + $0x34] sm:$0xf]
      %v3293 = vld [vmem:[%s3 + $0x38] sm:$0xf]
      %v3294 = vld [vmem:[%s3 + $0x3c] sm:$0xf]
      %v3295 = vld [vmem:[#allocation3 + $0x8] sm:$0xff]
      %v3296 = vld [vmem:[#allocation3 + $0x10] sm:$0xff]
      %v3297 = vld [vmem:[#allocation3 + $0x28] sm:$0xff]
      %v3298 = vld [vmem:[#allocation3 + $0x30] sm:$0xff]
      %v3299 = vld [vmem:[#allocation3 + $0x48] sm:$0xff]
      %v3300 = vld [vmem:[#allocation3 + $0x50] sm:$0xff]
      %v3301 = vld [vmem:[#allocation3 + $0x68] sm:$0xff]
      %v3302 = vld [vmem:[#allocation3 + $0x70] sm:$0xff]
      %v3303 = vld [vmem:[#allocation3 + $0x88] sm:$0xff]
      %v3304 = vld [vmem:[#allocation3 + $0x90] sm:$0xff]
      %v3305 = vld [vmem:[#allocation3 + $0xa8] sm:$0xff]
      %v3306 = vld [vmem:[#allocation3 + $0xb0] sm:$0xff]
      %v3307 = vld [vmem:[#allocation3 + $0xc8] sm:$0xff]
      %v3308 = vld [vmem:[#allocation3 + $0xd0] sm:$0xff]
      %v3309 = vld [vmem:[#allocation3 + $0xe8] sm:$0xff]
      %v3310 = vld [vmem:[#allocation3 + $0xf0] sm:$0xff]
      %v3311 = vld [vmem:[#allocation3 + $0x108] sm:$0xff]
      %v3312 = vld [vmem:[#allocation3 + $0x110] sm:$0xff]
      %v3313 = vld [vmem:[#allocation3 + $0x128] sm:$0xff]
      %v3314 = vld [vmem:[#allocation3 + $0x130] sm:$0xff]
      %v3315 = vld [vmem:[#allocation3 + $0x148] sm:$0xff]
      %v3316 = vld [vmem:[#allocation3 + $0x150] sm:$0xff]
      %v3317 = vld [vmem:[#allocation3 + $0x168] sm:$0xff]
      %v3318 = vld [vmem:[#allocation3 + $0x170] sm:$0xff]
      %v3319 = vld [vmem:[#allocation3 + $0x188] sm:$0xff]
      %v3320 = vld [vmem:[#allocation3 + $0x190] sm:$0xff]
      %v3321 = vld [vmem:[#allocation3 + $0x1a8] sm:$0xff]
      %v3322 = vld [vmem:[#allocation3 + $0x1b0] sm:$0xff]
      %v3323 = vld [vmem:[#allocation3 + $0x1c8] sm:$0xff]
      %v3324 = vld [vmem:[#allocation3 + $0x1d0] sm:$0xff]
      %v3325 = vld [vmem:[#allocation3 + $0x1e8] sm:$0xff]
      %v3326 = vld [vmem:[#allocation3 + $0x1f0] sm:$0xff]
      %v3327 = vpack.c.bf16 %v3296, %v3295
      %v3328 = vpack.c.bf16 %v3298, %v3297
      %v3329 = vpack.c.bf16 %v3300, %v3299
      %v3330 = vpack.c.bf16 %v3302, %v3301
      %v3331 = vpack.c.bf16 %v3304, %v3303
      %v3332 = vpack.c.bf16 %v3306, %v3305
      %v3333 = vpack.c.bf16 %v3308, %v3307
      %v3334 = vpack.c.bf16 %v3310, %v3309
      %v3335 = vpack.c.bf16 %v3312, %v3311
      %v3336 = vpack.c.bf16 %v3314, %v3313
      %v3337 = vpack.c.bf16 %v3316, %v3315
      %v3338 = vpack.c.bf16 %v3318, %v3317
      %v3339 = vpack.c.bf16 %v3320, %v3319
      %v3340 = vpack.c.bf16 %v3322, %v3321
      %v3341 = vpack.c.bf16 %v3324, %v3323
      %v3342 = vpack.c.bf16 %v3326, %v3325
      %s3343 = scalar_lea.vmem %s3, 64
      %v3344 = vld [vmem:[%s3343] sm:$0xf]
      %v3345 = vld [vmem:[%s3343 + $0x4] sm:$0xf]
      %v3346 = vld [vmem:[%s3343 + $0x8] sm:$0xf]
      %v3347 = vld [vmem:[%s3343 + $0xc] sm:$0xf]
      %v3348 = vld [vmem:[%s3343 + $0x10] sm:$0xf]
      %v3349 = vld [vmem:[%s3343 + $0x14] sm:$0xf]
      %v3350 = vld [vmem:[%s3343 + $0x18] sm:$0xf]
      %v3351 = vld [vmem:[%s3343 + $0x1c] sm:$0xf]
      %v3352 = vld [vmem:[%s3343 + $0x20] sm:$0xf]
      %v3353 = vld [vmem:[%s3343 + $0x24] sm:$0xf]
      %v3354 = vld [vmem:[%s3343 + $0x28] sm:$0xf]
      %v3355 = vld [vmem:[%s3343 + $0x2c] sm:$0xf]
      %v3356 = vld [vmem:[%s3343 + $0x30] sm:$0xf]
      %v3357 = vld [vmem:[%s3343 + $0x34] sm:$0xf]
      %v3358 = vld [vmem:[%s3343 + $0x38] sm:$0xf]
      %v3359 = vld [vmem:[%s3343 + $0x3c] sm:$0xf]
      %v3376 = vunpack.c.l.b16 %v3344
      %v3377 = vunpack.c.l.b16 %v3345
      %v3378 = vunpack.c.l.b16 %v3346
      %v3379 = vunpack.c.l.b16 %v3347
      %v3380 = vunpack.c.l.b16 %v3348
      %v3381 = vunpack.c.l.b16 %v3349
      %v3382 = vunpack.c.l.b16 %v3350
      %v3383 = vunpack.c.l.b16 %v3351
      %v3384 = vunpack.c.l.b16 %v3352
      %v3385 = vunpack.c.l.b16 %v3353
      %v3386 = vunpack.c.l.b16 %v3354
      %v3387 = vunpack.c.l.b16 %v3355
      %v3388 = vunpack.c.l.b16 %v3356
      %v3389 = vunpack.c.l.b16 %v3357
      %v3390 = vunpack.c.l.b16 %v3358
      %v3391 = vunpack.c.l.b16 %v3359
      %v3392 = vpack.c.b16 %v3377, %v3376
      %v3393 = vpack.c.b16 %v3379, %v3378
      %v3394 = vpack.c.b16 %v3381, %v3380
      %v3395 = vpack.c.b16 %v3383, %v3382
      %v3396 = vpack.c.b16 %v3385, %v3384
      %v3397 = vpack.c.b16 %v3387, %v3386
      %v3398 = vpack.c.b16 %v3389, %v3388
      %v3399 = vpack.c.b16 %v3391, %v3390
      %3408 = vmatprep.subr.bf16.mxu0 0
      %3409 = vmatpush1.bf16.msra.mxu0 %v3392
      %3410 = vmatprep.subr.bf16.mxu0 0
      %3411 = vmatpush1.bf16.msra.mxu0 %v3393
      %3412 = vmatprep.subr.bf16.mxu0 0
      %3413 = vmatpush1.bf16.msra.mxu0 %v3394
      %3414 = vmatprep.subr.bf16.mxu0 0
      %3415 = vmatpush1.bf16.msra.mxu0 %v3395
      %3416 = vmatprep.subr.bf16.mxu0 0
      %3417 = vmatpush1.bf16.msra.mxu0 %v3396
      %3418 = vmatprep.subr.bf16.mxu0 0
      %3419 = vmatpush1.bf16.msra.mxu0 %v3397
      %3420 = vmatprep.subr.bf16.mxu0 0
      %3421 = vmatpush1.bf16.msra.mxu0 %v3398
      %3422 = vmatprep.subr.bf16.mxu0 0
      %3423 = vmatpush1.bf16.msra.mxu0 %v3399
      %3424 = vmatprep.subr.bf16.mxu0 0
      %3425 = vmatpush1.bf16.msra.mxu0 0
      %3426 = vmatprep.subr.bf16.mxu0 0
      %3427 = vmatpush1.bf16.msra.mxu0 0
      %3428 = vmatprep.subr.bf16.mxu0 0
      %3429 = vmatpush1.bf16.msra.mxu0 0
      %3430 = vmatprep.subr.bf16.mxu0 0
      %3431 = vmatpush1.bf16.msra.mxu0 0
      %3432 = vmatprep.subr.bf16.mxu0 0
      %3433 = vmatpush1.bf16.msra.mxu0 0
      %3434 = vmatprep.subr.bf16.mxu0 0
      %3435 = vmatpush1.bf16.msra.mxu0 0
      %3436 = vmatprep.subr.bf16.mxu0 0
      %3437 = vmatpush1.bf16.msra.mxu0 0
      %3438 = vmatprep.subr.bf16.mxu0 0
      %3439 = vmatpush1.bf16.msra.mxu0 0
      %3440 = vmatprep.mubr.bf16.mxu0 0
      %3441 = vmatmul.mubr.bf16.gmra.mrb[0].mxu0 %v3327
      %v3442 = vpop.f32.mrb[0].mxu0
      %v3443 = vadd.f32 0.0, %v3442
      %v3444 = vpop.f32.mrb[0].mxu0
      %v3445 = vpop.f32.mrb[0].mxu0
      %v3446 = vadd.f32 0.0, %v3445
      %v3447 = vpop.f32.mrb[0].mxu0
      %3448 = vmatprep.mubr.bf16.mxu0 0
      %3449 = vmatmul.mubr.bf16.gmra.mrb[0].mxu0 %v3328
      %v3450 = vpop.f32.mrb[0].mxu0
      %v3451 = vadd.f32 0.0, %v3450
      %v3452 = vpop.f32.mrb[0].mxu0
      %v3453 = vpop.f32.mrb[0].mxu0
      %v3454 = vadd.f32 0.0, %v3453
      %v3455 = vpop.f32.mrb[0].mxu0
      %3456 = vmatprep.mubr.bf16.mxu0 0
      %3457 = vmatmul.mubr.bf16.gmra.mrb[0].mxu0 %v3329
      %v3458 = vpop.f32.mrb[0].mxu0
      %v3459 = vadd.f32 0.0, %v3458
      %v3460 = vpop.f32.mrb[0].mxu0
      %v3461 = vpop.f32.mrb[0].mxu0
      %v3462 = vadd.f32 0.0, %v3461
      %v3463 = vpop.f32.mrb[0].mxu0
      %3464 = vmatprep.mubr.bf16.mxu0 0
      %3465 = vmatmul.mubr.bf16.gmra.mrb[0].mxu0 %v3330
      %v3466 = vpop.f32.mrb[0].mxu0
      %v3467 = vadd.f32 0.0, %v3466
      %v3468 = vpop.f32.mrb[0].mxu0
      %v3469 = vpop.f32.mrb[0].mxu0
      %v3470 = vadd.f32 0.0, %v3469
      %v3471 = vpop.f32.mrb[0].mxu0
      %3472 = vmatprep.mubr.bf16.mxu0 0
      %3473 = vmatmul.mubr.bf16.gmra.mrb[0].mxu0 %v3331
      %v3474 = vpop.f32.mrb[0].mxu0
      %v3475 = vadd.f32 0.0, %v3474
      %v3476 = vpop.f32.mrb[0].mxu0
      %v3477 = vpop.f32.mrb[0].mxu0
      %v3478 = vadd.f32 0.0, %v3477
      %v3479 = vpop.f32.mrb[0].mxu0
      %3480 = vmatprep.mubr.bf16.mxu0 0
      %3481 = vmatmul.mubr.bf16.gmra.mrb[0].mxu0 %v3332
      %v3482 = vpop.f32.mrb[0].mxu0
      %v3483 = vadd.f32 0.0, %v3482
      %v3484 = vpop.f32.mrb[0].mxu0
      %v3485 = vpop.f32.mrb[0].mxu0
      %v3486 = vadd.f32 0.0, %v3485
      %v3487 = vpop.f32.mrb[0].mxu0
      %3488 = vmatprep.mubr.bf16.mxu0 0
      %3489 = vmatmul.mubr.bf16.gmra.mrb[0].mxu0 %v3333
      %v3490 = vpop.f32.mrb[0].mxu0
      %v3491 = vadd.f32 0.0, %v3490
      %v3492 = vpop.f32.mrb[0].mxu0
      %v3493 = vpop.f32.mrb[0].mxu0
      %v3494 = vadd.f32 0.0, %v3493
      %v3495 = vpop.f32.mrb[0].mxu0
      %3496 = vmatprep.mubr.bf16.mxu0 0
      %3497 = vmatmul.mubr.bf16.gmra.mrb[0].mxu0 %v3334
      %v3498 = vpop.f32.mrb[0].mxu0
      %v3499 = vadd.f32 0.0, %v3498
      %v3500 = vpop.f32.mrb[0].mxu0
      %v3501 = vpop.f32.mrb[0].mxu0
      %v3502 = vadd.f32 0.0, %v3501
      %v3503 = vpop.f32.mrb[0].mxu0
      %3504 = vmatprep.mubr.bf16.mxu0 0
      %3505 = vmatmul.mubr.bf16.gmra.mrb[0].mxu0 %v3335
      %v3506 = vpop.f32.mrb[0].mxu0
      %v3507 = vadd.f32 0.0, %v3506
      %v3508 = vpop.f32.mrb[0].mxu0
      %v3509 = vpop.f32.mrb[0].mxu0
      %v3510 = vadd.f32 0.0, %v3509
      %v3511 = vpop.f32.mrb[0].mxu0
      %3512 = vmatprep.mubr.bf16.mxu0 0
      %3513 = vmatmul.mubr.bf16.gmra.mrb[0].mxu0 %v3336
      %v3514 = vpop.f32.mrb[0].mxu0
      %v3515 = vadd.f32 0.0, %v3514
      %v3516 = vpop.f32.mrb[0].mxu0
      %v3517 = vpop.f32.mrb[0].mxu0
      %v3518 = vadd.f32 0.0, %v3517
      %v3519 = vpop.f32.mrb[0].mxu0
      %3520 = vmatprep.mubr.bf16.mxu0 0
      %3521 = vmatmul.mubr.bf16.gmra.mrb[0].mxu0 %v3337
      %v3522 = vpop.f32.mrb[0].mxu0
      %v3523 = vadd.f32 0.0, %v3522
      %v3524 = vpop.f32.mrb[0].mxu0
      %v3525 = vpop.f32.mrb[0].mxu0
      %v3526 = vadd.f32 0.0, %v3525
      %v3527 = vpop.f32.mrb[0].mxu0
      %3528 = vmatprep.mubr.bf16.mxu0 0
      %3529 = vmatmul.mubr.bf16.gmra.mrb[0].mxu0 %v3338
      %v3530 = vpop.f32.mrb[0].mxu0
      %v3531 = vadd.f32 0.0, %v3530
      %v3532 = vpop.f32.mrb[0].mxu0
      %v3533 = vpop.f32.mrb[0].mxu0
      %v3534 = vadd.f32 0.0, %v3533
      %v3535 = vpop.f32.mrb[0].mxu0
      %3536 = vmatprep.mubr.bf16.mxu0 0
      %3537 = vmatmul.mubr.bf16.gmra.mrb[0].mxu0 %v3339
      %v3538 = vpop.f32.mrb[0].mxu0
      %v3539 = vadd.f32 0.0, %v3538
      %v3540 = vpop.f32.mrb[0].mxu0
      %v3541 = vpop.f32.mrb[0].mxu0
      %v3542 = vadd.f32 0.0, %v3541
      %v3543 = vpop.f32.mrb[0].mxu0
      %3544 = vmatprep.mubr.bf16.mxu0 0
      %3545 = vmatmul.mubr.bf16.gmra.mrb[0].mxu0 %v3340
      %v3546 = vpop.f32.mrb[0].mxu0
      %v3547 = vadd.f32 0.0, %v3546
      %v3548 = vpop.f32.mrb[0].mxu0
      %v3549 = vpop.f32.mrb[0].mxu0
      %v3550 = vadd.f32 0.0, %v3549
      %v3551 = vpop.f32.mrb[0].mxu0
      %3552 = vmatprep.mubr.bf16.mxu0 0
      %3553 = vmatmul.mubr.bf16.gmra.mrb[0].mxu0 %v3341
      %v3554 = vpop.f32.mrb[0].mxu0
      %v3555 = vadd.f32 0.0, %v3554
      %v3556 = vpop.f32.mrb[0].mxu0
      %v3557 = vpop.f32.mrb[0].mxu0
      %v3558 = vadd.f32 0.0, %v3557
      %v3559 = vpop.f32.mrb[0].mxu0
      %3560 = vmatprep.mubr.bf16.mxu0 0
      %3561 = vmatmul.mubr.bf16.gmra.mrb[0].mxu0 %v3342
      %v3562 = vpop.f32.mrb[0].mxu0
      %v3563 = vadd.f32 0.0, %v3562
      %v3564 = vpop.f32.mrb[0].mxu0
      %v3565 = vpop.f32.mrb[0].mxu0
      %v3566 = vadd.f32 0.0, %v3565
      %v3567 = vpop.f32.mrb[0].mxu0
      %3568 = vdwg.mxu0
      %v3585 = vunpack.c.l.b16 %v3279
      %v3586 = vunpack.c.l.b16 %v3280
      %v3587 = vunpack.c.l.b16 %v3281
      %v3588 = vunpack.c.l.b16 %v3282
      %v3589 = vunpack.c.l.b16 %v3283
      %v3590 = vunpack.c.l.b16 %v3284
      %v3591 = vunpack.c.l.b16 %v3285
      %v3592 = vunpack.c.l.b16 %v3286
      %v3593 = vunpack.c.l.b16 %v3287
      %v3594 = vunpack.c.l.b16 %v3288
      %v3595 = vunpack.c.l.b16 %v3289
      %v3596 = vunpack.c.l.b16 %v3290
      %v3597 = vunpack.c.l.b16 %v3291
      %v3598 = vunpack.c.l.b16 %v3292
      %v3599 = vunpack.c.l.b16 %v3293
      %v3600 = vunpack.c.l.b16 %v3294
      %v3601 = vpack.c.b16 %v3586, %v3585
      %v3602 = vpack.c.b16 %v3588, %v3587
      %v3603 = vpack.c.b16 %v3590, %v3589
      %v3604 = vpack.c.b16 %v3592, %v3591
      %v3605 = vpack.c.b16 %v3594, %v3593
      %v3606 = vpack.c.b16 %v3596, %v3595
      %v3607 = vpack.c.b16 %v3598, %v3597
      %v3608 = vpack.c.b16 %v3600, %v3599
      %3617 = vmatprep.subr.bf16.mxu0 0
      %3618 = vmatpush1.bf16.msra.mxu0 %v3601
      %3619 = vmatprep.subr.bf16.mxu0 0
      %3620 = vmatpush1.bf16.msra.mxu0 %v3602
      %3621 = vmatprep.subr.bf16.mxu0 0
      %3622 = vmatpush1.bf16.msra.mxu0 %v3603
      %3623 = vmatprep.subr.bf16.mxu0 0
      %3624 = vmatpush1.bf16.msra.mxu0 %v3604
      %3625 = vmatprep.subr.bf16.mxu0 0
      %3626 = vmatpush1.bf16.msra.mxu0 %v3605
      %3627 = vmatprep.subr.bf16.mxu0 0
      %3628 = vmatpush1.bf16.msra.mxu0 %v3606
      %3629 = vmatprep.subr.bf16.mxu0 0
      %3630 = vmatpush1.bf16.msra.mxu0 %v3607
      %3631 = vmatprep.subr.bf16.mxu0 0
      %3632 = vmatpush1.bf16.msra.mxu0 %v3608
      %3633 = vmatprep.subr.bf16.mxu0 0
      %3634 = vmatpush1.bf16.msra.mxu0 0
      %3635 = vmatprep.subr.bf16.mxu0 0
      %3636 = vmatpush1.bf16.msra.mxu0 0
      %3637 = vmatprep.subr.bf16.mxu0 0
      %3638 = vmatpush1.bf16.msra.mxu0 0
      %3639 = vmatprep.subr.bf16.mxu0 0
      %3640 = vmatpush1.bf16.msra.mxu0 0
      %3641 = vmatprep.subr.bf16.mxu0 0
      %3642 = vmatpush1.bf16.msra.mxu0 0
      %3643 = vmatprep.subr.bf16.mxu0 0
      %3644 = vmatpush1.bf16.msra.mxu0 0
      %3645 = vmatprep.subr.bf16.mxu0 0
      %3646 = vmatpush1.bf16.msra.mxu0 0
      %3647 = vmatprep.subr.bf16.mxu0 0
      %3648 = vmatpush1.bf16.msra.mxu0 0
      %3649 = vmatprep.mubr.bf16.mxu0 0
      %3650 = vmatmul.mubr.bf16.gmra.mrb[0].mxu0 %v3263
      %v3651 = vpop.f32.mrb[0].mxu0
      %v3652 = vadd.f32 %v3443, %v3651
      %v3653 = vpop.f32.mrb[0].mxu0
      %v3654 = vpop.f32.mrb[0].mxu0
      %v3655 = vadd.f32 %v3446, %v3654
      %v3656 = vpop.f32.mrb[0].mxu0
      %3657 = vmatprep.mubr.bf16.mxu0 0
      %3658 = vmatmul.mubr.bf16.gmra.mrb[0].mxu0 %v3264
      %v3659 = vpop.f32.mrb[0].mxu0
      %v3660 = vadd.f32 %v3451, %v3659
      %v3661 = vpop.f32.mrb[0].mxu0
      %v3662 = vpop.f32.mrb[0].mxu0
      %v3663 = vadd.f32 %v3454, %v3662
      %v3664 = vpop.f32.mrb[0].mxu0
      %3665 = vmatprep.mubr.bf16.mxu0 0
      %3666 = vmatmul.mubr.bf16.gmra.mrb[0].mxu0 %v3265
      %v3667 = vpop.f32.mrb[0].mxu0
      %v3668 = vadd.f32 %v3459, %v3667
      %v3669 = vpop.f32.mrb[0].mxu0
      %v3670 = vpop.f32.mrb[0].mxu0
      %v3671 = vadd.f32 %v3462, %v3670
      %v3672 = vpop.f32.mrb[0].mxu0
      %3673 = vmatprep.mubr.bf16.mxu0 0
      %3674 = vmatmul.mubr.bf16.gmra.mrb[0].mxu0 %v3266
      %v3675 = vpop.f32.mrb[0].mxu0
      %v3676 = vadd.f32 %v3467, %v3675
      %v3677 = vpop.f32.mrb[0].mxu0
      %v3678 = vpop.f32.mrb[0].mxu0
      %v3679 = vadd.f32 %v3470, %v3678
      %v3680 = vpop.f32.mrb[0].mxu0
      %3681 = vmatprep.mubr.bf16.mxu0 0
      %3682 = vmatmul.mubr.bf16.gmra.mrb[0].mxu0 %v3267
      %v3683 = vpop.f32.mrb[0].mxu0
      %v3684 = vadd.f32 %v3475, %v3683
      %v3685 = vpop.f32.mrb[0].mxu0
      %v3686 = vpop.f32.mrb[0].mxu0
      %v3687 = vadd.f32 %v3478, %v3686
      %v3688 = vpop.f32.mrb[0].mxu0
      %3689 = vmatprep.mubr.bf16.mxu0 0
      %3690 = vmatmul.mubr.bf16.gmra.mrb[0].mxu0 %v3268
      %v3691 = vpop.f32.mrb[0].mxu0
      %v3692 = vadd.f32 %v3483, %v3691
      %v3693 = vpop.f32.mrb[0].mxu0
      %v3694 = vpop.f32.mrb[0].mxu0
      %v3695 = vadd.f32 %v3486, %v3694
      %v3696 = vpop.f32.mrb[0].mxu0
      %3697 = vmatprep.mubr.bf16.mxu0 0
      %3698 = vmatmul.mubr.bf16.gmra.mrb[0].mxu0 %v3269
      %v3699 = vpop.f32.mrb[0].mxu0
      %v3700 = vadd.f32 %v3491, %v3699
      %v3701 = vpop.f32.mrb[0].mxu0
      %v3702 = vpop.f32.mrb[0].mxu0
      %v3703 = vadd.f32 %v3494, %v3702
      %v3704 = vpop.f32.mrb[0].mxu0
      %3705 = vmatprep.mubr.bf16.mxu0 0
      %3706 = vmatmul.mubr.bf16.gmra.mrb[0].mxu0 %v3270
      %v3707 = vpop.f32.mrb[0].mxu0
      %v3708 = vadd.f32 %v3499, %v3707
      %v3709 = vpop.f32.mrb[0].mxu0
      %v3710 = vpop.f32.mrb[0].mxu0
      %v3711 = vadd.f32 %v3502, %v3710
      %v3712 = vpop.f32.mrb[0].mxu0
      %3713 = vmatprep.mubr.bf16.mxu0 0
      %3714 = vmatmul.mubr.bf16.gmra.mrb[0].mxu0 %v3271
      %v3715 = vpop.f32.mrb[0].mxu0
      %v3716 = vadd.f32 %v3507, %v3715
      %v3717 = vpop.f32.mrb[0].mxu0
      %v3718 = vpop.f32.mrb[0].mxu0
      %v3719 = vadd.f32 %v3510, %v3718
      %v3720 = vpop.f32.mrb[0].mxu0
      %3721 = vmatprep.mubr.bf16.mxu0 0
      %3722 = vmatmul.mubr.bf16.gmra.mrb[0].mxu0 %v3272
      %v3723 = vpop.f32.mrb[0].mxu0
      %v3724 = vadd.f32 %v3515, %v3723
      %v3725 = vpop.f32.mrb[0].mxu0
      %v3726 = vpop.f32.mrb[0].mxu0
      %v3727 = vadd.f32 %v3518, %v3726
      %v3728 = vpop.f32.mrb[0].mxu0
      %3729 = vmatprep.mubr.bf16.mxu0 0
      %3730 = vmatmul.mubr.bf16.gmra.mrb[0].mxu0 %v3273
      %v3731 = vpop.f32.mrb[0].mxu0
      %v3732 = vadd.f32 %v3523, %v3731
      %v3733 = vpop.f32.mrb[0].mxu0
      %v3734 = vpop.f32.mrb[0].mxu0
      %v3735 = vadd.f32 %v3526, %v3734
      %v3736 = vpop.f32.mrb[0].mxu0
      %3737 = vmatprep.mubr.bf16.mxu0 0
      %3738 = vmatmul.mubr.bf16.gmra.mrb[0].mxu0 %v3274
      %v3739 = vpop.f32.mrb[0].mxu0
      %v3740 = vadd.f32 %v3531, %v3739
      %v3741 = vpop.f32.mrb[0].mxu0
      %v3742 = vpop.f32.mrb[0].mxu0
      %v3743 = vadd.f32 %v3534, %v3742
      %v3744 = vpop.f32.mrb[0].mxu0
      %3745 = vmatprep.mubr.bf16.mxu0 0
      %3746 = vmatmul.mubr.bf16.gmra.mrb[0].mxu0 %v3275
      %v3747 = vpop.f32.mrb[0].mxu0
      %v3748 = vadd.f32 %v3539, %v3747
      %v3749 = vpop.f32.mrb[0].mxu0
      %v3750 = vpop.f32.mrb[0].mxu0
      %v3751 = vadd.f32 %v3542, %v3750
      %v3752 = vpop.f32.mrb[0].mxu0
      %3753 = vmatprep.mubr.bf16.mxu0 0
      %3754 = vmatmul.mubr.bf16.gmra.mrb[0].mxu0 %v3276
      %v3755 = vpop.f32.mrb[0].mxu0
      %v3756 = vadd.f32 %v3547, %v3755
      %v3757 = vpop.f32.mrb[0].mxu0
      %v3758 = vpop.f32.mrb[0].mxu0
      %v3759 = vadd.f32 %v3550, %v3758
      %v3760 = vpop.f32.mrb[0].mxu0
      %3761 = vmatprep.mubr.bf16.mxu0 0
      %3762 = vmatmul.mubr.bf16.gmra.mrb[0].mxu0 %v3277
      %v3763 = vpop.f32.mrb[0].mxu0
      %v3764 = vadd.f32 %v3555, %v3763
      %v3765 = vpop.f32.mrb[0].mxu0
      %v3766 = vpop.f32.mrb[0].mxu0
      %v3767 = vadd.f32 %v3558, %v3766
      %v3768 = vpop.f32.mrb[0].mxu0
      %3769 = vmatprep.mubr.bf16.mxu0 0
      %3770 = vmatmul.mubr.bf16.gmra.mrb[0].mxu0 %v3278
      %v3771 = vpop.f32.mrb[0].mxu0
      %v3772 = vadd.f32 %v3563, %v3771
      %v3773 = vpop.f32.mrb[0].mxu0
      %v3774 = vpop.f32.mrb[0].mxu0
      %v3775 = vadd.f32 %v3566, %v3774
      %v3776 = vpop.f32.mrb[0].mxu0
      %3777 = vdwg.mxu0
      %v3778 = vld [vmem:[#allocation3 + $0x9] sm:$0xff]
      %v3779 = vld [vmem:[#allocation3 + $0x11] sm:$0xff]
      %v3780 = vld [vmem:[#allocation3 + $0x29] sm:$0xff]
      %v3781 = vld [vmem:[#allocation3 + $0x31] sm:$0xff]
      %v3782 = vld [vmem:[#allocation3 + $0x49] sm:$0xff]
      %v3783 = vld [vmem:[#allocation3 + $0x51] sm:$0xff]
      %v3784 = vld [vmem:[#allocation3 + $0x69] sm:$0xff]
      %v3785 = vld [vmem:[#allocation3 + $0x71] sm:$0xff]
      %v3786 = vld [vmem:[#allocation3 + $0x89] sm:$0xff]
      %v3787 = vld [vmem:[#allocation3 + $0x91] sm:$0xff]
      %v3788 = vld [vmem:[#allocation3 + $0xa9] sm:$0xff]
      %v3789 = vld [vmem:[#allocation3 + $0xb1] sm:$0xff]
      %v3790 = vld [vmem:[#allocation3 + $0xc9] sm:$0xff]
      %v3791 = vld [vmem:[#allocation3 + $0xd1] sm:$0xff]
      %v3792 = vld [vmem:[#allocation3 + $0xe9] sm:$0xff]
      %v3793 = vld [vmem:[#allocation3 + $0xf1] sm:$0xff]
      %v3794 = vld [vmem:[#allocation3 + $0x109] sm:$0xff]
      %v3795 = vld [vmem:[#allocation3 + $0x111] sm:$0xff]
      %v3796 = vld [vmem:[#allocation3 + $0x129] sm:$0xff]
      %v3797 = vld [vmem:[#allocation3 + $0x131] sm:$0xff]
      %v3798 = vld [vmem:[#allocation3 + $0x149] sm:$0xff]
      %v3799 = vld [vmem:[#allocation3 + $0x151] sm:$0xff]
      %v3800 = vld [vmem:[#allocation3 + $0x169] sm:$0xff]
      %v3801 = vld [vmem:[#allocation3 + $0x171] sm:$0xff]
      %v3802 = vld [vmem:[#allocation3 + $0x189] sm:$0xff]
      %v3803 = vld [vmem:[#allocation3 + $0x191] sm:$0xff]
      %v3804 = vld [vmem:[#allocation3 + $0x1a9] sm:$0xff]
      %v3805 = vld [vmem:[#allocation3 + $0x1b1] sm:$0xff]
      %v3806 = vld [vmem:[#allocation3 + $0x1c9] sm:$0xff]
      %v3807 = vld [vmem:[#allocation3 + $0x1d1] sm:$0xff]
      %v3808 = vld [vmem:[#allocation3 + $0x1e9] sm:$0xff]
      %v3809 = vld [vmem:[#allocation3 + $0x1f1] sm:$0xff]
      %v3810 = vpack.c.bf16 %v3779, %v3778
      %v3811 = vpack.c.bf16 %v3781, %v3780
      %v3812 = vpack.c.bf16 %v3783, %v3782
      %v3813 = vpack.c.bf16 %v3785, %v3784
      %v3814 = vpack.c.bf16 %v3787, %v3786
      %v3815 = vpack.c.bf16 %v3789, %v3788
      %v3816 = vpack.c.bf16 %v3791, %v3790
      %v3817 = vpack.c.bf16 %v3793, %v3792
      %v3818 = vpack.c.bf16 %v3795, %v3794
      %v3819 = vpack.c.bf16 %v3797, %v3796
      %v3820 = vpack.c.bf16 %v3799, %v3798
      %v3821 = vpack.c.bf16 %v3801, %v3800
      %v3822 = vpack.c.bf16 %v3803, %v3802
      %v3823 = vpack.c.bf16 %v3805, %v3804
      %v3824 = vpack.c.bf16 %v3807, %v3806
      %v3825 = vpack.c.bf16 %v3809, %v3808
      %s3826 = scalar_lea.vmem %s3, 128
      %v3827 = vld [vmem:[%s3826] sm:$0xf]
      %v3828 = vld [vmem:[%s3826 + $0x4] sm:$0xf]
      %v3829 = vld [vmem:[%s3826 + $0x8] sm:$0xf]
      %v3830 = vld [vmem:[%s3826 + $0xc] sm:$0xf]
      %v3831 = vld [vmem:[%s3826 + $0x10] sm:$0xf]
      %v3832 = vld [vmem:[%s3826 + $0x14] sm:$0xf]
      %v3833 = vld [vmem:[%s3826 + $0x18] sm:$0xf]
      %v3834 = vld [vmem:[%s3826 + $0x1c] sm:$0xf]
      %v3835 = vld [vmem:[%s3826 + $0x20] sm:$0xf]
      %v3836 = vld [vmem:[%s3826 + $0x24] sm:$0xf]
      %v3837 = vld [vmem:[%s3826 + $0x28] sm:$0xf]
      %v3838 = vld [vmem:[%s3826 + $0x2c] sm:$0xf]
      %v3839 = vld [vmem:[%s3826 + $0x30] sm:$0xf]
      %v3840 = vld [vmem:[%s3826 + $0x34] sm:$0xf]
      %v3841 = vld [vmem:[%s3826 + $0x38] sm:$0xf]
      %v3842 = vld [vmem:[%s3826 + $0x3c] sm:$0xf]
      %v3859 = vunpack.c.l.b16 %v3827
      %v3860 = vunpack.c.l.b16 %v3828
      %v3861 = vunpack.c.l.b16 %v3829
      %v3862 = vunpack.c.l.b16 %v3830
      %v3863 = vunpack.c.l.b16 %v3831
      %v3864 = vunpack.c.l.b16 %v3832
      %v3865 = vunpack.c.l.b16 %v3833
      %v3866 = vunpack.c.l.b16 %v3834
      %v3867 = vunpack.c.l.b16 %v3835
      %v3868 = vunpack.c.l.b16 %v3836
      %v3869 = vunpack.c.l.b16 %v3837
      %v3870 = vunpack.c.l.b16 %v3838
      %v3871 = vunpack.c.l.b16 %v3839
      %v3872 = vunpack.c.l.b16 %v3840
      %v3873 = vunpack.c.l.b16 %v3841
      %v3874 = vunpack.c.l.b16 %v3842
      %v3875 = vpack.c.b16 %v3860, %v3859
      %v3876 = vpack.c.b16 %v3862, %v3861
      %v3877 = vpack.c.b16 %v3864, %v3863
      %v3878 = vpack.c.b16 %v3866, %v3865
      %v3879 = vpack.c.b16 %v3868, %v3867
      %v3880 = vpack.c.b16 %v3870, %v3869
      %v3881 = vpack.c.b16 %v3872, %v3871
      %v3882 = vpack.c.b16 %v3874, %v3873
      %3891 = vmatprep.subr.bf16.mxu0 0
      %3892 = vmatpush1.bf16.msra.mxu0 %v3875
      %3893 = vmatprep.subr.bf16.mxu0 0
      %3894 = vmatpush1.bf16.msra.mxu0 %v3876
      %3895 = vmatprep.subr.bf16.mxu0 0
      %3896 = vmatpush1.bf16.msra.mxu0 %v3877
      %3897 = vmatprep.subr.bf16.mxu0 0
      %3898 = vmatpush1.bf16.msra.mxu0 %v3878
      %3899 = vmatprep.subr.bf16.mxu0 0
      %3900 = vmatpush1.bf16.msra.mxu0 %v3879
      %3901 = vmatprep.subr.bf16.mxu0 0
      %3902 = vmatpush1.bf16.msra.mxu0 %v3880
      %3903 = vmatprep.subr.bf16.mxu0 0
      %3904 = vmatpush1.bf16.msra.mxu0 %v3881
      %3905 = vmatprep.subr.bf16.mxu0 0
      %3906 = vmatpush1.bf16.msra.mxu0 %v3882
      %3907 = vmatprep.subr.bf16.mxu0 0
      %3908 = vmatpush1.bf16.msra.mxu0 0
      %3909 = vmatprep.subr.bf16.mxu0 0
      %3910 = vmatpush1.bf16.msra.mxu0 0
      %3911 = vmatprep.subr.bf16.mxu0 0
      %3912 = vmatpush1.bf16.msra.mxu0 0
      %3913 = vmatprep.subr.bf16.mxu0 0
      %3914 = vmatpush1.bf16.msra.mxu0 0
      %3915 = vmatprep.subr.bf16.mxu0 0
      %3916 = vmatpush1.bf16.msra.mxu0 0
      %3917 = vmatprep.subr.bf16.mxu0 0
      %3918 = vmatpush1.bf16.msra.mxu0 0
      %3919 = vmatprep.subr.bf16.mxu0 0
      %3920 = vmatpush1.bf16.msra.mxu0 0
      %3921 = vmatprep.subr.bf16.mxu0 0
      %3922 = vmatpush1.bf16.msra.mxu0 0
      %3923 = vmatprep.mubr.bf16.mxu0 0
      %3924 = vmatmul.mubr.bf16.gmra.mrb[0].mxu0 %v3810
      %v3925 = vpop.f32.mrb[0].mxu0
      %v3926 = vadd.f32 0.0, %v3925
      %v3927 = vpop.f32.mrb[0].mxu0
      %v3928 = vpop.f32.mrb[0].mxu0
      %v3929 = vadd.f32 0.0, %v3928
      %v3930 = vpop.f32.mrb[0].mxu0
      %3931 = vmatprep.mubr.bf16.mxu0 0
      %3932 = vmatmul.mubr.bf16.gmra.mrb[0].mxu0 %v3811
      %v3933 = vpop.f32.mrb[0].mxu0
      %v3934 = vadd.f32 0.0, %v3933
      %v3935 = vpop.f32.mrb[0].mxu0
      %v3936 = vpop.f32.mrb[0].mxu0
      %v3937 = vadd.f32 0.0, %v3936
      %v3938 = vpop.f32.mrb[0].mxu0
      %3939 = vmatprep.mubr.bf16.mxu0 0
      %3940 = vmatmul.mubr.bf16.gmra.mrb[0].mxu0 %v3812
      %v3941 = vpop.f32.mrb[0].mxu0
      %v3942 = vadd.f32 0.0, %v3941
      %v3943 = vpop.f32.mrb[0].mxu0
      %v3944 = vpop.f32.mrb[0].mxu0
      %v3945 = vadd.f32 0.0, %v3944
      %v3946 = vpop.f32.mrb[0].mxu0
      %3947 = vmatprep.mubr.bf16.mxu0 0
      %3948 = vmatmul.mubr.bf16.gmra.mrb[0].mxu0 %v3813
      %v3949 = vpop.f32.mrb[0].mxu0
      %v3950 = vadd.f32 0.0, %v3949
      %v3951 = vpop.f32.mrb[0].mxu0
      %v3952 = vpop.f32.mrb[0].mxu0
      %v3953 = vadd.f32 0.0, %v3952
      %v3954 = vpop.f32.mrb[0].mxu0
      %3955 = vmatprep.mubr.bf16.mxu0 0
      %3956 = vmatmul.mubr.bf16.gmra.mrb[0].mxu0 %v3814
      %v3957 = vpop.f32.mrb[0].mxu0
      %v3958 = vadd.f32 0.0, %v3957
      %v3959 = vpop.f32.mrb[0].mxu0
      %v3960 = vpop.f32.mrb[0].mxu0
      %v3961 = vadd.f32 0.0, %v3960
      %v3962 = vpop.f32.mrb[0].mxu0
      %3963 = vmatprep.mubr.bf16.mxu0 0
      %3964 = vmatmul.mubr.bf16.gmra.mrb[0].mxu0 %v3815
      %v3965 = vpop.f32.mrb[0].mxu0
      %v3966 = vadd.f32 0.0, %v3965
      %v3967 = vpop.f32.mrb[0].mxu0
      %v3968 = vpop.f32.mrb[0].mxu0
      %v3969 = vadd.f32 0.0, %v3968
      %v3970 = vpop.f32.mrb[0].mxu0
      %3971 = vmatprep.mubr.bf16.mxu0 0
      %3972 = vmatmul.mubr.bf16.gmra.mrb[0].mxu0 %v3816
      %v3973 = vpop.f32.mrb[0].mxu0
      %v3974 = vadd.f32 0.0, %v3973
      %v3975 = vpop.f32.mrb[0].mxu0
      %v3976 = vpop.f32.mrb[0].mxu0
      %v3977 = vadd.f32 0.0, %v3976
      %v3978 = vpop.f32.mrb[0].mxu0
      %3979 = vmatprep.mubr.bf16.mxu0 0
      %3980 = vmatmul.mubr.bf16.gmra.mrb[0].mxu0 %v3817
      %v3981 = vpop.f32.mrb[0].mxu0
      %v3982 = vadd.f32 0.0, %v3981
      %v3983 = vpop.f32.mrb[0].mxu0
      %v3984 = vpop.f32.mrb[0].mxu0
      %v3985 = vadd.f32 0.0, %v3984
      %v3986 = vpop.f32.mrb[0].mxu0
      %3987 = vmatprep.mubr.bf16.mxu0 0
      %3988 = vmatmul.mubr.bf16.gmra.mrb[0].mxu0 %v3818
      %v3989 = vpop.f32.mrb[0].mxu0
      %v3990 = vadd.f32 0.0, %v3989
      %v3991 = vpop.f32.mrb[0].mxu0
      %v3992 = vpop.f32.mrb[0].mxu0
      %v3993 = vadd.f32 0.0, %v3992
      %v3994 = vpop.f32.mrb[0].mxu0
      %3995 = vmatprep.mubr.bf16.mxu0 0
      %3996 = vmatmul.mubr.bf16.gmra.mrb[0].mxu0 %v3819
      %v3997 = vpop.f32.mrb[0].mxu0
      %v3998 = vadd.f32 0.0, %v3997
      %v3999 = vpop.f32.mrb[0].mxu0
      %v4000 = vpop.f32.mrb[0].mxu0
      %v4001 = vadd.f32 0.0, %v4000
      %v4002 = vpop.f32.mrb[0].mxu0
      %4003 = vmatprep.mubr.bf16.mxu0 0
      %4004 = vmatmul.mubr.bf16.gmra.mrb[0].mxu0 %v3820
      %v4005 = vpop.f32.mrb[0].mxu0
      %v4006 = vadd.f32 0.0, %v4005
      %v4007 = vpop.f32.mrb[0].mxu0
      %v4008 = vpop.f32.mrb[0].mxu0
      %v4009 = vadd.f32 0.0, %v4008
      %v4010 = vpop.f32.mrb[0].mxu0
      %4011 = vmatprep.mubr.bf16.mxu0 0
      %4012 = vmatmul.mubr.bf16.gmra.mrb[0].mxu0 %v3821
      %v4013 = vpop.f32.mrb[0].mxu0
      %v4014 = vadd.f32 0.0, %v4013
      %v4015 = vpop.f32.mrb[0].mxu0
      %v4016 = vpop.f32.mrb[0].mxu0
      %v4017 = vadd.f32 0.0, %v4016
      %v4018 = vpop.f32.mrb[0].mxu0
      %4019 = vmatprep.mubr.bf16.mxu0 0
      %4020 = vmatmul.mubr.bf16.gmra.mrb[0].mxu0 %v3822
      %v4021 = vpop.f32.mrb[0].mxu0
      %v4022 = vadd.f32 0.0, %v4021
      %v4023 = vpop.f32.mrb[0].mxu0
      %v4024 = vpop.f32.mrb[0].mxu0
      %v4025 = vadd.f32 0.0, %v4024
      %v4026 = vpop.f32.mrb[0].mxu0
      %4027 = vmatprep.mubr.bf16.mxu0 0
      %4028 = vmatmul.mubr.bf16.gmra.mrb[0].mxu0 %v3823
      %v4029 = vpop.f32.mrb[0].mxu0
      %v4030 = vadd.f32 0.0, %v4029
      %v4031 = vpop.f32.mrb[0].mxu0
      %v4032 = vpop.f32.mrb[0].mxu0
      %v4033 = vadd.f32 0.0, %v4032
      %v4034 = vpop.f32.mrb[0].mxu0
      %4035 = vmatprep.mubr.bf16.mxu0 0
      %4036 = vmatmul.mubr.bf16.gmra.mrb[0].mxu0 %v3824
      %v4037 = vpop.f32.mrb[0].mxu0
      %v4038 = vadd.f32 0.0, %v4037
      %v4039 = vpop.f32.mrb[0].mxu0
      %v4040 = vpop.f32.mrb[0].mxu0
      %v4041 = vadd.f32 0.0, %v4040
      %v4042 = vpop.f32.mrb[0].mxu0
      %4043 = vmatprep.mubr.bf16.mxu0 0
      %4044 = vmatmul.mubr.bf16.gmra.mrb[0].mxu0 %v3825
      %v4045 = vpop.f32.mrb[0].mxu0
      %v4046 = vadd.f32 0.0, %v4045
      %v4047 = vpop.f32.mrb[0].mxu0
      %v4048 = vpop.f32.mrb[0].mxu0
      %v4049 = vadd.f32 0.0, %v4048
      %v4050 = vpop.f32.mrb[0].mxu0
      %4051 = vdwg.mxu0
      %v4052 = vadd.f32 %v3652, %v3926
      %v4053 = vadd.f32 %v3655, %v3929
      %v4054 = vadd.f32 %v3660, %v3934
      %v4055 = vadd.f32 %v3663, %v3937
      %v4056 = vadd.f32 %v3668, %v3942
      %v4057 = vadd.f32 %v3671, %v3945
      %v4058 = vadd.f32 %v3676, %v3950
      %v4059 = vadd.f32 %v3679, %v3953
      %v4060 = vadd.f32 %v3684, %v3958
      %v4061 = vadd.f32 %v3687, %v3961
      %v4062 = vadd.f32 %v3692, %v3966
      %v4063 = vadd.f32 %v3695, %v3969
      %v4064 = vadd.f32 %v3700, %v3974
      %v4065 = vadd.f32 %v3703, %v3977
      %v4066 = vadd.f32 %v3708, %v3982
      %v4067 = vadd.f32 %v3711, %v3985
      %v4068 = vadd.f32 %v3716, %v3990
      %v4069 = vadd.f32 %v3719, %v3993
      %v4070 = vadd.f32 %v3724, %v3998
      %v4071 = vadd.f32 %v3727, %v4001
      %v4072 = vadd.f32 %v3732, %v4006
      %v4073 = vadd.f32 %v3735, %v4009
      %v4074 = vadd.f32 %v3740, %v4014
      %v4075 = vadd.f32 %v3743, %v4017
      %v4076 = vadd.f32 %v3748, %v4022
      %v4077 = vadd.f32 %v3751, %v4025
      %v4078 = vadd.f32 %v3756, %v4030
      %v4079 = vadd.f32 %v3759, %v4033
      %v4080 = vadd.f32 %v3764, %v4038
      %v4081 = vadd.f32 %v3767, %v4041
      %v4082 = vadd.f32 %v3772, %v4046
      %v4083 = vadd.f32 %v3775, %v4049
      %v4084 = vld [vmem:[%s277 + $0x7] sm:$0xff]
      %v4085 = vld [vmem:[%s277 + $0xf] sm:$0xff]
      %v4086 = vld [vmem:[%s277 + $0x27] sm:$0xff]
      %v4087 = vld [vmem:[%s277 + $0x2f] sm:$0xff]
      %v4088 = vld [vmem:[%s277 + $0x47] sm:$0xff]
      %v4089 = vld [vmem:[%s277 + $0x4f] sm:$0xff]
      %v4090 = vld [vmem:[%s277 + $0x67] sm:$0xff]
      %v4091 = vld [vmem:[%s277 + $0x6f] sm:$0xff]
      %v4092 = vld [vmem:[%s277 + $0x87] sm:$0xff]
      %v4093 = vld [vmem:[%s277 + $0x8f] sm:$0xff]
      %v4094 = vld [vmem:[%s277 + $0xa7] sm:$0xff]
      %v4095 = vld [vmem:[%s277 + $0xaf] sm:$0xff]
      %v4096 = vld [vmem:[%s277 + $0xc7] sm:$0xff]
      %v4097 = vld [vmem:[%s277 + $0xcf] sm:$0xff]
      %v4098 = vld [vmem:[%s277 + $0xe7] sm:$0xff]
      %v4099 = vld [vmem:[%s277 + $0xef] sm:$0xff]
      %v4100 = vld [vmem:[%s277 + $0x107] sm:$0xff]
      %v4101 = vld [vmem:[%s277 + $0x10f] sm:$0xff]
      %v4102 = vld [vmem:[%s277 + $0x127] sm:$0xff]
      %v4103 = vld [vmem:[%s277 + $0x12f] sm:$0xff]
      %v4104 = vld [vmem:[%s277 + $0x147] sm:$0xff]
      %v4105 = vld [vmem:[%s277 + $0x14f] sm:$0xff]
      %v4106 = vld [vmem:[%s277 + $0x167] sm:$0xff]
      %v4107 = vld [vmem:[%s277 + $0x16f] sm:$0xff]
      %v4108 = vld [vmem:[%s277 + $0x187] sm:$0xff]
      %v4109 = vld [vmem:[%s277 + $0x18f] sm:$0xff]
      %v4110 = vld [vmem:[%s277 + $0x1a7] sm:$0xff]
      %v4111 = vld [vmem:[%s277 + $0x1af] sm:$0xff]
      %v4112 = vld [vmem:[%s277 + $0x1c7] sm:$0xff]
      %v4113 = vld [vmem:[%s277 + $0x1cf] sm:$0xff]
      %v4114 = vld [vmem:[%s277 + $0x1e7] sm:$0xff]
      %v4115 = vld [vmem:[%s277 + $0x1ef] sm:$0xff]
      %v4116 = vpack.c.bf16 %v4085, %v4084
      %v4117 = vpack.c.bf16 %v4087, %v4086
      %v4118 = vpack.c.bf16 %v4089, %v4088
      %v4119 = vpack.c.bf16 %v4091, %v4090
      %v4120 = vpack.c.bf16 %v4093, %v4092
      %v4121 = vpack.c.bf16 %v4095, %v4094
      %v4122 = vpack.c.bf16 %v4097, %v4096
      %v4123 = vpack.c.bf16 %v4099, %v4098
      %v4124 = vpack.c.bf16 %v4101, %v4100
      %v4125 = vpack.c.bf16 %v4103, %v4102
      %v4126 = vpack.c.bf16 %v4105, %v4104
      %v4127 = vpack.c.bf16 %v4107, %v4106
      %v4128 = vpack.c.bf16 %v4109, %v4108
      %v4129 = vpack.c.bf16 %v4111, %v4110
      %v4130 = vpack.c.bf16 %v4113, %v4112
      %v4131 = vpack.c.bf16 %v4115, %v4114
      %s4132 = scalar_lea.vmem %s3, 192
      %v4133 = vld [vmem:[%s4132] sm:$0xf]
      %v4134 = vld [vmem:[%s4132 + $0x4] sm:$0xf]
      %v4135 = vld [vmem:[%s4132 + $0x8] sm:$0xf]
      %v4136 = vld [vmem:[%s4132 + $0xc] sm:$0xf]
      %v4137 = vld [vmem:[%s4132 + $0x10] sm:$0xf]
      %v4138 = vld [vmem:[%s4132 + $0x14] sm:$0xf]
      %v4139 = vld [vmem:[%s4132 + $0x18] sm:$0xf]
      %v4140 = vld [vmem:[%s4132 + $0x1c] sm:$0xf]
      %v4141 = vld [vmem:[%s4132 + $0x20] sm:$0xf]
      %v4142 = vld [vmem:[%s4132 + $0x24] sm:$0xf]
      %v4143 = vld [vmem:[%s4132 + $0x28] sm:$0xf]
      %v4144 = vld [vmem:[%s4132 + $0x2c] sm:$0xf]
      %v4145 = vld [vmem:[%s4132 + $0x30] sm:$0xf]
      %v4146 = vld [vmem:[%s4132 + $0x34] sm:$0xf]
      %v4147 = vld [vmem:[%s4132 + $0x38] sm:$0xf]
      %v4148 = vld [vmem:[%s4132 + $0x3c] sm:$0xf]
      %v4165 = vunpack.c.l.b16 %v4133
      %v4166 = vunpack.c.l.b16 %v4134
      %v4167 = vunpack.c.l.b16 %v4135
      %v4168 = vunpack.c.l.b16 %v4136
      %v4169 = vunpack.c.l.b16 %v4137
      %v4170 = vunpack.c.l.b16 %v4138
      %v4171 = vunpack.c.l.b16 %v4139
      %v4172 = vunpack.c.l.b16 %v4140
      %v4173 = vunpack.c.l.b16 %v4141
      %v4174 = vunpack.c.l.b16 %v4142
      %v4175 = vunpack.c.l.b16 %v4143
      %v4176 = vunpack.c.l.b16 %v4144
      %v4177 = vunpack.c.l.b16 %v4145
      %v4178 = vunpack.c.l.b16 %v4146
      %v4179 = vunpack.c.l.b16 %v4147
      %v4180 = vunpack.c.l.b16 %v4148
      %v4181 = vpack.c.b16 %v4166, %v4165
      %v4182 = vpack.c.b16 %v4168, %v4167
      %v4183 = vpack.c.b16 %v4170, %v4169
      %v4184 = vpack.c.b16 %v4172, %v4171
      %v4185 = vpack.c.b16 %v4174, %v4173
      %v4186 = vpack.c.b16 %v4176, %v4175
      %v4187 = vpack.c.b16 %v4178, %v4177
      %v4188 = vpack.c.b16 %v4180, %v4179
      %4197 = vmatprep.subr.bf16.mxu0 0
      %4198 = vmatpush1.bf16.msra.mxu0 %v4181
      %4199 = vmatprep.subr.bf16.mxu0 0
      %4200 = vmatpush1.bf16.msra.mxu0 %v4182
      %4201 = vmatprep.subr.bf16.mxu0 0
      %4202 = vmatpush1.bf16.msra.mxu0 %v4183
      %4203 = vmatprep.subr.bf16.mxu0 0
      %4204 = vmatpush1.bf16.msra.mxu0 %v4184
      %4205 = vmatprep.subr.bf16.mxu0 0
      %4206 = vmatpush1.bf16.msra.mxu0 %v4185
      %4207 = vmatprep.subr.bf16.mxu0 0
      %4208 = vmatpush1.bf16.msra.mxu0 %v4186
      %4209 = vmatprep.subr.bf16.mxu0 0
      %4210 = vmatpush1.bf16.msra.mxu0 %v4187
      %4211 = vmatprep.subr.bf16.mxu0 0
      %4212 = vmatpush1.bf16.msra.mxu0 %v4188
      %4213 = vmatprep.subr.bf16.mxu0 0
      %4214 = vmatpush1.bf16.msra.mxu0 0
      %4215 = vmatprep.subr.bf16.mxu0 0
      %4216 = vmatpush1.bf16.msra.mxu0 0
      %4217 = vmatprep.subr.bf16.mxu0 0
      %4218 = vmatpush1.bf16.msra.mxu0 0
      %4219 = vmatprep.subr.bf16.mxu0 0
      %4220 = vmatpush1.bf16.msra.mxu0 0
      %4221 = vmatprep.subr.bf16.mxu0 0
      %4222 = vmatpush1.bf16.msra.mxu0 0
      %4223 = vmatprep.subr.bf16.mxu0 0
      %4224 = vmatpush1.bf16.msra.mxu0 0
      %4225 = vmatprep.subr.bf16.mxu0 0
      %4226 = vmatpush1.bf16.msra.mxu0 0
      %4227 = vmatprep.subr.bf16.mxu0 0
      %4228 = vmatpush1.bf16.msra.mxu0 0
      %4229 = vmatprep.mubr.bf16.mxu0 0
      %4230 = vmatmul.mubr.bf16.gmra.mrb[0].mxu0 %v4116
      %v4231 = vpop.f32.mrb[0].mxu0
      %v4232 = vadd.f32 0.0, %v4231
      %v4233 = vpop.f32.mrb[0].mxu0
      %v4234 = vpop.f32.mrb[0].mxu0
      %v4235 = vadd.f32 0.0, %v4234
      %v4236 = vpop.f32.mrb[0].mxu0
      %4237 = vmatprep.mubr.bf16.mxu0 0
      %4238 = vmatmul.mubr.bf16.gmra.mrb[0].mxu0 %v4117
      %v4239 = vpop.f32.mrb[0].mxu0
      %v4240 = vadd.f32 0.0, %v4239
      %v4241 = vpop.f32.mrb[0].mxu0
      %v4242 = vpop.f32.mrb[0].mxu0
      %v4243 = vadd.f32 0.0, %v4242
      %v4244 = vpop.f32.mrb[0].mxu0
      %4245 = vmatprep.mubr.bf16.mxu0 0
      %4246 = vmatmul.mubr.bf16.gmra.mrb[0].mxu0 %v4118
      %v4247 = vpop.f32.mrb[0].mxu0
      %v4248 = vadd.f32 0.0, %v4247
      %v4249 = vpop.f32.mrb[0].mxu0
      %v4250 = vpop.f32.mrb[0].mxu0
      %v4251 = vadd.f32 0.0, %v4250
      %v4252 = vpop.f32.mrb[0].mxu0
      %4253 = vmatprep.mubr.bf16.mxu0 0
      %4254 = vmatmul.mubr.bf16.gmra.mrb[0].mxu0 %v4119
      %v4255 = vpop.f32.mrb[0].mxu0
      %v4256 = vadd.f32 0.0, %v4255
      %v4257 = vpop.f32.mrb[0].mxu0
      %v4258 = vpop.f32.mrb[0].mxu0
      %v4259 = vadd.f32 0.0, %v4258
      %v4260 = vpop.f32.mrb[0].mxu0
      %4261 = vmatprep.mubr.bf16.mxu0 0
      %4262 = vmatmul.mubr.bf16.gmra.mrb[0].mxu0 %v4120
      %v4263 = vpop.f32.mrb[0].mxu0
      %v4264 = vadd.f32 0.0, %v4263
      %v4265 = vpop.f32.mrb[0].mxu0
      %v4266 = vpop.f32.mrb[0].mxu0
      %v4267 = vadd.f32 0.0, %v4266
      %v4268 = vpop.f32.mrb[0].mxu0
      %4269 = vmatprep.mubr.bf16.mxu0 0
      %4270 = vmatmul.mubr.bf16.gmra.mrb[0].mxu0 %v4121
      %v4271 = vpop.f32.mrb[0].mxu0
      %v4272 = vadd.f32 0.0, %v4271
      %v4273 = vpop.f32.mrb[0].mxu0
      %v4274 = vpop.f32.mrb[0].mxu0
      %v4275 = vadd.f32 0.0, %v4274
      %v4276 = vpop.f32.mrb[0].mxu0
      %4277 = vmatprep.mubr.bf16.mxu0 0
      %4278 = vmatmul.mubr.bf16.gmra.mrb[0].mxu0 %v4122
      %v4279 = vpop.f32.mrb[0].mxu0
      %v4280 = vadd.f32 0.0, %v4279
      %v4281 = vpop.f32.mrb[0].mxu0
      %v4282 = vpop.f32.mrb[0].mxu0
      %v4283 = vadd.f32 0.0, %v4282
      %v4284 = vpop.f32.mrb[0].mxu0
      %4285 = vmatprep.mubr.bf16.mxu0 0
      %4286 = vmatmul.mubr.bf16.gmra.mrb[0].mxu0 %v4123
      %v4287 = vpop.f32.mrb[0].mxu0
      %v4288 = vadd.f32 0.0, %v4287
      %v4289 = vpop.f32.mrb[0].mxu0
      %v4290 = vpop.f32.mrb[0].mxu0
      %v4291 = vadd.f32 0.0, %v4290
      %v4292 = vpop.f32.mrb[0].mxu0
      %4293 = vmatprep.mubr.bf16.mxu0 0
      %4294 = vmatmul.mubr.bf16.gmra.mrb[0].mxu0 %v4124
      %v4295 = vpop.f32.mrb[0].mxu0
      %v4296 = vadd.f32 0.0, %v4295
      %v4297 = vpop.f32.mrb[0].mxu0
      %v4298 = vpop.f32.mrb[0].mxu0
      %v4299 = vadd.f32 0.0, %v4298
      %v4300 = vpop.f32.mrb[0].mxu0
      %4301 = vmatprep.mubr.bf16.mxu0 0
      %4302 = vmatmul.mubr.bf16.gmra.mrb[0].mxu0 %v4125
      %v4303 = vpop.f32.mrb[0].mxu0
      %v4304 = vadd.f32 0.0, %v4303
      %v4305 = vpop.f32.mrb[0].mxu0
      %v4306 = vpop.f32.mrb[0].mxu0
      %v4307 = vadd.f32 0.0, %v4306
      %v4308 = vpop.f32.mrb[0].mxu0
      %4309 = vmatprep.mubr.bf16.mxu0 0
      %4310 = vmatmul.mubr.bf16.gmra.mrb[0].mxu0 %v4126
      %v4311 = vpop.f32.mrb[0].mxu0
      %v4312 = vadd.f32 0.0, %v4311
      %v4313 = vpop.f32.mrb[0].mxu0
      %v4314 = vpop.f32.mrb[0].mxu0
      %v4315 = vadd.f32 0.0, %v4314
      %v4316 = vpop.f32.mrb[0].mxu0
      %4317 = vmatprep.mubr.bf16.mxu0 0
      %4318 = vmatmul.mubr.bf16.gmra.mrb[0].mxu0 %v4127
      %v4319 = vpop.f32.mrb[0].mxu0
      %v4320 = vadd.f32 0.0, %v4319
      %v4321 = vpop.f32.mrb[0].mxu0
      %v4322 = vpop.f32.mrb[0].mxu0
      %v4323 = vadd.f32 0.0, %v4322
      %v4324 = vpop.f32.mrb[0].mxu0
      %4325 = vmatprep.mubr.bf16.mxu0 0
      %4326 = vmatmul.mubr.bf16.gmra.mrb[0].mxu0 %v4128
      %v4327 = vpop.f32.mrb[0].mxu0
      %v4328 = vadd.f32 0.0, %v4327
      %v4329 = vpop.f32.mrb[0].mxu0
      %v4330 = vpop.f32.mrb[0].mxu0
      %v4331 = vadd.f32 0.0, %v4330
      %v4332 = vpop.f32.mrb[0].mxu0
      %4333 = vmatprep.mubr.bf16.mxu0 0
      %4334 = vmatmul.mubr.bf16.gmra.mrb[0].mxu0 %v4129
      %v4335 = vpop.f32.mrb[0].mxu0
      %v4336 = vadd.f32 0.0, %v4335
      %v4337 = vpop.f32.mrb[0].mxu0
      %v4338 = vpop.f32.mrb[0].mxu0
      %v4339 = vadd.f32 0.0, %v4338
      %v4340 = vpop.f32.mrb[0].mxu0
      %4341 = vmatprep.mubr.bf16.mxu0 0
      %4342 = vmatmul.mubr.bf16.gmra.mrb[0].mxu0 %v4130
      %v4343 = vpop.f32.mrb[0].mxu0
      %v4344 = vadd.f32 0.0, %v4343
      %v4345 = vpop.f32.mrb[0].mxu0
      %v4346 = vpop.f32.mrb[0].mxu0
      %v4347 = vadd.f32 0.0, %v4346
      %v4348 = vpop.f32.mrb[0].mxu0
      %4349 = vmatprep.mubr.bf16.mxu0 0
      %4350 = vmatmul.mubr.bf16.gmra.mrb[0].mxu0 %v4131
      %v4351 = vpop.f32.mrb[0].mxu0
      %v4352 = vadd.f32 0.0, %v4351
      %v4353 = vpop.f32.mrb[0].mxu0
      %v4354 = vpop.f32.mrb[0].mxu0
      %v4355 = vadd.f32 0.0, %v4354
      %v4356 = vpop.f32.mrb[0].mxu0
      %4357 = vdwg.mxu0
      %v4358 = vadd.f32 %v4052, %v4232
      %v4359 = vadd.f32 %v4053, %v4235
      %v4360 = vadd.f32 %v4054, %v4240
      %v4361 = vadd.f32 %v4055, %v4243
      %v4362 = vadd.f32 %v4056, %v4248
      %v4363 = vadd.f32 %v4057, %v4251
      %v4364 = vadd.f32 %v4058, %v4256
      %v4365 = vadd.f32 %v4059, %v4259
      %v4366 = vadd.f32 %v4060, %v4264
      %v4367 = vadd.f32 %v4061, %v4267
      %v4368 = vadd.f32 %v4062, %v4272
      %v4369 = vadd.f32 %v4063, %v4275
      %v4370 = vadd.f32 %v4064, %v4280
      %v4371 = vadd.f32 %v4065, %v4283
      %v4372 = vadd.f32 %v4066, %v4288
      %v4373 = vadd.f32 %v4067, %v4291
      %v4374 = vadd.f32 %v4068, %v4296
      %v4375 = vadd.f32 %v4069, %v4299
      %v4376 = vadd.f32 %v4070, %v4304
      %v4377 = vadd.f32 %v4071, %v4307
      %v4378 = vadd.f32 %v4072, %v4312
      %v4379 = vadd.f32 %v4073, %v4315
      %v4380 = vadd.f32 %v4074, %v4320
      %v4381 = vadd.f32 %v4075, %v4323
      %v4382 = vadd.f32 %v4076, %v4328
      %v4383 = vadd.f32 %v4077, %v4331
      %v4384 = vadd.f32 %v4078, %v4336
      %v4385 = vadd.f32 %v4079, %v4339
      %v4386 = vadd.f32 %v4080, %v4344
      %v4387 = vadd.f32 %v4081, %v4347
      %v4388 = vadd.f32 %v4082, %v4352
      %v4389 = vadd.f32 %v4083, %v4355
      %v4390 = vld [vmem:[%s277 + $0x8] sm:$0xff]
      %v4391 = vld [vmem:[%s277 + $0x10] sm:$0xff]
      %v4392 = vld [vmem:[%s277 + $0x28] sm:$0xff]
      %v4393 = vld [vmem:[%s277 + $0x30] sm:$0xff]
      %v4394 = vld [vmem:[%s277 + $0x48] sm:$0xff]
      %v4395 = vld [vmem:[%s277 + $0x50] sm:$0xff]
      %v4396 = vld [vmem:[%s277 + $0x68] sm:$0xff]
      %v4397 = vld [vmem:[%s277 + $0x70] sm:$0xff]
      %v4398 = vld [vmem:[%s277 + $0x88] sm:$0xff]
      %v4399 = vld [vmem:[%s277 + $0x90] sm:$0xff]
      %v4400 = vld [vmem:[%s277 + $0xa8] sm:$0xff]
      %v4401 = vld [vmem:[%s277 + $0xb0] sm:$0xff]
      %v4402 = vld [vmem:[%s277 + $0xc8] sm:$0xff]
      %v4403 = vld [vmem:[%s277 + $0xd0] sm:$0xff]
      %v4404 = vld [vmem:[%s277 + $0xe8] sm:$0xff]
      %v4405 = vld [vmem:[%s277 + $0xf0] sm:$0xff]
      %v4406 = vld [vmem:[%s277 + $0x108] sm:$0xff]
      %v4407 = vld [vmem:[%s277 + $0x110] sm:$0xff]
      %v4408 = vld [vmem:[%s277 + $0x128] sm:$0xff]
      %v4409 = vld [vmem:[%s277 + $0x130] sm:$0xff]
      %v4410 = vld [vmem:[%s277 + $0x148] sm:$0xff]
      %v4411 = vld [vmem:[%s277 + $0x150] sm:$0xff]
      %v4412 = vld [vmem:[%s277 + $0x168] sm:$0xff]
      %v4413 = vld [vmem:[%s277 + $0x170] sm:$0xff]
      %v4414 = vld [vmem:[%s277 + $0x188] sm:$0xff]
      %v4415 = vld [vmem:[%s277 + $0x190] sm:$0xff]
      %v4416 = vld [vmem:[%s277 + $0x1a8] sm:$0xff]
      %v4417 = vld [vmem:[%s277 + $0x1b0] sm:$0xff]
      %v4418 = vld [vmem:[%s277 + $0x1c8] sm:$0xff]
      %v4419 = vld [vmem:[%s277 + $0x1d0] sm:$0xff]
      %v4420 = vld [vmem:[%s277 + $0x1e8] sm:$0xff]
      %v4421 = vld [vmem:[%s277 + $0x1f0] sm:$0xff]
      %v4422 = vpack.c.bf16 %v4391, %v4390
      %v4423 = vpack.c.bf16 %v4393, %v4392
      %v4424 = vpack.c.bf16 %v4395, %v4394
      %v4425 = vpack.c.bf16 %v4397, %v4396
      %v4426 = vpack.c.bf16 %v4399, %v4398
      %v4427 = vpack.c.bf16 %v4401, %v4400
      %v4428 = vpack.c.bf16 %v4403, %v4402
      %v4429 = vpack.c.bf16 %v4405, %v4404
      %v4430 = vpack.c.bf16 %v4407, %v4406
      %v4431 = vpack.c.bf16 %v4409, %v4408
      %v4432 = vpack.c.bf16 %v4411, %v4410
      %v4433 = vpack.c.bf16 %v4413, %v4412
      %v4434 = vpack.c.bf16 %v4415, %v4414
      %v4435 = vpack.c.bf16 %v4417, %v4416
      %v4436 = vpack.c.bf16 %v4419, %v4418
      %v4437 = vpack.c.bf16 %v4421, %v4420
      %s4438 = scalar_lea.vmem %s3, 256
      %v4439 = vld [vmem:[%s4438] sm:$0xf]
      %v4440 = vld [vmem:[%s4438 + $0x4] sm:$0xf]
      %v4441 = vld [vmem:[%s4438 + $0x8] sm:$0xf]
      %v4442 = vld [vmem:[%s4438 + $0xc] sm:$0xf]
      %v4443 = vld [vmem:[%s4438 + $0x10] sm:$0xf]
      %v4444 = vld [vmem:[%s4438 + $0x14] sm:$0xf]
      %v4445 = vld [vmem:[%s4438 + $0x18] sm:$0xf]
      %v4446 = vld [vmem:[%s4438 + $0x1c] sm:$0xf]
      %v4447 = vld [vmem:[%s4438 + $0x20] sm:$0xf]
      %v4448 = vld [vmem:[%s4438 + $0x24] sm:$0xf]
      %v4449 = vld [vmem:[%s4438 + $0x28] sm:$0xf]
      %v4450 = vld [vmem:[%s4438 + $0x2c] sm:$0xf]
      %v4451 = vld [vmem:[%s4438 + $0x30] sm:$0xf]
      %v4452 = vld [vmem:[%s4438 + $0x34] sm:$0xf]
      %v4453 = vld [vmem:[%s4438 + $0x38] sm:$0xf]
      %v4454 = vld [vmem:[%s4438 + $0x3c] sm:$0xf]
      %v4471 = vunpack.c.l.b16 %v4439
      %v4472 = vunpack.c.l.b16 %v4440
      %v4473 = vunpack.c.l.b16 %v4441
      %v4474 = vunpack.c.l.b16 %v4442
      %v4475 = vunpack.c.l.b16 %v4443
      %v4476 = vunpack.c.l.b16 %v4444
      %v4477 = vunpack.c.l.b16 %v4445
      %v4478 = vunpack.c.l.b16 %v4446
      %v4479 = vunpack.c.l.b16 %v4447
      %v4480 = vunpack.c.l.b16 %v4448
      %v4481 = vunpack.c.l.b16 %v4449
      %v4482 = vunpack.c.l.b16 %v4450
      %v4483 = vunpack.c.l.b16 %v4451
      %v4484 = vunpack.c.l.b16 %v4452
      %v4485 = vunpack.c.l.b16 %v4453
      %v4486 = vunpack.c.l.b16 %v4454
      %v4487 = vpack.c.b16 %v4472, %v4471
      %v4488 = vpack.c.b16 %v4474, %v4473
      %v4489 = vpack.c.b16 %v4476, %v4475
      %v4490 = vpack.c.b16 %v4478, %v4477
      %v4491 = vpack.c.b16 %v4480, %v4479
      %v4492 = vpack.c.b16 %v4482, %v4481
      %v4493 = vpack.c.b16 %v4484, %v4483
      %v4494 = vpack.c.b16 %v4486, %v4485
      %4503 = vmatprep.subr.bf16.mxu0 0
      %4504 = vmatpush1.bf16.msra.mxu0 %v4487
      %4505 = vmatprep.subr.bf16.mxu0 0
      %4506 = vmatpush1.bf16.msra.mxu0 %v4488
      %4507 = vmatprep.subr.bf16.mxu0 0
      %4508 = vmatpush1.bf16.msra.mxu0 %v4489
      %4509 = vmatprep.subr.bf16.mxu0 0
      %4510 = vmatpush1.bf16.msra.mxu0 %v4490
      %4511 = vmatprep.subr.bf16.mxu0 0
      %4512 = vmatpush1.bf16.msra.mxu0 %v4491
      %4513 = vmatprep.subr.bf16.mxu0 0
      %4514 = vmatpush1.bf16.msra.mxu0 %v4492
      %4515 = vmatprep.subr.bf16.mxu0 0
      %4516 = vmatpush1.bf16.msra.mxu0 %v4493
      %4517 = vmatprep.subr.bf16.mxu0 0
      %4518 = vmatpush1.bf16.msra.mxu0 %v4494
      %4519 = vmatprep.subr.bf16.mxu0 0
      %4520 = vmatpush1.bf16.msra.mxu0 0
      %4521 = vmatprep.subr.bf16.mxu0 0
      %4522 = vmatpush1.bf16.msra.mxu0 0
      %4523 = vmatprep.subr.bf16.mxu0 0
      %4524 = vmatpush1.bf16.msra.mxu0 0
      %4525 = vmatprep.subr.bf16.mxu0 0
      %4526 = vmatpush1.bf16.msra.mxu0 0
      %4527 = vmatprep.subr.bf16.mxu0 0
      %4528 = vmatpush1.bf16.msra.mxu0 0
      %4529 = vmatprep.subr.bf16.mxu0 0
      %4530 = vmatpush1.bf16.msra.mxu0 0
      %4531 = vmatprep.subr.bf16.mxu0 0
      %4532 = vmatpush1.bf16.msra.mxu0 0
      %4533 = vmatprep.subr.bf16.mxu0 0
      %4534 = vmatpush1.bf16.msra.mxu0 0
      %4535 = vmatprep.mubr.bf16.mxu0 0
      %4536 = vmatmul.mubr.bf16.gmra.mrb[0].mxu0 %v4422
      %v4537 = vpop.f32.mrb[0].mxu0
      %v4538 = vadd.f32 0.0, %v4537
      %v4539 = vpop.f32.mrb[0].mxu0
      %v4540 = vpop.f32.mrb[0].mxu0
      %v4541 = vadd.f32 0.0, %v4540
      %v4542 = vpop.f32.mrb[0].mxu0
      %4543 = vmatprep.mubr.bf16.mxu0 0
      %4544 = vmatmul.mubr.bf16.gmra.mrb[0].mxu0 %v4423
      %v4545 = vpop.f32.mrb[0].mxu0
      %v4546 = vadd.f32 0.0, %v4545
      %v4547 = vpop.f32.mrb[0].mxu0
      %v4548 = vpop.f32.mrb[0].mxu0
      %v4549 = vadd.f32 0.0, %v4548
      %v4550 = vpop.f32.mrb[0].mxu0
      %4551 = vmatprep.mubr.bf16.mxu0 0
      %4552 = vmatmul.mubr.bf16.gmra.mrb[0].mxu0 %v4424
      %v4553 = vpop.f32.mrb[0].mxu0
      %v4554 = vadd.f32 0.0, %v4553
      %v4555 = vpop.f32.mrb[0].mxu0
      %v4556 = vpop.f32.mrb[0].mxu0
      %v4557 = vadd.f32 0.0, %v4556
      %v4558 = vpop.f32.mrb[0].mxu0
      %4559 = vmatprep.mubr.bf16.mxu0 0
      %4560 = vmatmul.mubr.bf16.gmra.mrb[0].mxu0 %v4425
      %v4561 = vpop.f32.mrb[0].mxu0
      %v4562 = vadd.f32 0.0, %v4561
      %v4563 = vpop.f32.mrb[0].mxu0
      %v4564 = vpop.f32.mrb[0].mxu0
      %v4565 = vadd.f32 0.0, %v4564
      %v4566 = vpop.f32.mrb[0].mxu0
      %4567 = vmatprep.mubr.bf16.mxu0 0
      %4568 = vmatmul.mubr.bf16.gmra.mrb[0].mxu0 %v4426
      %v4569 = vpop.f32.mrb[0].mxu0
      %v4570 = vadd.f32 0.0, %v4569
      %v4571 = vpop.f32.mrb[0].mxu0
      %v4572 = vpop.f32.mrb[0].mxu0
      %v4573 = vadd.f32 0.0, %v4572
      %v4574 = vpop.f32.mrb[0].mxu0
      %4575 = vmatprep.mubr.bf16.mxu0 0
      %4576 = vmatmul.mubr.bf16.gmra.mrb[0].mxu0 %v4427
      %v4577 = vpop.f32.mrb[0].mxu0
      %v4578 = vadd.f32 0.0, %v4577
      %v4579 = vpop.f32.mrb[0].mxu0
      %v4580 = vpop.f32.mrb[0].mxu0
      %v4581 = vadd.f32 0.0, %v4580
      %v4582 = vpop.f32.mrb[0].mxu0
      %4583 = vmatprep.mubr.bf16.mxu0 0
      %4584 = vmatmul.mubr.bf16.gmra.mrb[0].mxu0 %v4428
      %v4585 = vpop.f32.mrb[0].mxu0
      %v4586 = vadd.f32 0.0, %v4585
      %v4587 = vpop.f32.mrb[0].mxu0
      %v4588 = vpop.f32.mrb[0].mxu0
      %v4589 = vadd.f32 0.0, %v4588
      %v4590 = vpop.f32.mrb[0].mxu0
      %4591 = vmatprep.mubr.bf16.mxu0 0
      %4592 = vmatmul.mubr.bf16.gmra.mrb[0].mxu0 %v4429
      %v4593 = vpop.f32.mrb[0].mxu0
      %v4594 = vadd.f32 0.0, %v4593
      %v4595 = vpop.f32.mrb[0].mxu0
      %v4596 = vpop.f32.mrb[0].mxu0
      %v4597 = vadd.f32 0.0, %v4596
      %v4598 = vpop.f32.mrb[0].mxu0
      %4599 = vmatprep.mubr.bf16.mxu0 0
      %4600 = vmatmul.mubr.bf16.gmra.mrb[0].mxu0 %v4430
      %v4601 = vpop.f32.mrb[0].mxu0
      %v4602 = vadd.f32 0.0, %v4601
      %v4603 = vpop.f32.mrb[0].mxu0
      %v4604 = vpop.f32.mrb[0].mxu0
      %v4605 = vadd.f32 0.0, %v4604
      %v4606 = vpop.f32.mrb[0].mxu0
      %4607 = vmatprep.mubr.bf16.mxu0 0
      %4608 = vmatmul.mubr.bf16.gmra.mrb[0].mxu0 %v4431
      %v4609 = vpop.f32.mrb[0].mxu0
      %v4610 = vadd.f32 0.0, %v4609
      %v4611 = vpop.f32.mrb[0].mxu0
      %v4612 = vpop.f32.mrb[0].mxu0
      %v4613 = vadd.f32 0.0, %v4612
      %v4614 = vpop.f32.mrb[0].mxu0
      %4615 = vmatprep.mubr.bf16.mxu0 0
      %4616 = vmatmul.mubr.bf16.gmra.mrb[0].mxu0 %v4432
      %v4617 = vpop.f32.mrb[0].mxu0
      %v4618 = vadd.f32 0.0, %v4617
      %v4619 = vpop.f32.mrb[0].mxu0
      %v4620 = vpop.f32.mrb[0].mxu0
      %v4621 = vadd.f32 0.0, %v4620
      %v4622 = vpop.f32.mrb[0].mxu0
      %4623 = vmatprep.mubr.bf16.mxu0 0
      %4624 = vmatmul.mubr.bf16.gmra.mrb[0].mxu0 %v4433
      %v4625 = vpop.f32.mrb[0].mxu0
      %v4626 = vadd.f32 0.0, %v4625
      %v4627 = vpop.f32.mrb[0].mxu0
      %v4628 = vpop.f32.mrb[0].mxu0
      %v4629 = vadd.f32 0.0, %v4628
      %v4630 = vpop.f32.mrb[0].mxu0
      %4631 = vmatprep.mubr.bf16.mxu0 0
      %4632 = vmatmul.mubr.bf16.gmra.mrb[0].mxu0 %v4434
      %v4633 = vpop.f32.mrb[0].mxu0
      %v4634 = vadd.f32 0.0, %v4633
      %v4635 = vpop.f32.mrb[0].mxu0
      %v4636 = vpop.f32.mrb[0].mxu0
      %v4637 = vadd.f32 0.0, %v4636
      %v4638 = vpop.f32.mrb[0].mxu0
      %4639 = vmatprep.mubr.bf16.mxu0 0
      %4640 = vmatmul.mubr.bf16.gmra.mrb[0].mxu0 %v4435
      %v4641 = vpop.f32.mrb[0].mxu0
      %v4642 = vadd.f32 0.0, %v4641
      %v4643 = vpop.f32.mrb[0].mxu0
      %v4644 = vpop.f32.mrb[0].mxu0
      %v4645 = vadd.f32 0.0, %v4644
      %v4646 = vpop.f32.mrb[0].mxu0
      %4647 = vmatprep.mubr.bf16.mxu0 0
      %4648 = vmatmul.mubr.bf16.gmra.mrb[0].mxu0 %v4436
      %v4649 = vpop.f32.mrb[0].mxu0
      %v4650 = vadd.f32 0.0, %v4649
      %v4651 = vpop.f32.mrb[0].mxu0
      %v4652 = vpop.f32.mrb[0].mxu0
      %v4653 = vadd.f32 0.0, %v4652
      %v4654 = vpop.f32.mrb[0].mxu0
      %4655 = vmatprep.mubr.bf16.mxu0 0
      %4656 = vmatmul.mubr.bf16.gmra.mrb[0].mxu0 %v4437
      %v4657 = vpop.f32.mrb[0].mxu0
      %v4658 = vadd.f32 0.0, %v4657
      %v4659 = vpop.f32.mrb[0].mxu0
      %v4660 = vpop.f32.mrb[0].mxu0
      %v4661 = vadd.f32 0.0, %v4660
      %v4662 = vpop.f32.mrb[0].mxu0
      %4663 = vdwg.mxu0
      %v4664 = vadd.f32 %v4358, %v4538
      %v4665 = vadd.f32 %v4359, %v4541
      %v4666 = vadd.f32 %v4360, %v4546
      %v4667 = vadd.f32 %v4361, %v4549
      %v4668 = vadd.f32 %v4362, %v4554
      %v4669 = vadd.f32 %v4363, %v4557
      %v4670 = vadd.f32 %v4364, %v4562
      %v4671 = vadd.f32 %v4365, %v4565
      %v4672 = vadd.f32 %v4366, %v4570
      %v4673 = vadd.f32 %v4367, %v4573
      %v4674 = vadd.f32 %v4368, %v4578
      %v4675 = vadd.f32 %v4369, %v4581
      %v4676 = vadd.f32 %v4370, %v4586
      %v4677 = vadd.f32 %v4371, %v4589
      %v4678 = vadd.f32 %v4372, %v4594
      %v4679 = vadd.f32 %v4373, %v4597
      %v4680 = vadd.f32 %v4374, %v4602
      %v4681 = vadd.f32 %v4375, %v4605
      %v4682 = vadd.f32 %v4376, %v4610
      %v4683 = vadd.f32 %v4377, %v4613
      %v4684 = vadd.f32 %v4378, %v4618
      %v4685 = vadd.f32 %v4379, %v4621
      %v4686 = vadd.f32 %v4380, %v4626
      %v4687 = vadd.f32 %v4381, %v4629
      %v4688 = vadd.f32 %v4382, %v4634
      %v4689 = vadd.f32 %v4383, %v4637
      %v4690 = vadd.f32 %v4384, %v4642
      %v4691 = vadd.f32 %v4385, %v4645
      %v4692 = vadd.f32 %v4386, %v4650
      %v4693 = vadd.f32 %v4387, %v4653
      %v4694 = vadd.f32 %v4388, %v4658
      %v4695 = vadd.f32 %v4389, %v4661
      %v4696 = vld [vmem:[%s277 + $0x9] sm:$0xff]
      %v4697 = vld [vmem:[%s277 + $0x11] sm:$0xff]
      %v4698 = vld [vmem:[%s277 + $0x29] sm:$0xff]
      %v4699 = vld [vmem:[%s277 + $0x31] sm:$0xff]
      %v4700 = vld [vmem:[%s277 + $0x49] sm:$0xff]
      %v4701 = vld [vmem:[%s277 + $0x51] sm:$0xff]
      %v4702 = vld [vmem:[%s277 + $0x69] sm:$0xff]
      %v4703 = vld [vmem:[%s277 + $0x71] sm:$0xff]
      %v4704 = vld [vmem:[%s277 + $0x89] sm:$0xff]
      %v4705 = vld [vmem:[%s277 + $0x91] sm:$0xff]
      %v4706 = vld [vmem:[%s277 + $0xa9] sm:$0xff]
      %v4707 = vld [vmem:[%s277 + $0xb1] sm:$0xff]
      %v4708 = vld [vmem:[%s277 + $0xc9] sm:$0xff]
      %v4709 = vld [vmem:[%s277 + $0xd1] sm:$0xff]
      %v4710 = vld [vmem:[%s277 + $0xe9] sm:$0xff]
      %v4711 = vld [vmem:[%s277 + $0xf1] sm:$0xff]
      %v4712 = vld [vmem:[%s277 + $0x109] sm:$0xff]
      %v4713 = vld [vmem:[%s277 + $0x111] sm:$0xff]
      %v4714 = vld [vmem:[%s277 + $0x129] sm:$0xff]
      %v4715 = vld [vmem:[%s277 + $0x131] sm:$0xff]
      %v4716 = vld [vmem:[%s277 + $0x149] sm:$0xff]
      %v4717 = vld [vmem:[%s277 + $0x151] sm:$0xff]
      %v4718 = vld [vmem:[%s277 + $0x169] sm:$0xff]
      %v4719 = vld [vmem:[%s277 + $0x171] sm:$0xff]
      %v4720 = vld [vmem:[%s277 + $0x189] sm:$0xff]
      %v4721 = vld [vmem:[%s277 + $0x191] sm:$0xff]
      %v4722 = vld [vmem:[%s277 + $0x1a9] sm:$0xff]
      %v4723 = vld [vmem:[%s277 + $0x1b1] sm:$0xff]
      %v4724 = vld [vmem:[%s277 + $0x1c9] sm:$0xff]
      %v4725 = vld [vmem:[%s277 + $0x1d1] sm:$0xff]
      %v4726 = vld [vmem:[%s277 + $0x1e9] sm:$0xff]
      %v4727 = vld [vmem:[%s277 + $0x1f1] sm:$0xff]
      %v4728 = vpack.c.bf16 %v4697, %v4696
      %v4729 = vpack.c.bf16 %v4699, %v4698
      %v4730 = vpack.c.bf16 %v4701, %v4700
      %v4731 = vpack.c.bf16 %v4703, %v4702
      %v4732 = vpack.c.bf16 %v4705, %v4704
      %v4733 = vpack.c.bf16 %v4707, %v4706
      %v4734 = vpack.c.bf16 %v4709, %v4708
      %v4735 = vpack.c.bf16 %v4711, %v4710
      %v4736 = vpack.c.bf16 %v4713, %v4712
      %v4737 = vpack.c.bf16 %v4715, %v4714
      %v4738 = vpack.c.bf16 %v4717, %v4716
      %v4739 = vpack.c.bf16 %v4719, %v4718
      %v4740 = vpack.c.bf16 %v4721, %v4720
      %v4741 = vpack.c.bf16 %v4723, %v4722
      %v4742 = vpack.c.bf16 %v4725, %v4724
      %v4743 = vpack.c.bf16 %v4727, %v4726
      %s4744 = scalar_lea.vmem %s3, 320
      %v4745 = vld [vmem:[%s4744] sm:$0xf]
      %v4746 = vld [vmem:[%s4744 + $0x4] sm:$0xf]
      %v4747 = vld [vmem:[%s4744 + $0x8] sm:$0xf]
      %v4748 = vld [vmem:[%s4744 + $0xc] sm:$0xf]
      %v4749 = vld [vmem:[%s4744 + $0x10] sm:$0xf]
      %v4750 = vld [vmem:[%s4744 + $0x14] sm:$0xf]
      %v4751 = vld [vmem:[%s4744 + $0x18] sm:$0xf]
      %v4752 = vld [vmem:[%s4744 + $0x1c] sm:$0xf]
      %v4753 = vld [vmem:[%s4744 + $0x20] sm:$0xf]
      %v4754 = vld [vmem:[%s4744 + $0x24] sm:$0xf]
      %v4755 = vld [vmem:[%s4744 + $0x28] sm:$0xf]
      %v4756 = vld [vmem:[%s4744 + $0x2c] sm:$0xf]
      %v4757 = vld [vmem:[%s4744 + $0x30] sm:$0xf]
      %v4758 = vld [vmem:[%s4744 + $0x34] sm:$0xf]
      %v4759 = vld [vmem:[%s4744 + $0x38] sm:$0xf]
      %v4760 = vld [vmem:[%s4744 + $0x3c] sm:$0xf]
      %v4777 = vunpack.c.l.b16 %v4745
      %v4778 = vunpack.c.l.b16 %v4746
      %v4779 = vunpack.c.l.b16 %v4747
      %v4780 = vunpack.c.l.b16 %v4748
      %v4781 = vunpack.c.l.b16 %v4749
      %v4782 = vunpack.c.l.b16 %v4750
      %v4783 = vunpack.c.l.b16 %v4751
      %v4784 = vunpack.c.l.b16 %v4752
      %v4785 = vunpack.c.l.b16 %v4753
      %v4786 = vunpack.c.l.b16 %v4754
      %v4787 = vunpack.c.l.b16 %v4755
      %v4788 = vunpack.c.l.b16 %v4756
      %v4789 = vunpack.c.l.b16 %v4757
      %v4790 = vunpack.c.l.b16 %v4758
      %v4791 = vunpack.c.l.b16 %v4759
      %v4792 = vunpack.c.l.b16 %v4760
      %v4793 = vpack.c.b16 %v4778, %v4777
      %v4794 = vpack.c.b16 %v4780, %v4779
      %v4795 = vpack.c.b16 %v4782, %v4781
      %v4796 = vpack.c.b16 %v4784, %v4783
      %v4797 = vpack.c.b16 %v4786, %v4785
      %v4798 = vpack.c.b16 %v4788, %v4787
      %v4799 = vpack.c.b16 %v4790, %v4789
      %v4800 = vpack.c.b16 %v4792, %v4791
      %4809 = vmatprep.subr.bf16.mxu0 0
      %4810 = vmatpush1.bf16.msra.mxu0 %v4793
      %4811 = vmatprep.subr.bf16.mxu0 0
      %4812 = vmatpush1.bf16.msra.mxu0 %v4794
      %4813 = vmatprep.subr.bf16.mxu0 0
      %4814 = vmatpush1.bf16.msra.mxu0 %v4795
      %4815 = vmatprep.subr.bf16.mxu0 0
      %4816 = vmatpush1.bf16.msra.mxu0 %v4796
      %4817 = vmatprep.subr.bf16.mxu0 0
      %4818 = vmatpush1.bf16.msra.mxu0 %v4797
      %4819 = vmatprep.subr.bf16.mxu0 0
      %4820 = vmatpush1.bf16.msra.mxu0 %v4798
      %4821 = vmatprep.subr.bf16.mxu0 0
      %4822 = vmatpush1.bf16.msra.mxu0 %v4799
      %4823 = vmatprep.subr.bf16.mxu0 0
      %4824 = vmatpush1.bf16.msra.mxu0 %v4800
      %4825 = vmatprep.subr.bf16.mxu0 0
      %4826 = vmatpush1.bf16.msra.mxu0 0
      %4827 = vmatprep.subr.bf16.mxu0 0
      %4828 = vmatpush1.bf16.msra.mxu0 0
      %4829 = vmatprep.subr.bf16.mxu0 0
      %4830 = vmatpush1.bf16.msra.mxu0 0
      %4831 = vmatprep.subr.bf16.mxu0 0
      %4832 = vmatpush1.bf16.msra.mxu0 0
      %4833 = vmatprep.subr.bf16.mxu0 0
      %4834 = vmatpush1.bf16.msra.mxu0 0
      %4835 = vmatprep.subr.bf16.mxu0 0
      %4836 = vmatpush1.bf16.msra.mxu0 0
      %4837 = vmatprep.subr.bf16.mxu0 0
      %4838 = vmatpush1.bf16.msra.mxu0 0
      %4839 = vmatprep.subr.bf16.mxu0 0
      %4840 = vmatpush1.bf16.msra.mxu0 0
      %4841 = vmatprep.mubr.bf16.mxu0 0
      %4842 = vmatmul.mubr.bf16.gmra.mrb[0].mxu0 %v4728
      %v4843 = vpop.f32.mrb[0].mxu0
      %v4844 = vadd.f32 0.0, %v4843
      %v4845 = vpop.f32.mrb[0].mxu0
      %v4846 = vpop.f32.mrb[0].mxu0
      %v4847 = vadd.f32 0.0, %v4846
      %v4848 = vpop.f32.mrb[0].mxu0
      %4849 = vmatprep.mubr.bf16.mxu0 0
      %4850 = vmatmul.mubr.bf16.gmra.mrb[0].mxu0 %v4729
      %v4851 = vpop.f32.mrb[0].mxu0
      %v4852 = vadd.f32 0.0, %v4851
      %v4853 = vpop.f32.mrb[0].mxu0
      %v4854 = vpop.f32.mrb[0].mxu0
      %v4855 = vadd.f32 0.0, %v4854
      %v4856 = vpop.f32.mrb[0].mxu0
      %4857 = vmatprep.mubr.bf16.mxu0 0
      %4858 = vmatmul.mubr.bf16.gmra.mrb[0].mxu0 %v4730
      %v4859 = vpop.f32.mrb[0].mxu0
      %v4860 = vadd.f32 0.0, %v4859
      %v4861 = vpop.f32.mrb[0].mxu0
      %v4862 = vpop.f32.mrb[0].mxu0
      %v4863 = vadd.f32 0.0, %v4862
      %v4864 = vpop.f32.mrb[0].mxu0
      %4865 = vmatprep.mubr.bf16.mxu0 0
      %4866 = vmatmul.mubr.bf16.gmra.mrb[0].mxu0 %v4731
      %v4867 = vpop.f32.mrb[0].mxu0
      %v4868 = vadd.f32 0.0, %v4867
      %v4869 = vpop.f32.mrb[0].mxu0
      %v4870 = vpop.f32.mrb[0].mxu0
      %v4871 = vadd.f32 0.0, %v4870
      %v4872 = vpop.f32.mrb[0].mxu0
      %4873 = vmatprep.mubr.bf16.mxu0 0
      %4874 = vmatmul.mubr.bf16.gmra.mrb[0].mxu0 %v4732
      %v4875 = vpop.f32.mrb[0].mxu0
      %v4876 = vadd.f32 0.0, %v4875
      %v4877 = vpop.f32.mrb[0].mxu0
      %v4878 = vpop.f32.mrb[0].mxu0
      %v4879 = vadd.f32 0.0, %v4878
      %v4880 = vpop.f32.mrb[0].mxu0
      %4881 = vmatprep.mubr.bf16.mxu0 0
      %4882 = vmatmul.mubr.bf16.gmra.mrb[0].mxu0 %v4733
      %v4883 = vpop.f32.mrb[0].mxu0
      %v4884 = vadd.f32 0.0, %v4883
      %v4885 = vpop.f32.mrb[0].mxu0
      %v4886 = vpop.f32.mrb[0].mxu0
      %v4887 = vadd.f32 0.0, %v4886
      %v4888 = vpop.f32.mrb[0].mxu0
      %4889 = vmatprep.mubr.bf16.mxu0 0
      %4890 = vmatmul.mubr.bf16.gmra.mrb[0].mxu0 %v4734
      %v4891 = vpop.f32.mrb[0].mxu0
      %v4892 = vadd.f32 0.0, %v4891
      %v4893 = vpop.f32.mrb[0].mxu0
      %v4894 = vpop.f32.mrb[0].mxu0
      %v4895 = vadd.f32 0.0, %v4894
      %v4896 = vpop.f32.mrb[0].mxu0
      %4897 = vmatprep.mubr.bf16.mxu0 0
      %4898 = vmatmul.mubr.bf16.gmra.mrb[0].mxu0 %v4735
      %v4899 = vpop.f32.mrb[0].mxu0
      %v4900 = vadd.f32 0.0, %v4899
      %v4901 = vpop.f32.mrb[0].mxu0
      %v4902 = vpop.f32.mrb[0].mxu0
      %v4903 = vadd.f32 0.0, %v4902
      %v4904 = vpop.f32.mrb[0].mxu0
      %4905 = vmatprep.mubr.bf16.mxu0 0
      %4906 = vmatmul.mubr.bf16.gmra.mrb[0].mxu0 %v4736
      %v4907 = vpop.f32.mrb[0].mxu0
      %v4908 = vadd.f32 0.0, %v4907
      %v4909 = vpop.f32.mrb[0].mxu0
      %v4910 = vpop.f32.mrb[0].mxu0
      %v4911 = vadd.f32 0.0, %v4910
      %v4912 = vpop.f32.mrb[0].mxu0
      %4913 = vmatprep.mubr.bf16.mxu0 0
      %4914 = vmatmul.mubr.bf16.gmra.mrb[0].mxu0 %v4737
      %v4915 = vpop.f32.mrb[0].mxu0
      %v4916 = vadd.f32 0.0, %v4915
      %v4917 = vpop.f32.mrb[0].mxu0
      %v4918 = vpop.f32.mrb[0].mxu0
      %v4919 = vadd.f32 0.0, %v4918
      %v4920 = vpop.f32.mrb[0].mxu0
      %4921 = vmatprep.mubr.bf16.mxu0 0
      %4922 = vmatmul.mubr.bf16.gmra.mrb[0].mxu0 %v4738
      %v4923 = vpop.f32.mrb[0].mxu0
      %v4924 = vadd.f32 0.0, %v4923
      %v4925 = vpop.f32.mrb[0].mxu0
      %v4926 = vpop.f32.mrb[0].mxu0
      %v4927 = vadd.f32 0.0, %v4926
      %v4928 = vpop.f32.mrb[0].mxu0
      %4929 = vmatprep.mubr.bf16.mxu0 0
      %4930 = vmatmul.mubr.bf16.gmra.mrb[0].mxu0 %v4739
      %v4931 = vpop.f32.mrb[0].mxu0
      %v4932 = vadd.f32 0.0, %v4931
      %v4933 = vpop.f32.mrb[0].mxu0
      %v4934 = vpop.f32.mrb[0].mxu0
      %v4935 = vadd.f32 0.0, %v4934
      %v4936 = vpop.f32.mrb[0].mxu0
      %4937 = vmatprep.mubr.bf16.mxu0 0
      %4938 = vmatmul.mubr.bf16.gmra.mrb[0].mxu0 %v4740
      %v4939 = vpop.f32.mrb[0].mxu0
      %v4940 = vadd.f32 0.0, %v4939
      %v4941 = vpop.f32.mrb[0].mxu0
      %v4942 = vpop.f32.mrb[0].mxu0
      %v4943 = vadd.f32 0.0, %v4942
      %v4944 = vpop.f32.mrb[0].mxu0
      %4945 = vmatprep.mubr.bf16.mxu0 0
      %4946 = vmatmul.mubr.bf16.gmra.mrb[0].mxu0 %v4741
      %v4947 = vpop.f32.mrb[0].mxu0
      %v4948 = vadd.f32 0.0, %v4947
      %v4949 = vpop.f32.mrb[0].mxu0
      %v4950 = vpop.f32.mrb[0].mxu0
      %v4951 = vadd.f32 0.0, %v4950
      %v4952 = vpop.f32.mrb[0].mxu0
      %4953 = vmatprep.mubr.bf16.mxu0 0
      %4954 = vmatmul.mubr.bf16.gmra.mrb[0].mxu0 %v4742
      %v4955 = vpop.f32.mrb[0].mxu0
      %v4956 = vadd.f32 0.0, %v4955
      %v4957 = vpop.f32.mrb[0].mxu0
      %v4958 = vpop.f32.mrb[0].mxu0
      %v4959 = vadd.f32 0.0, %v4958
      %v4960 = vpop.f32.mrb[0].mxu0
      %4961 = vmatprep.mubr.bf16.mxu0 0
      %4962 = vmatmul.mubr.bf16.gmra.mrb[0].mxu0 %v4743
      %v4963 = vpop.f32.mrb[0].mxu0
      %v4964 = vadd.f32 0.0, %v4963
      %v4965 = vpop.f32.mrb[0].mxu0
      %v4966 = vpop.f32.mrb[0].mxu0
      %v4967 = vadd.f32 0.0, %v4966
      %v4968 = vpop.f32.mrb[0].mxu0
      %4969 = vdwg.mxu0
      %v4970 = vadd.f32 %v4664, %v4844
      %v4971 = vadd.f32 %v4665, %v4847
      %v4972 = vadd.f32 %v4666, %v4852
      %v4973 = vadd.f32 %v4667, %v4855
      %v4974 = vadd.f32 %v4668, %v4860
      %v4975 = vadd.f32 %v4669, %v4863
      %v4976 = vadd.f32 %v4670, %v4868
      %v4977 = vadd.f32 %v4671, %v4871
      %v4978 = vadd.f32 %v4672, %v4876
      %v4979 = vadd.f32 %v4673, %v4879
      %v4980 = vadd.f32 %v4674, %v4884
      %v4981 = vadd.f32 %v4675, %v4887
      %v4982 = vadd.f32 %v4676, %v4892
      %v4983 = vadd.f32 %v4677, %v4895
      %v4984 = vadd.f32 %v4678, %v4900
      %v4985 = vadd.f32 %v4679, %v4903
      %v4986 = vadd.f32 %v4680, %v4908
      %v4987 = vadd.f32 %v4681, %v4911
      %v4988 = vadd.f32 %v4682, %v4916
      %v4989 = vadd.f32 %v4683, %v4919
      %v4990 = vadd.f32 %v4684, %v4924
      %v4991 = vadd.f32 %v4685, %v4927
      %v4992 = vadd.f32 %v4686, %v4932
      %v4993 = vadd.f32 %v4687, %v4935
      %v4994 = vadd.f32 %v4688, %v4940
      %v4995 = vadd.f32 %v4689, %v4943
      %v4996 = vadd.f32 %v4690, %v4948
      %v4997 = vadd.f32 %v4691, %v4951
      %v4998 = vadd.f32 %v4692, %v4956
      %v4999 = vadd.f32 %v4693, %v4959
      %v5000 = vadd.f32 %v4694, %v4964
      %v5001 = vadd.f32 %v4695, %v4967
      %s5002 = scalar_lea.vmem [#allocation3], 64
      %v5003 = vld [vmem:[%s5002 + $0x7] sm:$0xff]
      %v5004 = vld [vmem:[%s5002 + $0xf] sm:$0xff]
      %v5005 = vld [vmem:[%s5002 + $0x27] sm:$0xff]
      %v5006 = vld [vmem:[%s5002 + $0x2f] sm:$0xff]
      %v5007 = vld [vmem:[%s5002 + $0x47] sm:$0xff]
      %v5008 = vld [vmem:[%s5002 + $0x4f] sm:$0xff]
      %v5009 = vld [vmem:[%s5002 + $0x67] sm:$0xff]
      %v5010 = vld [vmem:[%s5002 + $0x6f] sm:$0xff]
      %v5011 = vld [vmem:[%s5002 + $0x87] sm:$0xff]
      %v5012 = vld [vmem:[%s5002 + $0x8f] sm:$0xff]
      %v5013 = vld [vmem:[%s5002 + $0xa7] sm:$0xff]
      %v5014 = vld [vmem:[%s5002 + $0xaf] sm:$0xff]
      %v5015 = vld [vmem:[%s5002 + $0xc7] sm:$0xff]
      %v5016 = vld [vmem:[%s5002 + $0xcf] sm:$0xff]
      %v5017 = vld [vmem:[%s5002 + $0xe7] sm:$0xff]
      %v5018 = vld [vmem:[%s5002 + $0xef] sm:$0xff]
      %v5019 = vld [vmem:[%s5002 + $0x107] sm:$0xff]
      %v5020 = vld [vmem:[%s5002 + $0x10f] sm:$0xff]
      %v5021 = vld [vmem:[%s5002 + $0x127] sm:$0xff]
      %v5022 = vld [vmem:[%s5002 + $0x12f] sm:$0xff]
      %v5023 = vld [vmem:[%s5002 + $0x147] sm:$0xff]
      %v5024 = vld [vmem:[%s5002 + $0x14f] sm:$0xff]
      %v5025 = vld [vmem:[%s5002 + $0x167] sm:$0xff]
      %v5026 = vld [vmem:[%s5002 + $0x16f] sm:$0xff]
      %v5027 = vld [vmem:[%s5002 + $0x187] sm:$0xff]
      %v5028 = vld [vmem:[%s5002 + $0x18f] sm:$0xff]
      %v5029 = vld [vmem:[%s5002 + $0x1a7] sm:$0xff]
      %v5030 = vld [vmem:[%s5002 + $0x1af] sm:$0xff]
      %v5031 = vld [vmem:[%s5002 + $0x1c7] sm:$0xff]
      %v5032 = vld [vmem:[%s5002 + $0x1cf] sm:$0xff]
      %v5033 = vld [vmem:[%s5002 + $0x1e7] sm:$0xff]
      %v5034 = vld [vmem:[%s5002 + $0x1ef] sm:$0xff]
      %v5035 = vpack.c.bf16 %v5004, %v5003
      %v5036 = vpack.c.bf16 %v5006, %v5005
      %v5037 = vpack.c.bf16 %v5008, %v5007
      %v5038 = vpack.c.bf16 %v5010, %v5009
      %v5039 = vpack.c.bf16 %v5012, %v5011
      %v5040 = vpack.c.bf16 %v5014, %v5013
      %v5041 = vpack.c.bf16 %v5016, %v5015
      %v5042 = vpack.c.bf16 %v5018, %v5017
      %v5043 = vpack.c.bf16 %v5020, %v5019
      %v5044 = vpack.c.bf16 %v5022, %v5021
      %v5045 = vpack.c.bf16 %v5024, %v5023
      %v5046 = vpack.c.bf16 %v5026, %v5025
      %v5047 = vpack.c.bf16 %v5028, %v5027
      %v5048 = vpack.c.bf16 %v5030, %v5029
      %v5049 = vpack.c.bf16 %v5032, %v5031
      %v5050 = vpack.c.bf16 %v5034, %v5033
      %s5051 = scalar_lea.vmem %s3, 384
      %v5052 = vld [vmem:[%s5051] sm:$0xf]
      %v5053 = vld [vmem:[%s5051 + $0x4] sm:$0xf]
      %v5054 = vld [vmem:[%s5051 + $0x8] sm:$0xf]
      %v5055 = vld [vmem:[%s5051 + $0xc] sm:$0xf]
      %v5056 = vld [vmem:[%s5051 + $0x10] sm:$0xf]
      %v5057 = vld [vmem:[%s5051 + $0x14] sm:$0xf]
      %v5058 = vld [vmem:[%s5051 + $0x18] sm:$0xf]
      %v5059 = vld [vmem:[%s5051 + $0x1c] sm:$0xf]
      %v5060 = vld [vmem:[%s5051 + $0x20] sm:$0xf]
      %v5061 = vld [vmem:[%s5051 + $0x24] sm:$0xf]
      %v5062 = vld [vmem:[%s5051 + $0x28] sm:$0xf]
      %v5063 = vld [vmem:[%s5051 + $0x2c] sm:$0xf]
      %v5064 = vld [vmem:[%s5051 + $0x30] sm:$0xf]
      %v5065 = vld [vmem:[%s5051 + $0x34] sm:$0xf]
      %v5066 = vld [vmem:[%s5051 + $0x38] sm:$0xf]
      %v5067 = vld [vmem:[%s5051 + $0x3c] sm:$0xf]
      %v5084 = vunpack.c.l.b16 %v5052
      %v5085 = vunpack.c.l.b16 %v5053
      %v5086 = vunpack.c.l.b16 %v5054
      %v5087 = vunpack.c.l.b16 %v5055
      %v5088 = vunpack.c.l.b16 %v5056
      %v5089 = vunpack.c.l.b16 %v5057
      %v5090 = vunpack.c.l.b16 %v5058
      %v5091 = vunpack.c.l.b16 %v5059
      %v5092 = vunpack.c.l.b16 %v5060
      %v5093 = vunpack.c.l.b16 %v5061
      %v5094 = vunpack.c.l.b16 %v5062
      %v5095 = vunpack.c.l.b16 %v5063
      %v5096 = vunpack.c.l.b16 %v5064
      %v5097 = vunpack.c.l.b16 %v5065
      %v5098 = vunpack.c.l.b16 %v5066
      %v5099 = vunpack.c.l.b16 %v5067
      %v5100 = vpack.c.b16 %v5085, %v5084
      %v5101 = vpack.c.b16 %v5087, %v5086
      %v5102 = vpack.c.b16 %v5089, %v5088
      %v5103 = vpack.c.b16 %v5091, %v5090
      %v5104 = vpack.c.b16 %v5093, %v5092
      %v5105 = vpack.c.b16 %v5095, %v5094
      %v5106 = vpack.c.b16 %v5097, %v5096
      %v5107 = vpack.c.b16 %v5099, %v5098
      %5116 = vmatprep.subr.bf16.mxu0 0
      %5117 = vmatpush1.bf16.msra.mxu0 %v5100
      %5118 = vmatprep.subr.bf16.mxu0 0
      %5119 = vmatpush1.bf16.msra.mxu0 %v5101
      %5120 = vmatprep.subr.bf16.mxu0 0
      %5121 = vmatpush1.bf16.msra.mxu0 %v5102
      %5122 = vmatprep.subr.bf16.mxu0 0
      %5123 = vmatpush1.bf16.msra.mxu0 %v5103
      %5124 = vmatprep.subr.bf16.mxu0 0
      %5125 = vmatpush1.bf16.msra.mxu0 %v5104
      %5126 = vmatprep.subr.bf16.mxu0 0
      %5127 = vmatpush1.bf16.msra.mxu0 %v5105
      %5128 = vmatprep.subr.bf16.mxu0 0
      %5129 = vmatpush1.bf16.msra.mxu0 %v5106
      %5130 = vmatprep.subr.bf16.mxu0 0
      %5131 = vmatpush1.bf16.msra.mxu0 %v5107
      %5132 = vmatprep.subr.bf16.mxu0 0
      %5133 = vmatpush1.bf16.msra.mxu0 0
      %5134 = vmatprep.subr.bf16.mxu0 0
      %5135 = vmatpush1.bf16.msra.mxu0 0
      %5136 = vmatprep.subr.bf16.mxu0 0
      %5137 = vmatpush1.bf16.msra.mxu0 0
      %5138 = vmatprep.subr.bf16.mxu0 0
      %5139 = vmatpush1.bf16.msra.mxu0 0
      %5140 = vmatprep.subr.bf16.mxu0 0
      %5141 = vmatpush1.bf16.msra.mxu0 0
      %5142 = vmatprep.subr.bf16.mxu0 0
      %5143 = vmatpush1.bf16.msra.mxu0 0
      %5144 = vmatprep.subr.bf16.mxu0 0
      %5145 = vmatpush1.bf16.msra.mxu0 0
      %5146 = vmatprep.subr.bf16.mxu0 0
      %5147 = vmatpush1.bf16.msra.mxu0 0
      %5148 = vmatprep.mubr.bf16.mxu0 0
      %5149 = vmatmul.mubr.bf16.gmra.mrb[0].mxu0 %v5035
      %v5150 = vpop.f32.mrb[0].mxu0
      %v5151 = vadd.f32 0.0, %v5150
      %v5152 = vpop.f32.mrb[0].mxu0
      %v5153 = vpop.f32.mrb[0].mxu0
      %v5154 = vadd.f32 0.0, %v5153
      %v5155 = vpop.f32.mrb[0].mxu0
      %5156 = vmatprep.mubr.bf16.mxu0 0
      %5157 = vmatmul.mubr.bf16.gmra.mrb[0].mxu0 %v5036
      %v5158 = vpop.f32.mrb[0].mxu0
      %v5159 = vadd.f32 0.0, %v5158
      %v5160 = vpop.f32.mrb[0].mxu0
      %v5161 = vpop.f32.mrb[0].mxu0
      %v5162 = vadd.f32 0.0, %v5161
      %v5163 = vpop.f32.mrb[0].mxu0
      %5164 = vmatprep.mubr.bf16.mxu0 0
      %5165 = vmatmul.mubr.bf16.gmra.mrb[0].mxu0 %v5037
      %v5166 = vpop.f32.mrb[0].mxu0
      %v5167 = vadd.f32 0.0, %v5166
      %v5168 = vpop.f32.mrb[0].mxu0
      %v5169 = vpop.f32.mrb[0].mxu0
      %v5170 = vadd.f32 0.0, %v5169
      %v5171 = vpop.f32.mrb[0].mxu0
      %5172 = vmatprep.mubr.bf16.mxu0 0
      %5173 = vmatmul.mubr.bf16.gmra.mrb[0].mxu0 %v5038
      %v5174 = vpop.f32.mrb[0].mxu0
      %v5175 = vadd.f32 0.0, %v5174
      %v5176 = vpop.f32.mrb[0].mxu0
      %v5177 = vpop.f32.mrb[0].mxu0
      %v5178 = vadd.f32 0.0, %v5177
      %v5179 = vpop.f32.mrb[0].mxu0
      %5180 = vmatprep.mubr.bf16.mxu0 0
      %5181 = vmatmul.mubr.bf16.gmra.mrb[0].mxu0 %v5039
      %v5182 = vpop.f32.mrb[0].mxu0
      %v5183 = vadd.f32 0.0, %v5182
      %v5184 = vpop.f32.mrb[0].mxu0
      %v5185 = vpop.f32.mrb[0].mxu0
      %v5186 = vadd.f32 0.0, %v5185
      %v5187 = vpop.f32.mrb[0].mxu0
      %5188 = vmatprep.mubr.bf16.mxu0 0
      %5189 = vmatmul.mubr.bf16.gmra.mrb[0].mxu0 %v5040
      %v5190 = vpop.f32.mrb[0].mxu0
      %v5191 = vadd.f32 0.0, %v5190
      %v5192 = vpop.f32.mrb[0].mxu0
      %v5193 = vpop.f32.mrb[0].mxu0
      %v5194 = vadd.f32 0.0, %v5193
      %v5195 = vpop.f32.mrb[0].mxu0
      %5196 = vmatprep.mubr.bf16.mxu0 0
      %5197 = vmatmul.mubr.bf16.gmra.mrb[0].mxu0 %v5041
      %v5198 = vpop.f32.mrb[0].mxu0
      %v5199 = vadd.f32 0.0, %v5198
      %v5200 = vpop.f32.mrb[0].mxu0
      %v5201 = vpop.f32.mrb[0].mxu0
      %v5202 = vadd.f32 0.0, %v5201
      %v5203 = vpop.f32.mrb[0].mxu0
      %5204 = vmatprep.mubr.bf16.mxu0 0
      %5205 = vmatmul.mubr.bf16.gmra.mrb[0].mxu0 %v5042
      %v5206 = vpop.f32.mrb[0].mxu0
      %v5207 = vadd.f32 0.0, %v5206
      %v5208 = vpop.f32.mrb[0].mxu0
      %v5209 = vpop.f32.mrb[0].mxu0
      %v5210 = vadd.f32 0.0, %v5209
      %v5211 = vpop.f32.mrb[0].mxu0
      %5212 = vmatprep.mubr.bf16.mxu0 0
      %5213 = vmatmul.mubr.bf16.gmra.mrb[0].mxu0 %v5043
      %v5214 = vpop.f32.mrb[0].mxu0
      %v5215 = vadd.f32 0.0, %v5214
      %v5216 = vpop.f32.mrb[0].mxu0
      %v5217 = vpop.f32.mrb[0].mxu0
      %v5218 = vadd.f32 0.0, %v5217
      %v5219 = vpop.f32.mrb[0].mxu0
      %5220 = vmatprep.mubr.bf16.mxu0 0
      %5221 = vmatmul.mubr.bf16.gmra.mrb[0].mxu0 %v5044
      %v5222 = vpop.f32.mrb[0].mxu0
      %v5223 = vadd.f32 0.0, %v5222
      %v5224 = vpop.f32.mrb[0].mxu0
      %v5225 = vpop.f32.mrb[0].mxu0
      %v5226 = vadd.f32 0.0, %v5225
      %v5227 = vpop.f32.mrb[0].mxu0
      %5228 = vmatprep.mubr.bf16.mxu0 0
      %5229 = vmatmul.mubr.bf16.gmra.mrb[0].mxu0 %v5045
      %v5230 = vpop.f32.mrb[0].mxu0
      %v5231 = vadd.f32 0.0, %v5230
      %v5232 = vpop.f32.mrb[0].mxu0
      %v5233 = vpop.f32.mrb[0].mxu0
      %v5234 = vadd.f32 0.0, %v5233
      %v5235 = vpop.f32.mrb[0].mxu0
      %5236 = vmatprep.mubr.bf16.mxu0 0
      %5237 = vmatmul.mubr.bf16.gmra.mrb[0].mxu0 %v5046
      %v5238 = vpop.f32.mrb[0].mxu0
      %v5239 = vadd.f32 0.0, %v5238
      %v5240 = vpop.f32.mrb[0].mxu0
      %v5241 = vpop.f32.mrb[0].mxu0
      %v5242 = vadd.f32 0.0, %v5241
      %v5243 = vpop.f32.mrb[0].mxu0
      %5244 = vmatprep.mubr.bf16.mxu0 0
      %5245 = vmatmul.mubr.bf16.gmra.mrb[0].mxu0 %v5047
      %v5246 = vpop.f32.mrb[0].mxu0
      %v5247 = vadd.f32 0.0, %v5246
      %v5248 = vpop.f32.mrb[0].mxu0
      %v5249 = vpop.f32.mrb[0].mxu0
      %v5250 = vadd.f32 0.0, %v5249
      %v5251 = vpop.f32.mrb[0].mxu0
      %5252 = vmatprep.mubr.bf16.mxu0 0
      %5253 = vmatmul.mubr.bf16.gmra.mrb[0].mxu0 %v5048
      %v5254 = vpop.f32.mrb[0].mxu0
      %v5255 = vadd.f32 0.0, %v5254
      %v5256 = vpop.f32.mrb[0].mxu0
      %v5257 = vpop.f32.mrb[0].mxu0
      %v5258 = vadd.f32 0.0, %v5257
      %v5259 = vpop.f32.mrb[0].mxu0
      %5260 = vmatprep.mubr.bf16.mxu0 0
      %5261 = vmatmul.mubr.bf16.gmra.mrb[0].mxu0 %v5049
      %v5262 = vpop.f32.mrb[0].mxu0
      %v5263 = vadd.f32 0.0, %v5262
      %v5264 = vpop.f32.mrb[0].mxu0
      %v5265 = vpop.f32.mrb[0].mxu0
      %v5266 = vadd.f32 0.0, %v5265
      %v5267 = vpop.f32.mrb[0].mxu0
      %5268 = vmatprep.mubr.bf16.mxu0 0
      %5269 = vmatmul.mubr.bf16.gmra.mrb[0].mxu0 %v5050
      %v5270 = vpop.f32.mrb[0].mxu0
      %v5271 = vadd.f32 0.0, %v5270
      %v5272 = vpop.f32.mrb[0].mxu0
      %v5273 = vpop.f32.mrb[0].mxu0
      %v5274 = vadd.f32 0.0, %v5273
      %v5275 = vpop.f32.mrb[0].mxu0
      %5276 = vdwg.mxu0
      %v5277 = vadd.f32 %v4970, %v5151
      %v5278 = vadd.f32 %v4971, %v5154
      %v5279 = vadd.f32 %v4972, %v5159
      %v5280 = vadd.f32 %v4973, %v5162
      %v5281 = vadd.f32 %v4974, %v5167
      %v5282 = vadd.f32 %v4975, %v5170
      %v5283 = vadd.f32 %v4976, %v5175
      %v5284 = vadd.f32 %v4977, %v5178
      %v5285 = vadd.f32 %v4978, %v5183
      %v5286 = vadd.f32 %v4979, %v5186
      %v5287 = vadd.f32 %v4980, %v5191
      %v5288 = vadd.f32 %v4981, %v5194
      %v5289 = vadd.f32 %v4982, %v5199
      %v5290 = vadd.f32 %v4983, %v5202
      %v5291 = vadd.f32 %v4984, %v5207
      %v5292 = vadd.f32 %v4985, %v5210
      %v5293 = vadd.f32 %v4986, %v5215
      %v5294 = vadd.f32 %v4987, %v5218
      %v5295 = vadd.f32 %v4988, %v5223
      %v5296 = vadd.f32 %v4989, %v5226
      %v5297 = vadd.f32 %v4990, %v5231
      %v5298 = vadd.f32 %v4991, %v5234
      %v5299 = vadd.f32 %v4992, %v5239
      %v5300 = vadd.f32 %v4993, %v5242
      %v5301 = vadd.f32 %v4994, %v5247
      %v5302 = vadd.f32 %v4995, %v5250
      %v5303 = vadd.f32 %v4996, %v5255
      %v5304 = vadd.f32 %v4997, %v5258
      %v5305 = vadd.f32 %v4998, %v5263
      %v5306 = vadd.f32 %v4999, %v5266
      %v5307 = vadd.f32 %v5000, %v5271
      %v5308 = vadd.f32 %v5001, %v5274
      %v5309 = vld [vmem:[%s5002 + $0x8] sm:$0xff]
      %v5310 = vld [vmem:[%s5002 + $0x10] sm:$0xff]
      %v5311 = vld [vmem:[%s5002 + $0x28] sm:$0xff]
      %v5312 = vld [vmem:[%s5002 + $0x30] sm:$0xff]
      %v5313 = vld [vmem:[%s5002 + $0x48] sm:$0xff]
      %v5314 = vld [vmem:[%s5002 + $0x50] sm:$0xff]
      %v5315 = vld [vmem:[%s5002 + $0x68] sm:$0xff]
      %v5316 = vld [vmem:[%s5002 + $0x70] sm:$0xff]
      %v5317 = vld [vmem:[%s5002 + $0x88] sm:$0xff]
      %v5318 = vld [vmem:[%s5002 + $0x90] sm:$0xff]
      %v5319 = vld [vmem:[%s5002 + $0xa8] sm:$0xff]
      %v5320 = vld [vmem:[%s5002 + $0xb0] sm:$0xff]
      %v5321 = vld [vmem:[%s5002 + $0xc8] sm:$0xff]
      %v5322 = vld [vmem:[%s5002 + $0xd0] sm:$0xff]
      %v5323 = vld [vmem:[%s5002 + $0xe8] sm:$0xff]
      %v5324 = vld [vmem:[%s5002 + $0xf0] sm:$0xff]
      %v5325 = vld [vmem:[%s5002 + $0x108] sm:$0xff]
      %v5326 = vld [vmem:[%s5002 + $0x110] sm:$0xff]
      %v5327 = vld [vmem:[%s5002 + $0x128] sm:$0xff]
      %v5328 = vld [vmem:[%s5002 + $0x130] sm:$0xff]
      %v5329 = vld [vmem:[%s5002 + $0x148] sm:$0xff]
      %v5330 = vld [vmem:[%s5002 + $0x150] sm:$0xff]
      %v5331 = vld [vmem:[%s5002 + $0x168] sm:$0xff]
      %v5332 = vld [vmem:[%s5002 + $0x170] sm:$0xff]
      %v5333 = vld [vmem:[%s5002 + $0x188] sm:$0xff]
      %v5334 = vld [vmem:[%s5002 + $0x190] sm:$0xff]
      %v5335 = vld [vmem:[%s5002 + $0x1a8] sm:$0xff]
      %v5336 = vld [vmem:[%s5002 + $0x1b0] sm:$0xff]
      %v5337 = vld [vmem:[%s5002 + $0x1c8] sm:$0xff]
      %v5338 = vld [vmem:[%s5002 + $0x1d0] sm:$0xff]
      %v5339 = vld [vmem:[%s5002 + $0x1e8] sm:$0xff]
      %v5340 = vld [vmem:[%s5002 + $0x1f0] sm:$0xff]
      %v5341 = vpack.c.bf16 %v5310, %v5309
      %v5342 = vpack.c.bf16 %v5312, %v5311
      %v5343 = vpack.c.bf16 %v5314, %v5313
      %v5344 = vpack.c.bf16 %v5316, %v5315
      %v5345 = vpack.c.bf16 %v5318, %v5317
      %v5346 = vpack.c.bf16 %v5320, %v5319
      %v5347 = vpack.c.bf16 %v5322, %v5321
      %v5348 = vpack.c.bf16 %v5324, %v5323
      %v5349 = vpack.c.bf16 %v5326, %v5325
      %v5350 = vpack.c.bf16 %v5328, %v5327
      %v5351 = vpack.c.bf16 %v5330, %v5329
      %v5352 = vpack.c.bf16 %v5332, %v5331
      %v5353 = vpack.c.bf16 %v5334, %v5333
      %v5354 = vpack.c.bf16 %v5336, %v5335
      %v5355 = vpack.c.bf16 %v5338, %v5337
      %v5356 = vpack.c.bf16 %v5340, %v5339
      %s5357 = scalar_lea.vmem %s3, 448
      %v5358 = vld [vmem:[%s5357] sm:$0xf]
      %v5359 = vld [vmem:[%s5357 + $0x4] sm:$0xf]
      %v5360 = vld [vmem:[%s5357 + $0x8] sm:$0xf]
      %v5361 = vld [vmem:[%s5357 + $0xc] sm:$0xf]
      %v5362 = vld [vmem:[%s5357 + $0x10] sm:$0xf]
      %v5363 = vld [vmem:[%s5357 + $0x14] sm:$0xf]
      %v5364 = vld [vmem:[%s5357 + $0x18] sm:$0xf]
      %v5365 = vld [vmem:[%s5357 + $0x1c] sm:$0xf]
      %v5366 = vld [vmem:[%s5357 + $0x20] sm:$0xf]
      %v5367 = vld [vmem:[%s5357 + $0x24] sm:$0xf]
      %v5368 = vld [vmem:[%s5357 + $0x28] sm:$0xf]
      %v5369 = vld [vmem:[%s5357 + $0x2c] sm:$0xf]
      %v5370 = vld [vmem:[%s5357 + $0x30] sm:$0xf]
      %v5371 = vld [vmem:[%s5357 + $0x34] sm:$0xf]
      %v5372 = vld [vmem:[%s5357 + $0x38] sm:$0xf]
      %v5373 = vld [vmem:[%s5357 + $0x3c] sm:$0xf]
      %v5390 = vunpack.c.l.b16 %v5358
      %v5391 = vunpack.c.l.b16 %v5359
      %v5392 = vunpack.c.l.b16 %v5360
      %v5393 = vunpack.c.l.b16 %v5361
      %v5394 = vunpack.c.l.b16 %v5362
      %v5395 = vunpack.c.l.b16 %v5363
      %v5396 = vunpack.c.l.b16 %v5364
      %v5397 = vunpack.c.l.b16 %v5365
      %v5398 = vunpack.c.l.b16 %v5366
      %v5399 = vunpack.c.l.b16 %v5367
      %v5400 = vunpack.c.l.b16 %v5368
      %v5401 = vunpack.c.l.b16 %v5369
      %v5402 = vunpack.c.l.b16 %v5370
      %v5403 = vunpack.c.l.b16 %v5371
      %v5404 = vunpack.c.l.b16 %v5372
      %v5405 = vunpack.c.l.b16 %v5373
      %v5406 = vpack.c.b16 %v5391, %v5390
      %v5407 = vpack.c.b16 %v5393, %v5392
      %v5408 = vpack.c.b16 %v5395, %v5394
      %v5409 = vpack.c.b16 %v5397, %v5396
      %v5410 = vpack.c.b16 %v5399, %v5398
      %v5411 = vpack.c.b16 %v5401, %v5400
      %v5412 = vpack.c.b16 %v5403, %v5402
      %v5413 = vpack.c.b16 %v5405, %v5404
      %5422 = vmatprep.subr.bf16.mxu0 0
      %5423 = vmatpush1.bf16.msra.mxu0 %v5406
      %5424 = vmatprep.subr.bf16.mxu0 0
      %5425 = vmatpush1.bf16.msra.mxu0 %v5407
      %5426 = vmatprep.subr.bf16.mxu0 0
      %5427 = vmatpush1.bf16.msra.mxu0 %v5408
      %5428 = vmatprep.subr.bf16.mxu0 0
      %5429 = vmatpush1.bf16.msra.mxu0 %v5409
      %5430 = vmatprep.subr.bf16.mxu0 0
      %5431 = vmatpush1.bf16.msra.mxu0 %v5410
      %5432 = vmatprep.subr.bf16.mxu0 0
      %5433 = vmatpush1.bf16.msra.mxu0 %v5411
      %5434 = vmatprep.subr.bf16.mxu0 0
      %5435 = vmatpush1.bf16.msra.mxu0 %v5412
      %5436 = vmatprep.subr.bf16.mxu0 0
      %5437 = vmatpush1.bf16.msra.mxu0 %v5413
      %5438 = vmatprep.subr.bf16.mxu0 0
      %5439 = vmatpush1.bf16.msra.mxu0 0
      %5440 = vmatprep.subr.bf16.mxu0 0
      %5441 = vmatpush1.bf16.msra.mxu0 0
      %5442 = vmatprep.subr.bf16.mxu0 0
      %5443 = vmatpush1.bf16.msra.mxu0 0
      %5444 = vmatprep.subr.bf16.mxu0 0
      %5445 = vmatpush1.bf16.msra.mxu0 0
      %5446 = vmatprep.subr.bf16.mxu0 0
      %5447 = vmatpush1.bf16.msra.mxu0 0
      %5448 = vmatprep.subr.bf16.mxu0 0
      %5449 = vmatpush1.bf16.msra.mxu0 0
      %5450 = vmatprep.subr.bf16.mxu0 0
      %5451 = vmatpush1.bf16.msra.mxu0 0
      %5452 = vmatprep.subr.bf16.mxu0 0
      %5453 = vmatpush1.bf16.msra.mxu0 0
      %5454 = vmatprep.mubr.bf16.mxu0 0
      %5455 = vmatmul.mubr.bf16.gmra.mrb[0].mxu0 %v5341
      %v5456 = vpop.f32.mrb[0].mxu0
      %v5457 = vadd.f32 0.0, %v5456
      %v5458 = vpop.f32.mrb[0].mxu0
      %v5459 = vpop.f32.mrb[0].mxu0
      %v5460 = vadd.f32 0.0, %v5459
      %v5461 = vpop.f32.mrb[0].mxu0
      %5462 = vmatprep.mubr.bf16.mxu0 0
      %5463 = vmatmul.mubr.bf16.gmra.mrb[0].mxu0 %v5342
      %v5464 = vpop.f32.mrb[0].mxu0
      %v5465 = vadd.f32 0.0, %v5464
      %v5466 = vpop.f32.mrb[0].mxu0
      %v5467 = vpop.f32.mrb[0].mxu0
      %v5468 = vadd.f32 0.0, %v5467
      %v5469 = vpop.f32.mrb[0].mxu0
      %5470 = vmatprep.mubr.bf16.mxu0 0
      %5471 = vmatmul.mubr.bf16.gmra.mrb[0].mxu0 %v5343
      %v5472 = vpop.f32.mrb[0].mxu0
      %v5473 = vadd.f32 0.0, %v5472
      %v5474 = vpop.f32.mrb[0].mxu0
      %v5475 = vpop.f32.mrb[0].mxu0
      %v5476 = vadd.f32 0.0, %v5475
      %v5477 = vpop.f32.mrb[0].mxu0
      %5478 = vmatprep.mubr.bf16.mxu0 0
      %5479 = vmatmul.mubr.bf16.gmra.mrb[0].mxu0 %v5344
      %v5480 = vpop.f32.mrb[0].mxu0
      %v5481 = vadd.f32 0.0, %v5480
      %v5482 = vpop.f32.mrb[0].mxu0
      %v5483 = vpop.f32.mrb[0].mxu0
      %v5484 = vadd.f32 0.0, %v5483
      %v5485 = vpop.f32.mrb[0].mxu0
      %5486 = vmatprep.mubr.bf16.mxu0 0
      %5487 = vmatmul.mubr.bf16.gmra.mrb[0].mxu0 %v5345
      %v5488 = vpop.f32.mrb[0].mxu0
      %v5489 = vadd.f32 0.0, %v5488
      %v5490 = vpop.f32.mrb[0].mxu0
      %v5491 = vpop.f32.mrb[0].mxu0
      %v5492 = vadd.f32 0.0, %v5491
      %v5493 = vpop.f32.mrb[0].mxu0
      %5494 = vmatprep.mubr.bf16.mxu0 0
      %5495 = vmatmul.mubr.bf16.gmra.mrb[0].mxu0 %v5346
      %v5496 = vpop.f32.mrb[0].mxu0
      %v5497 = vadd.f32 0.0, %v5496
      %v5498 = vpop.f32.mrb[0].mxu0
      %v5499 = vpop.f32.mrb[0].mxu0
      %v5500 = vadd.f32 0.0, %v5499
      %v5501 = vpop.f32.mrb[0].mxu0
      %5502 = vmatprep.mubr.bf16.mxu0 0
      %5503 = vmatmul.mubr.bf16.gmra.mrb[0].mxu0 %v5347
      %v5504 = vpop.f32.mrb[0].mxu0
      %v5505 = vadd.f32 0.0, %v5504
      %v5506 = vpop.f32.mrb[0].mxu0
      %v5507 = vpop.f32.mrb[0].mxu0
      %v5508 = vadd.f32 0.0, %v5507
      %v5509 = vpop.f32.mrb[0].mxu0
      %5510 = vmatprep.mubr.bf16.mxu0 0
      %5511 = vmatmul.mubr.bf16.gmra.mrb[0].mxu0 %v5348
      %v5512 = vpop.f32.mrb[0].mxu0
      %v5513 = vadd.f32 0.0, %v5512
      %v5514 = vpop.f32.mrb[0].mxu0
      %v5515 = vpop.f32.mrb[0].mxu0
      %v5516 = vadd.f32 0.0, %v5515
      %v5517 = vpop.f32.mrb[0].mxu0
      %5518 = vmatprep.mubr.bf16.mxu0 0
      %5519 = vmatmul.mubr.bf16.gmra.mrb[0].mxu0 %v5349
      %v5520 = vpop.f32.mrb[0].mxu0
      %v5521 = vadd.f32 0.0, %v5520
      %v5522 = vpop.f32.mrb[0].mxu0
      %v5523 = vpop.f32.mrb[0].mxu0
      %v5524 = vadd.f32 0.0, %v5523
      %v5525 = vpop.f32.mrb[0].mxu0
      %5526 = vmatprep.mubr.bf16.mxu0 0
      %5527 = vmatmul.mubr.bf16.gmra.mrb[0].mxu0 %v5350
      %v5528 = vpop.f32.mrb[0].mxu0
      %v5529 = vadd.f32 0.0, %v5528
      %v5530 = vpop.f32.mrb[0].mxu0
      %v5531 = vpop.f32.mrb[0].mxu0
      %v5532 = vadd.f32 0.0, %v5531
      %v5533 = vpop.f32.mrb[0].mxu0
      %5534 = vmatprep.mubr.bf16.mxu0 0
      %5535 = vmatmul.mubr.bf16.gmra.mrb[0].mxu0 %v5351
      %v5536 = vpop.f32.mrb[0].mxu0
      %v5537 = vadd.f32 0.0, %v5536
      %v5538 = vpop.f32.mrb[0].mxu0
      %v5539 = vpop.f32.mrb[0].mxu0
      %v5540 = vadd.f32 0.0, %v5539
      %v5541 = vpop.f32.mrb[0].mxu0
      %5542 = vmatprep.mubr.bf16.mxu0 0
      %5543 = vmatmul.mubr.bf16.gmra.mrb[0].mxu0 %v5352
      %v5544 = vpop.f32.mrb[0].mxu0
      %v5545 = vadd.f32 0.0, %v5544
      %v5546 = vpop.f32.mrb[0].mxu0
      %v5547 = vpop.f32.mrb[0].mxu0
      %v5548 = vadd.f32 0.0, %v5547
      %v5549 = vpop.f32.mrb[0].mxu0
      %5550 = vmatprep.mubr.bf16.mxu0 0
      %5551 = vmatmul.mubr.bf16.gmra.mrb[0].mxu0 %v5353
      %v5552 = vpop.f32.mrb[0].mxu0
      %v5553 = vadd.f32 0.0, %v5552
      %v5554 = vpop.f32.mrb[0].mxu0
      %v5555 = vpop.f32.mrb[0].mxu0
      %v5556 = vadd.f32 0.0, %v5555
      %v5557 = vpop.f32.mrb[0].mxu0
      %5558 = vmatprep.mubr.bf16.mxu0 0
      %5559 = vmatmul.mubr.bf16.gmra.mrb[0].mxu0 %v5354
      %v5560 = vpop.f32.mrb[0].mxu0
      %v5561 = vadd.f32 0.0, %v5560
      %v5562 = vpop.f32.mrb[0].mxu0
      %v5563 = vpop.f32.mrb[0].mxu0
      %v5564 = vadd.f32 0.0, %v5563
      %v5565 = vpop.f32.mrb[0].mxu0
      %5566 = vmatprep.mubr.bf16.mxu0 0
      %5567 = vmatmul.mubr.bf16.gmra.mrb[0].mxu0 %v5355
      %v5568 = vpop.f32.mrb[0].mxu0
      %v5569 = vadd.f32 0.0, %v5568
      %v5570 = vpop.f32.mrb[0].mxu0
      %v5571 = vpop.f32.mrb[0].mxu0
      %v5572 = vadd.f32 0.0, %v5571
      %v5573 = vpop.f32.mrb[0].mxu0
      %5574 = vmatprep.mubr.bf16.mxu0 0
      %5575 = vmatmul.mubr.bf16.gmra.mrb[0].mxu0 %v5356
      %v5576 = vpop.f32.mrb[0].mxu0
      %v5577 = vadd.f32 0.0, %v5576
      %v5578 = vpop.f32.mrb[0].mxu0
      %v5579 = vpop.f32.mrb[0].mxu0
      %v5580 = vadd.f32 0.0, %v5579
      %v5581 = vpop.f32.mrb[0].mxu0
      %5582 = vdwg.mxu0
      %v5583 = vadd.f32 %v5277, %v5457
      %v5584 = vadd.f32 %v5278, %v5460
      %v5585 = vadd.f32 %v5279, %v5465
      %v5586 = vadd.f32 %v5280, %v5468
      %v5587 = vadd.f32 %v5281, %v5473
      %v5588 = vadd.f32 %v5282, %v5476
      %v5589 = vadd.f32 %v5283, %v5481
      %v5590 = vadd.f32 %v5284, %v5484
      %v5591 = vadd.f32 %v5285, %v5489
      %v5592 = vadd.f32 %v5286, %v5492
      %v5593 = vadd.f32 %v5287, %v5497
      %v5594 = vadd.f32 %v5288, %v5500
      %v5595 = vadd.f32 %v5289, %v5505
      %v5596 = vadd.f32 %v5290, %v5508
      %v5597 = vadd.f32 %v5291, %v5513
      %v5598 = vadd.f32 %v5292, %v5516
      %v5599 = vadd.f32 %v5293, %v5521
      %v5600 = vadd.f32 %v5294, %v5524
      %v5601 = vadd.f32 %v5295, %v5529
      %v5602 = vadd.f32 %v5296, %v5532
      %v5603 = vadd.f32 %v5297, %v5537
      %v5604 = vadd.f32 %v5298, %v5540
      %v5605 = vadd.f32 %v5299, %v5545
      %v5606 = vadd.f32 %v5300, %v5548
      %v5607 = vadd.f32 %v5301, %v5553
      %v5608 = vadd.f32 %v5302, %v5556
      %v5609 = vadd.f32 %v5303, %v5561
      %v5610 = vadd.f32 %v5304, %v5564
      %v5611 = vadd.f32 %v5305, %v5569
      %v5612 = vadd.f32 %v5306, %v5572
      %v5613 = vadd.f32 %v5307, %v5577
      %v5614 = vadd.f32 %v5308, %v5580
      %v5615 = vld [vmem:[%s5002 + $0x9] sm:$0xff]
      %v5616 = vld [vmem:[%s5002 + $0x11] sm:$0xff]
      %v5617 = vld [vmem:[%s5002 + $0x29] sm:$0xff]
      %v5618 = vld [vmem:[%s5002 + $0x31] sm:$0xff]
      %v5619 = vld [vmem:[%s5002 + $0x49] sm:$0xff]
      %v5620 = vld [vmem:[%s5002 + $0x51] sm:$0xff]
      %v5621 = vld [vmem:[%s5002 + $0x69] sm:$0xff]
      %v5622 = vld [vmem:[%s5002 + $0x71] sm:$0xff]
      %v5623 = vld [vmem:[%s5002 + $0x89] sm:$0xff]
      %v5624 = vld [vmem:[%s5002 + $0x91] sm:$0xff]
      %v5625 = vld [vmem:[%s5002 + $0xa9] sm:$0xff]
      %v5626 = vld [vmem:[%s5002 + $0xb1] sm:$0xff]
      %v5627 = vld [vmem:[%s5002 + $0xc9] sm:$0xff]
      %v5628 = vld [vmem:[%s5002 + $0xd1] sm:$0xff]
      %v5629 = vld [vmem:[%s5002 + $0xe9] sm:$0xff]
      %v5630 = vld [vmem:[%s5002 + $0xf1] sm:$0xff]
      %v5631 = vld [vmem:[%s5002 + $0x109] sm:$0xff]
      %v5632 = vld [vmem:[%s5002 + $0x111] sm:$0xff]
      %v5633 = vld [vmem:[%s5002 + $0x129] sm:$0xff]
      %v5634 = vld [vmem:[%s5002 + $0x131] sm:$0xff]
      %v5635 = vld [vmem:[%s5002 + $0x149] sm:$0xff]
      %v5636 = vld [vmem:[%s5002 + $0x151] sm:$0xff]
      %v5637 = vld [vmem:[%s5002 + $0x169] sm:$0xff]
      %v5638 = vld [vmem:[%s5002 + $0x171] sm:$0xff]
      %v5639 = vld [vmem:[%s5002 + $0x189] sm:$0xff]
      %v5640 = vld [vmem:[%s5002 + $0x191] sm:$0xff]
      %v5641 = vld [vmem:[%s5002 + $0x1a9] sm:$0xff]
      %v5642 = vld [vmem:[%s5002 + $0x1b1] sm:$0xff]
      %v5643 = vld [vmem:[%s5002 + $0x1c9] sm:$0xff]
      %v5644 = vld [vmem:[%s5002 + $0x1d1] sm:$0xff]
      %v5645 = vld [vmem:[%s5002 + $0x1e9] sm:$0xff]
      %v5646 = vld [vmem:[%s5002 + $0x1f1] sm:$0xff]
      %v5647 = vpack.c.bf16 %v5616, %v5615
      %v5648 = vpack.c.bf16 %v5618, %v5617
      %v5649 = vpack.c.bf16 %v5620, %v5619
      %v5650 = vpack.c.bf16 %v5622, %v5621
      %v5651 = vpack.c.bf16 %v5624, %v5623
      %v5652 = vpack.c.bf16 %v5626, %v5625
      %v5653 = vpack.c.bf16 %v5628, %v5627
      %v5654 = vpack.c.bf16 %v5630, %v5629
      %v5655 = vpack.c.bf16 %v5632, %v5631
      %v5656 = vpack.c.bf16 %v5634, %v5633
      %v5657 = vpack.c.bf16 %v5636, %v5635
      %v5658 = vpack.c.bf16 %v5638, %v5637
      %v5659 = vpack.c.bf16 %v5640, %v5639
      %v5660 = vpack.c.bf16 %v5642, %v5641
      %v5661 = vpack.c.bf16 %v5644, %v5643
      %v5662 = vpack.c.bf16 %v5646, %v5645
      %s5663 = scalar_lea.vmem %s3, 512
      %v5664 = vld [vmem:[%s5663] sm:$0xf]
      %v5665 = vld [vmem:[%s5663 + $0x4] sm:$0xf]
      %v5666 = vld [vmem:[%s5663 + $0x8] sm:$0xf]
      %v5667 = vld [vmem:[%s5663 + $0xc] sm:$0xf]
      %v5668 = vld [vmem:[%s5663 + $0x10] sm:$0xf]
      %v5669 = vld [vmem:[%s5663 + $0x14] sm:$0xf]
      %v5670 = vld [vmem:[%s5663 + $0x18] sm:$0xf]
      %v5671 = vld [vmem:[%s5663 + $0x1c] sm:$0xf]
      %v5672 = vld [vmem:[%s5663 + $0x20] sm:$0xf]
      %v5673 = vld [vmem:[%s5663 + $0x24] sm:$0xf]
      %v5674 = vld [vmem:[%s5663 + $0x28] sm:$0xf]
      %v5675 = vld [vmem:[%s5663 + $0x2c] sm:$0xf]
      %v5676 = vld [vmem:[%s5663 + $0x30] sm:$0xf]
      %v5677 = vld [vmem:[%s5663 + $0x34] sm:$0xf]
      %v5678 = vld [vmem:[%s5663 + $0x38] sm:$0xf]
      %v5679 = vld [vmem:[%s5663 + $0x3c] sm:$0xf]
      %v5696 = vunpack.c.l.b16 %v5664
      %v5697 = vunpack.c.l.b16 %v5665
      %v5698 = vunpack.c.l.b16 %v5666
      %v5699 = vunpack.c.l.b16 %v5667
      %v5700 = vunpack.c.l.b16 %v5668
      %v5701 = vunpack.c.l.b16 %v5669
      %v5702 = vunpack.c.l.b16 %v5670
      %v5703 = vunpack.c.l.b16 %v5671
      %v5704 = vunpack.c.l.b16 %v5672
      %v5705 = vunpack.c.l.b16 %v5673
      %v5706 = vunpack.c.l.b16 %v5674
      %v5707 = vunpack.c.l.b16 %v5675
      %v5708 = vunpack.c.l.b16 %v5676
      %v5709 = vunpack.c.l.b16 %v5677
      %v5710 = vunpack.c.l.b16 %v5678
      %v5711 = vunpack.c.l.b16 %v5679
      %v5712 = vpack.c.b16 %v5697, %v5696
      %v5713 = vpack.c.b16 %v5699, %v5698
      %v5714 = vpack.c.b16 %v5701, %v5700
      %v5715 = vpack.c.b16 %v5703, %v5702
      %v5716 = vpack.c.b16 %v5705, %v5704
      %v5717 = vpack.c.b16 %v5707, %v5706
      %v5718 = vpack.c.b16 %v5709, %v5708
      %v5719 = vpack.c.b16 %v5711, %v5710
      %5728 = vmatprep.subr.bf16.mxu0 0
      %5729 = vmatpush1.bf16.msra.mxu0 %v5712
      %5730 = vmatprep.subr.bf16.mxu0 0
      %5731 = vmatpush1.bf16.msra.mxu0 %v5713
      %5732 = vmatprep.subr.bf16.mxu0 0
      %5733 = vmatpush1.bf16.msra.mxu0 %v5714
      %5734 = vmatprep.subr.bf16.mxu0 0
      %5735 = vmatpush1.bf16.msra.mxu0 %v5715
      %5736 = vmatprep.subr.bf16.mxu0 0
      %5737 = vmatpush1.bf16.msra.mxu0 %v5716
      %5738 = vmatprep.subr.bf16.mxu0 0
      %5739 = vmatpush1.bf16.msra.mxu0 %v5717
      %5740 = vmatprep.subr.bf16.mxu0 0
      %5741 = vmatpush1.bf16.msra.mxu0 %v5718
      %5742 = vmatprep.subr.bf16.mxu0 0
      %5743 = vmatpush1.bf16.msra.mxu0 %v5719
      %5744 = vmatprep.subr.bf16.mxu0 0
      %5745 = vmatpush1.bf16.msra.mxu0 0
      %5746 = vmatprep.subr.bf16.mxu0 0
      %5747 = vmatpush1.bf16.msra.mxu0 0
      %5748 = vmatprep.subr.bf16.mxu0 0
      %5749 = vmatpush1.bf16.msra.mxu0 0
      %5750 = vmatprep.subr.bf16.mxu0 0
      %5751 = vmatpush1.bf16.msra.mxu0 0
      %5752 = vmatprep.subr.bf16.mxu0 0
      %5753 = vmatpush1.bf16.msra.mxu0 0
      %5754 = vmatprep.subr.bf16.mxu0 0
      %5755 = vmatpush1.bf16.msra.mxu0 0
      %5756 = vmatprep.subr.bf16.mxu0 0
      %5757 = vmatpush1.bf16.msra.mxu0 0
      %5758 = vmatprep.subr.bf16.mxu0 0
      %5759 = vmatpush1.bf16.msra.mxu0 0
      %5760 = vmatprep.mubr.bf16.mxu0 0
      %5761 = vmatmul.mubr.bf16.gmra.mrb[0].mxu0 %v5647
      %v5762 = vpop.f32.mrb[0].mxu0
      %v5763 = vadd.f32 0.0, %v5762
      %v5764 = vpop.f32.mrb[0].mxu0
      %v5765 = vpop.f32.mrb[0].mxu0
      %v5766 = vadd.f32 0.0, %v5765
      %v5767 = vpop.f32.mrb[0].mxu0
      %5768 = vmatprep.mubr.bf16.mxu0 0
      %5769 = vmatmul.mubr.bf16.gmra.mrb[0].mxu0 %v5648
      %v5770 = vpop.f32.mrb[0].mxu0
      %v5771 = vadd.f32 0.0, %v5770
      %v5772 = vpop.f32.mrb[0].mxu0
      %v5773 = vpop.f32.mrb[0].mxu0
      %v5774 = vadd.f32 0.0, %v5773
      %v5775 = vpop.f32.mrb[0].mxu0
      %5776 = vmatprep.mubr.bf16.mxu0 0
      %5777 = vmatmul.mubr.bf16.gmra.mrb[0].mxu0 %v5649
      %v5778 = vpop.f32.mrb[0].mxu0
      %v5779 = vadd.f32 0.0, %v5778
      %v5780 = vpop.f32.mrb[0].mxu0
      %v5781 = vpop.f32.mrb[0].mxu0
      %v5782 = vadd.f32 0.0, %v5781
      %v5783 = vpop.f32.mrb[0].mxu0
      %5784 = vmatprep.mubr.bf16.mxu0 0
      %5785 = vmatmul.mubr.bf16.gmra.mrb[0].mxu0 %v5650
      %v5786 = vpop.f32.mrb[0].mxu0
      %v5787 = vadd.f32 0.0, %v5786
      %v5788 = vpop.f32.mrb[0].mxu0
      %v5789 = vpop.f32.mrb[0].mxu0
      %v5790 = vadd.f32 0.0, %v5789
      %v5791 = vpop.f32.mrb[0].mxu0
      %5792 = vmatprep.mubr.bf16.mxu0 0
      %5793 = vmatmul.mubr.bf16.gmra.mrb[0].mxu0 %v5651
      %v5794 = vpop.f32.mrb[0].mxu0
      %v5795 = vadd.f32 0.0, %v5794
      %v5796 = vpop.f32.mrb[0].mxu0
      %v5797 = vpop.f32.mrb[0].mxu0
      %v5798 = vadd.f32 0.0, %v5797
      %v5799 = vpop.f32.mrb[0].mxu0
      %5800 = vmatprep.mubr.bf16.mxu0 0
      %5801 = vmatmul.mubr.bf16.gmra.mrb[0].mxu0 %v5652
      %v5802 = vpop.f32.mrb[0].mxu0
      %v5803 = vadd.f32 0.0, %v5802
      %v5804 = vpop.f32.mrb[0].mxu0
      %v5805 = vpop.f32.mrb[0].mxu0
      %v5806 = vadd.f32 0.0, %v5805
      %v5807 = vpop.f32.mrb[0].mxu0
      %5808 = vmatprep.mubr.bf16.mxu0 0
      %5809 = vmatmul.mubr.bf16.gmra.mrb[0].mxu0 %v5653
      %v5810 = vpop.f32.mrb[0].mxu0
      %v5811 = vadd.f32 0.0, %v5810
      %v5812 = vpop.f32.mrb[0].mxu0
      %v5813 = vpop.f32.mrb[0].mxu0
      %v5814 = vadd.f32 0.0, %v5813
      %v5815 = vpop.f32.mrb[0].mxu0
      %5816 = vmatprep.mubr.bf16.mxu0 0
      %5817 = vmatmul.mubr.bf16.gmra.mrb[0].mxu0 %v5654
      %v5818 = vpop.f32.mrb[0].mxu0
      %v5819 = vadd.f32 0.0, %v5818
      %v5820 = vpop.f32.mrb[0].mxu0
      %v5821 = vpop.f32.mrb[0].mxu0
      %v5822 = vadd.f32 0.0, %v5821
      %v5823 = vpop.f32.mrb[0].mxu0
      %5824 = vmatprep.mubr.bf16.mxu0 0
      %5825 = vmatmul.mubr.bf16.gmra.mrb[0].mxu0 %v5655
      %v5826 = vpop.f32.mrb[0].mxu0
      %v5827 = vadd.f32 0.0, %v5826
      %v5828 = vpop.f32.mrb[0].mxu0
      %v5829 = vpop.f32.mrb[0].mxu0
      %v5830 = vadd.f32 0.0, %v5829
      %v5831 = vpop.f32.mrb[0].mxu0
      %5832 = vmatprep.mubr.bf16.mxu0 0
      %5833 = vmatmul.mubr.bf16.gmra.mrb[0].mxu0 %v5656
      %v5834 = vpop.f32.mrb[0].mxu0
      %v5835 = vadd.f32 0.0, %v5834
      %v5836 = vpop.f32.mrb[0].mxu0
      %v5837 = vpop.f32.mrb[0].mxu0
      %v5838 = vadd.f32 0.0, %v5837
      %v5839 = vpop.f32.mrb[0].mxu0
      %5840 = vmatprep.mubr.bf16.mxu0 0
      %5841 = vmatmul.mubr.bf16.gmra.mrb[0].mxu0 %v5657
      %v5842 = vpop.f32.mrb[0].mxu0
      %v5843 = vadd.f32 0.0, %v5842
      %v5844 = vpop.f32.mrb[0].mxu0
      %v5845 = vpop.f32.mrb[0].mxu0
      %v5846 = vadd.f32 0.0, %v5845
      %v5847 = vpop.f32.mrb[0].mxu0
      %5848 = vmatprep.mubr.bf16.mxu0 0
      %5849 = vmatmul.mubr.bf16.gmra.mrb[0].mxu0 %v5658
      %v5850 = vpop.f32.mrb[0].mxu0
      %v5851 = vadd.f32 0.0, %v5850
      %v5852 = vpop.f32.mrb[0].mxu0
      %v5853 = vpop.f32.mrb[0].mxu0
      %v5854 = vadd.f32 0.0, %v5853
      %v5855 = vpop.f32.mrb[0].mxu0
      %5856 = vmatprep.mubr.bf16.mxu0 0
      %5857 = vmatmul.mubr.bf16.gmra.mrb[0].mxu0 %v5659
      %v5858 = vpop.f32.mrb[0].mxu0
      %v5859 = vadd.f32 0.0, %v5858
      %v5860 = vpop.f32.mrb[0].mxu0
      %v5861 = vpop.f32.mrb[0].mxu0
      %v5862 = vadd.f32 0.0, %v5861
      %v5863 = vpop.f32.mrb[0].mxu0
      %5864 = vmatprep.mubr.bf16.mxu0 0
      %5865 = vmatmul.mubr.bf16.gmra.mrb[0].mxu0 %v5660
      %v5866 = vpop.f32.mrb[0].mxu0
      %v5867 = vadd.f32 0.0, %v5866
      %v5868 = vpop.f32.mrb[0].mxu0
      %v5869 = vpop.f32.mrb[0].mxu0
      %v5870 = vadd.f32 0.0, %v5869
      %v5871 = vpop.f32.mrb[0].mxu0
      %5872 = vmatprep.mubr.bf16.mxu0 0
      %5873 = vmatmul.mubr.bf16.gmra.mrb[0].mxu0 %v5661
      %v5874 = vpop.f32.mrb[0].mxu0
      %v5875 = vadd.f32 0.0, %v5874
      %v5876 = vpop.f32.mrb[0].mxu0
      %v5877 = vpop.f32.mrb[0].mxu0
      %v5878 = vadd.f32 0.0, %v5877
      %v5879 = vpop.f32.mrb[0].mxu0
      %5880 = vmatprep.mubr.bf16.mxu0 0
      %5881 = vmatmul.mubr.bf16.gmra.mrb[0].mxu0 %v5662
      %v5882 = vpop.f32.mrb[0].mxu0
      %v5883 = vadd.f32 0.0, %v5882
      %v5884 = vpop.f32.mrb[0].mxu0
      %v5885 = vpop.f32.mrb[0].mxu0
      %v5886 = vadd.f32 0.0, %v5885
      %v5887 = vpop.f32.mrb[0].mxu0
      %5888 = vdwg.mxu0
      %v5889 = vadd.f32 %v5583, %v5763
      %v5890 = vadd.f32 %v5584, %v5766
      %v5891 = vadd.f32 %v5585, %v5771
      %v5892 = vadd.f32 %v5586, %v5774
      %v5893 = vadd.f32 %v5587, %v5779
      %v5894 = vadd.f32 %v5588, %v5782
      %v5895 = vadd.f32 %v5589, %v5787
      %v5896 = vadd.f32 %v5590, %v5790
      %v5897 = vadd.f32 %v5591, %v5795
      %v5898 = vadd.f32 %v5592, %v5798
      %v5899 = vadd.f32 %v5593, %v5803
      %v5900 = vadd.f32 %v5594, %v5806
      %v5901 = vadd.f32 %v5595, %v5811
      %v5902 = vadd.f32 %v5596, %v5814
      %v5903 = vadd.f32 %v5597, %v5819
      %v5904 = vadd.f32 %v5598, %v5822
      %v5905 = vadd.f32 %v5599, %v5827
      %v5906 = vadd.f32 %v5600, %v5830
      %v5907 = vadd.f32 %v5601, %v5835
      %v5908 = vadd.f32 %v5602, %v5838
      %v5909 = vadd.f32 %v5603, %v5843
      %v5910 = vadd.f32 %v5604, %v5846
      %v5911 = vadd.f32 %v5605, %v5851
      %v5912 = vadd.f32 %v5606, %v5854
      %v5913 = vadd.f32 %v5607, %v5859
      %v5914 = vadd.f32 %v5608, %v5862
      %v5915 = vadd.f32 %v5609, %v5867
      %v5916 = vadd.f32 %v5610, %v5870
      %v5917 = vadd.f32 %v5611, %v5875
      %v5918 = vadd.f32 %v5612, %v5878
      %v5919 = vadd.f32 %v5613, %v5883
      %v5920 = vadd.f32 %v5614, %v5886
      %v5921 = vld [vmem:[%s4] sm:$0x1]
      %v5923 = vlaneseq
      %v5924 = vshrl.u32 %v5923, 7
      %v5925 = vsub.s32 0, %v5924
      %v5926 = vrot.slane %v5921, %v5925
      %v5928 = vadd.f32 %v5889, %v5926
      %v5929 = vadd.f32 %v5890, %v5926
      %v5930 = vadd.f32 %v5891, %v5926
      %v5931 = vadd.f32 %v5892, %v5926
      %v5932 = vadd.f32 %v5893, %v5926
      %v5933 = vadd.f32 %v5894, %v5926
      %v5934 = vadd.f32 %v5895, %v5926
      %v5935 = vadd.f32 %v5896, %v5926
      %v5936 = vadd.f32 %v5897, %v5926
      %v5937 = vadd.f32 %v5898, %v5926
      %v5938 = vadd.f32 %v5899, %v5926
      %v5939 = vadd.f32 %v5900, %v5926
      %v5940 = vadd.f32 %v5901, %v5926
      %v5941 = vadd.f32 %v5902, %v5926
      %v5942 = vadd.f32 %v5903, %v5926
      %v5943 = vadd.f32 %v5904, %v5926
      %v5944 = vadd.f32 %v5905, %v5926
      %v5945 = vadd.f32 %v5906, %v5926
      %v5946 = vadd.f32 %v5907, %v5926
      %v5947 = vadd.f32 %v5908, %v5926
      %v5948 = vadd.f32 %v5909, %v5926
      %v5949 = vadd.f32 %v5910, %v5926
      %v5950 = vadd.f32 %v5911, %v5926
      %v5951 = vadd.f32 %v5912, %v5926
      %v5952 = vadd.f32 %v5913, %v5926
      %v5953 = vadd.f32 %v5914, %v5926
      %v5954 = vadd.f32 %v5915, %v5926
      %v5955 = vadd.f32 %v5916, %v5926
      %v5956 = vadd.f32 %v5917, %v5926
      %v5957 = vadd.f32 %v5918, %v5926
      %v5958 = vadd.f32 %v5919, %v5926
      %v5959 = vadd.f32 %v5920, %v5926
      %v5960 = vadd.f32 %v5928, %v342
      %v5961 = vadd.f32 %v5929, %v343
      %v5962 = vadd.f32 %v5930, %v344
      %v5963 = vadd.f32 %v5931, %v345
      %v5964 = vadd.f32 %v5932, %v346
      %v5965 = vadd.f32 %v5933, %v347
      %v5966 = vadd.f32 %v5934, %v348
      %v5967 = vadd.f32 %v5935, %v349
      %v5968 = vadd.f32 %v5936, %v350
      %v5969 = vadd.f32 %v5937, %v351
      %v5970 = vadd.f32 %v5938, %v352
      %v5971 = vadd.f32 %v5939, %v353
      %v5972 = vadd.f32 %v5940, %v354
      %v5973 = vadd.f32 %v5941, %v355
      %v5974 = vadd.f32 %v5942, %v356
      %v5975 = vadd.f32 %v5943, %v357
      %v5976 = vadd.f32 %v5944, %v358
      %v5977 = vadd.f32 %v5945, %v359
      %v5978 = vadd.f32 %v5946, %v360
      %v5979 = vadd.f32 %v5947, %v361
      %v5980 = vadd.f32 %v5948, %v362
      %v5981 = vadd.f32 %v5949, %v363
      %v5982 = vadd.f32 %v5950, %v364
      %v5983 = vadd.f32 %v5951, %v365
      %v5984 = vadd.f32 %v5952, %v366
      %v5985 = vadd.f32 %v5953, %v367
      %v5986 = vadd.f32 %v5954, %v368
      %v5987 = vadd.f32 %v5955, %v369
      %v5988 = vadd.f32 %v5956, %v370
      %v5989 = vadd.f32 %v5957, %v371
      %v5990 = vadd.f32 %v5958, %v372
      %v5991 = vadd.f32 %v5959, %v373
      %v5992 = vmax.f32 %v5960, 0.0
      %v5993 = vmax.f32 %v5961, 0.0
      %v5994 = vmax.f32 %v5962, 0.0
      %v5995 = vmax.f32 %v5963, 0.0
      %v5996 = vmax.f32 %v5964, 0.0
      %v5997 = vmax.f32 %v5965, 0.0
      %v5998 = vmax.f32 %v5966, 0.0
      %v5999 = vmax.f32 %v5967, 0.0
      %v6000 = vmax.f32 %v5968, 0.0
      %v6001 = vmax.f32 %v5969, 0.0
      %v6002 = vmax.f32 %v5970, 0.0
      %v6003 = vmax.f32 %v5971, 0.0
      %v6004 = vmax.f32 %v5972, 0.0
      %v6005 = vmax.f32 %v5973, 0.0
      %v6006 = vmax.f32 %v5974, 0.0
      %v6007 = vmax.f32 %v5975, 0.0
      %v6008 = vmax.f32 %v5976, 0.0
      %v6009 = vmax.f32 %v5977, 0.0
      %v6010 = vmax.f32 %v5978, 0.0
      %v6011 = vmax.f32 %v5979, 0.0
      %v6012 = vmax.f32 %v5980, 0.0
      %v6013 = vmax.f32 %v5981, 0.0
      %v6014 = vmax.f32 %v5982, 0.0
      %v6015 = vmax.f32 %v5983, 0.0
      %v6016 = vmax.f32 %v5984, 0.0
      %v6017 = vmax.f32 %v5985, 0.0
      %v6018 = vmax.f32 %v5986, 0.0
      %v6019 = vmax.f32 %v5987, 0.0
      %v6020 = vmax.f32 %v5988, 0.0
      %v6021 = vmax.f32 %v5989, 0.0
      %v6022 = vmax.f32 %v5990, 0.0
      %v6023 = vmax.f32 %v5991, 0.0
      %v6024 = vmin.f32 %v5992, 20.0
      %v6025 = vmin.f32 %v5993, 20.0
      %v6026 = vmin.f32 %v5994, 20.0
      %v6027 = vmin.f32 %v5995, 20.0
      %v6028 = vmin.f32 %v5996, 20.0
      %v6029 = vmin.f32 %v5997, 20.0
      %v6030 = vmin.f32 %v5998, 20.0
      %v6031 = vmin.f32 %v5999, 20.0
      %v6032 = vmin.f32 %v6000, 20.0
      %v6033 = vmin.f32 %v6001, 20.0
      %v6034 = vmin.f32 %v6002, 20.0
      %v6035 = vmin.f32 %v6003, 20.0
      %v6036 = vmin.f32 %v6004, 20.0
      %v6037 = vmin.f32 %v6005, 20.0
      %v6038 = vmin.f32 %v6006, 20.0
      %v6039 = vmin.f32 %v6007, 20.0
      %v6040 = vmin.f32 %v6008, 20.0
      %v6041 = vmin.f32 %v6009, 20.0
      %v6042 = vmin.f32 %v6010, 20.0
      %v6043 = vmin.f32 %v6011, 20.0
      %v6044 = vmin.f32 %v6012, 20.0
      %v6045 = vmin.f32 %v6013, 20.0
      %v6046 = vmin.f32 %v6014, 20.0
      %v6047 = vmin.f32 %v6015, 20.0
      %v6048 = vmin.f32 %v6016, 20.0
      %v6049 = vmin.f32 %v6017, 20.0
      %v6050 = vmin.f32 %v6018, 20.0
      %v6051 = vmin.f32 %v6019, 20.0
      %v6052 = vmin.f32 %v6020, 20.0
      %v6053 = vmin.f32 %v6021, 20.0
      %v6054 = vmin.f32 %v6022, 20.0
      %v6055 = vmin.f32 %v6023, 20.0
      %6056 = vst [vmem:[%s224] sm:$0xff] %v6024
      %6057 = vst [vmem:[%s224 + $0x8] sm:$0xff] %v6025
      %6058 = vst [vmem:[%s224 + $0x10] sm:$0xff] %v6026
      %6059 = vst [vmem:[%s224 + $0x18] sm:$0xff] %v6027
      %6060 = vst [vmem:[%s224 + $0x20] sm:$0xff] %v6028
      %6061 = vst [vmem:[%s224 + $0x28] sm:$0xff] %v6029
      %6062 = vst [vmem:[%s224 + $0x30] sm:$0xff] %v6030
      %6063 = vst [vmem:[%s224 + $0x38] sm:$0xff] %v6031
      %6064 = vst [vmem:[%s224 + $0x40] sm:$0xff] %v6032
      %6065 = vst [vmem:[%s224 + $0x48] sm:$0xff] %v6033
      %6066 = vst [vmem:[%s224 + $0x50] sm:$0xff] %v6034
      %6067 = vst [vmem:[%s224 + $0x58] sm:$0xff] %v6035
      %6068 = vst [vmem:[%s224 + $0x60] sm:$0xff] %v6036
      %6069 = vst [vmem:[%s224 + $0x68] sm:$0xff] %v6037
      %6070 = vst [vmem:[%s224 + $0x70] sm:$0xff] %v6038
      %6071 = vst [vmem:[%s224 + $0x78] sm:$0xff] %v6039
      %6072 = vst [vmem:[%s224 + $0x80] sm:$0xff] %v6040
      %6073 = vst [vmem:[%s224 + $0x88] sm:$0xff] %v6041
      %6074 = vst [vmem:[%s224 + $0x90] sm:$0xff] %v6042
      %6075 = vst [vmem:[%s224 + $0x98] sm:$0xff] %v6043
      %6076 = vst [vmem:[%s224 + $0xa0] sm:$0xff] %v6044
      %6077 = vst [vmem:[%s224 + $0xa8] sm:$0xff] %v6045
      %6078 = vst [vmem:[%s224 + $0xb0] sm:$0xff] %v6046
      %6079 = vst [vmem:[%s224 + $0xb8] sm:$0xff] %v6047
      %6080 = vst [vmem:[%s224 + $0xc0] sm:$0xff] %v6048
      %6081 = vst [vmem:[%s224 + $0xc8] sm:$0xff] %v6049
      %6082 = vst [vmem:[%s224 + $0xd0] sm:$0xff] %v6050
      %6083 = vst [vmem:[%s224 + $0xd8] sm:$0xff] %v6051
      %6084 = vst [vmem:[%s224 + $0xe0] sm:$0xff] %v6052
      %6085 = vst [vmem:[%s224 + $0xe8] sm:$0xff] %v6053
      %6086 = vst [vmem:[%s224 + $0xf0] sm:$0xff] %v6054
      %6087 = vst [vmem:[%s224 + $0xf8] sm:$0xff] %v6055
      %p6088 = scmp.lt.s32.totalorder %s16, 1
      %s6089 = scalar_select %p6088, %s16, 1
      %s6090 = smul.addr %s6089, 32
      %s6091 = smul.addr %s6090, 8
      %s6092 = scalar_lea.vmem %s5, %s6091
      // Predicated region
      $region41: #{basic_block_forward.1} parent=39 // pred_check
        %p6093 = pneg %p144
      $region42: #{basic_block_forward.1} parent=39 // pred_check_branch
        %6095 = sbr.rel (%p6093) target = $region44
      $region43: #{basic_block_forward.1} parent=39 // pred_region
        _
      $region44: #{basic_block_forward.1} parent=39 // pred_fallthru
        _
    $region40: #{basic_block_forward.1} parent=5 // pred_fallthru
      _
    %p6096 = scmp.le.s32.totalorder 2, %s11
    // Predicated region
    $region45: #{basic_block_forward.1} parent=5 // pred_check
      %p6097 = pneg %p6096
    $region46: #{basic_block_forward.1} parent=5 // pred_check_branch
      %6099 = sbr.rel (%p6097) target = $region48
    $region47: #{basic_block_forward.1} parent=5 // pred_region
      %s6100 = ssub.s32 %s11, 2
      // Predicated region
      $region49: #{basic_block_forward.1} parent=47 // pred_check
        %p6101 = pneg %p150
      $region50: #{basic_block_forward.1} parent=47 // pred_check_branch
        %6103 = sbr.rel (%p6101) target = $region52
      $region51: #{basic_block_forward.1} parent=47 // pred_region
        %p6104 = scmp.lt.s32.totalorder %s17, 1
        %s6105 = scalar_select %p6104, %s17, 1
        %s6106 = smul.addr %s6105, 32
        %s6107 = smul.addr %s6106, 8
        %s6108 = scalar_lea.vmem %s5, %s6107
      $region52: #{basic_block_forward.1} parent=47 // pred_fallthru
        _
    $region48: #{basic_block_forward.1} parent=5 // pred_fallthru
      _
  $region6: #{basic_block_forward.1} parent=0 // loop_footer
    %s15 = sadd.s32 1, %s11
  $region7: #{basic_block_forward.1} parent=0 // loop_footer_branch
    %10 = sbr.rel target = $region3
  $region8: #{basic_block_forward.1} parent=0 // loop_exit
    _

</llo_original>
